<compile_context>
chip_gen: v7x
topology: tpu7x:2x2x1
jax: 0.10.0
libtpu: 0.0.40
codegen_flags: <defaults>
</compile_context>

<pallas_src>
import math
from functools import partial

import jax
import jax.numpy as jnp
from jax.experimental import pallas as pl
from jax.experimental.pallas import tpu as pltpu


LN_EPS = 1e-5  # nn.Transformer default layer_norm_eps


# ---------------------------------------------------------------------------
# In-kernel helpers (operate on VMEM-resident values, not refs)
# ---------------------------------------------------------------------------

def _mm(x, w):
    """MXU matmul: bf16 operands, f32 accumulation. w is pre-transposed (K, N)."""
    return jnp.dot(x.astype(jnp.bfloat16), w.astype(jnp.bfloat16),
                   preferred_element_type=jnp.float32)


def _layernorm(x, g, b, eps=LN_EPS):
    mean = jnp.mean(x, axis=-1, keepdims=True)
    c = x - mean
    var = jnp.mean(c * c, axis=-1, keepdims=True)
    return c * jax.lax.rsqrt(var + eps) * g + b


def _mha_block(q_src, kv_src, w_qkv, b_qkv, w_o, b_o, mask, *, H, Dh, fused_qkv):
    """PyTorch nn.MultiheadAttention semantics for ONE batch element.

    q_src: (Sq, D) f32, kv_src: (Sk, D); returns (Sq, D) f32.
    """
    D = H * Dh
    scale = 1.0 / math.sqrt(Dh)

    if fused_qkv:                                   # self-attention: one matmul
        qkv = _mm(q_src, w_qkv) + b_qkv             # (Sq, 3D) f32
        q_all, k_all, v_all = qkv[:, :D], qkv[:, D:2 * D], qkv[:, 2 * D:]
    else:                                           # cross-attention
        q_all = _mm(q_src, w_qkv[:, :D]) + b_qkv[:, :D]
        kv = _mm(kv_src, w_qkv[:, D:]) + b_qkv[:, D:]
        k_all, v_all = kv[:, :D], kv[:, D:]

    # bf16 operands for the MXU (f32 accumulation kept via preferred_element_type)
    q_all = q_all.astype(jnp.bfloat16)
    k_all = k_all.astype(jnp.bfloat16)
    v_all = v_all.astype(jnp.bfloat16)

    head_outs = []
    for h in range(H):                              # H is small (num_heads)
        qh = q_all[:, h * Dh:(h + 1) * Dh]
        kh = k_all[:, h * Dh:(h + 1) * Dh]
        vh = v_all[:, h * Dh:(h + 1) * Dh]
        # Q @ K^T without materializing a transpose: contract on the Dh axis.
        s = jax.lax.dot_general(qh, kh, (((1,), (1,)), ((), ())),
                                preferred_element_type=jnp.float32) * scale
        if mask is not None:
            s = s + mask
        m = jnp.max(s, axis=-1, keepdims=True)
        p = jnp.exp(s - m)
        # approx reciprocal uses the EUP slot; not bit-exact vs torch softmax.
        p = p * pl.reciprocal(jnp.sum(p, axis=-1, keepdims=True), approx=True)
        head_outs.append(jnp.dot(p.astype(jnp.bfloat16), vh,
                                 preferred_element_type=jnp.float32))
    attn = jnp.concatenate(head_outs, axis=-1)      # (Sq, D) f32
    return _mm(attn, w_o) + b_o


# ---------------------------------------------------------------------------
# Fused Pallas kernels
#   grid = (B, n_ff_chunks): batch is "parallel", FF chunk is "arbitrary".
#   Attention + LN are computed once per batch element (at ff_chunk == 0) into
#   a VMEM scratch; the FFN streams w1/w2 chunk-by-chunk into an f32 accumulator.
# ---------------------------------------------------------------------------

def _encoder_layer_kernel(*refs, H, Dh, final_ln):
    if final_ln:
        (x_ref, w_qkv, b_qkv, w_o, b_o, ln1g, ln1b,
         w1, b1, w2, b2, ln2g, ln2b, encg, encb,
         o_ref, h1_sc, acc_sc) = refs
    else:
        (x_ref, w_qkv, b_qkv, w_o, b_o, ln1g, ln1b,
         w1, b1, w2, b2, ln2g, ln2b,
         o_ref, h1_sc, acc_sc) = refs
        encg = encb = None

    k = pl.program_id(1)

    @pl.when(k == 0)
    def _():
        x = x_ref[0].astype(jnp.float32)            # (S, D)
        attn = _mha_block(x, x, w_qkv[...], b_qkv[...], w_o[...], b_o[...],
                          None, H=H, Dh=Dh, fused_qkv=True)
        h1_sc[...] = _layernorm(x + attn, ln1g[...], ln1b[...])
        acc_sc[...] = jnp.zeros_like(acc_sc)

    h1 = h1_sc[...]
    hidden = jnp.maximum(_mm(h1, w1[...]) + b1[...], 0.0)     # ReLU, (S, tf)
    acc_sc[...] += _mm(hidden, w2[...])

    @pl.when(k == pl.num_programs(1) - 1)
    def _():
        out = _layernorm(h1_sc[...] + acc_sc[...] + b2[...], ln2g[...], ln2b[...])
        if final_ln:                                # fused nn.TransformerEncoder norm
            out = _layernorm(out, encg[...], encb[...])
        o_ref[0] = out.astype(o_ref.dtype)


def _decoder_layer_kernel(*refs, H, Dh, has_mask):
    if has_mask:
        (x_ref, mem_ref, mask_ref,
         sa_wqkv, sa_bqkv, sa_wo, sa_bo, ln1g, ln1b,
         ca_wqkv, ca_bqkv, ca_wo, ca_bo, ln2g, ln2b,
         w1, b1, w2, b2, ln3g, ln3b,
         o_ref, h2_sc, acc_sc) = refs
    else:
        (x_ref, mem_ref,
         sa_wqkv, sa_bqkv, sa_wo, sa_bo, ln1g, ln1b,
         ca_wqkv, ca_bqkv, ca_wo, ca_bo, ln2g, ln2b,
         w1, b1, w2, b2, ln3g, ln3b,
         o_ref, h2_sc, acc_sc) = refs
        mask_ref = None

    k = pl.program_id(1)

    @pl.when(k == 0)
    def _():
        x = x_ref[0].astype(jnp.float32)            # (St, D)
        mem = mem_ref[0]                            # (Ss, D) bf16
        mask = mask_ref[...] if has_mask else None
        sa = _mha_block(x, x, sa_wqkv[...], sa_bqkv[...], sa_wo[...], sa_bo[...],
                        mask, H=H, Dh=Dh, fused_qkv=True)
        h1 = _layernorm(x + sa, ln1g[...], ln1b[...])
        ca = _mha_block(h1, mem, ca_wqkv[...], ca_bqkv[...], ca_wo[...], ca_bo[...],
                        None, H=H, Dh=Dh, fused_qkv=False)
        h2_sc[...] = _layernorm(h1 + ca, ln2g[...], ln2b[...])
        acc_sc[...] = jnp.zeros_like(acc_sc)

    h2 = h2_sc[...]
    hidden = jnp.maximum(_mm(h2, w1[...]) + b1[...], 0.0)
    acc_sc[...] += _mm(hidden, w2[...])

    @pl.when(k == pl.num_programs(1) - 1)
    def _():
        out = _layernorm(h2_sc[...] + acc_sc[...] + b2[...], ln3g[...], ln3b[...])
        o_ref[0] = out.astype(o_ref.dtype)


def _final_kernel(x_ref, g_ref, b_ref, w_ref, bias_ref, o_ref):
    # Fused decoder-final LayerNorm + one vocab tile of the output projection.
    h = _layernorm(x_ref[...].astype(jnp.float32), g_ref[...], b_ref[...])
    o_ref[...] = _mm(h, w_ref[...]) + bias_ref[...]


# ---------------------------------------------------------------------------
# pallas_call wrappers
# ---------------------------------------------------------------------------

def _pick_tile(n, prefs=(512, 256, 128)):
    """Largest preferred tile that divides n (128-multiple), else n whole."""
    for t in prefs:
        if n >= t and n % t == 0:
            return t
    return n


def encoder_layer(x, p, *, B, S, D, H, Dh, enc_norm=None):
    """x: (B, S, D) bf16 -> (B, S, D) bf16."""
    a, f = p["attn"], p["ffn"]
    FF = f["w1"].shape[1]
    tf = _pick_tile(FF)
    n_k = FF // tf
    final_ln = enc_norm is not None

    def full(arr):
        shp = arr.shape
        return pl.BlockSpec(shp, lambda b, k: (0,) * len(shp))

    operands = [x, a["w_qkv"], a["b_qkv"], a["w_o"], a["b_o"],
                p["ln1"]["g"], p["ln1"]["b"],
                f["w1"], f["b1"], f["w2"], f["b2"],
                p["ln2"]["g"], p["ln2"]["b"]]
    in_specs = [pl.BlockSpec((1, S, D), lambda b, k: (b, 0, 0)),
                full(a["w_qkv"]), full(a["b_qkv"]), full(a["w_o"]), full(a["b_o"]),
                full(p["ln1"]["g"]), full(p["ln1"]["b"]),
                pl.BlockSpec((D, tf), lambda b, k: (0, k)),
                pl.BlockSpec((1, tf), lambda b, k: (0, k)),
                pl.BlockSpec((tf, D), lambda b, k: (k, 0)),
                full(f["b2"]),
                full(p["ln2"]["g"]), full(p["ln2"]["b"])]
    if final_ln:
        operands += [enc_norm["g"], enc_norm["b"]]
        in_specs += [full(enc_norm["g"]), full(enc_norm["b"])]

    return pl.pallas_call(
        partial(_encoder_layer_kernel, H=H, Dh=Dh, final_ln=final_ln),
        out_shape=jax.ShapeDtypeStruct((B, S, D), jnp.bfloat16),
        grid=(B, n_k),
        in_specs=in_specs,
        out_specs=pl.BlockSpec((1, S, D), lambda b, k: (b, 0, 0)),
        scratch_shapes=[pltpu.VMEM((S, D), jnp.float32),
                        pltpu.VMEM((S, D), jnp.float32)],
        compiler_params=pltpu.CompilerParams(
            dimension_semantics=("parallel", "arbitrary")),
    )(*operands)


def decoder_layer(x, mem, p, *, B, St, Ss, D, H, Dh, tgt_mask=None):
    """x: (B, St, D) bf16, mem: (B, Ss, D) bf16 -> (B, St, D) bf16."""
    a, c, f = p["self_attn"], p["cross_attn"], p["ffn"]
    FF = f["w1"].shape[1]
    tf = _pick_tile(FF)
    n_k = FF // tf
    has_mask = tgt_mask is not None

    def full(arr):
        shp = arr.shape
        return pl.BlockSpec(shp, lambda b, k: (0,) * len(shp))

    operands = [x, mem]
    in_specs = [pl.BlockSpec((1, St, D), lambda b, k: (b, 0, 0)),
                pl.BlockSpec((1, Ss, D), lambda b, k: (b, 0, 0))]
    if has_mask:
        operands.append(tgt_mask)
        in_specs.append(full(tgt_mask))
    operands += [a["w_qkv"], a["b_qkv"], a["w_o"], a["b_o"],
                 p["ln1"]["g"], p["ln1"]["b"],
                 c["w_qkv"], c["b_qkv"], c["w_o"], c["b_o"],
                 p["ln2"]["g"], p["ln2"]["b"],
                 f["w1"], f["b1"], f["w2"], f["b2"],
                 p["ln3"]["g"], p["ln3"]["b"]]
    in_specs += [full(a["w_qkv"]), full(a["b_qkv"]), full(a["w_o"]), full(a["b_o"]),
                 full(p["ln1"]["g"]), full(p["ln1"]["b"]),
                 full(c["w_qkv"]), full(c["b_qkv"]), full(c["w_o"]), full(c["b_o"]),
                 full(p["ln2"]["g"]), full(p["ln2"]["b"]),
                 pl.BlockSpec((D, tf), lambda b, k: (0, k)),
                 pl.BlockSpec((1, tf), lambda b, k: (0, k)),
                 pl.BlockSpec((tf, D), lambda b, k: (k, 0)),
                 full(f["b2"]),
                 full(p["ln3"]["g"]), full(p["ln3"]["b"])]

    return pl.pallas_call(
        partial(_decoder_layer_kernel, H=H, Dh=Dh, has_mask=has_mask),
        out_shape=jax.ShapeDtypeStruct((B, St, D), jnp.bfloat16),
        grid=(B, n_k),
        in_specs=in_specs,
        out_specs=pl.BlockSpec((1, St, D), lambda b, k: (b, 0, 0)),
        scratch_shapes=[pltpu.VMEM((St, D), jnp.float32),
                        pltpu.VMEM((St, D), jnp.float32)],
        compiler_params=pltpu.CompilerParams(
            dimension_semantics=("parallel", "arbitrary")),
    )(*operands)


def final_norm_project(x2d, ln, w, b):
    """x2d: (B*St, D) bf16 -> logits (B*St, V) f32.  Vocab is N-tiled."""
    M, D = x2d.shape
    V = w.shape[1]
    tn = _pick_tile(V, prefs=(1024, 512, 256, 128))
    n_j = V // tn

    return pl.pallas_call(
        _final_kernel,
        out_shape=jax.ShapeDtypeStruct((M, V), jnp.float32),
        grid=(n_j,),
        in_specs=[pl.BlockSpec((M, D), lambda j: (0, 0)),
                  pl.BlockSpec((1, D), lambda j: (0, 0)),
                  pl.BlockSpec((1, D), lambda j: (0, 0)),
                  pl.BlockSpec((D, tn), lambda j: (0, j)),
                  pl.BlockSpec((1, tn), lambda j: (0, j))],
        out_specs=pl.BlockSpec((M, tn), lambda j: (0, j)),
        compiler_params=pltpu.CompilerParams(
            dimension_semantics=("parallel",)),
    )(x2d, ln["g"], ln["b"], w, b)


# ---------------------------------------------------------------------------
# Forward pass
# ---------------------------------------------------------------------------

@partial(jax.jit, static_argnames=("num_heads",))
def transformer_forward(params, src_tokens, tgt_tokens, num_heads, tgt_mask=None):
    """src_tokens, tgt_tokens: int32 (seq_len, batch) -> (tgt_seq, batch, num_tokens)."""
    emb = params["embedding"]
    D = emb.shape[1]
    H = num_heads
    Dh = D // H
    sqrt_d = math.sqrt(D)

    def embed_and_pe(tokens):
        t = tokens.T                                 # permute(1, 0) -> (B, S)
        x = emb[t] * sqrt_d                          # (B, S, D)  gather in JAX glue
        pe = params["pos_encoding"][: x.shape[0]]    # (B, 1, D) -- faithful quirk:
        x = x + pe                                   #   PE indexed by *batch* axis
        B, S, _ = x.shape
        return x.astype(jnp.bfloat16), B, S          # bf16 across pallas_call boundary

    src, B, Ss = embed_and_pe(src_tokens)
    tgt, _, St = embed_and_pe(tgt_tokens)

    mem = src
    n_enc = len(params["enc_layers"])
    for li, lp in enumerate(params["enc_layers"]):
        # encoder-final LayerNorm fused into the last encoder layer kernel
        enc_norm = params["enc_norm"] if li == n_enc - 1 else None
        mem = encoder_layer(mem, lp, B=B, S=Ss, D=D, H=H, Dh=Dh, enc_norm=enc_norm)

    out = tgt
    for lp in params["dec_layers"]:
        out = decoder_layer(out, mem, lp, B=B, St=St, Ss=Ss, D=D, H=H, Dh=Dh,
                            tgt_mask=tgt_mask)

    logits = final_norm_project(out.reshape(B * St, D), params["dec_norm"],
                                params["out_w"], params["out_b"])
    V = logits.shape[1]
    # TODO(synk): for a realistic vocab, emit (tgt_S, B, V) tiles directly from
    # the final kernel's out_spec instead of this JAX-side reshape/transpose.
    return logits.reshape(B, St, V).transpose(1, 0, 2)   # (tgt_S, B, num_tokens)


# ---------------------------------------------------------------------------
# Parameter setup
# ---------------------------------------------------------------------------

def make_pos_encoding(dim_model, max_len):
    pos = jnp.arange(max_len, dtype=jnp.float32)[:, None]
    div = jnp.exp(jnp.arange(0, dim_model, 2, dtype=jnp.float32)
                  * (-math.log(10000.0) / dim_model))
    pe = jnp.zeros((max_len, dim_model), jnp.float32)
    pe = pe.at[:, 0::2].set(jnp.sin(pos * div))
    pe = pe.at[:, 1::2].set(jnp.cos(pos * div))
    return pe[:, None, :]  # (max_len, 1, dim_model)


def make_tgt_mask(size):
    """Causal additive mask, same semantics as Transformer.get_tgt_mask."""
    i = jnp.arange(size)[:, None]
    j = jnp.arange(size)[None, :]
    return jnp.where(j <= i, 0.0, -jnp.inf).astype(jnp.float32)


def init_params(key, num_tokens, dim_model, num_heads, n_enc, n_dec,
                dim_feedforward, max_len):
    state = {"key": key}

    def nxt():
        state["key"], sub = jax.random.split(state["key"])
        return sub

    def w(shape, scale=0.02, dtype=jnp.bfloat16):
        # Weights stored pre-transposed as (K, N): kernels do x @ w directly.
        return (jax.random.normal(nxt(), shape, jnp.float32) * scale).astype(dtype)

    def zrow(n):
        return jnp.zeros((1, n), jnp.float32)

    def attn_params(d):
        return dict(w_qkv=w((d, 3 * d)), b_qkv=zrow(3 * d),
                    w_o=w((d, d)), b_o=zrow(d))

    def ln_params(d):
        return dict(g=jnp.ones((1, d), jnp.float32), b=zrow(d))

    def ffn_params(d, f):
        return dict(w1=w((d, f)), b1=zrow(f),
                    w2=w((f, d)), b2=zrow(d))

    d, f = dim_model, dim_feedforward
    enc_layers = [dict(attn=attn_params(d), ln1=ln_params(d), ln2=ln_params(d),
                       ffn=ffn_params(d, f)) for _ in range(n_enc)]
    dec_layers = [dict(self_attn=attn_params(d), cross_attn=attn_params(d),
                       ln1=ln_params(d), ln2=ln_params(d), ln3=ln_params(d),
                       ffn=ffn_params(d, f)) for _ in range(n_dec)]

    return dict(
        embedding=w((num_tokens, d), scale=1.0, dtype=jnp.float32),
        pos_encoding=make_pos_encoding(d, max_len),
        enc_layers=enc_layers,
        dec_layers=dec_layers,
        enc_norm=ln_params(d),
        dec_norm=ln_params(d),
        out_w=w((d, num_tokens)),
        out_b=zrow(num_tokens),
    )


# ---------------------------------------------------------------------------
# main
# ---------------------------------------------------------------------------

if __name__ == "__main__":
    num_tokens = 32
    dim_model = 32
    num_heads = 2
    num_encoder_layers = 2
    num_decoder_layers = 2
    dim_feedforward = 2048   # nn.Transformer default
    max_len = 64
    seq_len = 8
    batch = 2

    key = jax.random.PRNGKey(0)
    pkey, skey, tkey = jax.random.split(key, 3)
    params = init_params(pkey, num_tokens, dim_model, num_heads,
                         num_encoder_layers, num_decoder_layers,
                         dim_feedforward, max_len)

    # PyTorch forward expects src/tgt of shape (seq_len, batch) with token ids.
    src = jax.random.randint(skey, (seq_len, batch), 0, num_tokens, dtype=jnp.int32)
    tgt = jax.random.randint(tkey, (seq_len, batch), 0, num_tokens, dtype=jnp.int32)

    # Unmasked forward.
    out = transformer_forward(params, src, tgt, num_heads, tgt_mask=None)
    out = jax.block_until_ready(out)
    assert out.shape == (seq_len, batch, num_tokens)
    assert bool(jnp.all(jnp.isfinite(out)))

    # Causal-mask forward (exercises the tgt_mask path, as in get_tgt_mask()).
    mask = make_tgt_mask(seq_len)
    out_m = transformer_forward(params, src, tgt, num_heads, tgt_mask=mask)
    out_m = jax.block_until_ready(out_m)
    assert out_m.shape == (seq_len, batch, num_tokens)
    assert bool(jnp.all(jnp.isfinite(out_m)))

    print("KERNEL_OK")
</pallas_src>

<mosaic_0001>
module attributes {stable_mosaic.version = 11 : i64} {
  func.func @_encoder_layer_kernel(%arg0: i32, %arg1: i32, %arg2: memref<1x8x32xbf16, #tpu.memory_space<vmem>>, %arg3: memref<32x96xbf16, #tpu.memory_space<vmem>>, %arg4: memref<1x96xf32, #tpu.memory_space<vmem>>, %arg5: memref<32x32xbf16, #tpu.memory_space<vmem>>, %arg6: memref<1x32xf32, #tpu.memory_space<vmem>>, %arg7: memref<1x32xf32, #tpu.memory_space<vmem>>, %arg8: memref<1x32xf32, #tpu.memory_space<vmem>>, %arg9: memref<32x512xbf16, #tpu.memory_space<vmem>>, %arg10: memref<1x512xf32, #tpu.memory_space<vmem>>, %arg11: memref<512x32xbf16, #tpu.memory_space<vmem>>, %arg12: memref<1x32xf32, #tpu.memory_space<vmem>>, %arg13: memref<1x32xf32, #tpu.memory_space<vmem>>, %arg14: memref<1x32xf32, #tpu.memory_space<vmem>>, %arg15: memref<1x32xf32, #tpu.memory_space<vmem>>, %arg16: memref<1x32xf32, #tpu.memory_space<vmem>>, %arg17: memref<1x8x32xbf16, #tpu.memory_space<vmem>>, %arg18: memref<8x32xf32, #tpu.memory_space<vmem>>, %arg19: memref<8x32xf32, #tpu.memory_space<vmem>>) attributes {dimension_semantics = [#tpu.dimension_semantics<parallel>, #tpu.dimension_semantics<arbitrary>], iteration_bounds = array<i64: 2, 4>, scalar_prefetch = 0 : i64, scratch_operands = 2 : i64, tpu.core_type = #tpu.core_type<tc>, window_params = [{transform_indices = @transform_0, window_bounds = array<i64: 1, 8, 32>}, {pipeline_mode = #tpu.pipeline_mode<synchronous>, transform_indices = @transform_1, window_bounds = array<i64: 32, 96>}, {pipeline_mode = #tpu.pipeline_mode<synchronous>, transform_indices = @transform_2, window_bounds = array<i64: 1, 96>}, {pipeline_mode = #tpu.pipeline_mode<synchronous>, transform_indices = @transform_3, window_bounds = array<i64: 32, 32>}, {pipeline_mode = #tpu.pipeline_mode<synchronous>, transform_indices = @transform_4, window_bounds = array<i64: 1, 32>}, {pipeline_mode = #tpu.pipeline_mode<synchronous>, transform_indices = @transform_5, window_bounds = array<i64: 1, 32>}, {pipeline_mode = #tpu.pipeline_mode<synchronous>, transform_indices = @transform_6, window_bounds = array<i64: 1, 32>}, {transform_indices = @transform_7, window_bounds = array<i64: 32, 512>}, {transform_indices = @transform_8, window_bounds = array<i64: 1, 512>}, {transform_indices = @transform_9, window_bounds = array<i64: 512, 32>}, {pipeline_mode = #tpu.pipeline_mode<synchronous>, transform_indices = @transform_10, window_bounds = array<i64: 1, 32>}, {pipeline_mode = #tpu.pipeline_mode<synchronous>, transform_indices = @transform_11, window_bounds = array<i64: 1, 32>}, {pipeline_mode = #tpu.pipeline_mode<synchronous>, transform_indices = @transform_12, window_bounds = array<i64: 1, 32>}, {pipeline_mode = #tpu.pipeline_mode<synchronous>, transform_indices = @transform_13, window_bounds = array<i64: 1, 32>}, {pipeline_mode = #tpu.pipeline_mode<synchronous>, transform_indices = @transform_14, window_bounds = array<i64: 1, 32>}, {transform_indices = @transform_15, window_bounds = array<i64: 1, 8, 32>}]} {
    %c0_i32 = arith.constant 0 : i32
    %0 = arith.cmpi eq, %arg1, %c0_i32 : i32
    %1 = arith.extui %0 : i1 to i32
    %c0_i32_0 = arith.constant 0 : i32
    %2 = arith.cmpi ne, %1, %c0_i32_0 : i32
    scf.if %2 {
      %c0_15 = arith.constant 0 : index
      %c0_16 = arith.constant 0 : index
      %c0_17 = arith.constant 0 : index
      %21 = vector.load %arg2[%c0_15, %c0_16, %c0_17] : memref<1x8x32xbf16, #tpu.memory_space<vmem>>, vector<1x8x32xbf16>
      %22 = vector.shape_cast %21 : vector<1x8x32xbf16> to vector<8x32xbf16>
      %23 = arith.extf %22 : vector<8x32xbf16> to vector<8x32xf32>
      %c0_18 = arith.constant 0 : index
      %c0_19 = arith.constant 0 : index
      %24 = vector.load %arg3[%c0_18, %c0_19] : memref<32x96xbf16, #tpu.memory_space<vmem>>, vector<32x96xbf16>
      %c0_20 = arith.constant 0 : index
      %c0_21 = arith.constant 0 : index
      %25 = vector.load %arg4[%c0_20, %c0_21] : memref<1x96xf32, #tpu.memory_space<vmem>>, vector<1x96xf32>
      %c0_22 = arith.constant 0 : index
      %c0_23 = arith.constant 0 : index
      %26 = vector.load %arg5[%c0_22, %c0_23] : memref<32x32xbf16, #tpu.memory_space<vmem>>, vector<32x32xbf16>
      %c0_24 = arith.constant 0 : index
      %c0_25 = arith.constant 0 : index
      %27 = vector.load %arg6[%c0_24, %c0_25] : memref<1x32xf32, #tpu.memory_space<vmem>>, vector<1x32xf32>
      %28 = arith.truncf %23 : vector<8x32xf32> to vector<8x32xbf16>
      %cst_26 = arith.constant dense<0.000000e+00> : vector<8x96xf32>
      %29 = tpu.matmul %28, %24, %cst_26 {dimension_numbers = #tpu.dot_dimension_numbers<[1], [0], [0], [1], [0, 0, 1, 1], [], []>} : vector<8x32xbf16>, vector<32x96xbf16>, vector<8x96xf32> -> vector<8x96xf32>
      %30 = vector.broadcast %25 : vector<1x96xf32> to vector<8x96xf32>
      %31 = arith.addf %29, %30 : vector<8x96xf32>
      %32 = vector.extract_strided_slice %31 {offsets = [0, 0], sizes = [8, 32], strides = [1, 1]} : vector<8x96xf32> to vector<8x32xf32>
      %33 = vector.extract_strided_slice %31 {offsets = [0, 32], sizes = [8, 32], strides = [1, 1]} : vector<8x96xf32> to vector<8x32xf32>
      %34 = vector.extract_strided_slice %31 {offsets = [0, 64], sizes = [8, 32], strides = [1, 1]} : vector<8x96xf32> to vector<8x32xf32>
      %35 = arith.truncf %32 : vector<8x32xf32> to vector<8x32xbf16>
      %36 = arith.truncf %33 : vector<8x32xf32> to vector<8x32xbf16>
      %37 = arith.truncf %34 : vector<8x32xf32> to vector<8x32xbf16>
      %38 = vector.extract_strided_slice %35 {offsets = [0, 0], sizes = [8, 16], strides = [1, 1]} : vector<8x32xbf16> to vector<8x16xbf16>
      %39 = vector.extract_strided_slice %36 {offsets = [0, 0], sizes = [8, 16], strides = [1, 1]} : vector<8x32xbf16> to vector<8x16xbf16>
      %40 = vector.extract_strided_slice %37 {offsets = [0, 0], sizes = [8, 16], strides = [1, 1]} : vector<8x32xbf16> to vector<8x16xbf16>
      %cst_27 = arith.constant dense<0.000000e+00> : vector<8x8xf32>
      %41 = tpu.matmul %38, %39, %cst_27 {dimension_numbers = #tpu.dot_dimension_numbers<[1], [1], [0], [0], [0, 0, 1, 0], [], []>} : vector<8x16xbf16>, vector<8x16xbf16>, vector<8x8xf32> -> vector<8x8xf32>
      %cst_28 = arith.constant 2.500000e-01 : f32
      %42 = vector.broadcast %cst_28 : f32 to vector<8x8xf32>
      %43 = arith.mulf %41, %42 : vector<8x8xf32>
      %cst_29 = arith.constant dense<0xFF800000> : vector<8xf32>
      %44 = vector.multi_reduction <maximumf>, %43, %cst_29 [1] : vector<8x8xf32> to vector<8xf32>
      %45 = vector.shape_cast %44 : vector<8xf32> to vector<8x1xf32>
      %46 = vector.broadcast %45 : vector<8x1xf32> to vector<8x8xf32>
      %47 = arith.subf %43, %46 : vector<8x8xf32>
      %48 = math.exp %47 : vector<8x8xf32>
      %cst_30 = arith.constant dense<0.000000e+00> : vector<8xf32>
      %49 = vector.multi_reduction <add>, %48, %cst_30 [1] : vector<8x8xf32> to vector<8xf32>
      %50 = vector.shape_cast %49 : vector<8xf32> to vector<8x1xf32>
      %51 = tpu.reciprocal %50 {approx = true} : vector<8x1xf32> -> vector<8x1xf32>
      %52 = vector.broadcast %51 : vector<8x1xf32> to vector<8x8xf32>
      %53 = arith.mulf %48, %52 : vector<8x8xf32>
      %54 = arith.truncf %53 : vector<8x8xf32> to vector<8x8xbf16>
      %cst_31 = arith.constant dense<0.000000e+00> : vector<8x16xf32>
      %55 = tpu.matmul %54, %40, %cst_31 {dimension_numbers = #tpu.dot_dimension_numbers<[1], [0], [0], [1], [0, 0, 1, 1], [], []>} : vector<8x8xbf16>, vector<8x16xbf16>, vector<8x16xf32> -> vector<8x16xf32>
      %56 = vector.extract_strided_slice %35 {offsets = [0, 16], sizes = [8, 16], strides = [1, 1]} : vector<8x32xbf16> to vector<8x16xbf16>
      %57 = vector.extract_strided_slice %36 {offsets = [0, 16], sizes = [8, 16], strides = [1, 1]} : vector<8x32xbf16> to vector<8x16xbf16>
      %58 = vector.extract_strided_slice %37 {offsets = [0, 16], sizes = [8, 16], strides = [1, 1]} : vector<8x32xbf16> to vector<8x16xbf16>
      %cst_32 = arith.constant dense<0.000000e+00> : vector<8x8xf32>
      %59 = tpu.matmul %56, %57, %cst_32 {dimension_numbers = #tpu.dot_dimension_numbers<[1], [1], [0], [0], [0, 0, 1, 0], [], []>} : vector<8x16xbf16>, vector<8x16xbf16>, vector<8x8xf32> -> vector<8x8xf32>
      %cst_33 = arith.constant 2.500000e-01 : f32
      %60 = vector.broadcast %cst_33 : f32 to vector<8x8xf32>
      %61 = arith.mulf %59, %60 : vector<8x8xf32>
      %cst_34 = arith.constant dense<0xFF800000> : vector<8xf32>
      %62 = vector.multi_reduction <maximumf>, %61, %cst_34 [1] : vector<8x8xf32> to vector<8xf32>
      %63 = vector.shape_cast %62 : vector<8xf32> to vector<8x1xf32>
      %64 = vector.broadcast %63 : vector<8x1xf32> to vector<8x8xf32>
      %65 = arith.subf %61, %64 : vector<8x8xf32>
      %66 = math.exp %65 : vector<8x8xf32>
      %cst_35 = arith.constant dense<0.000000e+00> : vector<8xf32>
      %67 = vector.multi_reduction <add>, %66, %cst_35 [1] : vector<8x8xf32> to vector<8xf32>
      %68 = vector.shape_cast %67 : vector<8xf32> to vector<8x1xf32>
      %69 = tpu.reciprocal %68 {approx = true} : vector<8x1xf32> -> vector<8x1xf32>
      %70 = vector.broadcast %69 : vector<8x1xf32> to vector<8x8xf32>
      %71 = arith.mulf %66, %70 : vector<8x8xf32>
      %72 = arith.truncf %71 : vector<8x8xf32> to vector<8x8xbf16>
      %cst_36 = arith.constant dense<0.000000e+00> : vector<8x16xf32>
      %73 = tpu.matmul %72, %58, %cst_36 {dimension_numbers = #tpu.dot_dimension_numbers<[1], [0], [0], [1], [0, 0, 1, 1], [], []>} : vector<8x8xbf16>, vector<8x16xbf16>, vector<8x16xf32> -> vector<8x16xf32>
      %74 = tpu.concatenate %55, %73 in 1 : vector<8x16xf32>, vector<8x16xf32> -> vector<8x32xf32>
      %75 = arith.truncf %74 : vector<8x32xf32> to vector<8x32xbf16>
      %cst_37 = arith.constant dense<0.000000e+00> : vector<8x32xf32>
      %76 = tpu.matmul %75, %26, %cst_37 {dimension_numbers = #tpu.dot_dimension_numbers<[1], [0], [0], [1], [0, 0, 1, 1], [], []>} : vector<8x32xbf16>, vector<32x32xbf16>, vector<8x32xf32> -> vector<8x32xf32>
      %77 = vector.broadcast %27 : vector<1x32xf32> to vector<8x32xf32>
      %78 = arith.addf %76, %77 : vector<8x32xf32>
      %79 = arith.addf %23, %78 : vector<8x32xf32>
      %c0_38 = arith.constant 0 : index
      %c0_39 = arith.constant 0 : index
      %80 = vector.load %arg7[%c0_38, %c0_39] : memref<1x32xf32, #tpu.memory_space<vmem>>, vector<1x32xf32>
      %c0_40 = arith.constant 0 : index
      %c0_41 = arith.constant 0 : index
      %81 = vector.load %arg8[%c0_40, %c0_41] : memref<1x32xf32, #tpu.memory_space<vmem>>, vector<1x32xf32>
      %cst_42 = arith.constant dense<0.000000e+00> : vector<8xf32>
      %82 = vector.multi_reduction <add>, %79, %cst_42 [1] : vector<8x32xf32> to vector<8xf32>
      %83 = vector.shape_cast %82 : vector<8xf32> to vector<8x1xf32>
      %cst_43 = arith.constant 3.200000e+01 : f32
      %84 = vector.broadcast %cst_43 : f32 to vector<8x1xf32>
      %85 = arith.divf %83, %84 : vector<8x1xf32>
      %86 = vector.broadcast %85 : vector<8x1xf32> to vector<8x32xf32>
      %87 = arith.subf %79, %86 : vector<8x32xf32>
      %88 = arith.mulf %87, %87 : vector<8x32xf32>
      %cst_44 = arith.constant dense<0.000000e+00> : vector<8xf32>
      %89 = vector.multi_reduction <add>, %88, %cst_44 [1] : vector<8x32xf32> to vector<8xf32>
      %90 = vector.shape_cast %89 : vector<8xf32> to vector<8x1xf32>
      %cst_45 = arith.constant 3.200000e+01 : f32
      %91 = vector.broadcast %cst_45 : f32 to vector<8x1xf32>
      %92 = arith.divf %90, %91 : vector<8x1xf32>
      %cst_46 = arith.constant 9.99999974E-6 : f32
      %93 = vector.broadcast %cst_46 : f32 to vector<8x1xf32>
      %94 = arith.addf %92, %93 : vector<8x1xf32>
      %95 = math.rsqrt %94 : vector<8x1xf32>
      %96 = vector.broadcast %95 : vector<8x1xf32> to vector<8x32xf32>
      %97 = arith.mulf %87, %96 : vector<8x32xf32>
      %98 = vector.broadcast %80 : vector<1x32xf32> to vector<8x32xf32>
      %99 = arith.mulf %97, %98 : vector<8x32xf32>
      %100 = vector.broadcast %81 : vector<1x32xf32> to vector<8x32xf32>
      %101 = arith.addf %99, %100 : vector<8x32xf32>
      %c0_47 = arith.constant 0 : index
      %c0_48 = arith.constant 0 : index
      %102 = vector.load %arg18[%c0_47, %c0_48] : memref<8x32xf32, #tpu.memory_space<vmem>>, vector<8x32xf32>
      tpu.vector_store %arg18[%c0_47, %c0_48], %101 {strides = array<i32>} : memref<8x32xf32, #tpu.memory_space<vmem>>, vector<8x32xf32>,
      %cst_49 = arith.constant 0.000000e+00 : f32
      %103 = vector.broadcast %cst_49 : f32 to vector<8x32xf32>
      %c0_50 = arith.constant 0 : index
      %c0_51 = arith.constant 0 : index
      %104 = vector.load %arg19[%c0_50, %c0_51] : memref<8x32xf32, #tpu.memory_space<vmem>>, vector<8x32xf32>
      tpu.vector_store %arg19[%c0_50, %c0_51], %103 {strides = array<i32>} : memref<8x32xf32, #tpu.memory_space<vmem>>, vector<8x32xf32>,
    } else {
    }
    %c0 = arith.constant 0 : index
    %c0_1 = arith.constant 0 : index
    %3 = vector.load %arg18[%c0, %c0_1] : memref<8x32xf32, #tpu.memory_space<vmem>>, vector<8x32xf32>
    %c0_2 = arith.constant 0 : index
    %c0_3 = arith.constant 0 : index
    %4 = vector.load %arg9[%c0_2, %c0_3] : memref<32x512xbf16, #tpu.memory_space<vmem>>, vector<32x512xbf16>
    %5 = arith.truncf %3 : vector<8x32xf32> to vector<8x32xbf16>
    %cst = arith.constant dense<0.000000e+00> : vector<8x512xf32>
    %6 = tpu.matmul %5, %4, %cst {dimension_numbers = #tpu.dot_dimension_numbers<[1], [0], [0], [1], [0, 0, 1, 1], [], []>} : vector<8x32xbf16>, vector<32x512xbf16>, vector<8x512xf32> -> vector<8x512xf32>
    %c0_4 = arith.constant 0 : index
    %c0_5 = arith.constant 0 : index
    %7 = vector.load %arg10[%c0_4, %c0_5] : memref<1x512xf32, #tpu.memory_space<vmem>>, vector<1x512xf32>
    %8 = vector.broadcast %7 : vector<1x512xf32> to vector<8x512xf32>
    %9 = arith.addf %6, %8 : vector<8x512xf32>
    %cst_6 = arith.constant 0.000000e+00 : f32
    %10 = vector.broadcast %cst_6 : f32 to vector<8x512xf32>
    %11 = arith.maximumf %9, %10 : vector<8x512xf32>
    %c0_7 = arith.constant 0 : index
    %c0_8 = arith.constant 0 : index
    %12 = vector.load %arg19[%c0_7, %c0_8] : memref<8x32xf32, #tpu.memory_space<vmem>>, vector<8x32xf32>
    %c0_9 = arith.constant 0 : index
    %c0_10 = arith.constant 0 : index
    %13 = vector.load %arg11[%c0_9, %c0_10] : memref<512x32xbf16, #tpu.memory_space<vmem>>, vector<512x32xbf16>
    %14 = arith.truncf %11 : vector<8x512xf32> to vector<8x512xbf16>
    %cst_11 = arith.constant dense<0.000000e+00> : vector<8x32xf32>
    %15 = tpu.matmul %14, %13, %cst_11 {dimension_numbers = #tpu.dot_dimension_numbers<[1], [0], [0], [1], [0, 0, 1, 1], [], []>} : vector<8x512xbf16>, vector<512x32xbf16>, vector<8x32xf32> -> vector<8x32xf32>
    %16 = arith.addf %12, %15 : vector<8x32xf32>
    %c0_12 = arith.constant 0 : index
    %c0_13 = arith.constant 0 : index
    %17 = vector.load %arg19[%c0_12, %c0_13] : memref<8x32xf32, #tpu.memory_space<vmem>>, vector<8x32xf32>
    tpu.vector_store %arg19[%c0_12, %c0_13], %16 {strides = array<i32>} : memref<8x32xf32, #tpu.memory_space<vmem>>, vector<8x32xf32>,
    %c3_i32 = arith.constant 3 : i32
    %18 = arith.cmpi eq, %arg1, %c3_i32 : i32
    %19 = arith.extui %18 : i1 to i32
    %c0_i32_14 = arith.constant 0 : i32
    %20 = arith.cmpi ne, %19, %c0_i32_14 : i32
    scf.if %20 {
      %c0_15 = arith.constant 0 : index
      %c0_16 = arith.constant 0 : index
      %21 = vector.load %arg18[%c0_15, %c0_16] : memref<8x32xf32, #tpu.memory_space<vmem>>, vector<8x32xf32>
      %c0_17 = arith.constant 0 : index
      %c0_18 = arith.constant 0 : index
      %22 = vector.load %arg19[%c0_17, %c0_18] : memref<8x32xf32, #tpu.memory_space<vmem>>, vector<8x32xf32>
      %23 = arith.addf %21, %22 : vector<8x32xf32>
      %c0_19 = arith.constant 0 : index
      %c0_20 = arith.constant 0 : index
      %24 = vector.load %arg12[%c0_19, %c0_20] : memref<1x32xf32, #tpu.memory_space<vmem>>, vector<1x32xf32>
      %25 = vector.broadcast %24 : vector<1x32xf32> to vector<8x32xf32>
      %26 = arith.addf %23, %25 : vector<8x32xf32>
      %c0_21 = arith.constant 0 : index
      %c0_22 = arith.constant 0 : index
      %27 = vector.load %arg13[%c0_21, %c0_22] : memref<1x32xf32, #tpu.memory_space<vmem>>, vector<1x32xf32>
      %c0_23 = arith.constant 0 : index
      %c0_24 = arith.constant 0 : index
      %28 = vector.load %arg14[%c0_23, %c0_24] : memref<1x32xf32, #tpu.memory_space<vmem>>, vector<1x32xf32>
      %cst_25 = arith.constant dense<0.000000e+00> : vector<8xf32>
      %29 = vector.multi_reduction <add>, %26, %cst_25 [1] : vector<8x32xf32> to vector<8xf32>
      %30 = vector.shape_cast %29 : vector<8xf32> to vector<8x1xf32>
      %cst_26 = arith.constant 3.200000e+01 : f32
      %31 = vector.broadcast %cst_26 : f32 to vector<8x1xf32>
      %32 = arith.divf %30, %31 : vector<8x1xf32>
      %33 = vector.broadcast %32 : vector<8x1xf32> to vector<8x32xf32>
      %34 = arith.subf %26, %33 : vector<8x32xf32>
      %35 = arith.mulf %34, %34 : vector<8x32xf32>
      %cst_27 = arith.constant dense<0.000000e+00> : vector<8xf32>
      %36 = vector.multi_reduction <add>, %35, %cst_27 [1] : vector<8x32xf32> to vector<8xf32>
      %37 = vector.shape_cast %36 : vector<8xf32> to vector<8x1xf32>
      %cst_28 = arith.constant 3.200000e+01 : f32
      %38 = vector.broadcast %cst_28 : f32 to vector<8x1xf32>
      %39 = arith.divf %37, %38 : vector<8x1xf32>
      %cst_29 = arith.constant 9.99999974E-6 : f32
      %40 = vector.broadcast %cst_29 : f32 to vector<8x1xf32>
      %41 = arith.addf %39, %40 : vector<8x1xf32>
      %42 = math.rsqrt %41 : vector<8x1xf32>
      %43 = vector.broadcast %42 : vector<8x1xf32> to vector<8x32xf32>
      %44 = arith.mulf %34, %43 : vector<8x32xf32>
      %45 = vector.broadcast %27 : vector<1x32xf32> to vector<8x32xf32>
      %46 = arith.mulf %44, %45 : vector<8x32xf32>
      %47 = vector.broadcast %28 : vector<1x32xf32> to vector<8x32xf32>
      %48 = arith.addf %46, %47 : vector<8x32xf32>
      %c0_30 = arith.constant 0 : index
      %c0_31 = arith.constant 0 : index
      %49 = vector.load %arg15[%c0_30, %c0_31] : memref<1x32xf32, #tpu.memory_space<vmem>>, vector<1x32xf32>
      %c0_32 = arith.constant 0 : index
      %c0_33 = arith.constant 0 : index
      %50 = vector.load %arg16[%c0_32, %c0_33] : memref<1x32xf32, #tpu.memory_space<vmem>>, vector<1x32xf32>
      %cst_34 = arith.constant dense<0.000000e+00> : vector<8xf32>
      %51 = vector.multi_reduction <add>, %48, %cst_34 [1] : vector<8x32xf32> to vector<8xf32>
      %52 = vector.shape_cast %51 : vector<8xf32> to vector<8x1xf32>
      %cst_35 = arith.constant 3.200000e+01 : f32
      %53 = vector.broadcast %cst_35 : f32 to vector<8x1xf32>
      %54 = arith.divf %52, %53 : vector<8x1xf32>
      %55 = vector.broadcast %54 : vector<8x1xf32> to vector<8x32xf32>
      %56 = arith.subf %48, %55 : vector<8x32xf32>
      %57 = arith.mulf %56, %56 : vector<8x32xf32>
      %cst_36 = arith.constant dense<0.000000e+00> : vector<8xf32>
      %58 = vector.multi_reduction <add>, %57, %cst_36 [1] : vector<8x32xf32> to vector<8xf32>
      %59 = vector.shape_cast %58 : vector<8xf32> to vector<8x1xf32>
      %cst_37 = arith.constant 3.200000e+01 : f32
      %60 = vector.broadcast %cst_37 : f32 to vector<8x1xf32>
      %61 = arith.divf %59, %60 : vector<8x1xf32>
      %cst_38 = arith.constant 9.99999974E-6 : f32
      %62 = vector.broadcast %cst_38 : f32 to vector<8x1xf32>
      %63 = arith.addf %61, %62 : vector<8x1xf32>
      %64 = math.rsqrt %63 : vector<8x1xf32>
      %65 = vector.broadcast %64 : vector<8x1xf32> to vector<8x32xf32>
      %66 = arith.mulf %56, %65 : vector<8x32xf32>
      %67 = vector.broadcast %49 : vector<1x32xf32> to vector<8x32xf32>
      %68 = arith.mulf %66, %67 : vector<8x32xf32>
      %69 = vector.broadcast %50 : vector<1x32xf32> to vector<8x32xf32>
      %70 = arith.addf %68, %69 : vector<8x32xf32>
      %71 = arith.truncf %70 : vector<8x32xf32> to vector<8x32xbf16>
      %c0_39 = arith.constant 0 : index
      %c0_40 = arith.constant 0 : index
      %c0_41 = arith.constant 0 : index
      %72 = vector.load %arg17[%c0_39, %c0_40, %c0_41] : memref<1x8x32xbf16, #tpu.memory_space<vmem>>, vector<1x8x32xbf16>
      %73 = vector.shape_cast %72 : vector<1x8x32xbf16> to vector<8x32xbf16>
      %74 = vector.shape_cast %71 : vector<8x32xbf16> to vector<1x8x32xbf16>
      tpu.vector_store %arg17[%c0_39, %c0_40, %c0_41], %74 {strides = array<i32>} : memref<1x8x32xbf16, #tpu.memory_space<vmem>>, vector<1x8x32xbf16>,
    } else {
    }
    return
  }
  func.func @transform_0(%arg0: i32, %arg1: i32) -> (i32, i32, i32) {
    %c0_i32 = arith.constant 0 : i32
    %c0_i32_0 = arith.constant 0 : i32
    %c0_i32_1 = arith.constant 0 : i32
    return %arg0, %c0_i32, %c0_i32_0 : i32, i32, i32
  }
  func.func @transform_1(%arg0: i32, %arg1: i32) -> (i32, i32) {
    %c0_i32 = arith.constant 0 : i32
    %c0_i32_0 = arith.constant 0 : i32
    %c0_i32_1 = arith.constant 0 : i32
    return %c0_i32, %c0_i32_0 : i32, i32
  }
  func.func @transform_2(%arg0: i32, %arg1: i32) -> (i32, i32) {
    %c0_i32 = arith.constant 0 : i32
    %c0_i32_0 = arith.constant 0 : i32
    %c0_i32_1 = arith.constant 0 : i32
    return %c0_i32, %c0_i32_0 : i32, i32
  }
  func.func @transform_3(%arg0: i32, %arg1: i32) -> (i32, i32) {
    %c0_i32 = arith.constant 0 : i32
    %c0_i32_0 = arith.constant 0 : i32
    %c0_i32_1 = arith.constant 0 : i32
    return %c0_i32, %c0_i32_0 : i32, i32
  }
  func.func @transform_4(%arg0: i32, %arg1: i32) -> (i32, i32) {
    %c0_i32 = arith.constant 0 : i32
    %c0_i32_0 = arith.constant 0 : i32
    %c0_i32_1 = arith.constant 0 : i32
    return %c0_i32, %c0_i32_0 : i32, i32
  }
  func.func @transform_5(%arg0: i32, %arg1: i32) -> (i32, i32) {
    %c0_i32 = arith.constant 0 : i32
    %c0_i32_0 = arith.constant 0 : i32
    %c0_i32_1 = arith.constant 0 : i32
    return %c0_i32, %c0_i32_0 : i32, i32
  }
  func.func @transform_6(%arg0: i32, %arg1: i32) -> (i32, i32) {
    %c0_i32 = arith.constant 0 : i32
    %c0_i32_0 = arith.constant 0 : i32
    %c0_i32_1 = arith.constant 0 : i32
    return %c0_i32, %c0_i32_0 : i32, i32
  }
  func.func @transform_7(%arg0: i32, %arg1: i32) -> (i32, i32) {
    %c0_i32 = arith.constant 0 : i32
    %c0_i32_0 = arith.constant 0 : i32
    return %c0_i32, %arg1 : i32, i32
  }
  func.func @transform_8(%arg0: i32, %arg1: i32) -> (i32, i32) {
    %c0_i32 = arith.constant 0 : i32
    %c0_i32_0 = arith.constant 0 : i32
    return %c0_i32, %arg1 : i32, i32
  }
  func.func @transform_9(%arg0: i32, %arg1: i32) -> (i32, i32) {
    %c0_i32 = arith.constant 0 : i32
    %c0_i32_0 = arith.constant 0 : i32
    return %arg1, %c0_i32 : i32, i32
  }
  func.func @transform_10(%arg0: i32, %arg1: i32) -> (i32, i32) {
    %c0_i32 = arith.constant 0 : i32
    %c0_i32_0 = arith.constant 0 : i32
    %c0_i32_1 = arith.constant 0 : i32
    return %c0_i32, %c0_i32_0 : i32, i32
  }
  func.func @transform_11(%arg0: i32, %arg1: i32) -> (i32, i32) {
    %c0_i32 = arith.constant 0 : i32
    %c0_i32_0 = arith.constant 0 : i32
    %c0_i32_1 = arith.constant 0 : i32
    return %c0_i32, %c0_i32_0 : i32, i32
  }
  func.func @transform_12(%arg0: i32, %arg1: i32) -> (i32, i32) {
    %c0_i32 = arith.constant 0 : i32
    %c0_i32_0 = arith.constant 0 : i32
    %c0_i32_1 = arith.constant 0 : i32
    return %c0_i32, %c0_i32_0 : i32, i32
  }
  func.func @transform_13(%arg0: i32, %arg1: i32) -> (i32, i32) {
    %c0_i32 = arith.constant 0 : i32
    %c0_i32_0 = arith.constant 0 : i32
    %c0_i32_1 = arith.constant 0 : i32
    return %c0_i32, %c0_i32_0 : i32, i32
  }
  func.func @transform_14(%arg0: i32, %arg1: i32) -> (i32, i32) {
    %c0_i32 = arith.constant 0 : i32
    %c0_i32_0 = arith.constant 0 : i32
    %c0_i32_1 = arith.constant 0 : i32
    return %c0_i32, %c0_i32_0 : i32, i32
  }
  func.func @transform_15(%arg0: i32, %arg1: i32) -> (i32, i32, i32) {
    %c0_i32 = arith.constant 0 : i32
    %c0_i32_0 = arith.constant 0 : i32
    %c0_i32_1 = arith.constant 0 : i32
    return %arg0, %c0_i32, %c0_i32_0 : i32, i32, i32
  }
}

module attributes {stable_mosaic.version = 11 : i64} {
  func.func @_decoder_layer_kernel(%arg0: i32, %arg1: i32, %arg2: memref<1x8x32xbf16, #tpu.memory_space<vmem>>, %arg3: memref<1x8x32xbf16, #tpu.memory_space<vmem>>, %arg4: memref<32x96xbf16, #tpu.memory_space<vmem>>, %arg5: memref<1x96xf32, #tpu.memory_space<vmem>>, %arg6: memref<32x32xbf16, #tpu.memory_space<vmem>>, %arg7: memref<1x32xf32, #tpu.memory_space<vmem>>, %arg8: memref<1x32xf32, #tpu.memory_space<vmem>>, %arg9: memref<1x32xf32, #tpu.memory_space<vmem>>, %arg10: memref<32x96xbf16, #tpu.memory_space<vmem>>, %arg11: memref<1x96xf32, #tpu.memory_space<vmem>>, %arg12: memref<32x32xbf16, #tpu.memory_space<vmem>>, %arg13: memref<1x32xf32, #tpu.memory_space<vmem>>, %arg14: memref<1x32xf32, #tpu.memory_space<vmem>>, %arg15: memref<1x32xf32, #tpu.memory_space<vmem>>, %arg16: memref<32x512xbf16, #tpu.memory_space<vmem>>, %arg17: memref<1x512xf32, #tpu.memory_space<vmem>>, %arg18: memref<512x32xbf16, #tpu.memory_space<vmem>>, %arg19: memref<1x32xf32, #tpu.memory_space<vmem>>, %arg20: memref<1x32xf32, #tpu.memory_space<vmem>>, %arg21: memref<1x32xf32, #tpu.memory_space<vmem>>, %arg22: memref<1x8x32xbf16, #tpu.memory_space<vmem>>, %arg23: memref<8x32xf32, #tpu.memory_space<vmem>>, %arg24: memref<8x32xf32, #tpu.memory_space<vmem>>) attributes {dimension_semantics = [#tpu.dimension_semantics<parallel>, #tpu.dimension_semantics<arbitrary>], iteration_bounds = array<i64: 2, 4>, scalar_prefetch = 0 : i64, scratch_operands = 2 : i64, tpu.core_type = #tpu.core_type<tc>, window_params = [{transform_indices = @transform_0, window_bounds = array<i64: 1, 8, 32>}, {transform_indices = @transform_1, window_bounds = array<i64: 1, 8, 32>}, {pipeline_mode = #tpu.pipeline_mode<synchronous>, transform_indices = @transform_2, window_bounds = array<i64: 32, 96>}, {pipeline_mode = #tpu.pipeline_mode<synchronous>, transform_indices = @transform_3, window_bounds = array<i64: 1, 96>}, {pipeline_mode = #tpu.pipeline_mode<synchronous>, transform_indices = @transform_4, window_bounds = array<i64: 32, 32>}, {pipeline_mode = #tpu.pipeline_mode<synchronous>, transform_indices = @transform_5, window_bounds = array<i64: 1, 32>}, {pipeline_mode = #tpu.pipeline_mode<synchronous>, transform_indices = @transform_6, window_bounds = array<i64: 1, 32>}, {pipeline_mode = #tpu.pipeline_mode<synchronous>, transform_indices = @transform_7, window_bounds = array<i64: 1, 32>}, {pipeline_mode = #tpu.pipeline_mode<synchronous>, transform_indices = @transform_8, window_bounds = array<i64: 32, 96>}, {pipeline_mode = #tpu.pipeline_mode<synchronous>, transform_indices = @transform_9, window_bounds = array<i64: 1, 96>}, {pipeline_mode = #tpu.pipeline_mode<synchronous>, transform_indices = @transform_10, window_bounds = array<i64: 32, 32>}, {pipeline_mode = #tpu.pipeline_mode<synchronous>, transform_indices = @transform_11, window_bounds = array<i64: 1, 32>}, {pipeline_mode = #tpu.pipeline_mode<synchronous>, transform_indices = @transform_12, window_bounds = array<i64: 1, 32>}, {pipeline_mode = #tpu.pipeline_mode<synchronous>, transform_indices = @transform_13, window_bounds = array<i64: 1, 32>}, {transform_indices = @transform_14, window_bounds = array<i64: 32, 512>}, {transform_indices = @transform_15, window_bounds = array<i64: 1, 512>}, {transform_indices = @transform_16, window_bounds = array<i64: 512, 32>}, {pipeline_mode = #tpu.pipeline_mode<synchronous>, transform_indices = @transform_17, window_bounds = array<i64: 1, 32>}, {pipeline_mode = #tpu.pipeline_mode<synchronous>, transform_indices = @transform_18, window_bounds = array<i64: 1, 32>}, {pipeline_mode = #tpu.pipeline_mode<synchronous>, transform_indices = @transform_19, window_bounds = array<i64: 1, 32>}, {transform_indices = @transform_20, window_bounds = array<i64: 1, 8, 32>}]} {
    %c0_i32 = arith.constant 0 : i32
    %0 = arith.cmpi eq, %arg1, %c0_i32 : i32
    %1 = arith.extui %0 : i1 to i32
    %c0_i32_0 = arith.constant 0 : i32
    %2 = arith.cmpi ne, %1, %c0_i32_0 : i32
    scf.if %2 {
      %c0_15 = arith.constant 0 : index
      %c0_16 = arith.constant 0 : index
      %c0_17 = arith.constant 0 : index
      %21 = vector.load %arg2[%c0_15, %c0_16, %c0_17] : memref<1x8x32xbf16, #tpu.memory_space<vmem>>, vector<1x8x32xbf16>
      %22 = vector.shape_cast %21 : vector<1x8x32xbf16> to vector<8x32xbf16>
      %23 = arith.extf %22 : vector<8x32xbf16> to vector<8x32xf32>
      %c0_18 = arith.constant 0 : index
      %c0_19 = arith.constant 0 : index
      %c0_20 = arith.constant 0 : index
      %24 = vector.load %arg3[%c0_18, %c0_19, %c0_20] : memref<1x8x32xbf16, #tpu.memory_space<vmem>>, vector<1x8x32xbf16>
      %25 = vector.shape_cast %24 : vector<1x8x32xbf16> to vector<8x32xbf16>
      %c0_21 = arith.constant 0 : index
      %c0_22 = arith.constant 0 : index
      %26 = vector.load %arg4[%c0_21, %c0_22] : memref<32x96xbf16, #tpu.memory_space<vmem>>, vector<32x96xbf16>
      %c0_23 = arith.constant 0 : index
      %c0_24 = arith.constant 0 : index
      %27 = vector.load %arg5[%c0_23, %c0_24] : memref<1x96xf32, #tpu.memory_space<vmem>>, vector<1x96xf32>
      %c0_25 = arith.constant 0 : index
      %c0_26 = arith.constant 0 : index
      %28 = vector.load %arg6[%c0_25, %c0_26] : memref<32x32xbf16, #tpu.memory_space<vmem>>, vector<32x32xbf16>
      %c0_27 = arith.constant 0 : index
      %c0_28 = arith.constant 0 : index
      %29 = vector.load %arg7[%c0_27, %c0_28] : memref<1x32xf32, #tpu.memory_space<vmem>>, vector<1x32xf32>
      %30 = arith.truncf %23 : vector<8x32xf32> to vector<8x32xbf16>
      %cst_29 = arith.constant dense<0.000000e+00> : vector<8x96xf32>
      %31 = tpu.matmul %30, %26, %cst_29 {dimension_numbers = #tpu.dot_dimension_numbers<[1], [0], [0], [1], [0, 0, 1, 1], [], []>} : vector<8x32xbf16>, vector<32x96xbf16>, vector<8x96xf32> -> vector<8x96xf32>
      %32 = vector.broadcast %27 : vector<1x96xf32> to vector<8x96xf32>
      %33 = arith.addf %31, %32 : vector<8x96xf32>
      %34 = vector.extract_strided_slice %33 {offsets = [0, 0], sizes = [8, 32], strides = [1, 1]} : vector<8x96xf32> to vector<8x32xf32>
      %35 = vector.extract_strided_slice %33 {offsets = [0, 32], sizes = [8, 32], strides = [1, 1]} : vector<8x96xf32> to vector<8x32xf32>
      %36 = vector.extract_strided_slice %33 {offsets = [0, 64], sizes = [8, 32], strides = [1, 1]} : vector<8x96xf32> to vector<8x32xf32>
      %37 = arith.truncf %34 : vector<8x32xf32> to vector<8x32xbf16>
      %38 = arith.truncf %35 : vector<8x32xf32> to vector<8x32xbf16>
      %39 = arith.truncf %36 : vector<8x32xf32> to vector<8x32xbf16>
      %40 = vector.extract_strided_slice %37 {offsets = [0, 0], sizes = [8, 16], strides = [1, 1]} : vector<8x32xbf16> to vector<8x16xbf16>
      %41 = vector.extract_strided_slice %38 {offsets = [0, 0], sizes = [8, 16], strides = [1, 1]} : vector<8x32xbf16> to vector<8x16xbf16>
      %42 = vector.extract_strided_slice %39 {offsets = [0, 0], sizes = [8, 16], strides = [1, 1]} : vector<8x32xbf16> to vector<8x16xbf16>
      %cst_30 = arith.constant dense<0.000000e+00> : vector<8x8xf32>
      %43 = tpu.matmul %40, %41, %cst_30 {dimension_numbers = #tpu.dot_dimension_numbers<[1], [1], [0], [0], [0, 0, 1, 0], [], []>} : vector<8x16xbf16>, vector<8x16xbf16>, vector<8x8xf32> -> vector<8x8xf32>
      %cst_31 = arith.constant 2.500000e-01 : f32
      %44 = vector.broadcast %cst_31 : f32 to vector<8x8xf32>
      %45 = arith.mulf %43, %44 : vector<8x8xf32>
      %cst_32 = arith.constant dense<0xFF800000> : vector<8xf32>
      %46 = vector.multi_reduction <maximumf>, %45, %cst_32 [1] : vector<8x8xf32> to vector<8xf32>
      %47 = vector.shape_cast %46 : vector<8xf32> to vector<8x1xf32>
      %48 = vector.broadcast %47 : vector<8x1xf32> to vector<8x8xf32>
      %49 = arith.subf %45, %48 : vector<8x8xf32>
      %50 = math.exp %49 : vector<8x8xf32>
      %cst_33 = arith.constant dense<0.000000e+00> : vector<8xf32>
      %51 = vector.multi_reduction <add>, %50, %cst_33 [1] : vector<8x8xf32> to vector<8xf32>
      %52 = vector.shape_cast %51 : vector<8xf32> to vector<8x1xf32>
      %53 = tpu.reciprocal %52 {approx = true} : vector<8x1xf32> -> vector<8x1xf32>
      %54 = vector.broadcast %53 : vector<8x1xf32> to vector<8x8xf32>
      %55 = arith.mulf %50, %54 : vector<8x8xf32>
      %56 = arith.truncf %55 : vector<8x8xf32> to vector<8x8xbf16>
      %cst_34 = arith.constant dense<0.000000e+00> : vector<8x16xf32>
      %57 = tpu.matmul %56, %42, %cst_34 {dimension_numbers = #tpu.dot_dimension_numbers<[1], [0], [0], [1], [0, 0, 1, 1], [], []>} : vector<8x8xbf16>, vector<8x16xbf16>, vector<8x16xf32> -> vector<8x16xf32>
      %58 = vector.extract_strided_slice %37 {offsets = [0, 16], sizes = [8, 16], strides = [1, 1]} : vector<8x32xbf16> to vector<8x16xbf16>
      %59 = vector.extract_strided_slice %38 {offsets = [0, 16], sizes = [8, 16], strides = [1, 1]} : vector<8x32xbf16> to vector<8x16xbf16>
      %60 = vector.extract_strided_slice %39 {offsets = [0, 16], sizes = [8, 16], strides = [1, 1]} : vector<8x32xbf16> to vector<8x16xbf16>
      %cst_35 = arith.constant dense<0.000000e+00> : vector<8x8xf32>
      %61 = tpu.matmul %58, %59, %cst_35 {dimension_numbers = #tpu.dot_dimension_numbers<[1], [1], [0], [0], [0, 0, 1, 0], [], []>} : vector<8x16xbf16>, vector<8x16xbf16>, vector<8x8xf32> -> vector<8x8xf32>
      %cst_36 = arith.constant 2.500000e-01 : f32
      %62 = vector.broadcast %cst_36 : f32 to vector<8x8xf32>
      %63 = arith.mulf %61, %62 : vector<8x8xf32>
      %cst_37 = arith.constant dense<0xFF800000> : vector<8xf32>
      %64 = vector.multi_reduction <maximumf>, %63, %cst_37 [1] : vector<8x8xf32> to vector<8xf32>
      %65 = vector.shape_cast %64 : vector<8xf32> to vector<8x1xf32>
      %66 = vector.broadcast %65 : vector<8x1xf32> to vector<8x8xf32>
      %67 = arith.subf %63, %66 : vector<8x8xf32>
      %68 = math.exp %67 : vector<8x8xf32>
      %cst_38 = arith.constant dense<0.000000e+00> : vector<8xf32>
      %69 = vector.multi_reduction <add>, %68, %cst_38 [1] : vector<8x8xf32> to vector<8xf32>
      %70 = vector.shape_cast %69 : vector<8xf32> to vector<8x1xf32>
      %71 = tpu.reciprocal %70 {approx = true} : vector<8x1xf32> -> vector<8x1xf32>
      %72 = vector.broadcast %71 : vector<8x1xf32> to vector<8x8xf32>
      %73 = arith.mulf %68, %72 : vector<8x8xf32>
      %74 = arith.truncf %73 : vector<8x8xf32> to vector<8x8xbf16>
      %cst_39 = arith.constant dense<0.000000e+00> : vector<8x16xf32>
      %75 = tpu.matmul %74, %60, %cst_39 {dimension_numbers = #tpu.dot_dimension_numbers<[1], [0], [0], [1], [0, 0, 1, 1], [], []>} : vector<8x8xbf16>, vector<8x16xbf16>, vector<8x16xf32> -> vector<8x16xf32>
      %76 = tpu.concatenate %57, %75 in 1 : vector<8x16xf32>, vector<8x16xf32> -> vector<8x32xf32>
      %77 = arith.truncf %76 : vector<8x32xf32> to vector<8x32xbf16>
      %cst_40 = arith.constant dense<0.000000e+00> : vector<8x32xf32>
      %78 = tpu.matmul %77, %28, %cst_40 {dimension_numbers = #tpu.dot_dimension_numbers<[1], [0], [0], [1], [0, 0, 1, 1], [], []>} : vector<8x32xbf16>, vector<32x32xbf16>, vector<8x32xf32> -> vector<8x32xf32>
      %79 = vector.broadcast %29 : vector<1x32xf32> to vector<8x32xf32>
      %80 = arith.addf %78, %79 : vector<8x32xf32>
      %81 = arith.addf %23, %80 : vector<8x32xf32>
      %c0_41 = arith.constant 0 : index
      %c0_42 = arith.constant 0 : index
      %82 = vector.load %arg8[%c0_41, %c0_42] : memref<1x32xf32, #tpu.memory_space<vmem>>, vector<1x32xf32>
      %c0_43 = arith.constant 0 : index
      %c0_44 = arith.constant 0 : index
      %83 = vector.load %arg9[%c0_43, %c0_44] : memref<1x32xf32, #tpu.memory_space<vmem>>, vector<1x32xf32>
      %cst_45 = arith.constant dense<0.000000e+00> : vector<8xf32>
      %84 = vector.multi_reduction <add>, %81, %cst_45 [1] : vector<8x32xf32> to vector<8xf32>
      %85 = vector.shape_cast %84 : vector<8xf32> to vector<8x1xf32>
      %cst_46 = arith.constant 3.200000e+01 : f32
      %86 = vector.broadcast %cst_46 : f32 to vector<8x1xf32>
      %87 = arith.divf %85, %86 : vector<8x1xf32>
      %88 = vector.broadcast %87 : vector<8x1xf32> to vector<8x32xf32>
      %89 = arith.subf %81, %88 : vector<8x32xf32>
      %90 = arith.mulf %89, %89 : vector<8x32xf32>
      %cst_47 = arith.constant dense<0.000000e+00> : vector<8xf32>
      %91 = vector.multi_reduction <add>, %90, %cst_47 [1] : vector<8x32xf32> to vector<8xf32>
      %92 = vector.shape_cast %91 : vector<8xf32> to vector<8x1xf32>
      %cst_48 = arith.constant 3.200000e+01 : f32
      %93 = vector.broadcast %cst_48 : f32 to vector<8x1xf32>
      %94 = arith.divf %92, %93 : vector<8x1xf32>
      %cst_49 = arith.constant 9.99999974E-6 : f32
      %95 = vector.broadcast %cst_49 : f32 to vector<8x1xf32>
      %96 = arith.addf %94, %95 : vector<8x1xf32>
      %97 = math.rsqrt %96 : vector<8x1xf32>
      %98 = vector.broadcast %97 : vector<8x1xf32> to vector<8x32xf32>
      %99 = arith.mulf %89, %98 : vector<8x32xf32>
      %100 = vector.broadcast %82 : vector<1x32xf32> to vector<8x32xf32>
      %101 = arith.mulf %99, %100 : vector<8x32xf32>
      %102 = vector.broadcast %83 : vector<1x32xf32> to vector<8x32xf32>
      %103 = arith.addf %101, %102 : vector<8x32xf32>
      %c0_50 = arith.constant 0 : index
      %c0_51 = arith.constant 0 : index
      %104 = vector.load %arg10[%c0_50, %c0_51] : memref<32x96xbf16, #tpu.memory_space<vmem>>, vector<32x96xbf16>
      %c0_52 = arith.constant 0 : index
      %c0_53 = arith.constant 0 : index
      %105 = vector.load %arg11[%c0_52, %c0_53] : memref<1x96xf32, #tpu.memory_space<vmem>>, vector<1x96xf32>
      %c0_54 = arith.constant 0 : index
      %c0_55 = arith.constant 0 : index
      %106 = vector.load %arg12[%c0_54, %c0_55] : memref<32x32xbf16, #tpu.memory_space<vmem>>, vector<32x32xbf16>
      %c0_56 = arith.constant 0 : index
      %c0_57 = arith.constant 0 : index
      %107 = vector.load %arg13[%c0_56, %c0_57] : memref<1x32xf32, #tpu.memory_space<vmem>>, vector<1x32xf32>
      %108 = vector.extract_strided_slice %104 {offsets = [0, 0], sizes = [32, 32], strides = [1, 1]} : vector<32x96xbf16> to vector<32x32xbf16>
      %109 = arith.truncf %103 : vector<8x32xf32> to vector<8x32xbf16>
      %cst_58 = arith.constant dense<0.000000e+00> : vector<8x32xf32>
      %110 = tpu.matmul %109, %108, %cst_58 {dimension_numbers = #tpu.dot_dimension_numbers<[1], [0], [0], [1], [0, 0, 1, 1], [], []>} : vector<8x32xbf16>, vector<32x32xbf16>, vector<8x32xf32> -> vector<8x32xf32>
      %111 = vector.extract_strided_slice %105 {offsets = [0, 0], sizes = [1, 32], strides = [1, 1]} : vector<1x96xf32> to vector<1x32xf32>
      %112 = vector.broadcast %111 : vector<1x32xf32> to vector<8x32xf32>
      %113 = arith.addf %110, %112 : vector<8x32xf32>
      %114 = vector.extract_strided_slice %104 {offsets = [0, 32], sizes = [32, 64], strides = [1, 1]} : vector<32x96xbf16> to vector<32x64xbf16>
      %cst_59 = arith.constant dense<0.000000e+00> : vector<8x64xf32>
      %115 = tpu.matmul %25, %114, %cst_59 {dimension_numbers = #tpu.dot_dimension_numbers<[1], [0], [0], [1], [0, 0, 1, 1], [], []>} : vector<8x32xbf16>, vector<32x64xbf16>, vector<8x64xf32> -> vector<8x64xf32>
      %116 = vector.extract_strided_slice %105 {offsets = [0, 32], sizes = [1, 64], strides = [1, 1]} : vector<1x96xf32> to vector<1x64xf32>
      %117 = vector.broadcast %116 : vector<1x64xf32> to vector<8x64xf32>
      %118 = arith.addf %115, %117 : vector<8x64xf32>
      %119 = vector.extract_strided_slice %118 {offsets = [0, 0], sizes = [8, 32], strides = [1, 1]} : vector<8x64xf32> to vector<8x32xf32>
      %120 = vector.extract_strided_slice %118 {offsets = [0, 32], sizes = [8, 32], strides = [1, 1]} : vector<8x64xf32> to vector<8x32xf32>
      %121 = arith.truncf %113 : vector<8x32xf32> to vector<8x32xbf16>
      %122 = arith.truncf %119 : vector<8x32xf32> to vector<8x32xbf16>
      %123 = arith.truncf %120 : vector<8x32xf32> to vector<8x32xbf16>
      %124 = vector.extract_strided_slice %121 {offsets = [0, 0], sizes = [8, 16], strides = [1, 1]} : vector<8x32xbf16> to vector<8x16xbf16>
      %125 = vector.extract_strided_slice %122 {offsets = [0, 0], sizes = [8, 16], strides = [1, 1]} : vector<8x32xbf16> to vector<8x16xbf16>
      %126 = vector.extract_strided_slice %123 {offsets = [0, 0], sizes = [8, 16], strides = [1, 1]} : vector<8x32xbf16> to vector<8x16xbf16>
      %cst_60 = arith.constant dense<0.000000e+00> : vector<8x8xf32>
      %127 = tpu.matmul %124, %125, %cst_60 {dimension_numbers = #tpu.dot_dimension_numbers<[1], [1], [0], [0], [0, 0, 1, 0], [], []>} : vector<8x16xbf16>, vector<8x16xbf16>, vector<8x8xf32> -> vector<8x8xf32>
      %cst_61 = arith.constant 2.500000e-01 : f32
      %128 = vector.broadcast %cst_61 : f32 to vector<8x8xf32>
      %129 = arith.mulf %127, %128 : vector<8x8xf32>
      %cst_62 = arith.constant dense<0xFF800000> : vector<8xf32>
      %130 = vector.multi_reduction <maximumf>, %129, %cst_62 [1] : vector<8x8xf32> to vector<8xf32>
      %131 = vector.shape_cast %130 : vector<8xf32> to vector<8x1xf32>
      %132 = vector.broadcast %131 : vector<8x1xf32> to vector<8x8xf32>
      %133 = arith.subf %129, %132 : vector<8x8xf32>
      %134 = math.exp %133 : vector<8x8xf32>
      %cst_63 = arith.constant dense<0.000000e+00> : vector<8xf32>
      %135 = vector.multi_reduction <add>, %134, %cst_63 [1] : vector<8x8xf32> to vector<8xf32>
      %136 = vector.shape_cast %135 : vector<8xf32> to vector<8x1xf32>
      %137 = tpu.reciprocal %136 {approx = true} : vector<8x1xf32> -> vector<8x1xf32>
      %138 = vector.broadcast %137 : vector<8x1xf32> to vector<8x8xf32>
      %139 = arith.mulf %134, %138 : vector<8x8xf32>
      %140 = arith.truncf %139 : vector<8x8xf32> to vector<8x8xbf16>
      %cst_64 = arith.constant dense<0.000000e+00> : vector<8x16xf32>
      %141 = tpu.matmul %140, %126, %cst_64 {dimension_numbers = #tpu.dot_dimension_numbers<[1], [0], [0], [1], [0, 0, 1, 1], [], []>} : vector<8x8xbf16>, vector<8x16xbf16>, vector<8x16xf32> -> vector<8x16xf32>
      %142 = vector.extract_strided_slice %121 {offsets = [0, 16], sizes = [8, 16], strides = [1, 1]} : vector<8x32xbf16> to vector<8x16xbf16>
      %143 = vector.extract_strided_slice %122 {offsets = [0, 16], sizes = [8, 16], strides = [1, 1]} : vector<8x32xbf16> to vector<8x16xbf16>
      %144 = vector.extract_strided_slice %123 {offsets = [0, 16], sizes = [8, 16], strides = [1, 1]} : vector<8x32xbf16> to vector<8x16xbf16>
      %cst_65 = arith.constant dense<0.000000e+00> : vector<8x8xf32>
      %145 = tpu.matmul %142, %143, %cst_65 {dimension_numbers = #tpu.dot_dimension_numbers<[1], [1], [0], [0], [0, 0, 1, 0], [], []>} : vector<8x16xbf16>, vector<8x16xbf16>, vector<8x8xf32> -> vector<8x8xf32>
      %cst_66 = arith.constant 2.500000e-01 : f32
      %146 = vector.broadcast %cst_66 : f32 to vector<8x8xf32>
      %147 = arith.mulf %145, %146 : vector<8x8xf32>
      %cst_67 = arith.constant dense<0xFF800000> : vector<8xf32>
      %148 = vector.multi_reduction <maximumf>, %147, %cst_67 [1] : vector<8x8xf32> to vector<8xf32>
      %149 = vector.shape_cast %148 : vector<8xf32> to vector<8x1xf32>
      %150 = vector.broadcast %149 : vector<8x1xf32> to vector<8x8xf32>
      %151 = arith.subf %147, %150 : vector<8x8xf32>
      %152 = math.exp %151 : vector<8x8xf32>
      %cst_68 = arith.constant dense<0.000000e+00> : vector<8xf32>
      %153 = vector.multi_reduction <add>, %152, %cst_68 [1] : vector<8x8xf32> to vector<8xf32>
      %154 = vector.shape_cast %153 : vector<8xf32> to vector<8x1xf32>
      %155 = tpu.reciprocal %154 {approx = true} : vector<8x1xf32> -> vector<8x1xf32>
      %156 = vector.broadcast %155 : vector<8x1xf32> to vector<8x8xf32>
      %157 = arith.mulf %152, %156 : vector<8x8xf32>
      %158 = arith.truncf %157 : vector<8x8xf32> to vector<8x8xbf16>
      %cst_69 = arith.constant dense<0.000000e+00> : vector<8x16xf32>
      %159 = tpu.matmul %158, %144, %cst_69 {dimension_numbers = #tpu.dot_dimension_numbers<[1], [0], [0], [1], [0, 0, 1, 1], [], []>} : vector<8x8xbf16>, vector<8x16xbf16>, vector<8x16xf32> -> vector<8x16xf32>
      %160 = tpu.concatenate %141, %159 in 1 : vector<8x16xf32>, vector<8x16xf32> -> vector<8x32xf32>
      %161 = arith.truncf %160 : vector<8x32xf32> to vector<8x32xbf16>
      %cst_70 = arith.constant dense<0.000000e+00> : vector<8x32xf32>
      %162 = tpu.matmul %161, %106, %cst_70 {dimension_numbers = #tpu.dot_dimension_numbers<[1], [0], [0], [1], [0, 0, 1, 1], [], []>} : vector<8x32xbf16>, vector<32x32xbf16>, vector<8x32xf32> -> vector<8x32xf32>
      %163 = vector.broadcast %107 : vector<1x32xf32> to vector<8x32xf32>
      %164 = arith.addf %162, %163 : vector<8x32xf32>
      %165 = arith.addf %103, %164 : vector<8x32xf32>
      %c0_71 = arith.constant 0 : index
      %c0_72 = arith.constant 0 : index
      %166 = vector.load %arg14[%c0_71, %c0_72] : memref<1x32xf32, #tpu.memory_space<vmem>>, vector<1x32xf32>
      %c0_73 = arith.constant 0 : index
      %c0_74 = arith.constant 0 : index
      %167 = vector.load %arg15[%c0_73, %c0_74] : memref<1x32xf32, #tpu.memory_space<vmem>>, vector<1x32xf32>
      %cst_75 = arith.constant dense<0.000000e+00> : vector<8xf32>
      %168 = vector.multi_reduction <add>, %165, %cst_75 [1] : vector<8x32xf32> to vector<8xf32>
      %169 = vector.shape_cast %168 : vector<8xf32> to vector<8x1xf32>
      %cst_76 = arith.constant 3.200000e+01 : f32
      %170 = vector.broadcast %cst_76 : f32 to vector<8x1xf32>
      %171 = arith.divf %169, %170 : vector<8x1xf32>
      %172 = vector.broadcast %171 : vector<8x1xf32> to vector<8x32xf32>
      %173 = arith.subf %165, %172 : vector<8x32xf32>
      %174 = arith.mulf %173, %173 : vector<8x32xf32>
      %cst_77 = arith.constant dense<0.000000e+00> : vector<8xf32>
      %175 = vector.multi_reduction <add>, %174, %cst_77 [1] : vector<8x32xf32> to vector<8xf32>
      %176 = vector.shape_cast %175 : vector<8xf32> to vector<8x1xf32>
      %cst_78 = arith.constant 3.200000e+01 : f32
      %177 = vector.broadcast %cst_78 : f32 to vector<8x1xf32>
      %178 = arith.divf %176, %177 : vector<8x1xf32>
      %cst_79 = arith.constant 9.99999974E-6 : f32
      %179 = vector.broadcast %cst_79 : f32 to vector<8x1xf32>
      %180 = arith.addf %178, %179 : vector<8x1xf32>
      %181 = math.rsqrt %180 : vector<8x1xf32>
      %182 = vector.broadcast %181 : vector<8x1xf32> to vector<8x32xf32>
      %183 = arith.mulf %173, %182 : vector<8x32xf32>
      %184 = vector.broadcast %166 : vector<1x32xf32> to vector<8x32xf32>
      %185 = arith.mulf %183, %184 : vector<8x32xf32>
      %186 = vector.broadcast %167 : vector<1x32xf32> to vector<8x32xf32>
      %187 = arith.addf %185, %186 : vector<8x32xf32>
      %c0_80 = arith.constant 0 : index
      %c0_81 = arith.constant 0 : index
      %188 = vector.load %arg23[%c0_80, %c0_81] : memref<8x32xf32, #tpu.memory_space<vmem>>, vector<8x32xf32>
      tpu.vector_store %arg23[%c0_80, %c0_81], %187 {strides = array<i32>} : memref<8x32xf32, #tpu.memory_space<vmem>>, vector<8x32xf32>,
      %cst_82 = arith.constant 0.000000e+00 : f32
      %189 = vector.broadcast %cst_82 : f32 to vector<8x32xf32>
      %c0_83 = arith.constant 0 : index
      %c0_84 = arith.constant 0 : index
      %190 = vector.load %arg24[%c0_83, %c0_84] : memref<8x32xf32, #tpu.memory_space<vmem>>, vector<8x32xf32>
      tpu.vector_store %arg24[%c0_83, %c0_84], %189 {strides = array<i32>} : memref<8x32xf32, #tpu.memory_space<vmem>>, vector<8x32xf32>,
    } else {
    }
    %c0 = arith.constant 0 : index
    %c0_1 = arith.constant 0 : index
    %3 = vector.load %arg23[%c0, %c0_1] : memref<8x32xf32, #tpu.memory_space<vmem>>, vector<8x32xf32>
    %c0_2 = arith.constant 0 : index
    %c0_3 = arith.constant 0 : index
    %4 = vector.load %arg16[%c0_2, %c0_3] : memref<32x512xbf16, #tpu.memory_space<vmem>>, vector<32x512xbf16>
    %5 = arith.truncf %3 : vector<8x32xf32> to vector<8x32xbf16>
    %cst = arith.constant dense<0.000000e+00> : vector<8x512xf32>
    %6 = tpu.matmul %5, %4, %cst {dimension_numbers = #tpu.dot_dimension_numbers<[1], [0], [0], [1], [0, 0, 1, 1], [], []>} : vector<8x32xbf16>, vector<32x512xbf16>, vector<8x512xf32> -> vector<8x512xf32>
    %c0_4 = arith.constant 0 : index
    %c0_5 = arith.constant 0 : index
    %7 = vector.load %arg17[%c0_4, %c0_5] : memref<1x512xf32, #tpu.memory_space<vmem>>, vector<1x512xf32>
    %8 = vector.broadcast %7 : vector<1x512xf32> to vector<8x512xf32>
    %9 = arith.addf %6, %8 : vector<8x512xf32>
    %cst_6 = arith.constant 0.000000e+00 : f32
    %10 = vector.broadcast %cst_6 : f32 to vector<8x512xf32>
    %11 = arith.maximumf %9, %10 : vector<8x512xf32>
    %c0_7 = arith.constant 0 : index
    %c0_8 = arith.constant 0 : index
    %12 = vector.load %arg24[%c0_7, %c0_8] : memref<8x32xf32, #tpu.memory_space<vmem>>, vector<8x32xf32>
    %c0_9 = arith.constant 0 : index
    %c0_10 = arith.constant 0 : index
    %13 = vector.load %arg18[%c0_9, %c0_10] : memref<512x32xbf16, #tpu.memory_space<vmem>>, vector<512x32xbf16>
    %14 = arith.truncf %11 : vector<8x512xf32> to vector<8x512xbf16>
    %cst_11 = arith.constant dense<0.000000e+00> : vector<8x32xf32>
    %15 = tpu.matmul %14, %13, %cst_11 {dimension_numbers = #tpu.dot_dimension_numbers<[1], [0], [0], [1], [0, 0, 1, 1], [], []>} : vector<8x512xbf16>, vector<512x32xbf16>, vector<8x32xf32> -> vector<8x32xf32>
    %16 = arith.addf %12, %15 : vector<8x32xf32>
    %c0_12 = arith.constant 0 : index
    %c0_13 = arith.constant 0 : index
    %17 = vector.load %arg24[%c0_12, %c0_13] : memref<8x32xf32, #tpu.memory_space<vmem>>, vector<8x32xf32>
    tpu.vector_store %arg24[%c0_12, %c0_13], %16 {strides = array<i32>} : memref<8x32xf32, #tpu.memory_space<vmem>>, vector<8x32xf32>,
    %c3_i32 = arith.constant 3 : i32
    %18 = arith.cmpi eq, %arg1, %c3_i32 : i32
    %19 = arith.extui %18 : i1 to i32
    %c0_i32_14 = arith.constant 0 : i32
    %20 = arith.cmpi ne, %19, %c0_i32_14 : i32
    scf.if %20 {
      %c0_15 = arith.constant 0 : index
      %c0_16 = arith.constant 0 : index
      %21 = vector.load %arg23[%c0_15, %c0_16] : memref<8x32xf32, #tpu.memory_space<vmem>>, vector<8x32xf32>
      %c0_17 = arith.constant 0 : index
      %c0_18 = arith.constant 0 : index
      %22 = vector.load %arg24[%c0_17, %c0_18] : memref<8x32xf32, #tpu.memory_space<vmem>>, vector<8x32xf32>
      %23 = arith.addf %21, %22 : vector<8x32xf32>
      %c0_19 = arith.constant 0 : index
      %c0_20 = arith.constant 0 : index
      %24 = vector.load %arg19[%c0_19, %c0_20] : memref<1x32xf32, #tpu.memory_space<vmem>>, vector<1x32xf32>
      %25 = vector.broadcast %24 : vector<1x32xf32> to vector<8x32xf32>
      %26 = arith.addf %23, %25 : vector<8x32xf32>
      %c0_21 = arith.constant 0 : index
      %c0_22 = arith.constant 0 : index
      %27 = vector.load %arg20[%c0_21, %c0_22] : memref<1x32xf32, #tpu.memory_space<vmem>>, vector<1x32xf32>
      %c0_23 = arith.constant 0 : index
      %c0_24 = arith.constant 0 : index
      %28 = vector.load %arg21[%c0_23, %c0_24] : memref<1x32xf32, #tpu.memory_space<vmem>>, vector<1x32xf32>
      %cst_25 = arith.constant dense<0.000000e+00> : vector<8xf32>
      %29 = vector.multi_reduction <add>, %26, %cst_25 [1] : vector<8x32xf32> to vector<8xf32>
      %30 = vector.shape_cast %29 : vector<8xf32> to vector<8x1xf32>
      %cst_26 = arith.constant 3.200000e+01 : f32
      %31 = vector.broadcast %cst_26 : f32 to vector<8x1xf32>
      %32 = arith.divf %30, %31 : vector<8x1xf32>
      %33 = vector.broadcast %32 : vector<8x1xf32> to vector<8x32xf32>
      %34 = arith.subf %26, %33 : vector<8x32xf32>
      %35 = arith.mulf %34, %34 : vector<8x32xf32>
      %cst_27 = arith.constant dense<0.000000e+00> : vector<8xf32>
      %36 = vector.multi_reduction <add>, %35, %cst_27 [1] : vector<8x32xf32> to vector<8xf32>
      %37 = vector.shape_cast %36 : vector<8xf32> to vector<8x1xf32>
      %cst_28 = arith.constant 3.200000e+01 : f32
      %38 = vector.broadcast %cst_28 : f32 to vector<8x1xf32>
      %39 = arith.divf %37, %38 : vector<8x1xf32>
      %cst_29 = arith.constant 9.99999974E-6 : f32
      %40 = vector.broadcast %cst_29 : f32 to vector<8x1xf32>
      %41 = arith.addf %39, %40 : vector<8x1xf32>
      %42 = math.rsqrt %41 : vector<8x1xf32>
      %43 = vector.broadcast %42 : vector<8x1xf32> to vector<8x32xf32>
      %44 = arith.mulf %34, %43 : vector<8x32xf32>
      %45 = vector.broadcast %27 : vector<1x32xf32> to vector<8x32xf32>
      %46 = arith.mulf %44, %45 : vector<8x32xf32>
      %47 = vector.broadcast %28 : vector<1x32xf32> to vector<8x32xf32>
      %48 = arith.addf %46, %47 : vector<8x32xf32>
      %49 = arith.truncf %48 : vector<8x32xf32> to vector<8x32xbf16>
      %c0_30 = arith.constant 0 : index
      %c0_31 = arith.constant 0 : index
      %c0_32 = arith.constant 0 : index
      %50 = vector.load %arg22[%c0_30, %c0_31, %c0_32] : memref<1x8x32xbf16, #tpu.memory_space<vmem>>, vector<1x8x32xbf16>
      %51 = vector.shape_cast %50 : vector<1x8x32xbf16> to vector<8x32xbf16>
      %52 = vector.shape_cast %49 : vector<8x32xbf16> to vector<1x8x32xbf16>
      tpu.vector_store %arg22[%c0_30, %c0_31, %c0_32], %52 {strides = array<i32>} : memref<1x8x32xbf16, #tpu.memory_space<vmem>>, vector<1x8x32xbf16>,
    } else {
    }
    return
  }
  func.func @transform_0(%arg0: i32, %arg1: i32) -> (i32, i32, i32) {
    %c0_i32 = arith.constant 0 : i32
    %c0_i32_0 = arith.constant 0 : i32
    %c0_i32_1 = arith.constant 0 : i32
    return %arg0, %c0_i32, %c0_i32_0 : i32, i32, i32
  }
  func.func @transform_1(%arg0: i32, %arg1: i32) -> (i32, i32, i32) {
    %c0_i32 = arith.constant 0 : i32
    %c0_i32_0 = arith.constant 0 : i32
    %c0_i32_1 = arith.constant 0 : i32
    return %arg0, %c0_i32, %c0_i32_0 : i32, i32, i32
  }
  func.func @transform_2(%arg0: i32, %arg1: i32) -> (i32, i32) {
    %c0_i32 = arith.constant 0 : i32
    %c0_i32_0 = arith.constant 0 : i32
    %c0_i32_1 = arith.constant 0 : i32
    return %c0_i32, %c0_i32_0 : i32, i32
  }
  func.func @transform_3(%arg0: i32, %arg1: i32) -> (i32, i32) {
    %c0_i32 = arith.constant 0 : i32
    %c0_i32_0 = arith.constant 0 : i32
    %c0_i32_1 = arith.constant 0 : i32
    return %c0_i32, %c0_i32_0 : i32, i32
  }
  func.func @transform_4(%arg0: i32, %arg1: i32) -> (i32, i32) {
    %c0_i32 = arith.constant 0 : i32
    %c0_i32_0 = arith.constant 0 : i32
    %c0_i32_1 = arith.constant 0 : i32
    return %c0_i32, %c0_i32_0 : i32, i32
  }
  func.func @transform_5(%arg0: i32, %arg1: i32) -> (i32, i32) {
    %c0_i32 = arith.constant 0 : i32
    %c0_i32_0 = arith.constant 0 : i32
    %c0_i32_1 = arith.constant 0 : i32
    return %c0_i32, %c0_i32_0 : i32, i32
  }
  func.func @transform_6(%arg0: i32, %arg1: i32) -> (i32, i32) {
    %c0_i32 = arith.constant 0 : i32
    %c0_i32_0 = arith.constant 0 : i32
    %c0_i32_1 = arith.constant 0 : i32
    return %c0_i32, %c0_i32_0 : i32, i32
  }
  func.func @transform_7(%arg0: i32, %arg1: i32) -> (i32, i32) {
    %c0_i32 = arith.constant 0 : i32
    %c0_i32_0 = arith.constant 0 : i32
    %c0_i32_1 = arith.constant 0 : i32
    return %c0_i32, %c0_i32_0 : i32, i32
  }
  func.func @transform_8(%arg0: i32, %arg1: i32) -> (i32, i32) {
    %c0_i32 = arith.constant 0 : i32
    %c0_i32_0 = arith.constant 0 : i32
    %c0_i32_1 = arith.constant 0 : i32
    return %c0_i32, %c0_i32_0 : i32, i32
  }
  func.func @transform_9(%arg0: i32, %arg1: i32) -> (i32, i32) {
    %c0_i32 = arith.constant 0 : i32
    %c0_i32_0 = arith.constant 0 : i32
    %c0_i32_1 = arith.constant 0 : i32
    return %c0_i32, %c0_i32_0 : i32, i32
  }
  func.func @transform_10(%arg0: i32, %arg1: i32) -> (i32, i32) {
    %c0_i32 = arith.constant 0 : i32
    %c0_i32_0 = arith.constant 0 : i32
    %c0_i32_1 = arith.constant 0 : i32
    return %c0_i32, %c0_i32_0 : i32, i32
  }
  func.func @transform_11(%arg0: i32, %arg1: i32) -> (i32, i32) {
    %c0_i32 = arith.constant 0 : i32
    %c0_i32_0 = arith.constant 0 : i32
    %c0_i32_1 = arith.constant 0 : i32
    return %c0_i32, %c0_i32_0 : i32, i32
  }
  func.func @transform_12(%arg0: i32, %arg1: i32) -> (i32, i32) {
    %c0_i32 = arith.constant 0 : i32
    %c0_i32_0 = arith.constant 0 : i32
    %c0_i32_1 = arith.constant 0 : i32
    return %c0_i32, %c0_i32_0 : i32, i32
  }
  func.func @transform_13(%arg0: i32, %arg1: i32) -> (i32, i32) {
    %c0_i32 = arith.constant 0 : i32
    %c0_i32_0 = arith.constant 0 : i32
    %c0_i32_1 = arith.constant 0 : i32
    return %c0_i32, %c0_i32_0 : i32, i32
  }
  func.func @transform_14(%arg0: i32, %arg1: i32) -> (i32, i32) {
    %c0_i32 = arith.constant 0 : i32
    %c0_i32_0 = arith.constant 0 : i32
    return %c0_i32, %arg1 : i32, i32
  }
  func.func @transform_15(%arg0: i32, %arg1: i32) -> (i32, i32) {
    %c0_i32 = arith.constant 0 : i32
    %c0_i32_0 = arith.constant 0 : i32
    return %c0_i32, %arg1 : i32, i32
  }
  func.func @transform_16(%arg0: i32, %arg1: i32) -> (i32, i32) {
    %c0_i32 = arith.constant 0 : i32
    %c0_i32_0 = arith.constant 0 : i32
    return %arg1, %c0_i32 : i32, i32
  }
  func.func @transform_17(%arg0: i32, %arg1: i32) -> (i32, i32) {
    %c0_i32 = arith.constant 0 : i32
    %c0_i32_0 = arith.constant 0 : i32
    %c0_i32_1 = arith.constant 0 : i32
    return %c0_i32, %c0_i32_0 : i32, i32
  }
  func.func @transform_18(%arg0: i32, %arg1: i32) -> (i32, i32) {
    %c0_i32 = arith.constant 0 : i32
    %c0_i32_0 = arith.constant 0 : i32
    %c0_i32_1 = arith.constant 0 : i32
    return %c0_i32, %c0_i32_0 : i32, i32
  }
  func.func @transform_19(%arg0: i32, %arg1: i32) -> (i32, i32) {
    %c0_i32 = arith.constant 0 : i32
    %c0_i32_0 = arith.constant 0 : i32
    %c0_i32_1 = arith.constant 0 : i32
    return %c0_i32, %c0_i32_0 : i32, i32
  }
  func.func @transform_20(%arg0: i32, %arg1: i32) -> (i32, i32, i32) {
    %c0_i32 = arith.constant 0 : i32
    %c0_i32_0 = arith.constant 0 : i32
    %c0_i32_1 = arith.constant 0 : i32
    return %arg0, %c0_i32, %c0_i32_0 : i32, i32, i32
  }
}

module attributes {stable_mosaic.version = 11 : i64} {
  func.func @_encoder_layer_kernel(%arg0: i32, %arg1: i32, %arg2: memref<1x8x32xbf16, #tpu.memory_space<vmem>>, %arg3: memref<32x96xbf16, #tpu.memory_space<vmem>>, %arg4: memref<1x96xf32, #tpu.memory_space<vmem>>, %arg5: memref<32x32xbf16, #tpu.memory_space<vmem>>, %arg6: memref<1x32xf32, #tpu.memory_space<vmem>>, %arg7: memref<1x32xf32, #tpu.memory_space<vmem>>, %arg8: memref<1x32xf32, #tpu.memory_space<vmem>>, %arg9: memref<32x512xbf16, #tpu.memory_space<vmem>>, %arg10: memref<1x512xf32, #tpu.memory_space<vmem>>, %arg11: memref<512x32xbf16, #tpu.memory_space<vmem>>, %arg12: memref<1x32xf32, #tpu.memory_space<vmem>>, %arg13: memref<1x32xf32, #tpu.memory_space<vmem>>, %arg14: memref<1x32xf32, #tpu.memory_space<vmem>>, %arg15: memref<1x8x32xbf16, #tpu.memory_space<vmem>>, %arg16: memref<8x32xf32, #tpu.memory_space<vmem>>, %arg17: memref<8x32xf32, #tpu.memory_space<vmem>>) attributes {dimension_semantics = [#tpu.dimension_semantics<parallel>, #tpu.dimension_semantics<arbitrary>], iteration_bounds = array<i64: 2, 4>, scalar_prefetch = 0 : i64, scratch_operands = 2 : i64, tpu.core_type = #tpu.core_type<tc>, window_params = [{transform_indices = @transform_0, window_bounds = array<i64: 1, 8, 32>}, {pipeline_mode = #tpu.pipeline_mode<synchronous>, transform_indices = @transform_1, window_bounds = array<i64: 32, 96>}, {pipeline_mode = #tpu.pipeline_mode<synchronous>, transform_indices = @transform_2, window_bounds = array<i64: 1, 96>}, {pipeline_mode = #tpu.pipeline_mode<synchronous>, transform_indices = @transform_3, window_bounds = array<i64: 32, 32>}, {pipeline_mode = #tpu.pipeline_mode<synchronous>, transform_indices = @transform_4, window_bounds = array<i64: 1, 32>}, {pipeline_mode = #tpu.pipeline_mode<synchronous>, transform_indices = @transform_5, window_bounds = array<i64: 1, 32>}, {pipeline_mode = #tpu.pipeline_mode<synchronous>, transform_indices = @transform_6, window_bounds = array<i64: 1, 32>}, {transform_indices = @transform_7, window_bounds = array<i64: 32, 512>}, {transform_indices = @transform_8, window_bounds = array<i64: 1, 512>}, {transform_indices = @transform_9, window_bounds = array<i64: 512, 32>}, {pipeline_mode = #tpu.pipeline_mode<synchronous>, transform_indices = @transform_10, window_bounds = array<i64: 1, 32>}, {pipeline_mode = #tpu.pipeline_mode<synchronous>, transform_indices = @transform_11, window_bounds = array<i64: 1, 32>}, {pipeline_mode = #tpu.pipeline_mode<synchronous>, transform_indices = @transform_12, window_bounds = array<i64: 1, 32>}, {transform_indices = @transform_13, window_bounds = array<i64: 1, 8, 32>}]} {
    %c0_i32 = arith.constant 0 : i32
    %0 = arith.cmpi eq, %arg1, %c0_i32 : i32
    %1 = arith.extui %0 : i1 to i32
    %c0_i32_0 = arith.constant 0 : i32
    %2 = arith.cmpi ne, %1, %c0_i32_0 : i32
    scf.if %2 {
      %c0_15 = arith.constant 0 : index
      %c0_16 = arith.constant 0 : index
      %c0_17 = arith.constant 0 : index
      %21 = vector.load %arg2[%c0_15, %c0_16, %c0_17] : memref<1x8x32xbf16, #tpu.memory_space<vmem>>, vector<1x8x32xbf16>
      %22 = vector.shape_cast %21 : vector<1x8x32xbf16> to vector<8x32xbf16>
      %23 = arith.extf %22 : vector<8x32xbf16> to vector<8x32xf32>
      %c0_18 = arith.constant 0 : index
      %c0_19 = arith.constant 0 : index
      %24 = vector.load %arg3[%c0_18, %c0_19] : memref<32x96xbf16, #tpu.memory_space<vmem>>, vector<32x96xbf16>
      %c0_20 = arith.constant 0 : index
      %c0_21 = arith.constant 0 : index
      %25 = vector.load %arg4[%c0_20, %c0_21] : memref<1x96xf32, #tpu.memory_space<vmem>>, vector<1x96xf32>
      %c0_22 = arith.constant 0 : index
      %c0_23 = arith.constant 0 : index
      %26 = vector.load %arg5[%c0_22, %c0_23] : memref<32x32xbf16, #tpu.memory_space<vmem>>, vector<32x32xbf16>
      %c0_24 = arith.constant 0 : index
      %c0_25 = arith.constant 0 : index
      %27 = vector.load %arg6[%c0_24, %c0_25] : memref<1x32xf32, #tpu.memory_space<vmem>>, vector<1x32xf32>
      %28 = arith.truncf %23 : vector<8x32xf32> to vector<8x32xbf16>
      %cst_26 = arith.constant dense<0.000000e+00> : vector<8x96xf32>
      %29 = tpu.matmul %28, %24, %cst_26 {dimension_numbers = #tpu.dot_dimension_numbers<[1], [0], [0], [1], [0, 0, 1, 1], [], []>} : vector<8x32xbf16>, vector<32x96xbf16>, vector<8x96xf32> -> vector<8x96xf32>
      %30 = vector.broadcast %25 : vector<1x96xf32> to vector<8x96xf32>
      %31 = arith.addf %29, %30 : vector<8x96xf32>
      %32 = vector.extract_strided_slice %31 {offsets = [0, 0], sizes = [8, 32], strides = [1, 1]} : vector<8x96xf32> to vector<8x32xf32>
      %33 = vector.extract_strided_slice %31 {offsets = [0, 32], sizes = [8, 32], strides = [1, 1]} : vector<8x96xf32> to vector<8x32xf32>
      %34 = vector.extract_strided_slice %31 {offsets = [0, 64], sizes = [8, 32], strides = [1, 1]} : vector<8x96xf32> to vector<8x32xf32>
      %35 = arith.truncf %32 : vector<8x32xf32> to vector<8x32xbf16>
      %36 = arith.truncf %33 : vector<8x32xf32> to vector<8x32xbf16>
      %37 = arith.truncf %34 : vector<8x32xf32> to vector<8x32xbf16>
      %38 = vector.extract_strided_slice %35 {offsets = [0, 0], sizes = [8, 16], strides = [1, 1]} : vector<8x32xbf16> to vector<8x16xbf16>
      %39 = vector.extract_strided_slice %36 {offsets = [0, 0], sizes = [8, 16], strides = [1, 1]} : vector<8x32xbf16> to vector<8x16xbf16>
      %40 = vector.extract_strided_slice %37 {offsets = [0, 0], sizes = [8, 16], strides = [1, 1]} : vector<8x32xbf16> to vector<8x16xbf16>
      %cst_27 = arith.constant dense<0.000000e+00> : vector<8x8xf32>
      %41 = tpu.matmul %38, %39, %cst_27 {dimension_numbers = #tpu.dot_dimension_numbers<[1], [1], [0], [0], [0, 0, 1, 0], [], []>} : vector<8x16xbf16>, vector<8x16xbf16>, vector<8x8xf32> -> vector<8x8xf32>
      %cst_28 = arith.constant 2.500000e-01 : f32
      %42 = vector.broadcast %cst_28 : f32 to vector<8x8xf32>
      %43 = arith.mulf %41, %42 : vector<8x8xf32>
      %cst_29 = arith.constant dense<0xFF800000> : vector<8xf32>
      %44 = vector.multi_reduction <maximumf>, %43, %cst_29 [1] : vector<8x8xf32> to vector<8xf32>
      %45 = vector.shape_cast %44 : vector<8xf32> to vector<8x1xf32>
      %46 = vector.broadcast %45 : vector<8x1xf32> to vector<8x8xf32>
      %47 = arith.subf %43, %46 : vector<8x8xf32>
      %48 = math.exp %47 : vector<8x8xf32>
      %cst_30 = arith.constant dense<0.000000e+00> : vector<8xf32>
      %49 = vector.multi_reduction <add>, %48, %cst_30 [1] : vector<8x8xf32> to vector<8xf32>
      %50 = vector.shape_cast %49 : vector<8xf32> to vector<8x1xf32>
      %51 = tpu.reciprocal %50 {approx = true} : vector<8x1xf32> -> vector<8x1xf32>
      %52 = vector.broadcast %51 : vector<8x1xf32> to vector<8x8xf32>
      %53 = arith.mulf %48, %52 : vector<8x8xf32>
      %54 = arith.truncf %53 : vector<8x8xf32> to vector<8x8xbf16>
      %cst_31 = arith.constant dense<0.000000e+00> : vector<8x16xf32>
      %55 = tpu.matmul %54, %40, %cst_31 {dimension_numbers = #tpu.dot_dimension_numbers<[1], [0], [0], [1], [0, 0, 1, 1], [], []>} : vector<8x8xbf16>, vector<8x16xbf16>, vector<8x16xf32> -> vector<8x16xf32>
      %56 = vector.extract_strided_slice %35 {offsets = [0, 16], sizes = [8, 16], strides = [1, 1]} : vector<8x32xbf16> to vector<8x16xbf16>
      %57 = vector.extract_strided_slice %36 {offsets = [0, 16], sizes = [8, 16], strides = [1, 1]} : vector<8x32xbf16> to vector<8x16xbf16>
      %58 = vector.extract_strided_slice %37 {offsets = [0, 16], sizes = [8, 16], strides = [1, 1]} : vector<8x32xbf16> to vector<8x16xbf16>
      %cst_32 = arith.constant dense<0.000000e+00> : vector<8x8xf32>
      %59 = tpu.matmul %56, %57, %cst_32 {dimension_numbers = #tpu.dot_dimension_numbers<[1], [1], [0], [0], [0, 0, 1, 0], [], []>} : vector<8x16xbf16>, vector<8x16xbf16>, vector<8x8xf32> -> vector<8x8xf32>
      %cst_33 = arith.constant 2.500000e-01 : f32
      %60 = vector.broadcast %cst_33 : f32 to vector<8x8xf32>
      %61 = arith.mulf %59, %60 : vector<8x8xf32>
      %cst_34 = arith.constant dense<0xFF800000> : vector<8xf32>
      %62 = vector.multi_reduction <maximumf>, %61, %cst_34 [1] : vector<8x8xf32> to vector<8xf32>
      %63 = vector.shape_cast %62 : vector<8xf32> to vector<8x1xf32>
      %64 = vector.broadcast %63 : vector<8x1xf32> to vector<8x8xf32>
      %65 = arith.subf %61, %64 : vector<8x8xf32>
      %66 = math.exp %65 : vector<8x8xf32>
      %cst_35 = arith.constant dense<0.000000e+00> : vector<8xf32>
      %67 = vector.multi_reduction <add>, %66, %cst_35 [1] : vector<8x8xf32> to vector<8xf32>
      %68 = vector.shape_cast %67 : vector<8xf32> to vector<8x1xf32>
      %69 = tpu.reciprocal %68 {approx = true} : vector<8x1xf32> -> vector<8x1xf32>
      %70 = vector.broadcast %69 : vector<8x1xf32> to vector<8x8xf32>
      %71 = arith.mulf %66, %70 : vector<8x8xf32>
      %72 = arith.truncf %71 : vector<8x8xf32> to vector<8x8xbf16>
      %cst_36 = arith.constant dense<0.000000e+00> : vector<8x16xf32>
      %73 = tpu.matmul %72, %58, %cst_36 {dimension_numbers = #tpu.dot_dimension_numbers<[1], [0], [0], [1], [0, 0, 1, 1], [], []>} : vector<8x8xbf16>, vector<8x16xbf16>, vector<8x16xf32> -> vector<8x16xf32>
      %74 = tpu.concatenate %55, %73 in 1 : vector<8x16xf32>, vector<8x16xf32> -> vector<8x32xf32>
      %75 = arith.truncf %74 : vector<8x32xf32> to vector<8x32xbf16>
      %cst_37 = arith.constant dense<0.000000e+00> : vector<8x32xf32>
      %76 = tpu.matmul %75, %26, %cst_37 {dimension_numbers = #tpu.dot_dimension_numbers<[1], [0], [0], [1], [0, 0, 1, 1], [], []>} : vector<8x32xbf16>, vector<32x32xbf16>, vector<8x32xf32> -> vector<8x32xf32>
      %77 = vector.broadcast %27 : vector<1x32xf32> to vector<8x32xf32>
      %78 = arith.addf %76, %77 : vector<8x32xf32>
      %79 = arith.addf %23, %78 : vector<8x32xf32>
      %c0_38 = arith.constant 0 : index
      %c0_39 = arith.constant 0 : index
      %80 = vector.load %arg7[%c0_38, %c0_39] : memref<1x32xf32, #tpu.memory_space<vmem>>, vector<1x32xf32>
      %c0_40 = arith.constant 0 : index
      %c0_41 = arith.constant 0 : index
      %81 = vector.load %arg8[%c0_40, %c0_41] : memref<1x32xf32, #tpu.memory_space<vmem>>, vector<1x32xf32>
      %cst_42 = arith.constant dense<0.000000e+00> : vector<8xf32>
      %82 = vector.multi_reduction <add>, %79, %cst_42 [1] : vector<8x32xf32> to vector<8xf32>
      %83 = vector.shape_cast %82 : vector<8xf32> to vector<8x1xf32>
      %cst_43 = arith.constant 3.200000e+01 : f32
      %84 = vector.broadcast %cst_43 : f32 to vector<8x1xf32>
      %85 = arith.divf %83, %84 : vector<8x1xf32>
      %86 = vector.broadcast %85 : vector<8x1xf32> to vector<8x32xf32>
      %87 = arith.subf %79, %86 : vector<8x32xf32>
      %88 = arith.mulf %87, %87 : vector<8x32xf32>
      %cst_44 = arith.constant dense<0.000000e+00> : vector<8xf32>
      %89 = vector.multi_reduction <add>, %88, %cst_44 [1] : vector<8x32xf32> to vector<8xf32>
      %90 = vector.shape_cast %89 : vector<8xf32> to vector<8x1xf32>
      %cst_45 = arith.constant 3.200000e+01 : f32
      %91 = vector.broadcast %cst_45 : f32 to vector<8x1xf32>
      %92 = arith.divf %90, %91 : vector<8x1xf32>
      %cst_46 = arith.constant 9.99999974E-6 : f32
      %93 = vector.broadcast %cst_46 : f32 to vector<8x1xf32>
      %94 = arith.addf %92, %93 : vector<8x1xf32>
      %95 = math.rsqrt %94 : vector<8x1xf32>
      %96 = vector.broadcast %95 : vector<8x1xf32> to vector<8x32xf32>
      %97 = arith.mulf %87, %96 : vector<8x32xf32>
      %98 = vector.broadcast %80 : vector<1x32xf32> to vector<8x32xf32>
      %99 = arith.mulf %97, %98 : vector<8x32xf32>
      %100 = vector.broadcast %81 : vector<1x32xf32> to vector<8x32xf32>
      %101 = arith.addf %99, %100 : vector<8x32xf32>
      %c0_47 = arith.constant 0 : index
      %c0_48 = arith.constant 0 : index
      %102 = vector.load %arg16[%c0_47, %c0_48] : memref<8x32xf32, #tpu.memory_space<vmem>>, vector<8x32xf32>
      tpu.vector_store %arg16[%c0_47, %c0_48], %101 {strides = array<i32>} : memref<8x32xf32, #tpu.memory_space<vmem>>, vector<8x32xf32>,
      %cst_49 = arith.constant 0.000000e+00 : f32
      %103 = vector.broadcast %cst_49 : f32 to vector<8x32xf32>
      %c0_50 = arith.constant 0 : index
      %c0_51 = arith.constant 0 : index
      %104 = vector.load %arg17[%c0_50, %c0_51] : memref<8x32xf32, #tpu.memory_space<vmem>>, vector<8x32xf32>
      tpu.vector_store %arg17[%c0_50, %c0_51], %103 {strides = array<i32>} : memref<8x32xf32, #tpu.memory_space<vmem>>, vector<8x32xf32>,
    } else {
    }
    %c0 = arith.constant 0 : index
    %c0_1 = arith.constant 0 : index
    %3 = vector.load %arg16[%c0, %c0_1] : memref<8x32xf32, #tpu.memory_space<vmem>>, vector<8x32xf32>
    %c0_2 = arith.constant 0 : index
    %c0_3 = arith.constant 0 : index
    %4 = vector.load %arg9[%c0_2, %c0_3] : memref<32x512xbf16, #tpu.memory_space<vmem>>, vector<32x512xbf16>
    %5 = arith.truncf %3 : vector<8x32xf32> to vector<8x32xbf16>
    %cst = arith.constant dense<0.000000e+00> : vector<8x512xf32>
    %6 = tpu.matmul %5, %4, %cst {dimension_numbers = #tpu.dot_dimension_numbers<[1], [0], [0], [1], [0, 0, 1, 1], [], []>} : vector<8x32xbf16>, vector<32x512xbf16>, vector<8x512xf32> -> vector<8x512xf32>
    %c0_4 = arith.constant 0 : index
    %c0_5 = arith.constant 0 : index
    %7 = vector.load %arg10[%c0_4, %c0_5] : memref<1x512xf32, #tpu.memory_space<vmem>>, vector<1x512xf32>
    %8 = vector.broadcast %7 : vector<1x512xf32> to vector<8x512xf32>
    %9 = arith.addf %6, %8 : vector<8x512xf32>
    %cst_6 = arith.constant 0.000000e+00 : f32
    %10 = vector.broadcast %cst_6 : f32 to vector<8x512xf32>
    %11 = arith.maximumf %9, %10 : vector<8x512xf32>
    %c0_7 = arith.constant 0 : index
    %c0_8 = arith.constant 0 : index
    %12 = vector.load %arg17[%c0_7, %c0_8] : memref<8x32xf32, #tpu.memory_space<vmem>>, vector<8x32xf32>
    %c0_9 = arith.constant 0 : index
    %c0_10 = arith.constant 0 : index
    %13 = vector.load %arg11[%c0_9, %c0_10] : memref<512x32xbf16, #tpu.memory_space<vmem>>, vector<512x32xbf16>
    %14 = arith.truncf %11 : vector<8x512xf32> to vector<8x512xbf16>
    %cst_11 = arith.constant dense<0.000000e+00> : vector<8x32xf32>
    %15 = tpu.matmul %14, %13, %cst_11 {dimension_numbers = #tpu.dot_dimension_numbers<[1], [0], [0], [1], [0, 0, 1, 1], [], []>} : vector<8x512xbf16>, vector<512x32xbf16>, vector<8x32xf32> -> vector<8x32xf32>
    %16 = arith.addf %12, %15 : vector<8x32xf32>
    %c0_12 = arith.constant 0 : index
    %c0_13 = arith.constant 0 : index
    %17 = vector.load %arg17[%c0_12, %c0_13] : memref<8x32xf32, #tpu.memory_space<vmem>>, vector<8x32xf32>
    tpu.vector_store %arg17[%c0_12, %c0_13], %16 {strides = array<i32>} : memref<8x32xf32, #tpu.memory_space<vmem>>, vector<8x32xf32>,
    %c3_i32 = arith.constant 3 : i32
    %18 = arith.cmpi eq, %arg1, %c3_i32 : i32
    %19 = arith.extui %18 : i1 to i32
    %c0_i32_14 = arith.constant 0 : i32
    %20 = arith.cmpi ne, %19, %c0_i32_14 : i32
    scf.if %20 {
      %c0_15 = arith.constant 0 : index
      %c0_16 = arith.constant 0 : index
      %21 = vector.load %arg16[%c0_15, %c0_16] : memref<8x32xf32, #tpu.memory_space<vmem>>, vector<8x32xf32>
      %c0_17 = arith.constant 0 : index
      %c0_18 = arith.constant 0 : index
      %22 = vector.load %arg17[%c0_17, %c0_18] : memref<8x32xf32, #tpu.memory_space<vmem>>, vector<8x32xf32>
      %23 = arith.addf %21, %22 : vector<8x32xf32>
      %c0_19 = arith.constant 0 : index
      %c0_20 = arith.constant 0 : index
      %24 = vector.load %arg12[%c0_19, %c0_20] : memref<1x32xf32, #tpu.memory_space<vmem>>, vector<1x32xf32>
      %25 = vector.broadcast %24 : vector<1x32xf32> to vector<8x32xf32>
      %26 = arith.addf %23, %25 : vector<8x32xf32>
      %c0_21 = arith.constant 0 : index
      %c0_22 = arith.constant 0 : index
      %27 = vector.load %arg13[%c0_21, %c0_22] : memref<1x32xf32, #tpu.memory_space<vmem>>, vector<1x32xf32>
      %c0_23 = arith.constant 0 : index
      %c0_24 = arith.constant 0 : index
      %28 = vector.load %arg14[%c0_23, %c0_24] : memref<1x32xf32, #tpu.memory_space<vmem>>, vector<1x32xf32>
      %cst_25 = arith.constant dense<0.000000e+00> : vector<8xf32>
      %29 = vector.multi_reduction <add>, %26, %cst_25 [1] : vector<8x32xf32> to vector<8xf32>
      %30 = vector.shape_cast %29 : vector<8xf32> to vector<8x1xf32>
      %cst_26 = arith.constant 3.200000e+01 : f32
      %31 = vector.broadcast %cst_26 : f32 to vector<8x1xf32>
      %32 = arith.divf %30, %31 : vector<8x1xf32>
      %33 = vector.broadcast %32 : vector<8x1xf32> to vector<8x32xf32>
      %34 = arith.subf %26, %33 : vector<8x32xf32>
      %35 = arith.mulf %34, %34 : vector<8x32xf32>
      %cst_27 = arith.constant dense<0.000000e+00> : vector<8xf32>
      %36 = vector.multi_reduction <add>, %35, %cst_27 [1] : vector<8x32xf32> to vector<8xf32>
      %37 = vector.shape_cast %36 : vector<8xf32> to vector<8x1xf32>
      %cst_28 = arith.constant 3.200000e+01 : f32
      %38 = vector.broadcast %cst_28 : f32 to vector<8x1xf32>
      %39 = arith.divf %37, %38 : vector<8x1xf32>
      %cst_29 = arith.constant 9.99999974E-6 : f32
      %40 = vector.broadcast %cst_29 : f32 to vector<8x1xf32>
      %41 = arith.addf %39, %40 : vector<8x1xf32>
      %42 = math.rsqrt %41 : vector<8x1xf32>
      %43 = vector.broadcast %42 : vector<8x1xf32> to vector<8x32xf32>
      %44 = arith.mulf %34, %43 : vector<8x32xf32>
      %45 = vector.broadcast %27 : vector<1x32xf32> to vector<8x32xf32>
      %46 = arith.mulf %44, %45 : vector<8x32xf32>
      %47 = vector.broadcast %28 : vector<1x32xf32> to vector<8x32xf32>
      %48 = arith.addf %46, %47 : vector<8x32xf32>
      %49 = arith.truncf %48 : vector<8x32xf32> to vector<8x32xbf16>
      %c0_30 = arith.constant 0 : index
      %c0_31 = arith.constant 0 : index
      %c0_32 = arith.constant 0 : index
      %50 = vector.load %arg15[%c0_30, %c0_31, %c0_32] : memref<1x8x32xbf16, #tpu.memory_space<vmem>>, vector<1x8x32xbf16>
      %51 = vector.shape_cast %50 : vector<1x8x32xbf16> to vector<8x32xbf16>
      %52 = vector.shape_cast %49 : vector<8x32xbf16> to vector<1x8x32xbf16>
      tpu.vector_store %arg15[%c0_30, %c0_31, %c0_32], %52 {strides = array<i32>} : memref<1x8x32xbf16, #tpu.memory_space<vmem>>, vector<1x8x32xbf16>,
    } else {
    }
    return
  }
  func.func @transform_0(%arg0: i32, %arg1: i32) -> (i32, i32, i32) {
    %c0_i32 = arith.constant 0 : i32
    %c0_i32_0 = arith.constant 0 : i32
    %c0_i32_1 = arith.constant 0 : i32
    return %arg0, %c0_i32, %c0_i32_0 : i32, i32, i32
  }
  func.func @transform_1(%arg0: i32, %arg1: i32) -> (i32, i32) {
    %c0_i32 = arith.constant 0 : i32
    %c0_i32_0 = arith.constant 0 : i32
    %c0_i32_1 = arith.constant 0 : i32
    return %c0_i32, %c0_i32_0 : i32, i32
  }
  func.func @transform_2(%arg0: i32, %arg1: i32) -> (i32, i32) {
    %c0_i32 = arith.constant 0 : i32
    %c0_i32_0 = arith.constant 0 : i32
    %c0_i32_1 = arith.constant 0 : i32
    return %c0_i32, %c0_i32_0 : i32, i32
  }
  func.func @transform_3(%arg0: i32, %arg1: i32) -> (i32, i32) {
    %c0_i32 = arith.constant 0 : i32
    %c0_i32_0 = arith.constant 0 : i32
    %c0_i32_1 = arith.constant 0 : i32
    return %c0_i32, %c0_i32_0 : i32, i32
  }
  func.func @transform_4(%arg0: i32, %arg1: i32) -> (i32, i32) {
    %c0_i32 = arith.constant 0 : i32
    %c0_i32_0 = arith.constant 0 : i32
    %c0_i32_1 = arith.constant 0 : i32
    return %c0_i32, %c0_i32_0 : i32, i32
  }
  func.func @transform_5(%arg0: i32, %arg1: i32) -> (i32, i32) {
    %c0_i32 = arith.constant 0 : i32
    %c0_i32_0 = arith.constant 0 : i32
    %c0_i32_1 = arith.constant 0 : i32
    return %c0_i32, %c0_i32_0 : i32, i32
  }
  func.func @transform_6(%arg0: i32, %arg1: i32) -> (i32, i32) {
    %c0_i32 = arith.constant 0 : i32
    %c0_i32_0 = arith.constant 0 : i32
    %c0_i32_1 = arith.constant 0 : i32
    return %c0_i32, %c0_i32_0 : i32, i32
  }
  func.func @transform_7(%arg0: i32, %arg1: i32) -> (i32, i32) {
    %c0_i32 = arith.constant 0 : i32
    %c0_i32_0 = arith.constant 0 : i32
    return %c0_i32, %arg1 : i32, i32
  }
  func.func @transform_8(%arg0: i32, %arg1: i32) -> (i32, i32) {
    %c0_i32 = arith.constant 0 : i32
    %c0_i32_0 = arith.constant 0 : i32
    return %c0_i32, %arg1 : i32, i32
  }
  func.func @transform_9(%arg0: i32, %arg1: i32) -> (i32, i32) {
    %c0_i32 = arith.constant 0 : i32
    %c0_i32_0 = arith.constant 0 : i32
    return %arg1, %c0_i32 : i32, i32
  }
  func.func @transform_10(%arg0: i32, %arg1: i32) -> (i32, i32) {
    %c0_i32 = arith.constant 0 : i32
    %c0_i32_0 = arith.constant 0 : i32
    %c0_i32_1 = arith.constant 0 : i32
    return %c0_i32, %c0_i32_0 : i32, i32
  }
  func.func @transform_11(%arg0: i32, %arg1: i32) -> (i32, i32) {
    %c0_i32 = arith.constant 0 : i32
    %c0_i32_0 = arith.constant 0 : i32
    %c0_i32_1 = arith.constant 0 : i32
    return %c0_i32, %c0_i32_0 : i32, i32
  }
  func.func @transform_12(%arg0: i32, %arg1: i32) -> (i32, i32) {
    %c0_i32 = arith.constant 0 : i32
    %c0_i32_0 = arith.constant 0 : i32
    %c0_i32_1 = arith.constant 0 : i32
    return %c0_i32, %c0_i32_0 : i32, i32
  }
  func.func @transform_13(%arg0: i32, %arg1: i32) -> (i32, i32, i32) {
    %c0_i32 = arith.constant 0 : i32
    %c0_i32_0 = arith.constant 0 : i32
    %c0_i32_1 = arith.constant 0 : i32
    return %arg0, %c0_i32, %c0_i32_0 : i32, i32, i32
  }
}

module attributes {stable_mosaic.version = 11 : i64} {
  func.func @_final_kernel(%arg0: i32, %arg1: memref<16x32xbf16, #tpu.memory_space<vmem>>, %arg2: memref<1x32xf32, #tpu.memory_space<vmem>>, %arg3: memref<1x32xf32, #tpu.memory_space<vmem>>, %arg4: memref<32x32xbf16, #tpu.memory_space<vmem>>, %arg5: memref<1x32xf32, #tpu.memory_space<vmem>>, %arg6: memref<16x32xf32, #tpu.memory_space<vmem>>) attributes {dimension_semantics = [#tpu.dimension_semantics<parallel>], iteration_bounds = array<i64: 1>, scalar_prefetch = 0 : i64, scratch_operands = 0 : i64, tpu.core_type = #tpu.core_type<tc>, window_params = [{pipeline_mode = #tpu.pipeline_mode<synchronous>, transform_indices = @transform_0, window_bounds = array<i64: 16, 32>}, {pipeline_mode = #tpu.pipeline_mode<synchronous>, transform_indices = @transform_1, window_bounds = array<i64: 1, 32>}, {pipeline_mode = #tpu.pipeline_mode<synchronous>, transform_indices = @transform_2, window_bounds = array<i64: 1, 32>}, {transform_indices = @transform_3, window_bounds = array<i64: 32, 32>}, {transform_indices = @transform_4, window_bounds = array<i64: 1, 32>}, {transform_indices = @transform_5, window_bounds = array<i64: 16, 32>}]} {
    %c0 = arith.constant 0 : index
    %c0_0 = arith.constant 0 : index
    %0 = vector.load %arg1[%c0, %c0_0] : memref<16x32xbf16, #tpu.memory_space<vmem>>, vector<16x32xbf16>
    %1 = arith.extf %0 : vector<16x32xbf16> to vector<16x32xf32>
    %c0_1 = arith.constant 0 : index
    %c0_2 = arith.constant 0 : index
    %2 = vector.load %arg2[%c0_1, %c0_2] : memref<1x32xf32, #tpu.memory_space<vmem>>, vector<1x32xf32>
    %c0_3 = arith.constant 0 : index
    %c0_4 = arith.constant 0 : index
    %3 = vector.load %arg3[%c0_3, %c0_4] : memref<1x32xf32, #tpu.memory_space<vmem>>, vector<1x32xf32>
    %cst = arith.constant dense<0.000000e+00> : vector<16xf32>
    %4 = vector.multi_reduction <add>, %1, %cst [1] : vector<16x32xf32> to vector<16xf32>
    %5 = vector.shape_cast %4 : vector<16xf32> to vector<16x1xf32>
    %cst_5 = arith.constant 3.200000e+01 : f32
    %6 = vector.broadcast %cst_5 : f32 to vector<16x1xf32>
    %7 = arith.divf %5, %6 : vector<16x1xf32>
    %8 = vector.broadcast %7 : vector<16x1xf32> to vector<16x32xf32>
    %9 = arith.subf %1, %8 : vector<16x32xf32>
    %10 = arith.mulf %9, %9 : vector<16x32xf32>
    %cst_6 = arith.constant dense<0.000000e+00> : vector<16xf32>
    %11 = vector.multi_reduction <add>, %10, %cst_6 [1] : vector<16x32xf32> to vector<16xf32>
    %12 = vector.shape_cast %11 : vector<16xf32> to vector<16x1xf32>
    %cst_7 = arith.constant 3.200000e+01 : f32
    %13 = vector.broadcast %cst_7 : f32 to vector<16x1xf32>
    %14 = arith.divf %12, %13 : vector<16x1xf32>
    %cst_8 = arith.constant 9.99999974E-6 : f32
    %15 = vector.broadcast %cst_8 : f32 to vector<16x1xf32>
    %16 = arith.addf %14, %15 : vector<16x1xf32>
    %17 = math.rsqrt %16 : vector<16x1xf32>
    %18 = vector.broadcast %17 : vector<16x1xf32> to vector<16x32xf32>
    %19 = arith.mulf %9, %18 : vector<16x32xf32>
    %20 = vector.broadcast %2 : vector<1x32xf32> to vector<16x32xf32>
    %21 = arith.mulf %19, %20 : vector<16x32xf32>
    %22 = vector.broadcast %3 : vector<1x32xf32> to vector<16x32xf32>
    %23 = arith.addf %21, %22 : vector<16x32xf32>
    %c0_9 = arith.constant 0 : index
    %c0_10 = arith.constant 0 : index
    %24 = vector.load %arg4[%c0_9, %c0_10] : memref<32x32xbf16, #tpu.memory_space<vmem>>, vector<32x32xbf16>
    %25 = arith.truncf %23 : vector<16x32xf32> to vector<16x32xbf16>
    %cst_11 = arith.constant dense<0.000000e+00> : vector<16x32xf32>
    %26 = tpu.matmul %25, %24, %cst_11 {dimension_numbers = #tpu.dot_dimension_numbers<[1], [0], [0], [1], [0, 0, 1, 1], [], []>} : vector<16x32xbf16>, vector<32x32xbf16>, vector<16x32xf32> -> vector<16x32xf32>
    %c0_12 = arith.constant 0 : index
    %c0_13 = arith.constant 0 : index
    %27 = vector.load %arg5[%c0_12, %c0_13] : memref<1x32xf32, #tpu.memory_space<vmem>>, vector<1x32xf32>
    %28 = vector.broadcast %27 : vector<1x32xf32> to vector<16x32xf32>
    %29 = arith.addf %26, %28 : vector<16x32xf32>
    %c0_14 = arith.constant 0 : index
    %c0_15 = arith.constant 0 : index
    %30 = vector.load %arg6[%c0_14, %c0_15] : memref<16x32xf32, #tpu.memory_space<vmem>>, vector<16x32xf32>
    tpu.vector_store %arg6[%c0_14, %c0_15], %29 {strides = array<i32>} : memref<16x32xf32, #tpu.memory_space<vmem>>, vector<16x32xf32>,
    return
  }
  func.func @transform_0(%arg0: i32) -> (i32, i32) {
    %c0_i32 = arith.constant 0 : i32
    %c0_i32_0 = arith.constant 0 : i32
    %c0_i32_1 = arith.constant 0 : i32
    return %c0_i32, %c0_i32_0 : i32, i32
  }
  func.func @transform_1(%arg0: i32) -> (i32, i32) {
    %c0_i32 = arith.constant 0 : i32
    %c0_i32_0 = arith.constant 0 : i32
    %c0_i32_1 = arith.constant 0 : i32
    return %c0_i32, %c0_i32_0 : i32, i32
  }
  func.func @transform_2(%arg0: i32) -> (i32, i32) {
    %c0_i32 = arith.constant 0 : i32
    %c0_i32_0 = arith.constant 0 : i32
    %c0_i32_1 = arith.constant 0 : i32
    return %c0_i32, %c0_i32_0 : i32, i32
  }
  func.func @transform_3(%arg0: i32) -> (i32, i32) {
    %c0_i32 = arith.constant 0 : i32
    %c0_i32_0 = arith.constant 0 : i32
    return %c0_i32, %arg0 : i32, i32
  }
  func.func @transform_4(%arg0: i32) -> (i32, i32) {
    %c0_i32 = arith.constant 0 : i32
    %c0_i32_0 = arith.constant 0 : i32
    return %c0_i32, %arg0 : i32, i32
  }
  func.func @transform_5(%arg0: i32) -> (i32, i32) {
    %c0_i32 = arith.constant 0 : i32
    %c0_i32_0 = arith.constant 0 : i32
    return %c0_i32, %arg0 : i32, i32
  }
}

</mosaic_0001>

<llo_original>
// kernel: transformer_forward.5
$region0: #{transformer_forward.5}
  #allocation0 [shape = 'u32[]', space=smem, size = 0x4, offset = 0x4, fixed_abs, tag = 'smem constant byte address 0x4 - core index']
  #allocation1 [shape = 'u32[144,128]{1,0:T(1,128)}', space=vmem, size = 0x12000, scoped, tag = 'internal scratch']
  #allocation2 [shape = 'f32[8,32]{1,0:T(8,128)}', space=vmem, size = 0x1000, scoped, tag = 'scratch operand']
  #allocation3 [shape = 'f32[8,32]{1,0:T(8,128)}', space=vmem, size = 0x1000, scoped, tag = 'scratch operand']
  %s0 = inlined_call_operand.vmem [shape: bf16[2,8,32], index: 0, kind: input, shape index: {}]
  %s1 = inlined_call_operand.vmem [shape: bf16[32,96], index: 1, kind: input, shape index: {}]
  %s2 = inlined_call_operand.vmem [shape: f32[1,96], index: 2, kind: input, shape index: {}]
  %s3 = inlined_call_operand.vmem [shape: bf16[32,32], index: 3, kind: input, shape index: {}]
  %s4 = inlined_call_operand.vmem [shape: f32[1,32], index: 4, kind: input, shape index: {}]
  %s5 = inlined_call_operand.vmem [shape: f32[1,32], index: 5, kind: input, shape index: {}]
  %s6 = inlined_call_operand.vmem [shape: f32[1,32], index: 6, kind: input, shape index: {}]
  %s7 = inlined_call_operand.vmem [shape: bf16[32,2048], index: 7, kind: input, shape index: {}]
  %s8 = inlined_call_operand.vmem [shape: f32[1,2048], index: 8, kind: input, shape index: {}]
  %s9 = inlined_call_operand.vmem [shape: bf16[2048,32], index: 9, kind: input, shape index: {}]
  %s10 = inlined_call_operand.vmem [shape: f32[1,32], index: 10, kind: input, shape index: {}]
  %s11 = inlined_call_operand.vmem [shape: f32[1,32], index: 11, kind: input, shape index: {}]
  %s12 = inlined_call_operand.vmem [shape: f32[1,32], index: 12, kind: input, shape index: {}]
  %s13 = inlined_call_operand.vmem [shape: bf16[2,8,32], index: 13, kind: output, shape index: {}]
  %s14 = sld [smem:[#allocation0]]
  $region116: #{transformer_forward.5} parent=0
    _
  %s16 = ssub.s32 1, %s14
  %s17 = scalar_select 0, %s16, %s14
  $region1: #{transformer_forward.5} parent=0
    #allocation4 [shape = 'u8[65536]{0}', space=vmem, size = 0x10000, scoped, tag = 'input window, operand 7']
    loop: start=0, step=1, limit=10
    $region2: #{transformer_forward.5} parent=1 // loop_pre_header
      _
    $region3: #{transformer_forward.5} parent=1 // loop_header
      %s19 = sphi 0, %s23
      %p20 = scmp.ge.s32.totalorder %s19, 10
      %s26 = sphi 0, %s38
      %s27 = sphi 0, %s34
      %s28 = sphi 0, %s26
      %s29 = sphi 0, %s27
      %s30 = sphi 0, %s28
      %s31 = sphi 0, %s29
      %s41 = sphi 0, %s43
      %s44 = sphi 0, %s41
      %s45 = sphi 0, %s44
      %s61 = sphi 0, %s45
      %s65 = sphi 0, %s65
      %s67 = sphi 0, %s65
      %s68 = sphi 0, %s67
      %s82 = sphi 0, %s68
      %s86 = sphi 0, %s86
      %s88 = sphi 0, %s86
      %s89 = sphi 0, %s88
      %s103 = sphi 0, %s89
      %s107 = sphi 0, %s107
      %s109 = sphi 0, %s107
      %s110 = sphi 0, %s109
      %s124 = sphi 0, %s110
      %s128 = sphi 0, %s128
      %s130 = sphi 0, %s128
      %s131 = sphi 0, %s130
      %s145 = sphi 0, %s131
      %s149 = sphi 0, %s149
      %s151 = sphi 0, %s149
      %s152 = sphi 0, %s151
      %s166 = sphi 0, %s152
      %s170 = sphi 0, %s170
      %s172 = sphi 0, %s170
      %s173 = sphi 0, %s172
      %s187 = sphi 0, %s173
      %s193 = sphi 0, %s195
      %s196 = sphi 0, %s193
      %s197 = sphi 0, %s196
      %s213 = sphi 0, %s197
      %s219 = sphi 0, %s221
      %s222 = sphi 0, %s219
      %s223 = sphi 0, %s222
      %s239 = sphi 0, %s223
      %s245 = sphi 0, %s247
      %s248 = sphi 0, %s245
      %s249 = sphi 0, %s248
      %s265 = sphi 0, %s249
      %s269 = sphi 0, %s269
      %s271 = sphi 0, %s269
      %s272 = sphi 0, %s271
      %s286 = sphi 0, %s272
      %s290 = sphi 0, %s290
      %s292 = sphi 0, %s290
      %s293 = sphi 0, %s292
      %s307 = sphi 0, %s293
      %s311 = sphi 0, %s311
      %s313 = sphi 0, %s311
      %s314 = sphi 0, %s313
      %s328 = sphi 0, %s314
      %s334 = sphi 0, %s336
      %s337 = sphi 0, %s334
      %s338 = sphi 0, %s337
      %s354 = sphi 0, %s338
    $region4: #{transformer_forward.5} parent=1 // loop_header_branch
      %22 = sbr.rel (%p20) target = $region8
    $region5: #{transformer_forward.5} parent=1 // loop_body
      %s24 = ssub.s32 %s19, 1
      %s25 = ssub.s32 %s19, 2
      %s32 = sadd.s32 1, %s27
      %p33 = scmp.ge.s32.totalorder %s32, 4
      %s34 = scalar_select %p33, 0, %s32
      %s35 = sadd.s32 1, %s26
      %s36 = scalar_select %p33, %s35, %s26
      %p37 = scmp.ge.s32.totalorder %s36, 2
      %s38 = scalar_select %p37, 0, %s36
      %s39 = ssub.s32 %s26, %s38
      %p40 = scmp.eq.s32.totalorder %s39, 0
      %s42 = sadd.s32 %s41, 1
      %s43 = scalar_select %p40, %s41, %s42
      %p46 = pneg %p40
      %p47 = scmp.eq.s32.totalorder %s19, 7
      %p48 = por %p46, %p47
      %p49 = scmp.ne.s32.totalorder %s41, %s44
      %p50 = scmp.eq.s32.totalorder %s19, 0
      %p51 = por %p49, %p50
      %p52 = scmp.ne.s32.totalorder %s41, %s44
      %p53 = scmp.eq.s32.totalorder %s24, 7
      %p54 = por %p52, %p53
      %p55 = scmp.ne.s32.totalorder %s44, %s45
      %p56 = scmp.eq.s32.totalorder %s24, 0
      %p57 = por %p55, %p56
      %p58 = scmp.ne.s32.totalorder %s44, %s45
      %p59 = scmp.eq.s32.totalorder %s25, 7
      %p60 = por %p58, %p59
      %p62 = scmp.ne.s32.totalorder %s45, %s61
      %p63 = scmp.eq.s32.totalorder %s25, 0
      %p64 = por %p62, %p63
      %s66 = sadd.s32 %s65, 1
      %p69 = scmp.eq.s32.totalorder %s19, 7
      %p70 = scmp.ne.s32.totalorder %s65, %s67
      %p71 = scmp.eq.s32.totalorder %s19, 0
      %p72 = por %p70, %p71
      %p73 = scmp.ne.s32.totalorder %s65, %s67
      %p74 = scmp.eq.s32.totalorder %s24, 7
      %p75 = por %p73, %p74
      %p76 = scmp.ne.s32.totalorder %s67, %s68
      %p77 = scmp.eq.s32.totalorder %s24, 0
      %p78 = por %p76, %p77
      %p79 = scmp.ne.s32.totalorder %s67, %s68
      %p80 = scmp.eq.s32.totalorder %s25, 7
      %p81 = por %p79, %p80
      %p83 = scmp.ne.s32.totalorder %s68, %s82
      %p84 = scmp.eq.s32.totalorder %s25, 0
      %p85 = por %p83, %p84
      %s87 = sadd.s32 %s86, 1
      %p90 = scmp.eq.s32.totalorder %s19, 7
      %p91 = scmp.ne.s32.totalorder %s86, %s88
      %p92 = scmp.eq.s32.totalorder %s19, 0
      %p93 = por %p91, %p92
      %p94 = scmp.ne.s32.totalorder %s86, %s88
      %p95 = scmp.eq.s32.totalorder %s24, 7
      %p96 = por %p94, %p95
      %p97 = scmp.ne.s32.totalorder %s88, %s89
      %p98 = scmp.eq.s32.totalorder %s24, 0
      %p99 = por %p97, %p98
      %p100 = scmp.ne.s32.totalorder %s88, %s89
      %p101 = scmp.eq.s32.totalorder %s25, 7
      %p102 = por %p100, %p101
      %p104 = scmp.ne.s32.totalorder %s89, %s103
      %p105 = scmp.eq.s32.totalorder %s25, 0
      %p106 = por %p104, %p105
      %s108 = sadd.s32 %s107, 1
      %p111 = scmp.eq.s32.totalorder %s19, 7
      %p112 = scmp.ne.s32.totalorder %s107, %s109
      %p113 = scmp.eq.s32.totalorder %s19, 0
      %p114 = por %p112, %p113
      %p115 = scmp.ne.s32.totalorder %s107, %s109
      %p116 = scmp.eq.s32.totalorder %s24, 7
      %p117 = por %p115, %p116
      %p118 = scmp.ne.s32.totalorder %s109, %s110
      %p119 = scmp.eq.s32.totalorder %s24, 0
      %p120 = por %p118, %p119
      %p121 = scmp.ne.s32.totalorder %s109, %s110
      %p122 = scmp.eq.s32.totalorder %s25, 7
      %p123 = por %p121, %p122
      %p125 = scmp.ne.s32.totalorder %s110, %s124
      %p126 = scmp.eq.s32.totalorder %s25, 0
      %p127 = por %p125, %p126
      %s129 = sadd.s32 %s128, 1
      %p132 = scmp.eq.s32.totalorder %s19, 7
      %p133 = scmp.ne.s32.totalorder %s128, %s130
      %p134 = scmp.eq.s32.totalorder %s19, 0
      %p135 = por %p133, %p134
      %p136 = scmp.ne.s32.totalorder %s128, %s130
      %p137 = scmp.eq.s32.totalorder %s24, 7
      %p138 = por %p136, %p137
      %p139 = scmp.ne.s32.totalorder %s130, %s131
      %p140 = scmp.eq.s32.totalorder %s24, 0
      %p141 = por %p139, %p140
      %p142 = scmp.ne.s32.totalorder %s130, %s131
      %p143 = scmp.eq.s32.totalorder %s25, 7
      %p144 = por %p142, %p143
      %p146 = scmp.ne.s32.totalorder %s131, %s145
      %p147 = scmp.eq.s32.totalorder %s25, 0
      %p148 = por %p146, %p147
      %s150 = sadd.s32 %s149, 1
      %p153 = scmp.eq.s32.totalorder %s19, 7
      %p154 = scmp.ne.s32.totalorder %s149, %s151
      %p155 = scmp.eq.s32.totalorder %s19, 0
      %p156 = por %p154, %p155
      %p157 = scmp.ne.s32.totalorder %s149, %s151
      %p158 = scmp.eq.s32.totalorder %s24, 7
      %p159 = por %p157, %p158
      %p160 = scmp.ne.s32.totalorder %s151, %s152
      %p161 = scmp.eq.s32.totalorder %s24, 0
      %p162 = por %p160, %p161
      %p163 = scmp.ne.s32.totalorder %s151, %s152
      %p164 = scmp.eq.s32.totalorder %s25, 7
      %p165 = por %p163, %p164
      %p167 = scmp.ne.s32.totalorder %s152, %s166
      %p168 = scmp.eq.s32.totalorder %s25, 0
      %p169 = por %p167, %p168
      %s171 = sadd.s32 %s170, 1
      %p174 = scmp.eq.s32.totalorder %s19, 7
      %p175 = scmp.ne.s32.totalorder %s170, %s172
      %p176 = scmp.eq.s32.totalorder %s19, 0
      %p177 = por %p175, %p176
      %p178 = scmp.ne.s32.totalorder %s170, %s172
      %p179 = scmp.eq.s32.totalorder %s24, 7
      %p180 = por %p178, %p179
      %p181 = scmp.ne.s32.totalorder %s172, %s173
      %p182 = scmp.eq.s32.totalorder %s24, 0
      %p183 = por %p181, %p182
      %p184 = scmp.ne.s32.totalorder %s172, %s173
      %p185 = scmp.eq.s32.totalorder %s25, 7
      %p186 = por %p184, %p185
      %p188 = scmp.ne.s32.totalorder %s173, %s187
      %p189 = scmp.eq.s32.totalorder %s25, 0
      %p190 = por %p188, %p189
      %s191 = ssub.s32 %s27, %s34
      %p192 = scmp.eq.s32.totalorder %s191, 0
      %s194 = sadd.s32 %s193, 1
      %s195 = scalar_select %p192, %s193, %s194
      %p198 = pneg %p192
      %p199 = scmp.eq.s32.totalorder %s19, 7
      %p200 = por %p198, %p199
      %p201 = scmp.ne.s32.totalorder %s193, %s196
      %p202 = scmp.eq.s32.totalorder %s19, 0
      %p203 = por %p201, %p202
      %p204 = scmp.ne.s32.totalorder %s193, %s196
      %p205 = scmp.eq.s32.totalorder %s24, 7
      %p206 = por %p204, %p205
      %p207 = scmp.ne.s32.totalorder %s196, %s197
      %p208 = scmp.eq.s32.totalorder %s24, 0
      %p209 = por %p207, %p208
      %p210 = scmp.ne.s32.totalorder %s196, %s197
      %p211 = scmp.eq.s32.totalorder %s25, 7
      %p212 = por %p210, %p211
      %p214 = scmp.ne.s32.totalorder %s197, %s213
      %p215 = scmp.eq.s32.totalorder %s25, 0
      %p216 = por %p214, %p215
      %s217 = ssub.s32 %s27, %s34
      %p218 = scmp.eq.s32.totalorder %s217, 0
      %s220 = sadd.s32 %s219, 1
      %s221 = scalar_select %p218, %s219, %s220
      %p224 = pneg %p218
      %p225 = scmp.eq.s32.totalorder %s19, 7
      %p226 = por %p224, %p225
      %p227 = scmp.ne.s32.totalorder %s219, %s222
      %p228 = scmp.eq.s32.totalorder %s19, 0
      %p229 = por %p227, %p228
      %p230 = scmp.ne.s32.totalorder %s219, %s222
      %p231 = scmp.eq.s32.totalorder %s24, 7
      %p232 = por %p230, %p231
      %p233 = scmp.ne.s32.totalorder %s222, %s223
      %p234 = scmp.eq.s32.totalorder %s24, 0
      %p235 = por %p233, %p234
      %p236 = scmp.ne.s32.totalorder %s222, %s223
      %p237 = scmp.eq.s32.totalorder %s25, 7
      %p238 = por %p236, %p237
      %p240 = scmp.ne.s32.totalorder %s223, %s239
      %p241 = scmp.eq.s32.totalorder %s25, 0
      %p242 = por %p240, %p241
      %s243 = ssub.s32 %s27, %s34
      %p244 = scmp.eq.s32.totalorder %s243, 0
      %s246 = sadd.s32 %s245, 1
      %s247 = scalar_select %p244, %s245, %s246
      %p250 = pneg %p244
      %p251 = scmp.eq.s32.totalorder %s19, 7
      %p252 = por %p250, %p251
      %p253 = scmp.ne.s32.totalorder %s245, %s248
      %p254 = scmp.eq.s32.totalorder %s19, 0
      %p255 = por %p253, %p254
      %p256 = scmp.ne.s32.totalorder %s245, %s248
      %p257 = scmp.eq.s32.totalorder %s24, 7
      %p258 = por %p256, %p257
      %p259 = scmp.ne.s32.totalorder %s248, %s249
      %p260 = scmp.eq.s32.totalorder %s24, 0
      %p261 = por %p259, %p260
      %p262 = scmp.ne.s32.totalorder %s248, %s249
      %p263 = scmp.eq.s32.totalorder %s25, 7
      %p264 = por %p262, %p263
      %p266 = scmp.ne.s32.totalorder %s249, %s265
      %p267 = scmp.eq.s32.totalorder %s25, 0
      %p268 = por %p266, %p267
      %s270 = sadd.s32 %s269, 1
      %p273 = scmp.eq.s32.totalorder %s19, 7
      %p274 = scmp.ne.s32.totalorder %s269, %s271
      %p275 = scmp.eq.s32.totalorder %s19, 0
      %p276 = por %p274, %p275
      %p277 = scmp.ne.s32.totalorder %s269, %s271
      %p278 = scmp.eq.s32.totalorder %s24, 7
      %p279 = por %p277, %p278
      %p280 = scmp.ne.s32.totalorder %s271, %s272
      %p281 = scmp.eq.s32.totalorder %s24, 0
      %p282 = por %p280, %p281
      %p283 = scmp.ne.s32.totalorder %s271, %s272
      %p284 = scmp.eq.s32.totalorder %s25, 7
      %p285 = por %p283, %p284
      %p287 = scmp.ne.s32.totalorder %s272, %s286
      %p288 = scmp.eq.s32.totalorder %s25, 0
      %p289 = por %p287, %p288
      %s291 = sadd.s32 %s290, 1
      %p294 = scmp.eq.s32.totalorder %s19, 7
      %p295 = scmp.ne.s32.totalorder %s290, %s292
      %p296 = scmp.eq.s32.totalorder %s19, 0
      %p297 = por %p295, %p296
      %p298 = scmp.ne.s32.totalorder %s290, %s292
      %p299 = scmp.eq.s32.totalorder %s24, 7
      %p300 = por %p298, %p299
      %p301 = scmp.ne.s32.totalorder %s292, %s293
      %p302 = scmp.eq.s32.totalorder %s24, 0
      %p303 = por %p301, %p302
      %p304 = scmp.ne.s32.totalorder %s292, %s293
      %p305 = scmp.eq.s32.totalorder %s25, 7
      %p306 = por %p304, %p305
      %p308 = scmp.ne.s32.totalorder %s293, %s307
      %p309 = scmp.eq.s32.totalorder %s25, 0
      %p310 = por %p308, %p309
      %s312 = sadd.s32 %s311, 1
      %p315 = scmp.eq.s32.totalorder %s19, 7
      %p316 = scmp.ne.s32.totalorder %s311, %s313
      %p317 = scmp.eq.s32.totalorder %s19, 0
      %p318 = por %p316, %p317
      %p319 = scmp.ne.s32.totalorder %s311, %s313
      %p320 = scmp.eq.s32.totalorder %s24, 7
      %p321 = por %p319, %p320
      %p322 = scmp.ne.s32.totalorder %s313, %s314
      %p323 = scmp.eq.s32.totalorder %s24, 0
      %p324 = por %p322, %p323
      %p325 = scmp.ne.s32.totalorder %s313, %s314
      %p326 = scmp.eq.s32.totalorder %s25, 7
      %p327 = por %p325, %p326
      %p329 = scmp.ne.s32.totalorder %s314, %s328
      %p330 = scmp.eq.s32.totalorder %s25, 0
      %p331 = por %p329, %p330
      %s332 = ssub.s32 %s26, %s38
      %p333 = scmp.eq.s32.totalorder %s332, 0
      %s335 = sadd.s32 %s334, 1
      %s336 = scalar_select %p333, %s334, %s335
      %p339 = pneg %p333
      %p340 = scmp.eq.s32.totalorder %s19, 7
      %p341 = por %p339, %p340
      %p342 = scmp.ne.s32.totalorder %s334, %s337
      %p343 = scmp.eq.s32.totalorder %s19, 0
      %p344 = por %p342, %p343
      %p345 = scmp.ne.s32.totalorder %s334, %s337
      %p346 = scmp.eq.s32.totalorder %s24, 7
      %p347 = por %p345, %p346
      %p348 = scmp.ne.s32.totalorder %s337, %s338
      %p349 = scmp.eq.s32.totalorder %s24, 0
      %p350 = por %p348, %p349
      %p351 = scmp.ne.s32.totalorder %s337, %s338
      %p352 = scmp.eq.s32.totalorder %s25, 7
      %p353 = por %p351, %p352
      %p355 = scmp.ne.s32.totalorder %s338, %s354
      %p356 = scmp.eq.s32.totalorder %s25, 0
      %p357 = por %p355, %p356
      %p358 = scmp.le.s32.totalorder 1, %s19
      %p359 = scmp.lt.s32.totalorder %s19, 9
      %p360 = pnand %p358, %p359
      %p361 = pneg %p360
      // Predicated region
      $region9: #{transformer_forward.5} parent=5 // pred_check
        _
      $region10: #{transformer_forward.5} parent=5 // pred_check_branch
        %363 = sbr.rel (%p360) target = $region12
      $region11: #{transformer_forward.5} parent=5 // pred_region
        %s364 = ssub.s32 %s19, 1
        // Predicated region
        $region13: #{transformer_forward.5} parent=11 // pred_check
          %p365 = pneg %p78
        $region14: #{transformer_forward.5} parent=11 // pred_check_branch
          %367 = sbr.rel (%p365) target = $region16
        $region15: #{transformer_forward.5} parent=11 // pred_region
          _
        $region16: #{transformer_forward.5} parent=11 // pred_fallthru
          _
        // Predicated region
        $region17: #{transformer_forward.5} parent=11 // pred_check
          %p368 = pneg %p99
        $region18: #{transformer_forward.5} parent=11 // pred_check_branch
          %370 = sbr.rel (%p368) target = $region20
        $region19: #{transformer_forward.5} parent=11 // pred_region
          _
        $region20: #{transformer_forward.5} parent=11 // pred_fallthru
          _
        // Predicated region
        $region21: #{transformer_forward.5} parent=11 // pred_check
          %p371 = pneg %p120
        $region22: #{transformer_forward.5} parent=11 // pred_check_branch
          %373 = sbr.rel (%p371) target = $region24
        $region23: #{transformer_forward.5} parent=11 // pred_region
          _
        $region24: #{transformer_forward.5} parent=11 // pred_fallthru
          _
        // Predicated region
        $region25: #{transformer_forward.5} parent=11 // pred_check
          %p374 = pneg %p141
        $region26: #{transformer_forward.5} parent=11 // pred_check_branch
          %376 = sbr.rel (%p374) target = $region28
        $region27: #{transformer_forward.5} parent=11 // pred_region
          _
        $region28: #{transformer_forward.5} parent=11 // pred_fallthru
          _
        // Predicated region
        $region29: #{transformer_forward.5} parent=11 // pred_check
          %p377 = pneg %p162
        $region30: #{transformer_forward.5} parent=11 // pred_check_branch
          %379 = sbr.rel (%p377) target = $region32
        $region31: #{transformer_forward.5} parent=11 // pred_region
          _
        $region32: #{transformer_forward.5} parent=11 // pred_fallthru
          _
        // Predicated region
        $region33: #{transformer_forward.5} parent=11 // pred_check
          %p380 = pneg %p183
        $region34: #{transformer_forward.5} parent=11 // pred_check_branch
          %382 = sbr.rel (%p380) target = $region36
        $region35: #{transformer_forward.5} parent=11 // pred_region
          _
        $region36: #{transformer_forward.5} parent=11 // pred_fallthru
          _
        // Predicated region
        $region37: #{transformer_forward.5} parent=11 // pred_check
          %p383 = pneg %p282
        $region38: #{transformer_forward.5} parent=11 // pred_check_branch
          %385 = sbr.rel (%p383) target = $region40
        $region39: #{transformer_forward.5} parent=11 // pred_region
          _
        $region40: #{transformer_forward.5} parent=11 // pred_fallthru
          _
        // Predicated region
        $region41: #{transformer_forward.5} parent=11 // pred_check
          %p386 = pneg %p303
        $region42: #{transformer_forward.5} parent=11 // pred_check_branch
          %388 = sbr.rel (%p386) target = $region44
        $region43: #{transformer_forward.5} parent=11 // pred_region
          _
        $region44: #{transformer_forward.5} parent=11 // pred_fallthru
          _
        // Predicated region
        $region45: #{transformer_forward.5} parent=11 // pred_check
          %p389 = pneg %p324
        $region46: #{transformer_forward.5} parent=11 // pred_check_branch
          %391 = sbr.rel (%p389) target = $region48
        $region47: #{transformer_forward.5} parent=11 // pred_region
          _
        $region48: #{transformer_forward.5} parent=11 // pred_fallthru
          _
      $region12: #{transformer_forward.5} parent=5 // pred_fallthru
        _
      %p392 = scmp.lt.s32.totalorder %s19, 8
      // Predicated region
      $region49: #{transformer_forward.5} parent=5 // pred_check
        %p393 = pneg %p392
      $region50: #{transformer_forward.5} parent=5 // pred_check_branch
        %395 = sbr.rel (%p393) target = $region52
      $region51: #{transformer_forward.5} parent=5 // pred_region
        // Predicated region
        $region53: #{transformer_forward.5} parent=51 // pred_check
          %p396 = pneg %p51
        $region54: #{transformer_forward.5} parent=51 // pred_check_branch
          %398 = sbr.rel (%p396) target = $region56
        $region55: #{transformer_forward.5} parent=51 // pred_region
          %p399 = scmp.lt.s32.totalorder %s26, 1
          %s400 = scalar_select %p399, %s26, 1
          %s401 = smul.addr %s400, 4
          %s402 = scalar_lea.vmem %s0, %s401
        $region56: #{transformer_forward.5} parent=51 // pred_fallthru
          _
        // Predicated region
        $region57: #{transformer_forward.5} parent=51 // pred_check
          %p403 = pneg %p203
        $region58: #{transformer_forward.5} parent=51 // pred_check_branch
          %405 = sbr.rel (%p403) target = $region60
        $region59: #{transformer_forward.5} parent=51 // pred_region
          %s406 = sand.u32 %s193, 1
          %s407 = sand.u32 %s193, 1
          %s408 = smul.addr %s407, 64
          %s409 = scalar_lea.vmem [#allocation4], %s408
          %s410 = smul.u32 4, %s27
          %s411 = smul.addr %s410, 4
          %s412 = scalar_lea.vmem %s7, %s411
          // Predicated region
          $region61: #{transformer_forward.5} parent=59 // pred_check
            _
          $region62: #{transformer_forward.5} parent=59 // pred_check_branch
            %414 = sbr.rel (0) target = $region64
          $region63: #{transformer_forward.5} parent=59 // pred_region
            // Predicated region
            $region65: #{transformer_forward.5} parent=63 // pred_check
              _
            $region66: #{transformer_forward.5} parent=63 // pred_check_branch
              %416 = sbr.rel (0) target = $region68
            $region67: #{transformer_forward.5} parent=63 // pred_region
              loop: start=0, step=1, limit=1
              $region69: #{transformer_forward.5} parent=67 // loop_pre_header
                _
              $region70: #{transformer_forward.5} parent=67 // loop_header
                %s418 = sphi 0, %s422
                %p419 = scmp.ge.s32.totalorder %s418, 1
                %s423 = sphi %s412, %s412
                %s424 = sphi %s409, %s409
              $region71: #{transformer_forward.5} parent=67 // loop_header_branch
                %421 = sbr.rel (%p419) target = $region75
              $region72: #{transformer_forward.5} parent=67 // loop_body
                %v425 = vld [vmem:[%s423] sm:$0xff]
                %426 = vst [vmem:[%s424] sm:$0xff] %v425
                %v427 = vld [vmem:[%s423 + $0x8] sm:$0xff]
                %428 = vst [vmem:[%s424 + $0x8] sm:$0xff] %v427
                %v429 = vld [vmem:[%s423 + $0x40] sm:$0xff]
                %430 = vst [vmem:[%s424 + $0x10] sm:$0xff] %v429
                %v431 = vld [vmem:[%s423 + $0x48] sm:$0xff]
                %432 = vst [vmem:[%s424 + $0x18] sm:$0xff] %v431
                %v433 = vld [vmem:[%s423 + $0x80] sm:$0xff]
                %434 = vst [vmem:[%s424 + $0x20] sm:$0xff] %v433
                %v435 = vld [vmem:[%s423 + $0x88] sm:$0xff]
                %436 = vst [vmem:[%s424 + $0x28] sm:$0xff] %v435
                %v437 = vld [vmem:[%s423 + $0xc0] sm:$0xff]
                %438 = vst [vmem:[%s424 + $0x30] sm:$0xff] %v437
                %v439 = vld [vmem:[%s423 + $0xc8] sm:$0xff]
                %440 = vst [vmem:[%s424 + $0x38] sm:$0xff] %v439
              $region73: #{transformer_forward.5} parent=67 // loop_footer
                %s422 = sadd.s32 1, %s418
              $region74: #{transformer_forward.5} parent=67 // loop_footer_branch
                %417 = sbr.rel target = $region70
              $region75: #{transformer_forward.5} parent=67 // loop_exit
                _
            $region68: #{transformer_forward.5} parent=63 // pred_fallthru
              _
            // Predicated region
            $region76: #{transformer_forward.5} parent=63 // pred_check
              _
            $region77: #{transformer_forward.5} parent=63 // pred_check_branch
              %442 = sbr.rel target = $region79
            $region78: #{transformer_forward.5} parent=63 // pred_region
              _
            $region79: #{transformer_forward.5} parent=63 // pred_fallthru
              _
          $region64: #{transformer_forward.5} parent=59 // pred_fallthru
            _
          %443 = vnop
        $region60: #{transformer_forward.5} parent=51 // pred_fallthru
          _
        // Predicated region
        $region80: #{transformer_forward.5} parent=51 // pred_check
          %p444 = pneg %p229
        $region81: #{transformer_forward.5} parent=51 // pred_check_branch
          %446 = sbr.rel (%p444) target = $region83
        $region82: #{transformer_forward.5} parent=51 // pred_region
          %s447 = smul.u32 4, %s27
          %p448 = scmp.lt.s32.totalorder %s447, 15
          %s449 = scalar_select %p448, %s447, 15
          %s450 = scalar_lea.vmem %s8, %s449
          %s451 = smul.u32 4, %s27
        $region83: #{transformer_forward.5} parent=51 // pred_fallthru
          _
        // Predicated region
        $region84: #{transformer_forward.5} parent=51 // pred_check
          %p452 = pneg %p255
        $region85: #{transformer_forward.5} parent=51 // pred_check_branch
          %454 = sbr.rel (%p452) target = $region87
        $region86: #{transformer_forward.5} parent=51 // pred_region
          %s455 = smul.u32 64, %s27
          %p456 = scmp.lt.s32.totalorder %s455, 255
          %s457 = scalar_select %p456, %s455, 255
          %s458 = smul.addr %s457, 4
          %s459 = scalar_lea.vmem %s9, %s458
          %s460 = smul.u32 64, %s27
        $region87: #{transformer_forward.5} parent=51 // pred_fallthru
          _
      $region52: #{transformer_forward.5} parent=5 // pred_fallthru
        _
      %p461 = scmp.le.s32.totalorder 1, %s19
      %p462 = scmp.lt.s32.totalorder %s19, 9
      %p463 = pnand %p461, %p462
      %p464 = pneg %p463
      // Predicated region
      $region88: #{transformer_forward.5} parent=5 // pred_check
        _
      $region89: #{transformer_forward.5} parent=5 // pred_check_branch
        %466 = sbr.rel (%p463) target = $region91
      $region90: #{transformer_forward.5} parent=5 // pred_region
        %s467 = ssub.s32 %s19, 1
        %s468 = sand.u32 %s196, 1
        %s469 = sand.u32 %s196, 1
        %s470 = smul.addr %s469, 64
        %s471 = scalar_lea.vmem [#allocation4], %s470
        // Predicated region
        $region92: #{transformer_forward.5} parent=90 // pred_check
          %p472 = pneg %p209
        $region93: #{transformer_forward.5} parent=90 // pred_check_branch
          %474 = sbr.rel (%p472) target = $region95
        $region94: #{transformer_forward.5} parent=90 // pred_region
          _
        $region95: #{transformer_forward.5} parent=90 // pred_fallthru
          _
        %p475 = scmp.lt.s32.totalorder %s28, 1
        %s476 = scalar_select %p475, %s28, 1
        %s477 = smul.addr %s476, 4
        %s478 = scalar_lea.vmem %s0, %s477
        %p479 = pneg %p57
        %p480 = pneg %p54
        %p481 = pneg %p78
        %p482 = pneg %p75
        %p483 = pneg %p99
        %p484 = pneg %p96
        %p485 = pneg %p120
        %p486 = pneg %p117
        %p487 = pneg %p141
        %p488 = pneg %p138
        %p489 = pneg %p162
        %p490 = pneg %p159
        %p491 = pneg %p183
        %p492 = pneg %p180
        %s493 = sand.u32 %s196, 1
        %s494 = sand.u32 %s196, 1
        %s495 = smul.addr %s494, 64
        %s496 = scalar_lea.vmem [#allocation4], %s495
        %p497 = pneg %p209
        %p498 = pneg %p206
        %s499 = smul.u32 4, %s29
        %p500 = scmp.lt.s32.totalorder %s499, 15
        %s501 = scalar_select %p500, %s499, 15
        %s502 = scalar_lea.vmem %s8, %s501
        %p503 = pneg %p235
        %p504 = pneg %p232
        %s505 = smul.u32 64, %s29
        %p506 = scmp.lt.s32.totalorder %s505, 255
        %s507 = scalar_select %p506, %s505, 255
        %s508 = smul.addr %s507, 4
        %s509 = scalar_lea.vmem %s9, %s508
        %p510 = pneg %p261
        %p511 = pneg %p258
        %p512 = pneg %p282
        %p513 = pneg %p279
        %p514 = pneg %p303
        %p515 = pneg %p300
        %p516 = pneg %p324
        %p517 = pneg %p321
        %p518 = pneg %p350
        %p519 = pneg %p347
        %p520 = scmp.lt.s32.totalorder %s28, 1
        %s521 = scalar_select %p520, %s28, 1
        %s522 = smul.addr %s521, 4
        %s523 = scalar_lea.vmem %s13, %s522
        %p524 = scmp.lt.s32.totalorder %s28, 1
        %s525 = scalar_select %p524, %s28, 1
        %s526 = smul.addr %s525, 4
        %s527 = scalar_lea.vmem %s0, %s526
        %s528 = smul.u32 4, %s29
        %s529 = smul.u32 4, %s29
        %p530 = scmp.lt.s32.totalorder %s529, 15
        %s531 = scalar_select %p530, %s529, 15
        %s532 = scalar_lea.vmem %s8, %s531
        %s533 = smul.u32 4, %s29
        %s534 = smul.u32 64, %s29
        %p535 = scmp.lt.s32.totalorder %s534, 255
        %s536 = scalar_select %p535, %s534, 255
        %s537 = smul.addr %s536, 4
        %s538 = scalar_lea.vmem %s9, %s537
        %s539 = smul.u32 64, %s29
        %p540 = scmp.lt.s32.totalorder %s28, 1
        %s541 = scalar_select %p540, %s28, 1
        %s542 = smul.addr %s541, 4
        %s543 = scalar_lea.vmem %s13, %s542
        %p545 = scmp.eq.s32.totalorder %s29, 0
        // Predicated region
        $region96: #{transformer_forward.5} parent=90 // pred_check
          %p546 = pneg %p545
        $region97: #{transformer_forward.5} parent=90 // pred_check_branch
          %548 = sbr.rel (%p546) target = $region99
        $region98: #{transformer_forward.5} parent=90 // pred_region
          %v549 = vld [vmem:[%s527] sm:$0xf]
          %v550 = vunpack.c.l.bf16 %v549
          %v551 = vld [vmem:[%s1] sm:$0xf]
          %v552 = vld [vmem:[%s1 + $0x4] sm:$0xf]
          %v553 = vld [vmem:[%s1 + $0x8] sm:$0xf]
          %v554 = vld [vmem:[%s1 + $0xc] sm:$0xf]
          %v555 = vld [vmem:[%s2] sm:$0x1]
          %v556 = vld [vmem:[%s3] sm:$0xf]
          %v557 = vld [vmem:[%s3 + $0x4] sm:$0xf]
          %v558 = vld [vmem:[%s3 + $0x8] sm:$0xf]
          %v559 = vld [vmem:[%s3 + $0xc] sm:$0xf]
          %v560 = vld [vmem:[%s4] sm:$0x1]
          %v562 = vlaneseq
          %v563 = vshrl.u32 %v562, 7
          %v564 = vsub.s32 0, %v563
          %v565 = vrot.slane %v555, %v564
          %v571 = vunpack.c.l.b16 %v551
          %v572 = vunpack.c.l.b16 %v552
          %v573 = vunpack.c.l.b16 %v553
          %v574 = vunpack.c.l.b16 %v554
          %v575 = vpack.c.b16 %v572, %v571
          %v576 = vpack.c.b16 %v574, %v573
          %vm579 = vcmask 261120
          %v581 = vsel %vm579, %v549, 0
          %583 = vmatprep.subr.bf16.mxu0 0
          %584 = vmatpush1.bf16.msra.mxu0 %v575
          %585 = vmatprep.subr.bf16.mxu0 0
          %586 = vmatpush1.bf16.msra.mxu0 %v576
          %587 = vmatprep.subr.bf16.mxu0 0
          %588 = vmatpush1.bf16.msra.mxu0 0
          %589 = vmatprep.subr.bf16.mxu0 0
          %590 = vmatpush1.bf16.msra.mxu0 0
          %591 = vmatprep.subr.bf16.mxu0 0
          %592 = vmatpush1.bf16.msra.mxu0 0
          %593 = vmatprep.subr.bf16.mxu0 0
          %594 = vmatpush1.bf16.msra.mxu0 0
          %595 = vmatprep.subr.bf16.mxu0 0
          %596 = vmatpush1.bf16.msra.mxu0 0
          %597 = vmatprep.subr.bf16.mxu0 0
          %598 = vmatpush1.bf16.msra.mxu0 0
          %599 = vmatprep.subr.bf16.mxu0 0
          %600 = vmatpush1.bf16.msra.mxu0 0
          %601 = vmatprep.subr.bf16.mxu0 0
          %602 = vmatpush1.bf16.msra.mxu0 0
          %603 = vmatprep.subr.bf16.mxu0 0
          %604 = vmatpush1.bf16.msra.mxu0 0
          %605 = vmatprep.subr.bf16.mxu0 0
          %606 = vmatpush1.bf16.msra.mxu0 0
          %607 = vmatprep.subr.bf16.mxu0 0
          %608 = vmatpush1.bf16.msra.mxu0 0
          %609 = vmatprep.subr.bf16.mxu0 0
          %610 = vmatpush1.bf16.msra.mxu0 0
          %611 = vmatprep.subr.bf16.mxu0 0
          %612 = vmatpush1.bf16.msra.mxu0 0
          %613 = vmatprep.subr.bf16.mxu0 0
          %614 = vmatpush1.bf16.msra.mxu0 0
          %615 = vmatprep.mubr.bf16.mxu0 0
          %616 = vmatmul.mubr.bf16.gmra.mrb[0].mxu0 %v581
          %v617 = vpop.f32.mrb[0].mxu0
          %v618 = vadd.f32 %v565, %v617
          %v619 = vpop.f32.mrb[0].mxu0
          %v620 = vpop.f32.mrb[0].mxu0
          %v621 = vpop.f32.mrb[0].mxu0
          %622 = vdwg.mxu0
          %v623 = vpack.c.bf16 %v618, %v618
          %625 = vrot.lane.b32.xlu0 %v623, 96
          %v626 = vpop.permute.xlu0 %625
          %vm627 = vcmask 130048
          %v629 = vsel %vm627, %v623, 0
          %v632 = vsel %vm627, %v626, 0
          %634 = vmatprep.subr.bf16.mxu0 0
          %635 = vmatpush1.bf16.xpose.msra.mxu0 %v632
          %636 = vmatprep.subr.bf16.mxu0 0
          %637 = vmatpush1.bf16.xpose.msra.mxu0 0
          %638 = vmatprep.subr.bf16.mxu0 0
          %639 = vmatpush1.bf16.xpose.msra.mxu0 0
          %640 = vmatprep.subr.bf16.mxu0 0
          %641 = vmatpush1.bf16.xpose.msra.mxu0 0
          %642 = vmatprep.subr.bf16.mxu0 0
          %643 = vmatpush1.bf16.xpose.msra.mxu0 0
          %644 = vmatprep.subr.bf16.mxu0 0
          %645 = vmatpush1.bf16.xpose.msra.mxu0 0
          %646 = vmatprep.subr.bf16.mxu0 0
          %647 = vmatpush1.bf16.xpose.msra.mxu0 0
          %648 = vmatprep.subr.bf16.mxu0 0
          %649 = vmatpush1.bf16.xpose.msra.mxu0 0
          %650 = vmatprep.subr.bf16.mxu0 0
          %651 = vmatpush1.bf16.xpose.msra.mxu0 0
          %652 = vmatprep.subr.bf16.mxu0 0
          %653 = vmatpush1.bf16.xpose.msra.mxu0 0
          %654 = vmatprep.subr.bf16.mxu0 0
          %655 = vmatpush1.bf16.xpose.msra.mxu0 0
          %656 = vmatprep.subr.bf16.mxu0 0
          %657 = vmatpush1.bf16.xpose.msra.mxu0 0
          %658 = vmatprep.subr.bf16.mxu0 0
          %659 = vmatpush1.bf16.xpose.msra.mxu0 0
          %660 = vmatprep.subr.bf16.mxu0 0
          %661 = vmatpush1.bf16.xpose.msra.mxu0 0
          %662 = vmatprep.subr.bf16.mxu0 0
          %663 = vmatpush1.bf16.xpose.msra.mxu0 0
          %664 = vmatprep.subr.bf16.mxu0 0
          %665 = vmatpush1.bf16.xpose.msra.mxu0 0
          %666 = vmatprep.mubr.bf16.mxu0 0
          %667 = vmatmul.mubr.bf16.gmra.mrb[0].mxu0 %v629
          %v668 = vpop.f32.mrb[0].mxu0
          %v669 = vadd.f32 0.0, %v668
          %v670 = vpop.f32.mrb[0].mxu0
          %v671 = vpop.f32.mrb[0].mxu0
          %v672 = vpop.f32.mrb[0].mxu0
          %673 = vdwg.mxu0
          %v674 = vmul.f32 %v669, 0.25
          %vm675 = vcmask 64512
          %v676 = vsel %vm675, %v674, -inf
          %677 = vmax.xlane.f32.xlu0 %v676
          %v678 = vpop.xlane.xlu0 %677
          %v679 = vsub.f32 %v674, %v678
          %v680 = vmul.f32 %v679, 1.442695
          %v681 = vpow.pop %v680
          %v682 = vsel %vm675, %v681, 0.0
          %683 = vadd.xlane.f32.xlu0 %v682
          %v684 = vpop.xlane.xlu0 %683
          %v685 = vrcp.pop %v684
          %v686 = vmul.f32 %v681, %v685
          %v687 = vpack.c.bf16 %v686, %v686
          %688 = vrot.lane.b32.xlu0 %v623, 64
          %v689 = vpop.permute.xlu0 %688
          %v691 = vsel %vm675, %v687, 0
          %vm693 = vcmask 1043456
          %v695 = vsel %vm693, %v689, 0
          %697 = vmatprep.subr.bf16.mxu0 0
          %698 = vmatpush1.bf16.msra.mxu0 %v695
          %699 = vmatprep.subr.bf16.mxu0 0
          %700 = vmatpush1.bf16.msra.mxu0 0
          %701 = vmatprep.subr.bf16.mxu0 0
          %702 = vmatpush1.bf16.msra.mxu0 0
          %703 = vmatprep.subr.bf16.mxu0 0
          %704 = vmatpush1.bf16.msra.mxu0 0
          %705 = vmatprep.subr.bf16.mxu0 0
          %706 = vmatpush1.bf16.msra.mxu0 0
          %707 = vmatprep.subr.bf16.mxu0 0
          %708 = vmatpush1.bf16.msra.mxu0 0
          %709 = vmatprep.subr.bf16.mxu0 0
          %710 = vmatpush1.bf16.msra.mxu0 0
          %711 = vmatprep.subr.bf16.mxu0 0
          %712 = vmatpush1.bf16.msra.mxu0 0
          %713 = vmatprep.subr.bf16.mxu0 0
          %714 = vmatpush1.bf16.msra.mxu0 0
          %715 = vmatprep.subr.bf16.mxu0 0
          %716 = vmatpush1.bf16.msra.mxu0 0
          %717 = vmatprep.subr.bf16.mxu0 0
          %718 = vmatpush1.bf16.msra.mxu0 0
          %719 = vmatprep.subr.bf16.mxu0 0
          %720 = vmatpush1.bf16.msra.mxu0 0
          %721 = vmatprep.subr.bf16.mxu0 0
          %722 = vmatpush1.bf16.msra.mxu0 0
          %723 = vmatprep.subr.bf16.mxu0 0
          %724 = vmatpush1.bf16.msra.mxu0 0
          %725 = vmatprep.subr.bf16.mxu0 0
          %726 = vmatpush1.bf16.msra.mxu0 0
          %727 = vmatprep.subr.bf16.mxu0 0
          %728 = vmatpush1.bf16.msra.mxu0 0
          %729 = vmatprep.mubr.bf16.mxu0 0
          %730 = vmatmul.mubr.bf16.gmra.mrb[0].mxu0 %v691
          %v731 = vpop.f32.mrb[0].mxu0
          %v732 = vadd.f32 0.0, %v731
          %v733 = vpop.f32.mrb[0].mxu0
          %v734 = vpop.f32.mrb[0].mxu0
          %v735 = vpop.f32.mrb[0].mxu0
          %736 = vdwg.mxu0
          %737 = vrot.lane.b32.xlu0 %v623, 112
          %v738 = vpop.permute.xlu0 %737
          %739 = vrot.lane.b32.xlu0 %v623, 80
          %v740 = vpop.permute.xlu0 %739
          %v742 = vsel %vm627, %v738, 0
          %v745 = vsel %vm627, %v740, 0
          %747 = vmatprep.subr.bf16.mxu0 0
          %748 = vmatpush1.bf16.xpose.msra.mxu0 %v745
          %749 = vmatprep.subr.bf16.mxu0 0
          %750 = vmatpush1.bf16.xpose.msra.mxu0 0
          %751 = vmatprep.subr.bf16.mxu0 0
          %752 = vmatpush1.bf16.xpose.msra.mxu0 0
          %753 = vmatprep.subr.bf16.mxu0 0
          %754 = vmatpush1.bf16.xpose.msra.mxu0 0
          %755 = vmatprep.subr.bf16.mxu0 0
          %756 = vmatpush1.bf16.xpose.msra.mxu0 0
          %757 = vmatprep.subr.bf16.mxu0 0
          %758 = vmatpush1.bf16.xpose.msra.mxu0 0
          %759 = vmatprep.subr.bf16.mxu0 0
          %760 = vmatpush1.bf16.xpose.msra.mxu0 0
          %761 = vmatprep.subr.bf16.mxu0 0
          %762 = vmatpush1.bf16.xpose.msra.mxu0 0
          %763 = vmatprep.subr.bf16.mxu0 0
          %764 = vmatpush1.bf16.xpose.msra.mxu0 0
          %765 = vmatprep.subr.bf16.mxu0 0
          %766 = vmatpush1.bf16.xpose.msra.mxu0 0
          %767 = vmatprep.subr.bf16.mxu0 0
          %768 = vmatpush1.bf16.xpose.msra.mxu0 0
          %769 = vmatprep.subr.bf16.mxu0 0
          %770 = vmatpush1.bf16.xpose.msra.mxu0 0
          %771 = vmatprep.subr.bf16.mxu0 0
          %772 = vmatpush1.bf16.xpose.msra.mxu0 0
          %773 = vmatprep.subr.bf16.mxu0 0
          %774 = vmatpush1.bf16.xpose.msra.mxu0 0
          %775 = vmatprep.subr.bf16.mxu0 0
          %776 = vmatpush1.bf16.xpose.msra.mxu0 0
          %777 = vmatprep.subr.bf16.mxu0 0
          %778 = vmatpush1.bf16.xpose.msra.mxu0 0
          %779 = vmatprep.mubr.bf16.mxu0 0
          %780 = vmatmul.mubr.bf16.gmra.mrb[0].mxu0 %v742
          %v781 = vpop.f32.mrb[0].mxu0
          %v782 = vadd.f32 0.0, %v781
          %v783 = vpop.f32.mrb[0].mxu0
          %v784 = vpop.f32.mrb[0].mxu0
          %v785 = vpop.f32.mrb[0].mxu0
          %786 = vdwg.mxu0
          %v787 = vmul.f32 %v782, 0.25
          %v788 = vsel %vm675, %v787, -inf
          %789 = vmax.xlane.f32.xlu0 %v788
          %v790 = vpop.xlane.xlu0 %789
          %v791 = vsub.f32 %v787, %v790
          %v792 = vmul.f32 %v791, 1.442695
          %v793 = vpow.pop %v792
          %v794 = vsel %vm675, %v793, 0.0
          %795 = vadd.xlane.f32.xlu0 %v794
          %v796 = vpop.xlane.xlu0 %795
          %v797 = vrcp.pop %v796
          %v798 = vmul.f32 %v793, %v797
          %v799 = vpack.c.bf16 %v798, %v798
          %800 = vrot.lane.b32.xlu0 %v623, 48
          %v801 = vpop.permute.xlu0 %800
          %v803 = vsel %vm675, %v799, 0
          %v806 = vsel %vm693, %v801, 0
          %808 = vmatprep.subr.bf16.mxu0 0
          %809 = vmatpush1.bf16.msra.mxu0 %v806
          %810 = vmatprep.subr.bf16.mxu0 0
          %811 = vmatpush1.bf16.msra.mxu0 0
          %812 = vmatprep.subr.bf16.mxu0 0
          %813 = vmatpush1.bf16.msra.mxu0 0
          %814 = vmatprep.subr.bf16.mxu0 0
          %815 = vmatpush1.bf16.msra.mxu0 0
          %816 = vmatprep.subr.bf16.mxu0 0
          %817 = vmatpush1.bf16.msra.mxu0 0
          %818 = vmatprep.subr.bf16.mxu0 0
          %819 = vmatpush1.bf16.msra.mxu0 0
          %820 = vmatprep.subr.bf16.mxu0 0
          %821 = vmatpush1.bf16.msra.mxu0 0
          %822 = vmatprep.subr.bf16.mxu0 0
          %823 = vmatpush1.bf16.msra.mxu0 0
          %824 = vmatprep.subr.bf16.mxu0 0
          %825 = vmatpush1.bf16.msra.mxu0 0
          %826 = vmatprep.subr.bf16.mxu0 0
          %827 = vmatpush1.bf16.msra.mxu0 0
          %828 = vmatprep.subr.bf16.mxu0 0
          %829 = vmatpush1.bf16.msra.mxu0 0
          %830 = vmatprep.subr.bf16.mxu0 0
          %831 = vmatpush1.bf16.msra.mxu0 0
          %832 = vmatprep.subr.bf16.mxu0 0
          %833 = vmatpush1.bf16.msra.mxu0 0
          %834 = vmatprep.subr.bf16.mxu0 0
          %835 = vmatpush1.bf16.msra.mxu0 0
          %836 = vmatprep.subr.bf16.mxu0 0
          %837 = vmatpush1.bf16.msra.mxu0 0
          %838 = vmatprep.subr.bf16.mxu0 0
          %839 = vmatpush1.bf16.msra.mxu0 0
          %840 = vmatprep.mubr.bf16.mxu0 0
          %841 = vmatmul.mubr.bf16.gmra.mrb[0].mxu0 %v803
          %v842 = vpop.f32.mrb[0].mxu0
          %v843 = vadd.f32 0.0, %v842
          %v844 = vpop.f32.mrb[0].mxu0
          %v845 = vpop.f32.mrb[0].mxu0
          %v846 = vpop.f32.mrb[0].mxu0
          %847 = vdwg.mxu0
          %849 = vrot.lane.b32.xlu0 %v843, 16
          %v850 = vpop.permute.xlu0 %849
          %v852 = vsel %vm627, %v732, %v850
          %v853 = vpack.c.bf16 %v852, %v852
          %v855 = vlaneseq
          %v856 = vshrl.u32 %v855, 7
          %v857 = vsub.s32 0, %v856
          %v858 = vrot.slane %v560, %v857
          %v864 = vunpack.c.l.b16 %v556
          %v865 = vunpack.c.l.b16 %v557
          %v866 = vunpack.c.l.b16 %v558
          %v867 = vunpack.c.l.b16 %v559
          %v868 = vpack.c.b16 %v865, %v864
          %v869 = vpack.c.b16 %v867, %v866
          %v873 = vsel %vm579, %v853, 0
          %875 = vmatprep.subr.bf16.mxu0 0
          %876 = vmatpush1.bf16.msra.mxu0 %v868
          %877 = vmatprep.subr.bf16.mxu0 0
          %878 = vmatpush1.bf16.msra.mxu0 %v869
          %879 = vmatprep.subr.bf16.mxu0 0
          %880 = vmatpush1.bf16.msra.mxu0 0
          %881 = vmatprep.subr.bf16.mxu0 0
          %882 = vmatpush1.bf16.msra.mxu0 0
          %883 = vmatprep.subr.bf16.mxu0 0
          %884 = vmatpush1.bf16.msra.mxu0 0
          %885 = vmatprep.subr.bf16.mxu0 0
          %886 = vmatpush1.bf16.msra.mxu0 0
          %887 = vmatprep.subr.bf16.mxu0 0
          %888 = vmatpush1.bf16.msra.mxu0 0
          %889 = vmatprep.subr.bf16.mxu0 0
          %890 = vmatpush1.bf16.msra.mxu0 0
          %891 = vmatprep.subr.bf16.mxu0 0
          %892 = vmatpush1.bf16.msra.mxu0 0
          %893 = vmatprep.subr.bf16.mxu0 0
          %894 = vmatpush1.bf16.msra.mxu0 0
          %895 = vmatprep.subr.bf16.mxu0 0
          %896 = vmatpush1.bf16.msra.mxu0 0
          %897 = vmatprep.subr.bf16.mxu0 0
          %898 = vmatpush1.bf16.msra.mxu0 0
          %899 = vmatprep.subr.bf16.mxu0 0
          %900 = vmatpush1.bf16.msra.mxu0 0
          %901 = vmatprep.subr.bf16.mxu0 0
          %902 = vmatpush1.bf16.msra.mxu0 0
          %903 = vmatprep.subr.bf16.mxu0 0
          %904 = vmatpush1.bf16.msra.mxu0 0
          %905 = vmatprep.subr.bf16.mxu0 0
          %906 = vmatpush1.bf16.msra.mxu0 0
          %907 = vmatprep.mubr.bf16.mxu0 0
          %908 = vmatmul.mubr.bf16.gmra.mrb[0].mxu0 %v873
          %v909 = vpop.f32.mrb[0].mxu0
          %v910 = vadd.f32 %v858, %v909
          %v911 = vpop.f32.mrb[0].mxu0
          %v912 = vpop.f32.mrb[0].mxu0
          %v913 = vpop.f32.mrb[0].mxu0
          %914 = vdwg.mxu0
          %v915 = vadd.f32 %v550, %v910
          %v916 = vld [vmem:[%s5] sm:$0x1]
          %v917 = vld [vmem:[%s6] sm:$0x1]
          %v918 = vsel %vm579, %v915, 0.0
          %919 = vadd.xlane.f32.xlu0 %v918
          %v920 = vpop.xlane.xlu0 %919
          %v921 = vrcp.pop 32.0
          %v922 = vmul.f32 %v920, %v921
          %v923 = vsub.f32 %v915, %v922
          %v924 = vmul.f32 %v923, %v923
          %v925 = vsel %vm579, %v924, 0.0
          %926 = vadd.xlane.f32.xlu0 %v925
          %v927 = vpop.xlane.xlu0 %926
          %v928 = vmul.f32 %v927, %v921
          %v929 = vadd.f32 %v928, 1e-05
          %v930 = vrsqrt.pop %v929
          %v931 = vmul.f32 %v923, %v930
          %v933 = vlaneseq
          %v934 = vshrl.u32 %v933, 7
          %v935 = vsub.s32 0, %v934
          %v936 = vrot.slane %v916, %v935
          %v938 = vmul.f32 %v931, %v936
          %v940 = vlaneseq
          %v941 = vshrl.u32 %v940, 7
          %v942 = vsub.s32 0, %v941
          %v943 = vrot.slane %v917, %v942
          %v945 = vadd.f32 %v938, %v943
          %946 = vst.msk [vmem:[#allocation2] sm:$0xff] %vm579, %v945
          %947 = vst.msk [vmem:[#allocation3] sm:$0xff] %vm579, 0.0
        $region99: #{transformer_forward.5} parent=90 // pred_fallthru
          _
        %v948 = vld [vmem:[#allocation2] sm:$0xff]
        %v949 = vld [vmem:[%s471] sm:$0xff]
        %v950 = vld [vmem:[%s471 + $0x8] sm:$0xff]
        %v951 = vld [vmem:[%s471 + $0x10] sm:$0xff]
        %v952 = vld [vmem:[%s471 + $0x18] sm:$0xff]
        %v953 = vld [vmem:[%s471 + $0x20] sm:$0xff]
        %v954 = vld [vmem:[%s471 + $0x28] sm:$0xff]
        %v955 = vld [vmem:[%s471 + $0x30] sm:$0xff]
        %v956 = vld [vmem:[%s471 + $0x38] sm:$0xff]
        %v957 = vpack.c.bf16 %v948, %v948
        %v958 = vld [vmem:[%s532] sm:$0xf]
        %v960 = vlaneseq
        %v961 = vshrl.u32 %v960, 7
        %v962 = vsub.s32 0, %v961
        %v963 = vrot.slane %v958, %v962
        %v964 = vlaneseq
        %v965 = vshrl.u32 %v964, 7
        %v966 = vsub.s32 1, %v965
        %v967 = vrot.slane %v958, %v966
        %v968 = vlaneseq
        %v969 = vshrl.u32 %v968, 7
        %v970 = vsub.s32 2, %v969
        %v971 = vrot.slane %v958, %v970
        %v972 = vlaneseq
        %v973 = vshrl.u32 %v972, 7
        %v974 = vsub.s32 3, %v973
        %v975 = vrot.slane %v958, %v974
        %v988 = vunpack.c.l.b16 %v949
        %v989 = vunpack.c.h.b16 %v949
        %v990 = vunpack.c.l.b16 %v950
        %v991 = vunpack.c.h.b16 %v950
        %v992 = vunpack.c.l.b16 %v951
        %v993 = vunpack.c.h.b16 %v951
        %v994 = vunpack.c.l.b16 %v952
        %v995 = vunpack.c.h.b16 %v952
        %v996 = vunpack.c.l.b16 %v953
        %v997 = vunpack.c.h.b16 %v953
        %v998 = vunpack.c.l.b16 %v954
        %v999 = vunpack.c.h.b16 %v954
        %v1000 = vunpack.c.l.b16 %v955
        %v1001 = vunpack.c.h.b16 %v955
        %v1002 = vunpack.c.l.b16 %v956
        %v1003 = vunpack.c.h.b16 %v956
        %v1004 = vpack.c.b16 %v992, %v988
        %v1005 = vpack.c.b16 %v993, %v989
        %v1006 = vpack.c.b16 %v994, %v990
        %v1007 = vpack.c.b16 %v995, %v991
        %v1008 = vpack.c.b16 %v1000, %v996
        %v1009 = vpack.c.b16 %v1001, %v997
        %v1010 = vpack.c.b16 %v1002, %v998
        %v1011 = vpack.c.b16 %v1003, %v999
        %vm1020 = vcmask 261120
        %v1022 = vsel %vm1020, %v957, 0
        %1024 = vmatprep.subr.bf16.mxu0 %v1005
        %1025 = vmatpush1.bf16.msra.mxu0 %v1004
        %1026 = vmatprep.subr.bf16.mxu0 %v1009
        %1027 = vmatpush1.bf16.msra.mxu0 %v1008
        %1028 = vmatprep.subr.bf16.mxu0 0
        %1029 = vmatpush1.bf16.msra.mxu0 0
        %1030 = vmatprep.subr.bf16.mxu0 0
        %1031 = vmatpush1.bf16.msra.mxu0 0
        %1032 = vmatprep.subr.bf16.mxu0 0
        %1033 = vmatpush1.bf16.msra.mxu0 0
        %1034 = vmatprep.subr.bf16.mxu0 0
        %1035 = vmatpush1.bf16.msra.mxu0 0
        %1036 = vmatprep.subr.bf16.mxu0 0
        %1037 = vmatpush1.bf16.msra.mxu0 0
        %1038 = vmatprep.subr.bf16.mxu0 0
        %1039 = vmatpush1.bf16.msra.mxu0 0
        %1040 = vmatprep.subr.bf16.mxu0 0
        %1041 = vmatpush1.bf16.msra.mxu0 0
        %1042 = vmatprep.subr.bf16.mxu0 0
        %1043 = vmatpush1.bf16.msra.mxu0 0
        %1044 = vmatprep.subr.bf16.mxu0 0
        %1045 = vmatpush1.bf16.msra.mxu0 0
        %1046 = vmatprep.subr.bf16.mxu0 0
        %1047 = vmatpush1.bf16.msra.mxu0 0
        %1048 = vmatprep.subr.bf16.mxu0 0
        %1049 = vmatpush1.bf16.msra.mxu0 0
        %1050 = vmatprep.subr.bf16.mxu0 0
        %1051 = vmatpush1.bf16.msra.mxu0 0
        %1052 = vmatprep.subr.bf16.mxu0 0
        %1053 = vmatpush1.bf16.msra.mxu0 0
        %1054 = vmatprep.subr.bf16.mxu0 0
        %1055 = vmatpush1.bf16.msra.mxu0 0
        %1056 = vmatprep.mubr.bf16.mxu0 0
        %1057 = vmatmul.mubr.bf16.gmra.mrb[0].mxu0 %v1022
        %v1058 = vpop.f32.mrb[0].mxu0
        %v1059 = vadd.f32 %v963, %v1058
        %v1060 = vpop.f32.mrb[0].mxu0
        %v1061 = vadd.f32 %v967, %v1060
        %v1062 = vpop.f32.mrb[0].mxu0
        %v1063 = vpop.f32.mrb[0].mxu0
        %1064 = vdwg.mxu0
        %1065 = vmatprep.subr.bf16.mxu0 %v1007
        %1066 = vmatpush1.bf16.msra.mxu0 %v1006
        %1067 = vmatprep.subr.bf16.mxu0 %v1011
        %1068 = vmatpush1.bf16.msra.mxu0 %v1010
        %1069 = vmatprep.subr.bf16.mxu0 0
        %1070 = vmatpush1.bf16.msra.mxu0 0
        %1071 = vmatprep.subr.bf16.mxu0 0
        %1072 = vmatpush1.bf16.msra.mxu0 0
        %1073 = vmatprep.subr.bf16.mxu0 0
        %1074 = vmatpush1.bf16.msra.mxu0 0
        %1075 = vmatprep.subr.bf16.mxu0 0
        %1076 = vmatpush1.bf16.msra.mxu0 0
        %1077 = vmatprep.subr.bf16.mxu0 0
        %1078 = vmatpush1.bf16.msra.mxu0 0
        %1079 = vmatprep.subr.bf16.mxu0 0
        %1080 = vmatpush1.bf16.msra.mxu0 0
        %1081 = vmatprep.subr.bf16.mxu0 0
        %1082 = vmatpush1.bf16.msra.mxu0 0
        %1083 = vmatprep.subr.bf16.mxu0 0
        %1084 = vmatpush1.bf16.msra.mxu0 0
        %1085 = vmatprep.subr.bf16.mxu0 0
        %1086 = vmatpush1.bf16.msra.mxu0 0
        %1087 = vmatprep.subr.bf16.mxu0 0
        %1088 = vmatpush1.bf16.msra.mxu0 0
        %1089 = vmatprep.subr.bf16.mxu0 0
        %1090 = vmatpush1.bf16.msra.mxu0 0
        %1091 = vmatprep.subr.bf16.mxu0 0
        %1092 = vmatpush1.bf16.msra.mxu0 0
        %1093 = vmatprep.subr.bf16.mxu0 0
        %1094 = vmatpush1.bf16.msra.mxu0 0
        %1095 = vmatprep.subr.bf16.mxu0 0
        %1096 = vmatpush1.bf16.msra.mxu0 0
        %1097 = vmatprep.mubr.bf16.mxu0 0
        %1098 = vmatmul.mubr.bf16.gmra.mrb[0].mxu0 %v1022
        %v1099 = vpop.f32.mrb[0].mxu0
        %v1100 = vadd.f32 %v971, %v1099
        %v1101 = vpop.f32.mrb[0].mxu0
        %v1102 = vadd.f32 %v975, %v1101
        %v1103 = vpop.f32.mrb[0].mxu0
        %v1104 = vpop.f32.mrb[0].mxu0
        %1105 = vdwg.mxu0
        %v1106 = vmax.f32 %v1059, 0.0
        %v1107 = vmax.f32 %v1061, 0.0
        %v1108 = vmax.f32 %v1100, 0.0
        %v1109 = vmax.f32 %v1102, 0.0
        %v1110 = vld [vmem:[#allocation3] sm:$0xff]
        %v1111 = vld [vmem:[%s538] sm:$0xf]
        %v1112 = vld [vmem:[%s538 + $0x4] sm:$0xf]
        %v1113 = vld [vmem:[%s538 + $0x8] sm:$0xf]
        %v1114 = vld [vmem:[%s538 + $0xc] sm:$0xf]
        %v1115 = vld [vmem:[%s538 + $0x10] sm:$0xf]
        %v1116 = vld [vmem:[%s538 + $0x14] sm:$0xf]
        %v1117 = vld [vmem:[%s538 + $0x18] sm:$0xf]
        %v1118 = vld [vmem:[%s538 + $0x1c] sm:$0xf]
        %v1119 = vld [vmem:[%s538 + $0x20] sm:$0xf]
        %v1120 = vld [vmem:[%s538 + $0x24] sm:$0xf]
        %v1121 = vld [vmem:[%s538 + $0x28] sm:$0xf]
        %v1122 = vld [vmem:[%s538 + $0x2c] sm:$0xf]
        %v1123 = vld [vmem:[%s538 + $0x30] sm:$0xf]
        %v1124 = vld [vmem:[%s538 + $0x34] sm:$0xf]
        %v1125 = vld [vmem:[%s538 + $0x38] sm:$0xf]
        %v1126 = vld [vmem:[%s538 + $0x3c] sm:$0xf]
        %v1127 = vld [vmem:[%s538 + $0x40] sm:$0xf]
        %v1128 = vld [vmem:[%s538 + $0x44] sm:$0xf]
        %v1129 = vld [vmem:[%s538 + $0x48] sm:$0xf]
        %v1130 = vld [vmem:[%s538 + $0x4c] sm:$0xf]
        %v1131 = vld [vmem:[%s538 + $0x50] sm:$0xf]
        %v1132 = vld [vmem:[%s538 + $0x54] sm:$0xf]
        %v1133 = vld [vmem:[%s538 + $0x58] sm:$0xf]
        %v1134 = vld [vmem:[%s538 + $0x5c] sm:$0xf]
        %v1135 = vld [vmem:[%s538 + $0x60] sm:$0xf]
        %v1136 = vld [vmem:[%s538 + $0x64] sm:$0xf]
        %v1137 = vld [vmem:[%s538 + $0x68] sm:$0xf]
        %v1138 = vld [vmem:[%s538 + $0x6c] sm:$0xf]
        %v1139 = vld [vmem:[%s538 + $0x70] sm:$0xf]
        %v1140 = vld [vmem:[%s538 + $0x74] sm:$0xf]
        %v1141 = vld [vmem:[%s538 + $0x78] sm:$0xf]
        %v1142 = vld [vmem:[%s538 + $0x7c] sm:$0xf]
        %v1143 = vld [vmem:[%s538 + $0x80] sm:$0xf]
        %v1144 = vld [vmem:[%s538 + $0x84] sm:$0xf]
        %v1145 = vld [vmem:[%s538 + $0x88] sm:$0xf]
        %v1146 = vld [vmem:[%s538 + $0x8c] sm:$0xf]
        %v1147 = vld [vmem:[%s538 + $0x90] sm:$0xf]
        %v1148 = vld [vmem:[%s538 + $0x94] sm:$0xf]
        %v1149 = vld [vmem:[%s538 + $0x98] sm:$0xf]
        %v1150 = vld [vmem:[%s538 + $0x9c] sm:$0xf]
        %v1151 = vld [vmem:[%s538 + $0xa0] sm:$0xf]
        %v1152 = vld [vmem:[%s538 + $0xa4] sm:$0xf]
        %v1153 = vld [vmem:[%s538 + $0xa8] sm:$0xf]
        %v1154 = vld [vmem:[%s538 + $0xac] sm:$0xf]
        %v1155 = vld [vmem:[%s538 + $0xb0] sm:$0xf]
        %v1156 = vld [vmem:[%s538 + $0xb4] sm:$0xf]
        %v1157 = vld [vmem:[%s538 + $0xb8] sm:$0xf]
        %v1158 = vld [vmem:[%s538 + $0xbc] sm:$0xf]
        %v1159 = vld [vmem:[%s538 + $0xc0] sm:$0xf]
        %v1160 = vld [vmem:[%s538 + $0xc4] sm:$0xf]
        %v1161 = vld [vmem:[%s538 + $0xc8] sm:$0xf]
        %v1162 = vld [vmem:[%s538 + $0xcc] sm:$0xf]
        %v1163 = vld [vmem:[%s538 + $0xd0] sm:$0xf]
        %v1164 = vld [vmem:[%s538 + $0xd4] sm:$0xf]
        %v1165 = vld [vmem:[%s538 + $0xd8] sm:$0xf]
        %v1166 = vld [vmem:[%s538 + $0xdc] sm:$0xf]
        %v1167 = vld [vmem:[%s538 + $0xe0] sm:$0xf]
        %v1168 = vld [vmem:[%s538 + $0xe4] sm:$0xf]
        %v1169 = vld [vmem:[%s538 + $0xe8] sm:$0xf]
        %v1170 = vld [vmem:[%s538 + $0xec] sm:$0xf]
        %v1171 = vld [vmem:[%s538 + $0xf0] sm:$0xf]
        %v1172 = vld [vmem:[%s538 + $0xf4] sm:$0xf]
        %v1173 = vld [vmem:[%s538 + $0xf8] sm:$0xf]
        %v1174 = vld [vmem:[%s538 + $0xfc] sm:$0xf]
        %v1175 = vpack.c.bf16 %v1106, %v1106
        %v1176 = vpack.c.bf16 %v1107, %v1107
        %v1177 = vpack.c.bf16 %v1108, %v1108
        %v1178 = vpack.c.bf16 %v1109, %v1109
        %v1243 = vunpack.c.l.b16 %v1111
        %v1244 = vunpack.c.l.b16 %v1112
        %v1245 = vunpack.c.l.b16 %v1113
        %v1246 = vunpack.c.l.b16 %v1114
        %v1247 = vunpack.c.l.b16 %v1115
        %v1248 = vunpack.c.l.b16 %v1116
        %v1249 = vunpack.c.l.b16 %v1117
        %v1250 = vunpack.c.l.b16 %v1118
        %v1251 = vunpack.c.l.b16 %v1119
        %v1252 = vunpack.c.l.b16 %v1120
        %v1253 = vunpack.c.l.b16 %v1121
        %v1254 = vunpack.c.l.b16 %v1122
        %v1255 = vunpack.c.l.b16 %v1123
        %v1256 = vunpack.c.l.b16 %v1124
        %v1257 = vunpack.c.l.b16 %v1125
        %v1258 = vunpack.c.l.b16 %v1126
        %v1259 = vunpack.c.l.b16 %v1127
        %v1260 = vunpack.c.l.b16 %v1128
        %v1261 = vunpack.c.l.b16 %v1129
        %v1262 = vunpack.c.l.b16 %v1130
        %v1263 = vunpack.c.l.b16 %v1131
        %v1264 = vunpack.c.l.b16 %v1132
        %v1265 = vunpack.c.l.b16 %v1133
        %v1266 = vunpack.c.l.b16 %v1134
        %v1267 = vunpack.c.l.b16 %v1135
        %v1268 = vunpack.c.l.b16 %v1136
        %v1269 = vunpack.c.l.b16 %v1137
        %v1270 = vunpack.c.l.b16 %v1138
        %v1271 = vunpack.c.l.b16 %v1139
        %v1272 = vunpack.c.l.b16 %v1140
        %v1273 = vunpack.c.l.b16 %v1141
        %v1274 = vunpack.c.l.b16 %v1142
        %v1275 = vunpack.c.l.b16 %v1143
        %v1276 = vunpack.c.l.b16 %v1144
        %v1277 = vunpack.c.l.b16 %v1145
        %v1278 = vunpack.c.l.b16 %v1146
        %v1279 = vunpack.c.l.b16 %v1147
        %v1280 = vunpack.c.l.b16 %v1148
        %v1281 = vunpack.c.l.b16 %v1149
        %v1282 = vunpack.c.l.b16 %v1150
        %v1283 = vunpack.c.l.b16 %v1151
        %v1284 = vunpack.c.l.b16 %v1152
        %v1285 = vunpack.c.l.b16 %v1153
        %v1286 = vunpack.c.l.b16 %v1154
        %v1287 = vunpack.c.l.b16 %v1155
        %v1288 = vunpack.c.l.b16 %v1156
        %v1289 = vunpack.c.l.b16 %v1157
        %v1290 = vunpack.c.l.b16 %v1158
        %v1291 = vunpack.c.l.b16 %v1159
        %v1292 = vunpack.c.l.b16 %v1160
        %v1293 = vunpack.c.l.b16 %v1161
        %v1294 = vunpack.c.l.b16 %v1162
        %v1295 = vunpack.c.l.b16 %v1163
        %v1296 = vunpack.c.l.b16 %v1164
        %v1297 = vunpack.c.l.b16 %v1165
        %v1298 = vunpack.c.l.b16 %v1166
        %v1299 = vunpack.c.l.b16 %v1167
        %v1300 = vunpack.c.l.b16 %v1168
        %v1301 = vunpack.c.l.b16 %v1169
        %v1302 = vunpack.c.l.b16 %v1170
        %v1303 = vunpack.c.l.b16 %v1171
        %v1304 = vunpack.c.l.b16 %v1172
        %v1305 = vunpack.c.l.b16 %v1173
        %v1306 = vunpack.c.l.b16 %v1174
        %v1307 = vpack.c.b16 %v1244, %v1243
        %v1308 = vpack.c.b16 %v1246, %v1245
        %v1309 = vpack.c.b16 %v1248, %v1247
        %v1310 = vpack.c.b16 %v1250, %v1249
        %v1311 = vpack.c.b16 %v1252, %v1251
        %v1312 = vpack.c.b16 %v1254, %v1253
        %v1313 = vpack.c.b16 %v1256, %v1255
        %v1314 = vpack.c.b16 %v1258, %v1257
        %v1315 = vpack.c.b16 %v1260, %v1259
        %v1316 = vpack.c.b16 %v1262, %v1261
        %v1317 = vpack.c.b16 %v1264, %v1263
        %v1318 = vpack.c.b16 %v1266, %v1265
        %v1319 = vpack.c.b16 %v1268, %v1267
        %v1320 = vpack.c.b16 %v1270, %v1269
        %v1321 = vpack.c.b16 %v1272, %v1271
        %v1322 = vpack.c.b16 %v1274, %v1273
        %v1323 = vpack.c.b16 %v1276, %v1275
        %v1324 = vpack.c.b16 %v1278, %v1277
        %v1325 = vpack.c.b16 %v1280, %v1279
        %v1326 = vpack.c.b16 %v1282, %v1281
        %v1327 = vpack.c.b16 %v1284, %v1283
        %v1328 = vpack.c.b16 %v1286, %v1285
        %v1329 = vpack.c.b16 %v1288, %v1287
        %v1330 = vpack.c.b16 %v1290, %v1289
        %v1331 = vpack.c.b16 %v1292, %v1291
        %v1332 = vpack.c.b16 %v1294, %v1293
        %v1333 = vpack.c.b16 %v1296, %v1295
        %v1334 = vpack.c.b16 %v1298, %v1297
        %v1335 = vpack.c.b16 %v1300, %v1299
        %v1336 = vpack.c.b16 %v1302, %v1301
        %v1337 = vpack.c.b16 %v1304, %v1303
        %v1338 = vpack.c.b16 %v1306, %v1305
        %1371 = vmatprep.subr.bf16.mxu0 0
        %1372 = vmatpush1.bf16.msra.mxu0 %v1307
        %1373 = vmatprep.subr.bf16.mxu0 0
        %1374 = vmatpush1.bf16.msra.mxu0 %v1308
        %1375 = vmatprep.subr.bf16.mxu0 0
        %1376 = vmatpush1.bf16.msra.mxu0 %v1309
        %1377 = vmatprep.subr.bf16.mxu0 0
        %1378 = vmatpush1.bf16.msra.mxu0 %v1310
        %1379 = vmatprep.subr.bf16.mxu0 0
        %1380 = vmatpush1.bf16.msra.mxu0 %v1311
        %1381 = vmatprep.subr.bf16.mxu0 0
        %1382 = vmatpush1.bf16.msra.mxu0 %v1312
        %1383 = vmatprep.subr.bf16.mxu0 0
        %1384 = vmatpush1.bf16.msra.mxu0 %v1313
        %1385 = vmatprep.subr.bf16.mxu0 0
        %1386 = vmatpush1.bf16.msra.mxu0 %v1314
        %1387 = vmatprep.subr.bf16.mxu0 0
        %1388 = vmatpush1.bf16.msra.mxu0 %v1315
        %1389 = vmatprep.subr.bf16.mxu0 0
        %1390 = vmatpush1.bf16.msra.mxu0 %v1316
        %1391 = vmatprep.subr.bf16.mxu0 0
        %1392 = vmatpush1.bf16.msra.mxu0 %v1317
        %1393 = vmatprep.subr.bf16.mxu0 0
        %1394 = vmatpush1.bf16.msra.mxu0 %v1318
        %1395 = vmatprep.subr.bf16.mxu0 0
        %1396 = vmatpush1.bf16.msra.mxu0 %v1319
        %1397 = vmatprep.subr.bf16.mxu0 0
        %1398 = vmatpush1.bf16.msra.mxu0 %v1320
        %1399 = vmatprep.subr.bf16.mxu0 0
        %1400 = vmatpush1.bf16.msra.mxu0 %v1321
        %1401 = vmatprep.subr.bf16.mxu0 0
        %1402 = vmatpush1.bf16.msra.mxu0 %v1322
        %1403 = vmatprep.mubr.bf16.mxu0 %v1176
        %1404 = vmatmul.mubr.bf16.gmra.mrb[0].mxu0 %v1175
        %v1405 = vpop.f32.mrb[0].mxu0
        %v1406 = vadd.f32 0.0, %v1405
        %v1407 = vpop.f32.mrb[0].mxu0
        %v1408 = vpop.f32.mrb[0].mxu0
        %v1409 = vpop.f32.mrb[0].mxu0
        %1410 = vdwg.mxu0
        %1411 = vmatprep.subr.bf16.mxu0 0
        %1412 = vmatpush1.bf16.msra.mxu0 %v1323
        %1413 = vmatprep.subr.bf16.mxu0 0
        %1414 = vmatpush1.bf16.msra.mxu0 %v1324
        %1415 = vmatprep.subr.bf16.mxu0 0
        %1416 = vmatpush1.bf16.msra.mxu0 %v1325
        %1417 = vmatprep.subr.bf16.mxu0 0
        %1418 = vmatpush1.bf16.msra.mxu0 %v1326
        %1419 = vmatprep.subr.bf16.mxu0 0
        %1420 = vmatpush1.bf16.msra.mxu0 %v1327
        %1421 = vmatprep.subr.bf16.mxu0 0
        %1422 = vmatpush1.bf16.msra.mxu0 %v1328
        %1423 = vmatprep.subr.bf16.mxu0 0
        %1424 = vmatpush1.bf16.msra.mxu0 %v1329
        %1425 = vmatprep.subr.bf16.mxu0 0
        %1426 = vmatpush1.bf16.msra.mxu0 %v1330
        %1427 = vmatprep.subr.bf16.mxu0 0
        %1428 = vmatpush1.bf16.msra.mxu0 %v1331
        %1429 = vmatprep.subr.bf16.mxu0 0
        %1430 = vmatpush1.bf16.msra.mxu0 %v1332
        %1431 = vmatprep.subr.bf16.mxu0 0
        %1432 = vmatpush1.bf16.msra.mxu0 %v1333
        %1433 = vmatprep.subr.bf16.mxu0 0
        %1434 = vmatpush1.bf16.msra.mxu0 %v1334
        %1435 = vmatprep.subr.bf16.mxu0 0
        %1436 = vmatpush1.bf16.msra.mxu0 %v1335
        %1437 = vmatprep.subr.bf16.mxu0 0
        %1438 = vmatpush1.bf16.msra.mxu0 %v1336
        %1439 = vmatprep.subr.bf16.mxu0 0
        %1440 = vmatpush1.bf16.msra.mxu0 %v1337
        %1441 = vmatprep.subr.bf16.mxu0 0
        %1442 = vmatpush1.bf16.msra.mxu0 %v1338
        %1443 = vmatprep.mubr.bf16.mxu0 %v1178
        %1444 = vmatmul.mubr.bf16.gmra.mrb[0].mxu0 %v1177
        %v1445 = vpop.f32.mrb[0].mxu0
        %v1446 = vadd.f32 %v1406, %v1445
        %v1447 = vpop.f32.mrb[0].mxu0
        %v1448 = vpop.f32.mrb[0].mxu0
        %v1449 = vpop.f32.mrb[0].mxu0
        %1450 = vdwg.mxu0
        %v1451 = vadd.f32 %v1110, %v1446
        %1452 = vst.msk [vmem:[#allocation3] sm:$0xff] %vm1020, %v1451
        %p1453 = scmp.eq.s32.totalorder %s29, 3
        // Predicated region
        $region100: #{transformer_forward.5} parent=90 // pred_check
          %p1454 = pneg %p1453
        $region101: #{transformer_forward.5} parent=90 // pred_check_branch
          %1456 = sbr.rel (%p1454) target = $region103
        $region102: #{transformer_forward.5} parent=90 // pred_region
          %v1457 = vld [vmem:[#allocation2] sm:$0xff]
          %v1458 = vld [vmem:[#allocation3] sm:$0xff]
          %v1459 = vadd.f32 %v1457, %v1458
          %v1460 = vld [vmem:[%s10] sm:$0x1]
          %v1462 = vlaneseq
          %v1463 = vshrl.u32 %v1462, 7
          %v1464 = vsub.s32 0, %v1463
          %v1465 = vrot.slane %v1460, %v1464
          %v1467 = vadd.f32 %v1459, %v1465
          %v1468 = vld [vmem:[%s11] sm:$0x1]
          %v1469 = vld [vmem:[%s12] sm:$0x1]
          %v1470 = vsel %vm1020, %v1467, 0.0
          %1471 = vadd.xlane.f32.xlu0 %v1470
          %v1472 = vpop.xlane.xlu0 %1471
          %v1473 = vrcp.pop 32.0
          %v1474 = vmul.f32 %v1472, %v1473
          %v1475 = vsub.f32 %v1467, %v1474
          %v1476 = vmul.f32 %v1475, %v1475
          %v1477 = vsel %vm1020, %v1476, 0.0
          %1478 = vadd.xlane.f32.xlu0 %v1477
          %v1479 = vpop.xlane.xlu0 %1478
          %v1480 = vmul.f32 %v1479, %v1473
          %v1481 = vadd.f32 %v1480, 1e-05
          %v1482 = vrsqrt.pop %v1481
          %v1483 = vmul.f32 %v1475, %v1482
          %v1485 = vlaneseq
          %v1486 = vshrl.u32 %v1485, 7
          %v1487 = vsub.s32 0, %v1486
          %v1488 = vrot.slane %v1468, %v1487
          %v1490 = vmul.f32 %v1483, %v1488
          %v1492 = vlaneseq
          %v1493 = vshrl.u32 %v1492, 7
          %v1494 = vsub.s32 0, %v1493
          %v1495 = vrot.slane %v1469, %v1494
          %v1497 = vadd.f32 %v1490, %v1495
          %v1498 = vpack.c.bf16 %v1497, %v1497
          %vm1499 = vcmask 257024
          %1500 = vst.msk [vmem:[%s543] sm:$0xf] %vm1499, %v1498
        $region103: #{transformer_forward.5} parent=90 // pred_fallthru
          _
        %p1501 = scmp.lt.s32.totalorder %s28, 1
        %s1502 = scalar_select %p1501, %s28, 1
        %s1503 = smul.addr %s1502, 4
        %s1504 = scalar_lea.vmem %s13, %s1503
        // Predicated region
        $region104: #{transformer_forward.5} parent=90 // pred_check
          %p1505 = pneg %p347
        $region105: #{transformer_forward.5} parent=90 // pred_check_branch
          %1507 = sbr.rel (%p1505) target = $region107
        $region106: #{transformer_forward.5} parent=90 // pred_region
          _
        $region107: #{transformer_forward.5} parent=90 // pred_fallthru
          _
      $region91: #{transformer_forward.5} parent=5 // pred_fallthru
        _
      %p1508 = scmp.le.s32.totalorder 2, %s19
      // Predicated region
      $region108: #{transformer_forward.5} parent=5 // pred_check
        %p1509 = pneg %p1508
      $region109: #{transformer_forward.5} parent=5 // pred_check_branch
        %1511 = sbr.rel (%p1509) target = $region111
      $region110: #{transformer_forward.5} parent=5 // pred_region
        %s1512 = ssub.s32 %s19, 2
        // Predicated region
        $region112: #{transformer_forward.5} parent=110 // pred_check
          %p1513 = pneg %p353
        $region113: #{transformer_forward.5} parent=110 // pred_check_branch
          %1515 = sbr.rel (%p1513) target = $region115
        $region114: #{transformer_forward.5} parent=110 // pred_region
          %p1516 = scmp.lt.s32.totalorder %s30, 1
          %s1517 = scalar_select %p1516, %s30, 1
          %s1518 = smul.addr %s1517, 4
          %s1519 = scalar_lea.vmem %s13, %s1518
        $region115: #{transformer_forward.5} parent=110 // pred_fallthru
          _
      $region111: #{transformer_forward.5} parent=5 // pred_fallthru
        _
    $region6: #{transformer_forward.5} parent=1 // loop_footer
      %s23 = sadd.s32 1, %s19
    $region7: #{transformer_forward.5} parent=1 // loop_footer_branch
      %18 = sbr.rel target = $region3
    $region8: #{transformer_forward.5} parent=1 // loop_exit
      _

// kernel: transformer_forward.6
$region0: #{transformer_forward.6}
  #allocation0 [shape = 'u32[]', space=smem, size = 0x4, offset = 0x4, fixed_abs, tag = 'smem constant byte address 0x4 - core index']
  #allocation1 [shape = 'u32[144,128]{1,0:T(1,128)}', space=vmem, size = 0x12000, scoped, tag = 'internal scratch']
  #allocation2 [shape = 'f32[8,32]{1,0:T(8,128)}', space=vmem, size = 0x1000, scoped, tag = 'scratch operand']
  #allocation3 [shape = 'f32[8,32]{1,0:T(8,128)}', space=vmem, size = 0x1000, scoped, tag = 'scratch operand']
  %s0 = inlined_call_operand.vmem [shape: bf16[2,8,32], index: 0, kind: input, shape index: {}]
  %s1 = inlined_call_operand.vmem [shape: bf16[32,96], index: 1, kind: input, shape index: {}]
  %s2 = inlined_call_operand.vmem [shape: f32[1,96], index: 2, kind: input, shape index: {}]
  %s3 = inlined_call_operand.vmem [shape: bf16[32,32], index: 3, kind: input, shape index: {}]
  %s4 = inlined_call_operand.vmem [shape: f32[1,32], index: 4, kind: input, shape index: {}]
  %s5 = inlined_call_operand.vmem [shape: f32[1,32], index: 5, kind: input, shape index: {}]
  %s6 = inlined_call_operand.vmem [shape: f32[1,32], index: 6, kind: input, shape index: {}]
  %s7 = inlined_call_operand.vmem [shape: bf16[32,2048], index: 7, kind: input, shape index: {}]
  %s8 = inlined_call_operand.vmem [shape: f32[1,2048], index: 8, kind: input, shape index: {}]
  %s9 = inlined_call_operand.vmem [shape: bf16[2048,32], index: 9, kind: input, shape index: {}]
  %s10 = inlined_call_operand.vmem [shape: f32[1,32], index: 10, kind: input, shape index: {}]
  %s11 = inlined_call_operand.vmem [shape: f32[1,32], index: 11, kind: input, shape index: {}]
  %s12 = inlined_call_operand.vmem [shape: f32[1,32], index: 12, kind: input, shape index: {}]
  %s13 = inlined_call_operand.vmem [shape: f32[1,32], index: 13, kind: input, shape index: {}]
  %s14 = inlined_call_operand.vmem [shape: f32[1,32], index: 14, kind: input, shape index: {}]
  %s15 = inlined_call_operand.vmem [shape: bf16[2,8,32], index: 15, kind: output, shape index: {}]
  %s16 = sld [smem:[#allocation0]]
  $region124: #{transformer_forward.6} parent=0
    _
  %s18 = ssub.s32 1, %s16
  %s19 = scalar_select 0, %s18, %s16
  $region1: #{transformer_forward.6} parent=0
    #allocation4 [shape = 'u8[65536]{0}', space=vmem, size = 0x10000, scoped, tag = 'input window, operand 7']
    loop: start=0, step=1, limit=10
    $region2: #{transformer_forward.6} parent=1 // loop_pre_header
      _
    $region3: #{transformer_forward.6} parent=1 // loop_header
      %s21 = sphi 0, %s25
      %p22 = scmp.ge.s32.totalorder %s21, 10
      %s28 = sphi 0, %s40
      %s29 = sphi 0, %s36
      %s30 = sphi 0, %s28
      %s31 = sphi 0, %s29
      %s32 = sphi 0, %s30
      %s33 = sphi 0, %s31
      %s43 = sphi 0, %s45
      %s46 = sphi 0, %s43
      %s47 = sphi 0, %s46
      %s63 = sphi 0, %s47
      %s67 = sphi 0, %s67
      %s69 = sphi 0, %s67
      %s70 = sphi 0, %s69
      %s84 = sphi 0, %s70
      %s88 = sphi 0, %s88
      %s90 = sphi 0, %s88
      %s91 = sphi 0, %s90
      %s105 = sphi 0, %s91
      %s109 = sphi 0, %s109
      %s111 = sphi 0, %s109
      %s112 = sphi 0, %s111
      %s126 = sphi 0, %s112
      %s130 = sphi 0, %s130
      %s132 = sphi 0, %s130
      %s133 = sphi 0, %s132
      %s147 = sphi 0, %s133
      %s151 = sphi 0, %s151
      %s153 = sphi 0, %s151
      %s154 = sphi 0, %s153
      %s168 = sphi 0, %s154
      %s172 = sphi 0, %s172
      %s174 = sphi 0, %s172
      %s175 = sphi 0, %s174
      %s189 = sphi 0, %s175
      %s195 = sphi 0, %s197
      %s198 = sphi 0, %s195
      %s199 = sphi 0, %s198
      %s215 = sphi 0, %s199
      %s221 = sphi 0, %s223
      %s224 = sphi 0, %s221
      %s225 = sphi 0, %s224
      %s241 = sphi 0, %s225
      %s247 = sphi 0, %s249
      %s250 = sphi 0, %s247
      %s251 = sphi 0, %s250
      %s267 = sphi 0, %s251
      %s271 = sphi 0, %s271
      %s273 = sphi 0, %s271
      %s274 = sphi 0, %s273
      %s288 = sphi 0, %s274
      %s292 = sphi 0, %s292
      %s294 = sphi 0, %s292
      %s295 = sphi 0, %s294
      %s309 = sphi 0, %s295
      %s313 = sphi 0, %s313
      %s315 = sphi 0, %s313
      %s316 = sphi 0, %s315
      %s330 = sphi 0, %s316
      %s334 = sphi 0, %s334
      %s336 = sphi 0, %s334
      %s337 = sphi 0, %s336
      %s351 = sphi 0, %s337
      %s355 = sphi 0, %s355
      %s357 = sphi 0, %s355
      %s358 = sphi 0, %s357
      %s372 = sphi 0, %s358
      %s378 = sphi 0, %s380
      %s381 = sphi 0, %s378
      %s382 = sphi 0, %s381
      %s398 = sphi 0, %s382
    $region4: #{transformer_forward.6} parent=1 // loop_header_branch
      %24 = sbr.rel (%p22) target = $region8
    $region5: #{transformer_forward.6} parent=1 // loop_body
      %s26 = ssub.s32 %s21, 1
      %s27 = ssub.s32 %s21, 2
      %s34 = sadd.s32 1, %s29
      %p35 = scmp.ge.s32.totalorder %s34, 4
      %s36 = scalar_select %p35, 0, %s34
      %s37 = sadd.s32 1, %s28
      %s38 = scalar_select %p35, %s37, %s28
      %p39 = scmp.ge.s32.totalorder %s38, 2
      %s40 = scalar_select %p39, 0, %s38
      %s41 = ssub.s32 %s28, %s40
      %p42 = scmp.eq.s32.totalorder %s41, 0
      %s44 = sadd.s32 %s43, 1
      %s45 = scalar_select %p42, %s43, %s44
      %p48 = pneg %p42
      %p49 = scmp.eq.s32.totalorder %s21, 7
      %p50 = por %p48, %p49
      %p51 = scmp.ne.s32.totalorder %s43, %s46
      %p52 = scmp.eq.s32.totalorder %s21, 0
      %p53 = por %p51, %p52
      %p54 = scmp.ne.s32.totalorder %s43, %s46
      %p55 = scmp.eq.s32.totalorder %s26, 7
      %p56 = por %p54, %p55
      %p57 = scmp.ne.s32.totalorder %s46, %s47
      %p58 = scmp.eq.s32.totalorder %s26, 0
      %p59 = por %p57, %p58
      %p60 = scmp.ne.s32.totalorder %s46, %s47
      %p61 = scmp.eq.s32.totalorder %s27, 7
      %p62 = por %p60, %p61
      %p64 = scmp.ne.s32.totalorder %s47, %s63
      %p65 = scmp.eq.s32.totalorder %s27, 0
      %p66 = por %p64, %p65
      %s68 = sadd.s32 %s67, 1
      %p71 = scmp.eq.s32.totalorder %s21, 7
      %p72 = scmp.ne.s32.totalorder %s67, %s69
      %p73 = scmp.eq.s32.totalorder %s21, 0
      %p74 = por %p72, %p73
      %p75 = scmp.ne.s32.totalorder %s67, %s69
      %p76 = scmp.eq.s32.totalorder %s26, 7
      %p77 = por %p75, %p76
      %p78 = scmp.ne.s32.totalorder %s69, %s70
      %p79 = scmp.eq.s32.totalorder %s26, 0
      %p80 = por %p78, %p79
      %p81 = scmp.ne.s32.totalorder %s69, %s70
      %p82 = scmp.eq.s32.totalorder %s27, 7
      %p83 = por %p81, %p82
      %p85 = scmp.ne.s32.totalorder %s70, %s84
      %p86 = scmp.eq.s32.totalorder %s27, 0
      %p87 = por %p85, %p86
      %s89 = sadd.s32 %s88, 1
      %p92 = scmp.eq.s32.totalorder %s21, 7
      %p93 = scmp.ne.s32.totalorder %s88, %s90
      %p94 = scmp.eq.s32.totalorder %s21, 0
      %p95 = por %p93, %p94
      %p96 = scmp.ne.s32.totalorder %s88, %s90
      %p97 = scmp.eq.s32.totalorder %s26, 7
      %p98 = por %p96, %p97
      %p99 = scmp.ne.s32.totalorder %s90, %s91
      %p100 = scmp.eq.s32.totalorder %s26, 0
      %p101 = por %p99, %p100
      %p102 = scmp.ne.s32.totalorder %s90, %s91
      %p103 = scmp.eq.s32.totalorder %s27, 7
      %p104 = por %p102, %p103
      %p106 = scmp.ne.s32.totalorder %s91, %s105
      %p107 = scmp.eq.s32.totalorder %s27, 0
      %p108 = por %p106, %p107
      %s110 = sadd.s32 %s109, 1
      %p113 = scmp.eq.s32.totalorder %s21, 7
      %p114 = scmp.ne.s32.totalorder %s109, %s111
      %p115 = scmp.eq.s32.totalorder %s21, 0
      %p116 = por %p114, %p115
      %p117 = scmp.ne.s32.totalorder %s109, %s111
      %p118 = scmp.eq.s32.totalorder %s26, 7
      %p119 = por %p117, %p118
      %p120 = scmp.ne.s32.totalorder %s111, %s112
      %p121 = scmp.eq.s32.totalorder %s26, 0
      %p122 = por %p120, %p121
      %p123 = scmp.ne.s32.totalorder %s111, %s112
      %p124 = scmp.eq.s32.totalorder %s27, 7
      %p125 = por %p123, %p124
      %p127 = scmp.ne.s32.totalorder %s112, %s126
      %p128 = scmp.eq.s32.totalorder %s27, 0
      %p129 = por %p127, %p128
      %s131 = sadd.s32 %s130, 1
      %p134 = scmp.eq.s32.totalorder %s21, 7
      %p135 = scmp.ne.s32.totalorder %s130, %s132
      %p136 = scmp.eq.s32.totalorder %s21, 0
      %p137 = por %p135, %p136
      %p138 = scmp.ne.s32.totalorder %s130, %s132
      %p139 = scmp.eq.s32.totalorder %s26, 7
      %p140 = por %p138, %p139
      %p141 = scmp.ne.s32.totalorder %s132, %s133
      %p142 = scmp.eq.s32.totalorder %s26, 0
      %p143 = por %p141, %p142
      %p144 = scmp.ne.s32.totalorder %s132, %s133
      %p145 = scmp.eq.s32.totalorder %s27, 7
      %p146 = por %p144, %p145
      %p148 = scmp.ne.s32.totalorder %s133, %s147
      %p149 = scmp.eq.s32.totalorder %s27, 0
      %p150 = por %p148, %p149
      %s152 = sadd.s32 %s151, 1
      %p155 = scmp.eq.s32.totalorder %s21, 7
      %p156 = scmp.ne.s32.totalorder %s151, %s153
      %p157 = scmp.eq.s32.totalorder %s21, 0
      %p158 = por %p156, %p157
      %p159 = scmp.ne.s32.totalorder %s151, %s153
      %p160 = scmp.eq.s32.totalorder %s26, 7
      %p161 = por %p159, %p160
      %p162 = scmp.ne.s32.totalorder %s153, %s154
      %p163 = scmp.eq.s32.totalorder %s26, 0
      %p164 = por %p162, %p163
      %p165 = scmp.ne.s32.totalorder %s153, %s154
      %p166 = scmp.eq.s32.totalorder %s27, 7
      %p167 = por %p165, %p166
      %p169 = scmp.ne.s32.totalorder %s154, %s168
      %p170 = scmp.eq.s32.totalorder %s27, 0
      %p171 = por %p169, %p170
      %s173 = sadd.s32 %s172, 1
      %p176 = scmp.eq.s32.totalorder %s21, 7
      %p177 = scmp.ne.s32.totalorder %s172, %s174
      %p178 = scmp.eq.s32.totalorder %s21, 0
      %p179 = por %p177, %p178
      %p180 = scmp.ne.s32.totalorder %s172, %s174
      %p181 = scmp.eq.s32.totalorder %s26, 7
      %p182 = por %p180, %p181
      %p183 = scmp.ne.s32.totalorder %s174, %s175
      %p184 = scmp.eq.s32.totalorder %s26, 0
      %p185 = por %p183, %p184
      %p186 = scmp.ne.s32.totalorder %s174, %s175
      %p187 = scmp.eq.s32.totalorder %s27, 7
      %p188 = por %p186, %p187
      %p190 = scmp.ne.s32.totalorder %s175, %s189
      %p191 = scmp.eq.s32.totalorder %s27, 0
      %p192 = por %p190, %p191
      %s193 = ssub.s32 %s29, %s36
      %p194 = scmp.eq.s32.totalorder %s193, 0
      %s196 = sadd.s32 %s195, 1
      %s197 = scalar_select %p194, %s195, %s196
      %p200 = pneg %p194
      %p201 = scmp.eq.s32.totalorder %s21, 7
      %p202 = por %p200, %p201
      %p203 = scmp.ne.s32.totalorder %s195, %s198
      %p204 = scmp.eq.s32.totalorder %s21, 0
      %p205 = por %p203, %p204
      %p206 = scmp.ne.s32.totalorder %s195, %s198
      %p207 = scmp.eq.s32.totalorder %s26, 7
      %p208 = por %p206, %p207
      %p209 = scmp.ne.s32.totalorder %s198, %s199
      %p210 = scmp.eq.s32.totalorder %s26, 0
      %p211 = por %p209, %p210
      %p212 = scmp.ne.s32.totalorder %s198, %s199
      %p213 = scmp.eq.s32.totalorder %s27, 7
      %p214 = por %p212, %p213
      %p216 = scmp.ne.s32.totalorder %s199, %s215
      %p217 = scmp.eq.s32.totalorder %s27, 0
      %p218 = por %p216, %p217
      %s219 = ssub.s32 %s29, %s36
      %p220 = scmp.eq.s32.totalorder %s219, 0
      %s222 = sadd.s32 %s221, 1
      %s223 = scalar_select %p220, %s221, %s222
      %p226 = pneg %p220
      %p227 = scmp.eq.s32.totalorder %s21, 7
      %p228 = por %p226, %p227
      %p229 = scmp.ne.s32.totalorder %s221, %s224
      %p230 = scmp.eq.s32.totalorder %s21, 0
      %p231 = por %p229, %p230
      %p232 = scmp.ne.s32.totalorder %s221, %s224
      %p233 = scmp.eq.s32.totalorder %s26, 7
      %p234 = por %p232, %p233
      %p235 = scmp.ne.s32.totalorder %s224, %s225
      %p236 = scmp.eq.s32.totalorder %s26, 0
      %p237 = por %p235, %p236
      %p238 = scmp.ne.s32.totalorder %s224, %s225
      %p239 = scmp.eq.s32.totalorder %s27, 7
      %p240 = por %p238, %p239
      %p242 = scmp.ne.s32.totalorder %s225, %s241
      %p243 = scmp.eq.s32.totalorder %s27, 0
      %p244 = por %p242, %p243
      %s245 = ssub.s32 %s29, %s36
      %p246 = scmp.eq.s32.totalorder %s245, 0
      %s248 = sadd.s32 %s247, 1
      %s249 = scalar_select %p246, %s247, %s248
      %p252 = pneg %p246
      %p253 = scmp.eq.s32.totalorder %s21, 7
      %p254 = por %p252, %p253
      %p255 = scmp.ne.s32.totalorder %s247, %s250
      %p256 = scmp.eq.s32.totalorder %s21, 0
      %p257 = por %p255, %p256
      %p258 = scmp.ne.s32.totalorder %s247, %s250
      %p259 = scmp.eq.s32.totalorder %s26, 7
      %p260 = por %p258, %p259
      %p261 = scmp.ne.s32.totalorder %s250, %s251
      %p262 = scmp.eq.s32.totalorder %s26, 0
      %p263 = por %p261, %p262
      %p264 = scmp.ne.s32.totalorder %s250, %s251
      %p265 = scmp.eq.s32.totalorder %s27, 7
      %p266 = por %p264, %p265
      %p268 = scmp.ne.s32.totalorder %s251, %s267
      %p269 = scmp.eq.s32.totalorder %s27, 0
      %p270 = por %p268, %p269
      %s272 = sadd.s32 %s271, 1
      %p275 = scmp.eq.s32.totalorder %s21, 7
      %p276 = scmp.ne.s32.totalorder %s271, %s273
      %p277 = scmp.eq.s32.totalorder %s21, 0
      %p278 = por %p276, %p277
      %p279 = scmp.ne.s32.totalorder %s271, %s273
      %p280 = scmp.eq.s32.totalorder %s26, 7
      %p281 = por %p279, %p280
      %p282 = scmp.ne.s32.totalorder %s273, %s274
      %p283 = scmp.eq.s32.totalorder %s26, 0
      %p284 = por %p282, %p283
      %p285 = scmp.ne.s32.totalorder %s273, %s274
      %p286 = scmp.eq.s32.totalorder %s27, 7
      %p287 = por %p285, %p286
      %p289 = scmp.ne.s32.totalorder %s274, %s288
      %p290 = scmp.eq.s32.totalorder %s27, 0
      %p291 = por %p289, %p290
      %s293 = sadd.s32 %s292, 1
      %p296 = scmp.eq.s32.totalorder %s21, 7
      %p297 = scmp.ne.s32.totalorder %s292, %s294
      %p298 = scmp.eq.s32.totalorder %s21, 0
      %p299 = por %p297, %p298
      %p300 = scmp.ne.s32.totalorder %s292, %s294
      %p301 = scmp.eq.s32.totalorder %s26, 7
      %p302 = por %p300, %p301
      %p303 = scmp.ne.s32.totalorder %s294, %s295
      %p304 = scmp.eq.s32.totalorder %s26, 0
      %p305 = por %p303, %p304
      %p306 = scmp.ne.s32.totalorder %s294, %s295
      %p307 = scmp.eq.s32.totalorder %s27, 7
      %p308 = por %p306, %p307
      %p310 = scmp.ne.s32.totalorder %s295, %s309
      %p311 = scmp.eq.s32.totalorder %s27, 0
      %p312 = por %p310, %p311
      %s314 = sadd.s32 %s313, 1
      %p317 = scmp.eq.s32.totalorder %s21, 7
      %p318 = scmp.ne.s32.totalorder %s313, %s315
      %p319 = scmp.eq.s32.totalorder %s21, 0
      %p320 = por %p318, %p319
      %p321 = scmp.ne.s32.totalorder %s313, %s315
      %p322 = scmp.eq.s32.totalorder %s26, 7
      %p323 = por %p321, %p322
      %p324 = scmp.ne.s32.totalorder %s315, %s316
      %p325 = scmp.eq.s32.totalorder %s26, 0
      %p326 = por %p324, %p325
      %p327 = scmp.ne.s32.totalorder %s315, %s316
      %p328 = scmp.eq.s32.totalorder %s27, 7
      %p329 = por %p327, %p328
      %p331 = scmp.ne.s32.totalorder %s316, %s330
      %p332 = scmp.eq.s32.totalorder %s27, 0
      %p333 = por %p331, %p332
      %s335 = sadd.s32 %s334, 1
      %p338 = scmp.eq.s32.totalorder %s21, 7
      %p339 = scmp.ne.s32.totalorder %s334, %s336
      %p340 = scmp.eq.s32.totalorder %s21, 0
      %p341 = por %p339, %p340
      %p342 = scmp.ne.s32.totalorder %s334, %s336
      %p343 = scmp.eq.s32.totalorder %s26, 7
      %p344 = por %p342, %p343
      %p345 = scmp.ne.s32.totalorder %s336, %s337
      %p346 = scmp.eq.s32.totalorder %s26, 0
      %p347 = por %p345, %p346
      %p348 = scmp.ne.s32.totalorder %s336, %s337
      %p349 = scmp.eq.s32.totalorder %s27, 7
      %p350 = por %p348, %p349
      %p352 = scmp.ne.s32.totalorder %s337, %s351
      %p353 = scmp.eq.s32.totalorder %s27, 0
      %p354 = por %p352, %p353
      %s356 = sadd.s32 %s355, 1
      %p359 = scmp.eq.s32.totalorder %s21, 7
      %p360 = scmp.ne.s32.totalorder %s355, %s357
      %p361 = scmp.eq.s32.totalorder %s21, 0
      %p362 = por %p360, %p361
      %p363 = scmp.ne.s32.totalorder %s355, %s357
      %p364 = scmp.eq.s32.totalorder %s26, 7
      %p365 = por %p363, %p364
      %p366 = scmp.ne.s32.totalorder %s357, %s358
      %p367 = scmp.eq.s32.totalorder %s26, 0
      %p368 = por %p366, %p367
      %p369 = scmp.ne.s32.totalorder %s357, %s358
      %p370 = scmp.eq.s32.totalorder %s27, 7
      %p371 = por %p369, %p370
      %p373 = scmp.ne.s32.totalorder %s358, %s372
      %p374 = scmp.eq.s32.totalorder %s27, 0
      %p375 = por %p373, %p374
      %s376 = ssub.s32 %s28, %s40
      %p377 = scmp.eq.s32.totalorder %s376, 0
      %s379 = sadd.s32 %s378, 1
      %s380 = scalar_select %p377, %s378, %s379
      %p383 = pneg %p377
      %p384 = scmp.eq.s32.totalorder %s21, 7
      %p385 = por %p383, %p384
      %p386 = scmp.ne.s32.totalorder %s378, %s381
      %p387 = scmp.eq.s32.totalorder %s21, 0
      %p388 = por %p386, %p387
      %p389 = scmp.ne.s32.totalorder %s378, %s381
      %p390 = scmp.eq.s32.totalorder %s26, 7
      %p391 = por %p389, %p390
      %p392 = scmp.ne.s32.totalorder %s381, %s382
      %p393 = scmp.eq.s32.totalorder %s26, 0
      %p394 = por %p392, %p393
      %p395 = scmp.ne.s32.totalorder %s381, %s382
      %p396 = scmp.eq.s32.totalorder %s27, 7
      %p397 = por %p395, %p396
      %p399 = scmp.ne.s32.totalorder %s382, %s398
      %p400 = scmp.eq.s32.totalorder %s27, 0
      %p401 = por %p399, %p400
      %p402 = scmp.le.s32.totalorder 1, %s21
      %p403 = scmp.lt.s32.totalorder %s21, 9
      %p404 = pnand %p402, %p403
      %p405 = pneg %p404
      // Predicated region
      $region9: #{transformer_forward.6} parent=5 // pred_check
        _
      $region10: #{transformer_forward.6} parent=5 // pred_check_branch
        %407 = sbr.rel (%p404) target = $region12
      $region11: #{transformer_forward.6} parent=5 // pred_region
        %s408 = ssub.s32 %s21, 1
        // Predicated region
        $region13: #{transformer_forward.6} parent=11 // pred_check
          %p409 = pneg %p80
        $region14: #{transformer_forward.6} parent=11 // pred_check_branch
          %411 = sbr.rel (%p409) target = $region16
        $region15: #{transformer_forward.6} parent=11 // pred_region
          _
        $region16: #{transformer_forward.6} parent=11 // pred_fallthru
          _
        // Predicated region
        $region17: #{transformer_forward.6} parent=11 // pred_check
          %p412 = pneg %p101
        $region18: #{transformer_forward.6} parent=11 // pred_check_branch
          %414 = sbr.rel (%p412) target = $region20
        $region19: #{transformer_forward.6} parent=11 // pred_region
          _
        $region20: #{transformer_forward.6} parent=11 // pred_fallthru
          _
        // Predicated region
        $region21: #{transformer_forward.6} parent=11 // pred_check
          %p415 = pneg %p122
        $region22: #{transformer_forward.6} parent=11 // pred_check_branch
          %417 = sbr.rel (%p415) target = $region24
        $region23: #{transformer_forward.6} parent=11 // pred_region
          _
        $region24: #{transformer_forward.6} parent=11 // pred_fallthru
          _
        // Predicated region
        $region25: #{transformer_forward.6} parent=11 // pred_check
          %p418 = pneg %p143
        $region26: #{transformer_forward.6} parent=11 // pred_check_branch
          %420 = sbr.rel (%p418) target = $region28
        $region27: #{transformer_forward.6} parent=11 // pred_region
          _
        $region28: #{transformer_forward.6} parent=11 // pred_fallthru
          _
        // Predicated region
        $region29: #{transformer_forward.6} parent=11 // pred_check
          %p421 = pneg %p164
        $region30: #{transformer_forward.6} parent=11 // pred_check_branch
          %423 = sbr.rel (%p421) target = $region32
        $region31: #{transformer_forward.6} parent=11 // pred_region
          _
        $region32: #{transformer_forward.6} parent=11 // pred_fallthru
          _
        // Predicated region
        $region33: #{transformer_forward.6} parent=11 // pred_check
          %p424 = pneg %p185
        $region34: #{transformer_forward.6} parent=11 // pred_check_branch
          %426 = sbr.rel (%p424) target = $region36
        $region35: #{transformer_forward.6} parent=11 // pred_region
          _
        $region36: #{transformer_forward.6} parent=11 // pred_fallthru
          _
        // Predicated region
        $region37: #{transformer_forward.6} parent=11 // pred_check
          %p427 = pneg %p284
        $region38: #{transformer_forward.6} parent=11 // pred_check_branch
          %429 = sbr.rel (%p427) target = $region40
        $region39: #{transformer_forward.6} parent=11 // pred_region
          _
        $region40: #{transformer_forward.6} parent=11 // pred_fallthru
          _
        // Predicated region
        $region41: #{transformer_forward.6} parent=11 // pred_check
          %p430 = pneg %p305
        $region42: #{transformer_forward.6} parent=11 // pred_check_branch
          %432 = sbr.rel (%p430) target = $region44
        $region43: #{transformer_forward.6} parent=11 // pred_region
          _
        $region44: #{transformer_forward.6} parent=11 // pred_fallthru
          _
        // Predicated region
        $region45: #{transformer_forward.6} parent=11 // pred_check
          %p433 = pneg %p326
        $region46: #{transformer_forward.6} parent=11 // pred_check_branch
          %435 = sbr.rel (%p433) target = $region48
        $region47: #{transformer_forward.6} parent=11 // pred_region
          _
        $region48: #{transformer_forward.6} parent=11 // pred_fallthru
          _
        // Predicated region
        $region49: #{transformer_forward.6} parent=11 // pred_check
          %p436 = pneg %p347
        $region50: #{transformer_forward.6} parent=11 // pred_check_branch
          %438 = sbr.rel (%p436) target = $region52
        $region51: #{transformer_forward.6} parent=11 // pred_region
          _
        $region52: #{transformer_forward.6} parent=11 // pred_fallthru
          _
        // Predicated region
        $region53: #{transformer_forward.6} parent=11 // pred_check
          %p439 = pneg %p368
        $region54: #{transformer_forward.6} parent=11 // pred_check_branch
          %441 = sbr.rel (%p439) target = $region56
        $region55: #{transformer_forward.6} parent=11 // pred_region
          _
        $region56: #{transformer_forward.6} parent=11 // pred_fallthru
          _
      $region12: #{transformer_forward.6} parent=5 // pred_fallthru
        _
      %p442 = scmp.lt.s32.totalorder %s21, 8
      // Predicated region
      $region57: #{transformer_forward.6} parent=5 // pred_check
        %p443 = pneg %p442
      $region58: #{transformer_forward.6} parent=5 // pred_check_branch
        %445 = sbr.rel (%p443) target = $region60
      $region59: #{transformer_forward.6} parent=5 // pred_region
        // Predicated region
        $region61: #{transformer_forward.6} parent=59 // pred_check
          %p446 = pneg %p53
        $region62: #{transformer_forward.6} parent=59 // pred_check_branch
          %448 = sbr.rel (%p446) target = $region64
        $region63: #{transformer_forward.6} parent=59 // pred_region
          %p449 = scmp.lt.s32.totalorder %s28, 1
          %s450 = scalar_select %p449, %s28, 1
          %s451 = smul.addr %s450, 4
          %s452 = scalar_lea.vmem %s0, %s451
        $region64: #{transformer_forward.6} parent=59 // pred_fallthru
          _
        // Predicated region
        $region65: #{transformer_forward.6} parent=59 // pred_check
          %p453 = pneg %p205
        $region66: #{transformer_forward.6} parent=59 // pred_check_branch
          %455 = sbr.rel (%p453) target = $region68
        $region67: #{transformer_forward.6} parent=59 // pred_region
          %s456 = sand.u32 %s195, 1
          %s457 = sand.u32 %s195, 1
          %s458 = smul.addr %s457, 64
          %s459 = scalar_lea.vmem [#allocation4], %s458
          %s460 = smul.u32 4, %s29
          %s461 = smul.addr %s460, 4
          %s462 = scalar_lea.vmem %s7, %s461
          // Predicated region
          $region69: #{transformer_forward.6} parent=67 // pred_check
            _
          $region70: #{transformer_forward.6} parent=67 // pred_check_branch
            %464 = sbr.rel (0) target = $region72
          $region71: #{transformer_forward.6} parent=67 // pred_region
            // Predicated region
            $region73: #{transformer_forward.6} parent=71 // pred_check
              _
            $region74: #{transformer_forward.6} parent=71 // pred_check_branch
              %466 = sbr.rel (0) target = $region76
            $region75: #{transformer_forward.6} parent=71 // pred_region
              loop: start=0, step=1, limit=1
              $region77: #{transformer_forward.6} parent=75 // loop_pre_header
                _
              $region78: #{transformer_forward.6} parent=75 // loop_header
                %s468 = sphi 0, %s472
                %p469 = scmp.ge.s32.totalorder %s468, 1
                %s473 = sphi %s462, %s462
                %s474 = sphi %s459, %s459
              $region79: #{transformer_forward.6} parent=75 // loop_header_branch
                %471 = sbr.rel (%p469) target = $region83
              $region80: #{transformer_forward.6} parent=75 // loop_body
                %v475 = vld [vmem:[%s473] sm:$0xff]
                %476 = vst [vmem:[%s474] sm:$0xff] %v475
                %v477 = vld [vmem:[%s473 + $0x8] sm:$0xff]
                %478 = vst [vmem:[%s474 + $0x8] sm:$0xff] %v477
                %v479 = vld [vmem:[%s473 + $0x40] sm:$0xff]
                %480 = vst [vmem:[%s474 + $0x10] sm:$0xff] %v479
                %v481 = vld [vmem:[%s473 + $0x48] sm:$0xff]
                %482 = vst [vmem:[%s474 + $0x18] sm:$0xff] %v481
                %v483 = vld [vmem:[%s473 + $0x80] sm:$0xff]
                %484 = vst [vmem:[%s474 + $0x20] sm:$0xff] %v483
                %v485 = vld [vmem:[%s473 + $0x88] sm:$0xff]
                %486 = vst [vmem:[%s474 + $0x28] sm:$0xff] %v485
                %v487 = vld [vmem:[%s473 + $0xc0] sm:$0xff]
                %488 = vst [vmem:[%s474 + $0x30] sm:$0xff] %v487
                %v489 = vld [vmem:[%s473 + $0xc8] sm:$0xff]
                %490 = vst [vmem:[%s474 + $0x38] sm:$0xff] %v489
              $region81: #{transformer_forward.6} parent=75 // loop_footer
                %s472 = sadd.s32 1, %s468
              $region82: #{transformer_forward.6} parent=75 // loop_footer_branch
                %467 = sbr.rel target = $region78
              $region83: #{transformer_forward.6} parent=75 // loop_exit
                _
            $region76: #{transformer_forward.6} parent=71 // pred_fallthru
              _
            // Predicated region
            $region84: #{transformer_forward.6} parent=71 // pred_check
              _
            $region85: #{transformer_forward.6} parent=71 // pred_check_branch
              %492 = sbr.rel target = $region87
            $region86: #{transformer_forward.6} parent=71 // pred_region
              _
            $region87: #{transformer_forward.6} parent=71 // pred_fallthru
              _
          $region72: #{transformer_forward.6} parent=67 // pred_fallthru
            _
          %493 = vnop
        $region68: #{transformer_forward.6} parent=59 // pred_fallthru
          _
        // Predicated region
        $region88: #{transformer_forward.6} parent=59 // pred_check
          %p494 = pneg %p231
        $region89: #{transformer_forward.6} parent=59 // pred_check_branch
          %496 = sbr.rel (%p494) target = $region91
        $region90: #{transformer_forward.6} parent=59 // pred_region
          %s497 = smul.u32 4, %s29
          %p498 = scmp.lt.s32.totalorder %s497, 15
          %s499 = scalar_select %p498, %s497, 15
          %s500 = scalar_lea.vmem %s8, %s499
          %s501 = smul.u32 4, %s29
        $region91: #{transformer_forward.6} parent=59 // pred_fallthru
          _
        // Predicated region
        $region92: #{transformer_forward.6} parent=59 // pred_check
          %p502 = pneg %p257
        $region93: #{transformer_forward.6} parent=59 // pred_check_branch
          %504 = sbr.rel (%p502) target = $region95
        $region94: #{transformer_forward.6} parent=59 // pred_region
          %s505 = smul.u32 64, %s29
          %p506 = scmp.lt.s32.totalorder %s505, 255
          %s507 = scalar_select %p506, %s505, 255
          %s508 = smul.addr %s507, 4
          %s509 = scalar_lea.vmem %s9, %s508
          %s510 = smul.u32 64, %s29
        $region95: #{transformer_forward.6} parent=59 // pred_fallthru
          _
      $region60: #{transformer_forward.6} parent=5 // pred_fallthru
        _
      %p511 = scmp.le.s32.totalorder 1, %s21
      %p512 = scmp.lt.s32.totalorder %s21, 9
      %p513 = pnand %p511, %p512
      %p514 = pneg %p513
      // Predicated region
      $region96: #{transformer_forward.6} parent=5 // pred_check
        _
      $region97: #{transformer_forward.6} parent=5 // pred_check_branch
        %516 = sbr.rel (%p513) target = $region99
      $region98: #{transformer_forward.6} parent=5 // pred_region
        %s517 = ssub.s32 %s21, 1
        %s518 = sand.u32 %s198, 1
        %s519 = sand.u32 %s198, 1
        %s520 = smul.addr %s519, 64
        %s521 = scalar_lea.vmem [#allocation4], %s520
        // Predicated region
        $region100: #{transformer_forward.6} parent=98 // pred_check
          %p522 = pneg %p211
        $region101: #{transformer_forward.6} parent=98 // pred_check_branch
          %524 = sbr.rel (%p522) target = $region103
        $region102: #{transformer_forward.6} parent=98 // pred_region
          _
        $region103: #{transformer_forward.6} parent=98 // pred_fallthru
          _
        %p525 = scmp.lt.s32.totalorder %s30, 1
        %s526 = scalar_select %p525, %s30, 1
        %s527 = smul.addr %s526, 4
        %s528 = scalar_lea.vmem %s0, %s527
        %p529 = pneg %p59
        %p530 = pneg %p56
        %p531 = pneg %p80
        %p532 = pneg %p77
        %p533 = pneg %p101
        %p534 = pneg %p98
        %p535 = pneg %p122
        %p536 = pneg %p119
        %p537 = pneg %p143
        %p538 = pneg %p140
        %p539 = pneg %p164
        %p540 = pneg %p161
        %p541 = pneg %p185
        %p542 = pneg %p182
        %s543 = sand.u32 %s198, 1
        %s544 = sand.u32 %s198, 1
        %s545 = smul.addr %s544, 64
        %s546 = scalar_lea.vmem [#allocation4], %s545
        %p547 = pneg %p211
        %p548 = pneg %p208
        %s549 = smul.u32 4, %s31
        %p550 = scmp.lt.s32.totalorder %s549, 15
        %s551 = scalar_select %p550, %s549, 15
        %s552 = scalar_lea.vmem %s8, %s551
        %p553 = pneg %p237
        %p554 = pneg %p234
        %s555 = smul.u32 64, %s31
        %p556 = scmp.lt.s32.totalorder %s555, 255
        %s557 = scalar_select %p556, %s555, 255
        %s558 = smul.addr %s557, 4
        %s559 = scalar_lea.vmem %s9, %s558
        %p560 = pneg %p263
        %p561 = pneg %p260
        %p562 = pneg %p284
        %p563 = pneg %p281
        %p564 = pneg %p305
        %p565 = pneg %p302
        %p566 = pneg %p326
        %p567 = pneg %p323
        %p568 = pneg %p347
        %p569 = pneg %p344
        %p570 = pneg %p368
        %p571 = pneg %p365
        %p572 = pneg %p394
        %p573 = pneg %p391
        %p574 = scmp.lt.s32.totalorder %s30, 1
        %s575 = scalar_select %p574, %s30, 1
        %s576 = smul.addr %s575, 4
        %s577 = scalar_lea.vmem %s15, %s576
        %p578 = scmp.lt.s32.totalorder %s30, 1
        %s579 = scalar_select %p578, %s30, 1
        %s580 = smul.addr %s579, 4
        %s581 = scalar_lea.vmem %s0, %s580
        %s582 = smul.u32 4, %s31
        %s583 = smul.u32 4, %s31
        %p584 = scmp.lt.s32.totalorder %s583, 15
        %s585 = scalar_select %p584, %s583, 15
        %s586 = scalar_lea.vmem %s8, %s585
        %s587 = smul.u32 4, %s31
        %s588 = smul.u32 64, %s31
        %p589 = scmp.lt.s32.totalorder %s588, 255
        %s590 = scalar_select %p589, %s588, 255
        %s591 = smul.addr %s590, 4
        %s592 = scalar_lea.vmem %s9, %s591
        %s593 = smul.u32 64, %s31
        %p594 = scmp.lt.s32.totalorder %s30, 1
        %s595 = scalar_select %p594, %s30, 1
        %s596 = smul.addr %s595, 4
        %s597 = scalar_lea.vmem %s15, %s596
        %p599 = scmp.eq.s32.totalorder %s31, 0
        // Predicated region
        $region104: #{transformer_forward.6} parent=98 // pred_check
          %p600 = pneg %p599
        $region105: #{transformer_forward.6} parent=98 // pred_check_branch
          %602 = sbr.rel (%p600) target = $region107
        $region106: #{transformer_forward.6} parent=98 // pred_region
          %v603 = vld [vmem:[%s581] sm:$0xf]
          %v604 = vunpack.c.l.bf16 %v603
          %v605 = vld [vmem:[%s1] sm:$0xf]
          %v606 = vld [vmem:[%s1 + $0x4] sm:$0xf]
          %v607 = vld [vmem:[%s1 + $0x8] sm:$0xf]
          %v608 = vld [vmem:[%s1 + $0xc] sm:$0xf]
          %v609 = vld [vmem:[%s2] sm:$0x1]
          %v610 = vld [vmem:[%s3] sm:$0xf]
          %v611 = vld [vmem:[%s3 + $0x4] sm:$0xf]
          %v612 = vld [vmem:[%s3 + $0x8] sm:$0xf]
          %v613 = vld [vmem:[%s3 + $0xc] sm:$0xf]
          %v614 = vld [vmem:[%s4] sm:$0x1]
          %v616 = vlaneseq
          %v617 = vshrl.u32 %v616, 7
          %v618 = vsub.s32 0, %v617
          %v619 = vrot.slane %v609, %v618
          %v625 = vunpack.c.l.b16 %v605
          %v626 = vunpack.c.l.b16 %v606
          %v627 = vunpack.c.l.b16 %v607
          %v628 = vunpack.c.l.b16 %v608
          %v629 = vpack.c.b16 %v626, %v625
          %v630 = vpack.c.b16 %v628, %v627
          %vm633 = vcmask 261120
          %v635 = vsel %vm633, %v603, 0
          %637 = vmatprep.subr.bf16.mxu0 0
          %638 = vmatpush1.bf16.msra.mxu0 %v629
          %639 = vmatprep.subr.bf16.mxu0 0
          %640 = vmatpush1.bf16.msra.mxu0 %v630
          %641 = vmatprep.subr.bf16.mxu0 0
          %642 = vmatpush1.bf16.msra.mxu0 0
          %643 = vmatprep.subr.bf16.mxu0 0
          %644 = vmatpush1.bf16.msra.mxu0 0
          %645 = vmatprep.subr.bf16.mxu0 0
          %646 = vmatpush1.bf16.msra.mxu0 0
          %647 = vmatprep.subr.bf16.mxu0 0
          %648 = vmatpush1.bf16.msra.mxu0 0
          %649 = vmatprep.subr.bf16.mxu0 0
          %650 = vmatpush1.bf16.msra.mxu0 0
          %651 = vmatprep.subr.bf16.mxu0 0
          %652 = vmatpush1.bf16.msra.mxu0 0
          %653 = vmatprep.subr.bf16.mxu0 0
          %654 = vmatpush1.bf16.msra.mxu0 0
          %655 = vmatprep.subr.bf16.mxu0 0
          %656 = vmatpush1.bf16.msra.mxu0 0
          %657 = vmatprep.subr.bf16.mxu0 0
          %658 = vmatpush1.bf16.msra.mxu0 0
          %659 = vmatprep.subr.bf16.mxu0 0
          %660 = vmatpush1.bf16.msra.mxu0 0
          %661 = vmatprep.subr.bf16.mxu0 0
          %662 = vmatpush1.bf16.msra.mxu0 0
          %663 = vmatprep.subr.bf16.mxu0 0
          %664 = vmatpush1.bf16.msra.mxu0 0
          %665 = vmatprep.subr.bf16.mxu0 0
          %666 = vmatpush1.bf16.msra.mxu0 0
          %667 = vmatprep.subr.bf16.mxu0 0
          %668 = vmatpush1.bf16.msra.mxu0 0
          %669 = vmatprep.mubr.bf16.mxu0 0
          %670 = vmatmul.mubr.bf16.gmra.mrb[0].mxu0 %v635
          %v671 = vpop.f32.mrb[0].mxu0
          %v672 = vadd.f32 %v619, %v671
          %v673 = vpop.f32.mrb[0].mxu0
          %v674 = vpop.f32.mrb[0].mxu0
          %v675 = vpop.f32.mrb[0].mxu0
          %676 = vdwg.mxu0
          %v677 = vpack.c.bf16 %v672, %v672
          %679 = vrot.lane.b32.xlu0 %v677, 96
          %v680 = vpop.permute.xlu0 %679
          %vm681 = vcmask 130048
          %v683 = vsel %vm681, %v677, 0
          %v686 = vsel %vm681, %v680, 0
          %688 = vmatprep.subr.bf16.mxu0 0
          %689 = vmatpush1.bf16.xpose.msra.mxu0 %v686
          %690 = vmatprep.subr.bf16.mxu0 0
          %691 = vmatpush1.bf16.xpose.msra.mxu0 0
          %692 = vmatprep.subr.bf16.mxu0 0
          %693 = vmatpush1.bf16.xpose.msra.mxu0 0
          %694 = vmatprep.subr.bf16.mxu0 0
          %695 = vmatpush1.bf16.xpose.msra.mxu0 0
          %696 = vmatprep.subr.bf16.mxu0 0
          %697 = vmatpush1.bf16.xpose.msra.mxu0 0
          %698 = vmatprep.subr.bf16.mxu0 0
          %699 = vmatpush1.bf16.xpose.msra.mxu0 0
          %700 = vmatprep.subr.bf16.mxu0 0
          %701 = vmatpush1.bf16.xpose.msra.mxu0 0
          %702 = vmatprep.subr.bf16.mxu0 0
          %703 = vmatpush1.bf16.xpose.msra.mxu0 0
          %704 = vmatprep.subr.bf16.mxu0 0
          %705 = vmatpush1.bf16.xpose.msra.mxu0 0
          %706 = vmatprep.subr.bf16.mxu0 0
          %707 = vmatpush1.bf16.xpose.msra.mxu0 0
          %708 = vmatprep.subr.bf16.mxu0 0
          %709 = vmatpush1.bf16.xpose.msra.mxu0 0
          %710 = vmatprep.subr.bf16.mxu0 0
          %711 = vmatpush1.bf16.xpose.msra.mxu0 0
          %712 = vmatprep.subr.bf16.mxu0 0
          %713 = vmatpush1.bf16.xpose.msra.mxu0 0
          %714 = vmatprep.subr.bf16.mxu0 0
          %715 = vmatpush1.bf16.xpose.msra.mxu0 0
          %716 = vmatprep.subr.bf16.mxu0 0
          %717 = vmatpush1.bf16.xpose.msra.mxu0 0
          %718 = vmatprep.subr.bf16.mxu0 0
          %719 = vmatpush1.bf16.xpose.msra.mxu0 0
          %720 = vmatprep.mubr.bf16.mxu0 0
          %721 = vmatmul.mubr.bf16.gmra.mrb[0].mxu0 %v683
          %v722 = vpop.f32.mrb[0].mxu0
          %v723 = vadd.f32 0.0, %v722
          %v724 = vpop.f32.mrb[0].mxu0
          %v725 = vpop.f32.mrb[0].mxu0
          %v726 = vpop.f32.mrb[0].mxu0
          %727 = vdwg.mxu0
          %v728 = vmul.f32 %v723, 0.25
          %vm729 = vcmask 64512
          %v730 = vsel %vm729, %v728, -inf
          %731 = vmax.xlane.f32.xlu0 %v730
          %v732 = vpop.xlane.xlu0 %731
          %v733 = vsub.f32 %v728, %v732
          %v734 = vmul.f32 %v733, 1.442695
          %v735 = vpow.pop %v734
          %v736 = vsel %vm729, %v735, 0.0
          %737 = vadd.xlane.f32.xlu0 %v736
          %v738 = vpop.xlane.xlu0 %737
          %v739 = vrcp.pop %v738
          %v740 = vmul.f32 %v735, %v739
          %v741 = vpack.c.bf16 %v740, %v740
          %742 = vrot.lane.b32.xlu0 %v677, 64
          %v743 = vpop.permute.xlu0 %742
          %v745 = vsel %vm729, %v741, 0
          %vm747 = vcmask 1043456
          %v749 = vsel %vm747, %v743, 0
          %751 = vmatprep.subr.bf16.mxu0 0
          %752 = vmatpush1.bf16.msra.mxu0 %v749
          %753 = vmatprep.subr.bf16.mxu0 0
          %754 = vmatpush1.bf16.msra.mxu0 0
          %755 = vmatprep.subr.bf16.mxu0 0
          %756 = vmatpush1.bf16.msra.mxu0 0
          %757 = vmatprep.subr.bf16.mxu0 0
          %758 = vmatpush1.bf16.msra.mxu0 0
          %759 = vmatprep.subr.bf16.mxu0 0
          %760 = vmatpush1.bf16.msra.mxu0 0
          %761 = vmatprep.subr.bf16.mxu0 0
          %762 = vmatpush1.bf16.msra.mxu0 0
          %763 = vmatprep.subr.bf16.mxu0 0
          %764 = vmatpush1.bf16.msra.mxu0 0
          %765 = vmatprep.subr.bf16.mxu0 0
          %766 = vmatpush1.bf16.msra.mxu0 0
          %767 = vmatprep.subr.bf16.mxu0 0
          %768 = vmatpush1.bf16.msra.mxu0 0
          %769 = vmatprep.subr.bf16.mxu0 0
          %770 = vmatpush1.bf16.msra.mxu0 0
          %771 = vmatprep.subr.bf16.mxu0 0
          %772 = vmatpush1.bf16.msra.mxu0 0
          %773 = vmatprep.subr.bf16.mxu0 0
          %774 = vmatpush1.bf16.msra.mxu0 0
          %775 = vmatprep.subr.bf16.mxu0 0
          %776 = vmatpush1.bf16.msra.mxu0 0
          %777 = vmatprep.subr.bf16.mxu0 0
          %778 = vmatpush1.bf16.msra.mxu0 0
          %779 = vmatprep.subr.bf16.mxu0 0
          %780 = vmatpush1.bf16.msra.mxu0 0
          %781 = vmatprep.subr.bf16.mxu0 0
          %782 = vmatpush1.bf16.msra.mxu0 0
          %783 = vmatprep.mubr.bf16.mxu0 0
          %784 = vmatmul.mubr.bf16.gmra.mrb[0].mxu0 %v745
          %v785 = vpop.f32.mrb[0].mxu0
          %v786 = vadd.f32 0.0, %v785
          %v787 = vpop.f32.mrb[0].mxu0
          %v788 = vpop.f32.mrb[0].mxu0
          %v789 = vpop.f32.mrb[0].mxu0
          %790 = vdwg.mxu0
          %791 = vrot.lane.b32.xlu0 %v677, 112
          %v792 = vpop.permute.xlu0 %791
          %793 = vrot.lane.b32.xlu0 %v677, 80
          %v794 = vpop.permute.xlu0 %793
          %v796 = vsel %vm681, %v792, 0
          %v799 = vsel %vm681, %v794, 0
          %801 = vmatprep.subr.bf16.mxu0 0
          %802 = vmatpush1.bf16.xpose.msra.mxu0 %v799
          %803 = vmatprep.subr.bf16.mxu0 0
          %804 = vmatpush1.bf16.xpose.msra.mxu0 0
          %805 = vmatprep.subr.bf16.mxu0 0
          %806 = vmatpush1.bf16.xpose.msra.mxu0 0
          %807 = vmatprep.subr.bf16.mxu0 0
          %808 = vmatpush1.bf16.xpose.msra.mxu0 0
          %809 = vmatprep.subr.bf16.mxu0 0
          %810 = vmatpush1.bf16.xpose.msra.mxu0 0
          %811 = vmatprep.subr.bf16.mxu0 0
          %812 = vmatpush1.bf16.xpose.msra.mxu0 0
          %813 = vmatprep.subr.bf16.mxu0 0
          %814 = vmatpush1.bf16.xpose.msra.mxu0 0
          %815 = vmatprep.subr.bf16.mxu0 0
          %816 = vmatpush1.bf16.xpose.msra.mxu0 0
          %817 = vmatprep.subr.bf16.mxu0 0
          %818 = vmatpush1.bf16.xpose.msra.mxu0 0
          %819 = vmatprep.subr.bf16.mxu0 0
          %820 = vmatpush1.bf16.xpose.msra.mxu0 0
          %821 = vmatprep.subr.bf16.mxu0 0
          %822 = vmatpush1.bf16.xpose.msra.mxu0 0
          %823 = vmatprep.subr.bf16.mxu0 0
          %824 = vmatpush1.bf16.xpose.msra.mxu0 0
          %825 = vmatprep.subr.bf16.mxu0 0
          %826 = vmatpush1.bf16.xpose.msra.mxu0 0
          %827 = vmatprep.subr.bf16.mxu0 0
          %828 = vmatpush1.bf16.xpose.msra.mxu0 0
          %829 = vmatprep.subr.bf16.mxu0 0
          %830 = vmatpush1.bf16.xpose.msra.mxu0 0
          %831 = vmatprep.subr.bf16.mxu0 0
          %832 = vmatpush1.bf16.xpose.msra.mxu0 0
          %833 = vmatprep.mubr.bf16.mxu0 0
          %834 = vmatmul.mubr.bf16.gmra.mrb[0].mxu0 %v796
          %v835 = vpop.f32.mrb[0].mxu0
          %v836 = vadd.f32 0.0, %v835
          %v837 = vpop.f32.mrb[0].mxu0
          %v838 = vpop.f32.mrb[0].mxu0
          %v839 = vpop.f32.mrb[0].mxu0
          %840 = vdwg.mxu0
          %v841 = vmul.f32 %v836, 0.25
          %v842 = vsel %vm729, %v841, -inf
          %843 = vmax.xlane.f32.xlu0 %v842
          %v844 = vpop.xlane.xlu0 %843
          %v845 = vsub.f32 %v841, %v844
          %v846 = vmul.f32 %v845, 1.442695
          %v847 = vpow.pop %v846
          %v848 = vsel %vm729, %v847, 0.0
          %849 = vadd.xlane.f32.xlu0 %v848
          %v850 = vpop.xlane.xlu0 %849
          %v851 = vrcp.pop %v850
          %v852 = vmul.f32 %v847, %v851
          %v853 = vpack.c.bf16 %v852, %v852
          %854 = vrot.lane.b32.xlu0 %v677, 48
          %v855 = vpop.permute.xlu0 %854
          %v857 = vsel %vm729, %v853, 0
          %v860 = vsel %vm747, %v855, 0
          %862 = vmatprep.subr.bf16.mxu0 0
          %863 = vmatpush1.bf16.msra.mxu0 %v860
          %864 = vmatprep.subr.bf16.mxu0 0
          %865 = vmatpush1.bf16.msra.mxu0 0
          %866 = vmatprep.subr.bf16.mxu0 0
          %867 = vmatpush1.bf16.msra.mxu0 0
          %868 = vmatprep.subr.bf16.mxu0 0
          %869 = vmatpush1.bf16.msra.mxu0 0
          %870 = vmatprep.subr.bf16.mxu0 0
          %871 = vmatpush1.bf16.msra.mxu0 0
          %872 = vmatprep.subr.bf16.mxu0 0
          %873 = vmatpush1.bf16.msra.mxu0 0
          %874 = vmatprep.subr.bf16.mxu0 0
          %875 = vmatpush1.bf16.msra.mxu0 0
          %876 = vmatprep.subr.bf16.mxu0 0
          %877 = vmatpush1.bf16.msra.mxu0 0
          %878 = vmatprep.subr.bf16.mxu0 0
          %879 = vmatpush1.bf16.msra.mxu0 0
          %880 = vmatprep.subr.bf16.mxu0 0
          %881 = vmatpush1.bf16.msra.mxu0 0
          %882 = vmatprep.subr.bf16.mxu0 0
          %883 = vmatpush1.bf16.msra.mxu0 0
          %884 = vmatprep.subr.bf16.mxu0 0
          %885 = vmatpush1.bf16.msra.mxu0 0
          %886 = vmatprep.subr.bf16.mxu0 0
          %887 = vmatpush1.bf16.msra.mxu0 0
          %888 = vmatprep.subr.bf16.mxu0 0
          %889 = vmatpush1.bf16.msra.mxu0 0
          %890 = vmatprep.subr.bf16.mxu0 0
          %891 = vmatpush1.bf16.msra.mxu0 0
          %892 = vmatprep.subr.bf16.mxu0 0
          %893 = vmatpush1.bf16.msra.mxu0 0
          %894 = vmatprep.mubr.bf16.mxu0 0
          %895 = vmatmul.mubr.bf16.gmra.mrb[0].mxu0 %v857
          %v896 = vpop.f32.mrb[0].mxu0
          %v897 = vadd.f32 0.0, %v896
          %v898 = vpop.f32.mrb[0].mxu0
          %v899 = vpop.f32.mrb[0].mxu0
          %v900 = vpop.f32.mrb[0].mxu0
          %901 = vdwg.mxu0
          %903 = vrot.lane.b32.xlu0 %v897, 16
          %v904 = vpop.permute.xlu0 %903
          %v906 = vsel %vm681, %v786, %v904
          %v907 = vpack.c.bf16 %v906, %v906
          %v909 = vlaneseq
          %v910 = vshrl.u32 %v909, 7
          %v911 = vsub.s32 0, %v910
          %v912 = vrot.slane %v614, %v911
          %v918 = vunpack.c.l.b16 %v610
          %v919 = vunpack.c.l.b16 %v611
          %v920 = vunpack.c.l.b16 %v612
          %v921 = vunpack.c.l.b16 %v613
          %v922 = vpack.c.b16 %v919, %v918
          %v923 = vpack.c.b16 %v921, %v920
          %v927 = vsel %vm633, %v907, 0
          %929 = vmatprep.subr.bf16.mxu0 0
          %930 = vmatpush1.bf16.msra.mxu0 %v922
          %931 = vmatprep.subr.bf16.mxu0 0
          %932 = vmatpush1.bf16.msra.mxu0 %v923
          %933 = vmatprep.subr.bf16.mxu0 0
          %934 = vmatpush1.bf16.msra.mxu0 0
          %935 = vmatprep.subr.bf16.mxu0 0
          %936 = vmatpush1.bf16.msra.mxu0 0
          %937 = vmatprep.subr.bf16.mxu0 0
          %938 = vmatpush1.bf16.msra.mxu0 0
          %939 = vmatprep.subr.bf16.mxu0 0
          %940 = vmatpush1.bf16.msra.mxu0 0
          %941 = vmatprep.subr.bf16.mxu0 0
          %942 = vmatpush1.bf16.msra.mxu0 0
          %943 = vmatprep.subr.bf16.mxu0 0
          %944 = vmatpush1.bf16.msra.mxu0 0
          %945 = vmatprep.subr.bf16.mxu0 0
          %946 = vmatpush1.bf16.msra.mxu0 0
          %947 = vmatprep.subr.bf16.mxu0 0
          %948 = vmatpush1.bf16.msra.mxu0 0
          %949 = vmatprep.subr.bf16.mxu0 0
          %950 = vmatpush1.bf16.msra.mxu0 0
          %951 = vmatprep.subr.bf16.mxu0 0
          %952 = vmatpush1.bf16.msra.mxu0 0
          %953 = vmatprep.subr.bf16.mxu0 0
          %954 = vmatpush1.bf16.msra.mxu0 0
          %955 = vmatprep.subr.bf16.mxu0 0
          %956 = vmatpush1.bf16.msra.mxu0 0
          %957 = vmatprep.subr.bf16.mxu0 0
          %958 = vmatpush1.bf16.msra.mxu0 0
          %959 = vmatprep.subr.bf16.mxu0 0
          %960 = vmatpush1.bf16.msra.mxu0 0
          %961 = vmatprep.mubr.bf16.mxu0 0
          %962 = vmatmul.mubr.bf16.gmra.mrb[0].mxu0 %v927
          %v963 = vpop.f32.mrb[0].mxu0
          %v964 = vadd.f32 %v912, %v963
          %v965 = vpop.f32.mrb[0].mxu0
          %v966 = vpop.f32.mrb[0].mxu0
          %v967 = vpop.f32.mrb[0].mxu0
          %968 = vdwg.mxu0
          %v969 = vadd.f32 %v604, %v964
          %v970 = vld [vmem:[%s5] sm:$0x1]
          %v971 = vld [vmem:[%s6] sm:$0x1]
          %v972 = vsel %vm633, %v969, 0.0
          %973 = vadd.xlane.f32.xlu0 %v972
          %v974 = vpop.xlane.xlu0 %973
          %v975 = vrcp.pop 32.0
          %v976 = vmul.f32 %v974, %v975
          %v977 = vsub.f32 %v969, %v976
          %v978 = vmul.f32 %v977, %v977
          %v979 = vsel %vm633, %v978, 0.0
          %980 = vadd.xlane.f32.xlu0 %v979
          %v981 = vpop.xlane.xlu0 %980
          %v982 = vmul.f32 %v981, %v975
          %v983 = vadd.f32 %v982, 1e-05
          %v984 = vrsqrt.pop %v983
          %v985 = vmul.f32 %v977, %v984
          %v987 = vlaneseq
          %v988 = vshrl.u32 %v987, 7
          %v989 = vsub.s32 0, %v988
          %v990 = vrot.slane %v970, %v989
          %v992 = vmul.f32 %v985, %v990
          %v994 = vlaneseq
          %v995 = vshrl.u32 %v994, 7
          %v996 = vsub.s32 0, %v995
          %v997 = vrot.slane %v971, %v996
          %v999 = vadd.f32 %v992, %v997
          %1000 = vst.msk [vmem:[#allocation2] sm:$0xff] %vm633, %v999
          %1001 = vst.msk [vmem:[#allocation3] sm:$0xff] %vm633, 0.0
        $region107: #{transformer_forward.6} parent=98 // pred_fallthru
          _
        %v1002 = vld [vmem:[#allocation2] sm:$0xff]
        %v1003 = vld [vmem:[%s521] sm:$0xff]
        %v1004 = vld [vmem:[%s521 + $0x8] sm:$0xff]
        %v1005 = vld [vmem:[%s521 + $0x10] sm:$0xff]
        %v1006 = vld [vmem:[%s521 + $0x18] sm:$0xff]
        %v1007 = vld [vmem:[%s521 + $0x20] sm:$0xff]
        %v1008 = vld [vmem:[%s521 + $0x28] sm:$0xff]
        %v1009 = vld [vmem:[%s521 + $0x30] sm:$0xff]
        %v1010 = vld [vmem:[%s521 + $0x38] sm:$0xff]
        %v1011 = vpack.c.bf16 %v1002, %v1002
        %v1012 = vld [vmem:[%s586] sm:$0xf]
        %v1014 = vlaneseq
        %v1015 = vshrl.u32 %v1014, 7
        %v1016 = vsub.s32 0, %v1015
        %v1017 = vrot.slane %v1012, %v1016
        %v1018 = vlaneseq
        %v1019 = vshrl.u32 %v1018, 7
        %v1020 = vsub.s32 1, %v1019
        %v1021 = vrot.slane %v1012, %v1020
        %v1022 = vlaneseq
        %v1023 = vshrl.u32 %v1022, 7
        %v1024 = vsub.s32 2, %v1023
        %v1025 = vrot.slane %v1012, %v1024
        %v1026 = vlaneseq
        %v1027 = vshrl.u32 %v1026, 7
        %v1028 = vsub.s32 3, %v1027
        %v1029 = vrot.slane %v1012, %v1028
        %v1042 = vunpack.c.l.b16 %v1003
        %v1043 = vunpack.c.h.b16 %v1003
        %v1044 = vunpack.c.l.b16 %v1004
        %v1045 = vunpack.c.h.b16 %v1004
        %v1046 = vunpack.c.l.b16 %v1005
        %v1047 = vunpack.c.h.b16 %v1005
        %v1048 = vunpack.c.l.b16 %v1006
        %v1049 = vunpack.c.h.b16 %v1006
        %v1050 = vunpack.c.l.b16 %v1007
        %v1051 = vunpack.c.h.b16 %v1007
        %v1052 = vunpack.c.l.b16 %v1008
        %v1053 = vunpack.c.h.b16 %v1008
        %v1054 = vunpack.c.l.b16 %v1009
        %v1055 = vunpack.c.h.b16 %v1009
        %v1056 = vunpack.c.l.b16 %v1010
        %v1057 = vunpack.c.h.b16 %v1010
        %v1058 = vpack.c.b16 %v1046, %v1042
        %v1059 = vpack.c.b16 %v1047, %v1043
        %v1060 = vpack.c.b16 %v1048, %v1044
        %v1061 = vpack.c.b16 %v1049, %v1045
        %v1062 = vpack.c.b16 %v1054, %v1050
        %v1063 = vpack.c.b16 %v1055, %v1051
        %v1064 = vpack.c.b16 %v1056, %v1052
        %v1065 = vpack.c.b16 %v1057, %v1053
        %vm1074 = vcmask 261120
        %v1076 = vsel %vm1074, %v1011, 0
        %1078 = vmatprep.subr.bf16.mxu0 %v1059
        %1079 = vmatpush1.bf16.msra.mxu0 %v1058
        %1080 = vmatprep.subr.bf16.mxu0 %v1063
        %1081 = vmatpush1.bf16.msra.mxu0 %v1062
        %1082 = vmatprep.subr.bf16.mxu0 0
        %1083 = vmatpush1.bf16.msra.mxu0 0
        %1084 = vmatprep.subr.bf16.mxu0 0
        %1085 = vmatpush1.bf16.msra.mxu0 0
        %1086 = vmatprep.subr.bf16.mxu0 0
        %1087 = vmatpush1.bf16.msra.mxu0 0
        %1088 = vmatprep.subr.bf16.mxu0 0
        %1089 = vmatpush1.bf16.msra.mxu0 0
        %1090 = vmatprep.subr.bf16.mxu0 0
        %1091 = vmatpush1.bf16.msra.mxu0 0
        %1092 = vmatprep.subr.bf16.mxu0 0
        %1093 = vmatpush1.bf16.msra.mxu0 0
        %1094 = vmatprep.subr.bf16.mxu0 0
        %1095 = vmatpush1.bf16.msra.mxu0 0
        %1096 = vmatprep.subr.bf16.mxu0 0
        %1097 = vmatpush1.bf16.msra.mxu0 0
        %1098 = vmatprep.subr.bf16.mxu0 0
        %1099 = vmatpush1.bf16.msra.mxu0 0
        %1100 = vmatprep.subr.bf16.mxu0 0
        %1101 = vmatpush1.bf16.msra.mxu0 0
        %1102 = vmatprep.subr.bf16.mxu0 0
        %1103 = vmatpush1.bf16.msra.mxu0 0
        %1104 = vmatprep.subr.bf16.mxu0 0
        %1105 = vmatpush1.bf16.msra.mxu0 0
        %1106 = vmatprep.subr.bf16.mxu0 0
        %1107 = vmatpush1.bf16.msra.mxu0 0
        %1108 = vmatprep.subr.bf16.mxu0 0
        %1109 = vmatpush1.bf16.msra.mxu0 0
        %1110 = vmatprep.mubr.bf16.mxu0 0
        %1111 = vmatmul.mubr.bf16.gmra.mrb[0].mxu0 %v1076
        %v1112 = vpop.f32.mrb[0].mxu0
        %v1113 = vadd.f32 %v1017, %v1112
        %v1114 = vpop.f32.mrb[0].mxu0
        %v1115 = vadd.f32 %v1021, %v1114
        %v1116 = vpop.f32.mrb[0].mxu0
        %v1117 = vpop.f32.mrb[0].mxu0
        %1118 = vdwg.mxu0
        %1119 = vmatprep.subr.bf16.mxu0 %v1061
        %1120 = vmatpush1.bf16.msra.mxu0 %v1060
        %1121 = vmatprep.subr.bf16.mxu0 %v1065
        %1122 = vmatpush1.bf16.msra.mxu0 %v1064
        %1123 = vmatprep.subr.bf16.mxu0 0
        %1124 = vmatpush1.bf16.msra.mxu0 0
        %1125 = vmatprep.subr.bf16.mxu0 0
        %1126 = vmatpush1.bf16.msra.mxu0 0
        %1127 = vmatprep.subr.bf16.mxu0 0
        %1128 = vmatpush1.bf16.msra.mxu0 0
        %1129 = vmatprep.subr.bf16.mxu0 0
        %1130 = vmatpush1.bf16.msra.mxu0 0
        %1131 = vmatprep.subr.bf16.mxu0 0
        %1132 = vmatpush1.bf16.msra.mxu0 0
        %1133 = vmatprep.subr.bf16.mxu0 0
        %1134 = vmatpush1.bf16.msra.mxu0 0
        %1135 = vmatprep.subr.bf16.mxu0 0
        %1136 = vmatpush1.bf16.msra.mxu0 0
        %1137 = vmatprep.subr.bf16.mxu0 0
        %1138 = vmatpush1.bf16.msra.mxu0 0
        %1139 = vmatprep.subr.bf16.mxu0 0
        %1140 = vmatpush1.bf16.msra.mxu0 0
        %1141 = vmatprep.subr.bf16.mxu0 0
        %1142 = vmatpush1.bf16.msra.mxu0 0
        %1143 = vmatprep.subr.bf16.mxu0 0
        %1144 = vmatpush1.bf16.msra.mxu0 0
        %1145 = vmatprep.subr.bf16.mxu0 0
        %1146 = vmatpush1.bf16.msra.mxu0 0
        %1147 = vmatprep.subr.bf16.mxu0 0
        %1148 = vmatpush1.bf16.msra.mxu0 0
        %1149 = vmatprep.subr.bf16.mxu0 0
        %1150 = vmatpush1.bf16.msra.mxu0 0
        %1151 = vmatprep.mubr.bf16.mxu0 0
        %1152 = vmatmul.mubr.bf16.gmra.mrb[0].mxu0 %v1076
        %v1153 = vpop.f32.mrb[0].mxu0
        %v1154 = vadd.f32 %v1025, %v1153
        %v1155 = vpop.f32.mrb[0].mxu0
        %v1156 = vadd.f32 %v1029, %v1155
        %v1157 = vpop.f32.mrb[0].mxu0
        %v1158 = vpop.f32.mrb[0].mxu0
        %1159 = vdwg.mxu0
        %v1160 = vmax.f32 %v1113, 0.0
        %v1161 = vmax.f32 %v1115, 0.0
        %v1162 = vmax.f32 %v1154, 0.0
        %v1163 = vmax.f32 %v1156, 0.0
        %v1164 = vld [vmem:[#allocation3] sm:$0xff]
        %v1165 = vld [vmem:[%s592] sm:$0xf]
        %v1166 = vld [vmem:[%s592 + $0x4] sm:$0xf]
        %v1167 = vld [vmem:[%s592 + $0x8] sm:$0xf]
        %v1168 = vld [vmem:[%s592 + $0xc] sm:$0xf]
        %v1169 = vld [vmem:[%s592 + $0x10] sm:$0xf]
        %v1170 = vld [vmem:[%s592 + $0x14] sm:$0xf]
        %v1171 = vld [vmem:[%s592 + $0x18] sm:$0xf]
        %v1172 = vld [vmem:[%s592 + $0x1c] sm:$0xf]
        %v1173 = vld [vmem:[%s592 + $0x20] sm:$0xf]
        %v1174 = vld [vmem:[%s592 + $0x24] sm:$0xf]
        %v1175 = vld [vmem:[%s592 + $0x28] sm:$0xf]
        %v1176 = vld [vmem:[%s592 + $0x2c] sm:$0xf]
        %v1177 = vld [vmem:[%s592 + $0x30] sm:$0xf]
        %v1178 = vld [vmem:[%s592 + $0x34] sm:$0xf]
        %v1179 = vld [vmem:[%s592 + $0x38] sm:$0xf]
        %v1180 = vld [vmem:[%s592 + $0x3c] sm:$0xf]
        %v1181 = vld [vmem:[%s592 + $0x40] sm:$0xf]
        %v1182 = vld [vmem:[%s592 + $0x44] sm:$0xf]
        %v1183 = vld [vmem:[%s592 + $0x48] sm:$0xf]
        %v1184 = vld [vmem:[%s592 + $0x4c] sm:$0xf]
        %v1185 = vld [vmem:[%s592 + $0x50] sm:$0xf]
        %v1186 = vld [vmem:[%s592 + $0x54] sm:$0xf]
        %v1187 = vld [vmem:[%s592 + $0x58] sm:$0xf]
        %v1188 = vld [vmem:[%s592 + $0x5c] sm:$0xf]
        %v1189 = vld [vmem:[%s592 + $0x60] sm:$0xf]
        %v1190 = vld [vmem:[%s592 + $0x64] sm:$0xf]
        %v1191 = vld [vmem:[%s592 + $0x68] sm:$0xf]
        %v1192 = vld [vmem:[%s592 + $0x6c] sm:$0xf]
        %v1193 = vld [vmem:[%s592 + $0x70] sm:$0xf]
        %v1194 = vld [vmem:[%s592 + $0x74] sm:$0xf]
        %v1195 = vld [vmem:[%s592 + $0x78] sm:$0xf]
        %v1196 = vld [vmem:[%s592 + $0x7c] sm:$0xf]
        %v1197 = vld [vmem:[%s592 + $0x80] sm:$0xf]
        %v1198 = vld [vmem:[%s592 + $0x84] sm:$0xf]
        %v1199 = vld [vmem:[%s592 + $0x88] sm:$0xf]
        %v1200 = vld [vmem:[%s592 + $0x8c] sm:$0xf]
        %v1201 = vld [vmem:[%s592 + $0x90] sm:$0xf]
        %v1202 = vld [vmem:[%s592 + $0x94] sm:$0xf]
        %v1203 = vld [vmem:[%s592 + $0x98] sm:$0xf]
        %v1204 = vld [vmem:[%s592 + $0x9c] sm:$0xf]
        %v1205 = vld [vmem:[%s592 + $0xa0] sm:$0xf]
        %v1206 = vld [vmem:[%s592 + $0xa4] sm:$0xf]
        %v1207 = vld [vmem:[%s592 + $0xa8] sm:$0xf]
        %v1208 = vld [vmem:[%s592 + $0xac] sm:$0xf]
        %v1209 = vld [vmem:[%s592 + $0xb0] sm:$0xf]
        %v1210 = vld [vmem:[%s592 + $0xb4] sm:$0xf]
        %v1211 = vld [vmem:[%s592 + $0xb8] sm:$0xf]
        %v1212 = vld [vmem:[%s592 + $0xbc] sm:$0xf]
        %v1213 = vld [vmem:[%s592 + $0xc0] sm:$0xf]
        %v1214 = vld [vmem:[%s592 + $0xc4] sm:$0xf]
        %v1215 = vld [vmem:[%s592 + $0xc8] sm:$0xf]
        %v1216 = vld [vmem:[%s592 + $0xcc] sm:$0xf]
        %v1217 = vld [vmem:[%s592 + $0xd0] sm:$0xf]
        %v1218 = vld [vmem:[%s592 + $0xd4] sm:$0xf]
        %v1219 = vld [vmem:[%s592 + $0xd8] sm:$0xf]
        %v1220 = vld [vmem:[%s592 + $0xdc] sm:$0xf]
        %v1221 = vld [vmem:[%s592 + $0xe0] sm:$0xf]
        %v1222 = vld [vmem:[%s592 + $0xe4] sm:$0xf]
        %v1223 = vld [vmem:[%s592 + $0xe8] sm:$0xf]
        %v1224 = vld [vmem:[%s592 + $0xec] sm:$0xf]
        %v1225 = vld [vmem:[%s592 + $0xf0] sm:$0xf]
        %v1226 = vld [vmem:[%s592 + $0xf4] sm:$0xf]
        %v1227 = vld [vmem:[%s592 + $0xf8] sm:$0xf]
        %v1228 = vld [vmem:[%s592 + $0xfc] sm:$0xf]
        %v1229 = vpack.c.bf16 %v1160, %v1160
        %v1230 = vpack.c.bf16 %v1161, %v1161
        %v1231 = vpack.c.bf16 %v1162, %v1162
        %v1232 = vpack.c.bf16 %v1163, %v1163
        %v1297 = vunpack.c.l.b16 %v1165
        %v1298 = vunpack.c.l.b16 %v1166
        %v1299 = vunpack.c.l.b16 %v1167
        %v1300 = vunpack.c.l.b16 %v1168
        %v1301 = vunpack.c.l.b16 %v1169
        %v1302 = vunpack.c.l.b16 %v1170
        %v1303 = vunpack.c.l.b16 %v1171
        %v1304 = vunpack.c.l.b16 %v1172
        %v1305 = vunpack.c.l.b16 %v1173
        %v1306 = vunpack.c.l.b16 %v1174
        %v1307 = vunpack.c.l.b16 %v1175
        %v1308 = vunpack.c.l.b16 %v1176
        %v1309 = vunpack.c.l.b16 %v1177
        %v1310 = vunpack.c.l.b16 %v1178
        %v1311 = vunpack.c.l.b16 %v1179
        %v1312 = vunpack.c.l.b16 %v1180
        %v1313 = vunpack.c.l.b16 %v1181
        %v1314 = vunpack.c.l.b16 %v1182
        %v1315 = vunpack.c.l.b16 %v1183
        %v1316 = vunpack.c.l.b16 %v1184
        %v1317 = vunpack.c.l.b16 %v1185
        %v1318 = vunpack.c.l.b16 %v1186
        %v1319 = vunpack.c.l.b16 %v1187
        %v1320 = vunpack.c.l.b16 %v1188
        %v1321 = vunpack.c.l.b16 %v1189
        %v1322 = vunpack.c.l.b16 %v1190
        %v1323 = vunpack.c.l.b16 %v1191
        %v1324 = vunpack.c.l.b16 %v1192
        %v1325 = vunpack.c.l.b16 %v1193
        %v1326 = vunpack.c.l.b16 %v1194
        %v1327 = vunpack.c.l.b16 %v1195
        %v1328 = vunpack.c.l.b16 %v1196
        %v1329 = vunpack.c.l.b16 %v1197
        %v1330 = vunpack.c.l.b16 %v1198
        %v1331 = vunpack.c.l.b16 %v1199
        %v1332 = vunpack.c.l.b16 %v1200
        %v1333 = vunpack.c.l.b16 %v1201
        %v1334 = vunpack.c.l.b16 %v1202
        %v1335 = vunpack.c.l.b16 %v1203
        %v1336 = vunpack.c.l.b16 %v1204
        %v1337 = vunpack.c.l.b16 %v1205
        %v1338 = vunpack.c.l.b16 %v1206
        %v1339 = vunpack.c.l.b16 %v1207
        %v1340 = vunpack.c.l.b16 %v1208
        %v1341 = vunpack.c.l.b16 %v1209
        %v1342 = vunpack.c.l.b16 %v1210
        %v1343 = vunpack.c.l.b16 %v1211
        %v1344 = vunpack.c.l.b16 %v1212
        %v1345 = vunpack.c.l.b16 %v1213
        %v1346 = vunpack.c.l.b16 %v1214
        %v1347 = vunpack.c.l.b16 %v1215
        %v1348 = vunpack.c.l.b16 %v1216
        %v1349 = vunpack.c.l.b16 %v1217
        %v1350 = vunpack.c.l.b16 %v1218
        %v1351 = vunpack.c.l.b16 %v1219
        %v1352 = vunpack.c.l.b16 %v1220
        %v1353 = vunpack.c.l.b16 %v1221
        %v1354 = vunpack.c.l.b16 %v1222
        %v1355 = vunpack.c.l.b16 %v1223
        %v1356 = vunpack.c.l.b16 %v1224
        %v1357 = vunpack.c.l.b16 %v1225
        %v1358 = vunpack.c.l.b16 %v1226
        %v1359 = vunpack.c.l.b16 %v1227
        %v1360 = vunpack.c.l.b16 %v1228
        %v1361 = vpack.c.b16 %v1298, %v1297
        %v1362 = vpack.c.b16 %v1300, %v1299
        %v1363 = vpack.c.b16 %v1302, %v1301
        %v1364 = vpack.c.b16 %v1304, %v1303
        %v1365 = vpack.c.b16 %v1306, %v1305
        %v1366 = vpack.c.b16 %v1308, %v1307
        %v1367 = vpack.c.b16 %v1310, %v1309
        %v1368 = vpack.c.b16 %v1312, %v1311
        %v1369 = vpack.c.b16 %v1314, %v1313
        %v1370 = vpack.c.b16 %v1316, %v1315
        %v1371 = vpack.c.b16 %v1318, %v1317
        %v1372 = vpack.c.b16 %v1320, %v1319
        %v1373 = vpack.c.b16 %v1322, %v1321
        %v1374 = vpack.c.b16 %v1324, %v1323
        %v1375 = vpack.c.b16 %v1326, %v1325
        %v1376 = vpack.c.b16 %v1328, %v1327
        %v1377 = vpack.c.b16 %v1330, %v1329
        %v1378 = vpack.c.b16 %v1332, %v1331
        %v1379 = vpack.c.b16 %v1334, %v1333
        %v1380 = vpack.c.b16 %v1336, %v1335
        %v1381 = vpack.c.b16 %v1338, %v1337
        %v1382 = vpack.c.b16 %v1340, %v1339
        %v1383 = vpack.c.b16 %v1342, %v1341
        %v1384 = vpack.c.b16 %v1344, %v1343
        %v1385 = vpack.c.b16 %v1346, %v1345
        %v1386 = vpack.c.b16 %v1348, %v1347
        %v1387 = vpack.c.b16 %v1350, %v1349
        %v1388 = vpack.c.b16 %v1352, %v1351
        %v1389 = vpack.c.b16 %v1354, %v1353
        %v1390 = vpack.c.b16 %v1356, %v1355
        %v1391 = vpack.c.b16 %v1358, %v1357
        %v1392 = vpack.c.b16 %v1360, %v1359
        %1425 = vmatprep.subr.bf16.mxu0 0
        %1426 = vmatpush1.bf16.msra.mxu0 %v1361
        %1427 = vmatprep.subr.bf16.mxu0 0
        %1428 = vmatpush1.bf16.msra.mxu0 %v1362
        %1429 = vmatprep.subr.bf16.mxu0 0
        %1430 = vmatpush1.bf16.msra.mxu0 %v1363
        %1431 = vmatprep.subr.bf16.mxu0 0
        %1432 = vmatpush1.bf16.msra.mxu0 %v1364
        %1433 = vmatprep.subr.bf16.mxu0 0
        %1434 = vmatpush1.bf16.msra.mxu0 %v1365
        %1435 = vmatprep.subr.bf16.mxu0 0
        %1436 = vmatpush1.bf16.msra.mxu0 %v1366
        %1437 = vmatprep.subr.bf16.mxu0 0
        %1438 = vmatpush1.bf16.msra.mxu0 %v1367
        %1439 = vmatprep.subr.bf16.mxu0 0
        %1440 = vmatpush1.bf16.msra.mxu0 %v1368
        %1441 = vmatprep.subr.bf16.mxu0 0
        %1442 = vmatpush1.bf16.msra.mxu0 %v1369
        %1443 = vmatprep.subr.bf16.mxu0 0
        %1444 = vmatpush1.bf16.msra.mxu0 %v1370
        %1445 = vmatprep.subr.bf16.mxu0 0
        %1446 = vmatpush1.bf16.msra.mxu0 %v1371
        %1447 = vmatprep.subr.bf16.mxu0 0
        %1448 = vmatpush1.bf16.msra.mxu0 %v1372
        %1449 = vmatprep.subr.bf16.mxu0 0
        %1450 = vmatpush1.bf16.msra.mxu0 %v1373
        %1451 = vmatprep.subr.bf16.mxu0 0
        %1452 = vmatpush1.bf16.msra.mxu0 %v1374
        %1453 = vmatprep.subr.bf16.mxu0 0
        %1454 = vmatpush1.bf16.msra.mxu0 %v1375
        %1455 = vmatprep.subr.bf16.mxu0 0
        %1456 = vmatpush1.bf16.msra.mxu0 %v1376
        %1457 = vmatprep.mubr.bf16.mxu0 %v1230
        %1458 = vmatmul.mubr.bf16.gmra.mrb[0].mxu0 %v1229
        %v1459 = vpop.f32.mrb[0].mxu0
        %v1460 = vadd.f32 0.0, %v1459
        %v1461 = vpop.f32.mrb[0].mxu0
        %v1462 = vpop.f32.mrb[0].mxu0
        %v1463 = vpop.f32.mrb[0].mxu0
        %1464 = vdwg.mxu0
        %1465 = vmatprep.subr.bf16.mxu0 0
        %1466 = vmatpush1.bf16.msra.mxu0 %v1377
        %1467 = vmatprep.subr.bf16.mxu0 0
        %1468 = vmatpush1.bf16.msra.mxu0 %v1378
        %1469 = vmatprep.subr.bf16.mxu0 0
        %1470 = vmatpush1.bf16.msra.mxu0 %v1379
        %1471 = vmatprep.subr.bf16.mxu0 0
        %1472 = vmatpush1.bf16.msra.mxu0 %v1380
        %1473 = vmatprep.subr.bf16.mxu0 0
        %1474 = vmatpush1.bf16.msra.mxu0 %v1381
        %1475 = vmatprep.subr.bf16.mxu0 0
        %1476 = vmatpush1.bf16.msra.mxu0 %v1382
        %1477 = vmatprep.subr.bf16.mxu0 0
        %1478 = vmatpush1.bf16.msra.mxu0 %v1383
        %1479 = vmatprep.subr.bf16.mxu0 0
        %1480 = vmatpush1.bf16.msra.mxu0 %v1384
        %1481 = vmatprep.subr.bf16.mxu0 0
        %1482 = vmatpush1.bf16.msra.mxu0 %v1385
        %1483 = vmatprep.subr.bf16.mxu0 0
        %1484 = vmatpush1.bf16.msra.mxu0 %v1386
        %1485 = vmatprep.subr.bf16.mxu0 0
        %1486 = vmatpush1.bf16.msra.mxu0 %v1387
        %1487 = vmatprep.subr.bf16.mxu0 0
        %1488 = vmatpush1.bf16.msra.mxu0 %v1388
        %1489 = vmatprep.subr.bf16.mxu0 0
        %1490 = vmatpush1.bf16.msra.mxu0 %v1389
        %1491 = vmatprep.subr.bf16.mxu0 0
        %1492 = vmatpush1.bf16.msra.mxu0 %v1390
        %1493 = vmatprep.subr.bf16.mxu0 0
        %1494 = vmatpush1.bf16.msra.mxu0 %v1391
        %1495 = vmatprep.subr.bf16.mxu0 0
        %1496 = vmatpush1.bf16.msra.mxu0 %v1392
        %1497 = vmatprep.mubr.bf16.mxu0 %v1232
        %1498 = vmatmul.mubr.bf16.gmra.mrb[0].mxu0 %v1231
        %v1499 = vpop.f32.mrb[0].mxu0
        %v1500 = vadd.f32 %v1460, %v1499
        %v1501 = vpop.f32.mrb[0].mxu0
        %v1502 = vpop.f32.mrb[0].mxu0
        %v1503 = vpop.f32.mrb[0].mxu0
        %1504 = vdwg.mxu0
        %v1505 = vadd.f32 %v1164, %v1500
        %1506 = vst.msk [vmem:[#allocation3] sm:$0xff] %vm1074, %v1505
        %p1507 = scmp.eq.s32.totalorder %s31, 3
        // Predicated region
        $region108: #{transformer_forward.6} parent=98 // pred_check
          %p1508 = pneg %p1507
        $region109: #{transformer_forward.6} parent=98 // pred_check_branch
          %1510 = sbr.rel (%p1508) target = $region111
        $region110: #{transformer_forward.6} parent=98 // pred_region
          %v1511 = vld [vmem:[#allocation2] sm:$0xff]
          %v1512 = vld [vmem:[#allocation3] sm:$0xff]
          %v1513 = vadd.f32 %v1511, %v1512
          %v1514 = vld [vmem:[%s10] sm:$0x1]
          %v1516 = vlaneseq
          %v1517 = vshrl.u32 %v1516, 7
          %v1518 = vsub.s32 0, %v1517
          %v1519 = vrot.slane %v1514, %v1518
          %v1521 = vadd.f32 %v1513, %v1519
          %v1522 = vld [vmem:[%s11] sm:$0x1]
          %v1523 = vld [vmem:[%s12] sm:$0x1]
          %v1524 = vsel %vm1074, %v1521, 0.0
          %1525 = vadd.xlane.f32.xlu0 %v1524
          %v1526 = vpop.xlane.xlu0 %1525
          %v1527 = vrcp.pop 32.0
          %v1528 = vmul.f32 %v1526, %v1527
          %v1529 = vsub.f32 %v1521, %v1528
          %v1530 = vmul.f32 %v1529, %v1529
          %v1531 = vsel %vm1074, %v1530, 0.0
          %1532 = vadd.xlane.f32.xlu0 %v1531
          %v1533 = vpop.xlane.xlu0 %1532
          %v1534 = vmul.f32 %v1533, %v1527
          %v1535 = vadd.f32 %v1534, 1e-05
          %v1536 = vrsqrt.pop %v1535
          %v1537 = vmul.f32 %v1529, %v1536
          %v1539 = vlaneseq
          %v1540 = vshrl.u32 %v1539, 7
          %v1541 = vsub.s32 0, %v1540
          %v1542 = vrot.slane %v1522, %v1541
          %v1544 = vmul.f32 %v1537, %v1542
          %v1546 = vlaneseq
          %v1547 = vshrl.u32 %v1546, 7
          %v1548 = vsub.s32 0, %v1547
          %v1549 = vrot.slane %v1523, %v1548
          %v1551 = vadd.f32 %v1544, %v1549
          %v1552 = vld [vmem:[%s13] sm:$0x1]
          %v1553 = vld [vmem:[%s14] sm:$0x1]
          %v1554 = vsel %vm1074, %v1551, 0.0
          %1555 = vadd.xlane.f32.xlu0 %v1554
          %v1556 = vpop.xlane.xlu0 %1555
          %v1557 = vmul.f32 %v1556, %v1527
          %v1558 = vsub.f32 %v1551, %v1557
          %v1559 = vmul.f32 %v1558, %v1558
          %v1560 = vsel %vm1074, %v1559, 0.0
          %1561 = vadd.xlane.f32.xlu0 %v1560
          %v1562 = vpop.xlane.xlu0 %1561
          %v1563 = vmul.f32 %v1562, %v1527
          %v1564 = vadd.f32 %v1563, 1e-05
          %v1565 = vrsqrt.pop %v1564
          %v1566 = vmul.f32 %v1558, %v1565
          %v1568 = vlaneseq
          %v1569 = vshrl.u32 %v1568, 7
          %v1570 = vsub.s32 0, %v1569
          %v1571 = vrot.slane %v1552, %v1570
          %v1573 = vmul.f32 %v1566, %v1571
          %v1575 = vlaneseq
          %v1576 = vshrl.u32 %v1575, 7
          %v1577 = vsub.s32 0, %v1576
          %v1578 = vrot.slane %v1553, %v1577
          %v1580 = vadd.f32 %v1573, %v1578
          %v1581 = vpack.c.bf16 %v1580, %v1580
          %vm1582 = vcmask 257024
          %1583 = vst.msk [vmem:[%s597] sm:$0xf] %vm1582, %v1581
        $region111: #{transformer_forward.6} parent=98 // pred_fallthru
          _
        %p1584 = scmp.lt.s32.totalorder %s30, 1
        %s1585 = scalar_select %p1584, %s30, 1
        %s1586 = smul.addr %s1585, 4
        %s1587 = scalar_lea.vmem %s15, %s1586
        // Predicated region
        $region112: #{transformer_forward.6} parent=98 // pred_check
          %p1588 = pneg %p391
        $region113: #{transformer_forward.6} parent=98 // pred_check_branch
          %1590 = sbr.rel (%p1588) target = $region115
        $region114: #{transformer_forward.6} parent=98 // pred_region
          _
        $region115: #{transformer_forward.6} parent=98 // pred_fallthru
          _
      $region99: #{transformer_forward.6} parent=5 // pred_fallthru
        _
      %p1591 = scmp.le.s32.totalorder 2, %s21
      // Predicated region
      $region116: #{transformer_forward.6} parent=5 // pred_check
        %p1592 = pneg %p1591
      $region117: #{transformer_forward.6} parent=5 // pred_check_branch
        %1594 = sbr.rel (%p1592) target = $region119
      $region118: #{transformer_forward.6} parent=5 // pred_region
        %s1595 = ssub.s32 %s21, 2
        // Predicated region
        $region120: #{transformer_forward.6} parent=118 // pred_check
          %p1596 = pneg %p397
        $region121: #{transformer_forward.6} parent=118 // pred_check_branch
          %1598 = sbr.rel (%p1596) target = $region123
        $region122: #{transformer_forward.6} parent=118 // pred_region
          %p1599 = scmp.lt.s32.totalorder %s32, 1
          %s1600 = scalar_select %p1599, %s32, 1
          %s1601 = smul.addr %s1600, 4
          %s1602 = scalar_lea.vmem %s15, %s1601
        $region123: #{transformer_forward.6} parent=118 // pred_fallthru
          _
      $region119: #{transformer_forward.6} parent=5 // pred_fallthru
        _
    $region6: #{transformer_forward.6} parent=1 // loop_footer
      %s25 = sadd.s32 1, %s21
    $region7: #{transformer_forward.6} parent=1 // loop_footer_branch
      %20 = sbr.rel target = $region3
    $region8: #{transformer_forward.6} parent=1 // loop_exit
      _

// kernel: transformer_forward.7
$region0: #{transformer_forward.7}
  #allocation0 [shape = 'u32[]', space=smem, size = 0x4, offset = 0x4, fixed_abs, tag = 'smem constant byte address 0x4 - core index']
  #allocation1 [shape = 'u32[144,128]{1,0:T(1,128)}', space=vmem, size = 0x12000, scoped, tag = 'internal scratch']
  #allocation2 [shape = 'f32[8,32]{1,0:T(8,128)}', space=vmem, size = 0x1000, scoped, tag = 'scratch operand']
  #allocation3 [shape = 'f32[8,32]{1,0:T(8,128)}', space=vmem, size = 0x1000, scoped, tag = 'scratch operand']
  %s0 = inlined_call_operand.vmem [shape: bf16[2,8,32], index: 0, kind: input, shape index: {}]
  %s1 = inlined_call_operand.vmem [shape: bf16[2,8,32], index: 1, kind: input, shape index: {}]
  %s2 = inlined_call_operand.vmem [shape: bf16[32,96], index: 2, kind: input, shape index: {}]
  %s3 = inlined_call_operand.vmem [shape: f32[1,96], index: 3, kind: input, shape index: {}]
  %s4 = inlined_call_operand.vmem [shape: bf16[32,32], index: 4, kind: input, shape index: {}]
  %s5 = inlined_call_operand.vmem [shape: f32[1,32], index: 5, kind: input, shape index: {}]
  %s6 = inlined_call_operand.vmem [shape: f32[1,32], index: 6, kind: input, shape index: {}]
  %s7 = inlined_call_operand.vmem [shape: f32[1,32], index: 7, kind: input, shape index: {}]
  %s8 = inlined_call_operand.vmem [shape: bf16[32,96], index: 8, kind: input, shape index: {}]
  %s9 = inlined_call_operand.vmem [shape: f32[1,96], index: 9, kind: input, shape index: {}]
  %s10 = inlined_call_operand.vmem [shape: bf16[32,32], index: 10, kind: input, shape index: {}]
  %s11 = inlined_call_operand.vmem [shape: f32[1,32], index: 11, kind: input, shape index: {}]
  %s12 = inlined_call_operand.vmem [shape: f32[1,32], index: 12, kind: input, shape index: {}]
  %s13 = inlined_call_operand.vmem [shape: f32[1,32], index: 13, kind: input, shape index: {}]
  %s14 = inlined_call_operand.vmem [shape: bf16[32,2048], index: 14, kind: input, shape index: {}]
  %s15 = inlined_call_operand.vmem [shape: f32[1,2048], index: 15, kind: input, shape index: {}]
  %s16 = inlined_call_operand.vmem [shape: bf16[2048,32], index: 16, kind: input, shape index: {}]
  %s17 = inlined_call_operand.vmem [shape: f32[1,32], index: 17, kind: input, shape index: {}]
  %s18 = inlined_call_operand.vmem [shape: f32[1,32], index: 18, kind: input, shape index: {}]
  %s19 = inlined_call_operand.vmem [shape: f32[1,32], index: 19, kind: input, shape index: {}]
  %s20 = inlined_call_operand.vmem [shape: bf16[2,8,32], index: 20, kind: output, shape index: {}]
  %s21 = sld [smem:[#allocation0]]
  $region144: #{transformer_forward.7} parent=0
    _
  %s23 = ssub.s32 1, %s21
  %s24 = scalar_select 0, %s23, %s21
  $region1: #{transformer_forward.7} parent=0
    #allocation4 [shape = 'u8[65536]{0}', space=vmem, size = 0x10000, scoped, tag = 'input window, operand 14']
    loop: start=0, step=1, limit=10
    $region2: #{transformer_forward.7} parent=1 // loop_pre_header
      _
    $region3: #{transformer_forward.7} parent=1 // loop_header
      %s26 = sphi 0, %s30
      %p27 = scmp.ge.s32.totalorder %s26, 10
      %s33 = sphi 0, %s45
      %s34 = sphi 0, %s41
      %s35 = sphi 0, %s33
      %s36 = sphi 0, %s34
      %s37 = sphi 0, %s35
      %s38 = sphi 0, %s36
      %s48 = sphi 0, %s50
      %s51 = sphi 0, %s48
      %s52 = sphi 0, %s51
      %s68 = sphi 0, %s52
      %s74 = sphi 0, %s76
      %s77 = sphi 0, %s74
      %s78 = sphi 0, %s77
      %s94 = sphi 0, %s78
      %s98 = sphi 0, %s98
      %s100 = sphi 0, %s98
      %s101 = sphi 0, %s100
      %s115 = sphi 0, %s101
      %s119 = sphi 0, %s119
      %s121 = sphi 0, %s119
      %s122 = sphi 0, %s121
      %s136 = sphi 0, %s122
      %s140 = sphi 0, %s140
      %s142 = sphi 0, %s140
      %s143 = sphi 0, %s142
      %s157 = sphi 0, %s143
      %s161 = sphi 0, %s161
      %s163 = sphi 0, %s161
      %s164 = sphi 0, %s163
      %s178 = sphi 0, %s164
      %s182 = sphi 0, %s182
      %s184 = sphi 0, %s182
      %s185 = sphi 0, %s184
      %s199 = sphi 0, %s185
      %s203 = sphi 0, %s203
      %s205 = sphi 0, %s203
      %s206 = sphi 0, %s205
      %s220 = sphi 0, %s206
      %s224 = sphi 0, %s224
      %s226 = sphi 0, %s224
      %s227 = sphi 0, %s226
      %s241 = sphi 0, %s227
      %s245 = sphi 0, %s245
      %s247 = sphi 0, %s245
      %s248 = sphi 0, %s247
      %s262 = sphi 0, %s248
      %s266 = sphi 0, %s266
      %s268 = sphi 0, %s266
      %s269 = sphi 0, %s268
      %s283 = sphi 0, %s269
      %s287 = sphi 0, %s287
      %s289 = sphi 0, %s287
      %s290 = sphi 0, %s289
      %s304 = sphi 0, %s290
      %s308 = sphi 0, %s308
      %s310 = sphi 0, %s308
      %s311 = sphi 0, %s310
      %s325 = sphi 0, %s311
      %s329 = sphi 0, %s329
      %s331 = sphi 0, %s329
      %s332 = sphi 0, %s331
      %s346 = sphi 0, %s332
      %s352 = sphi 0, %s354
      %s355 = sphi 0, %s352
      %s356 = sphi 0, %s355
      %s372 = sphi 0, %s356
      %s378 = sphi 0, %s380
      %s381 = sphi 0, %s378
      %s382 = sphi 0, %s381
      %s398 = sphi 0, %s382
      %s404 = sphi 0, %s406
      %s407 = sphi 0, %s404
      %s408 = sphi 0, %s407
      %s424 = sphi 0, %s408
      %s428 = sphi 0, %s428
      %s430 = sphi 0, %s428
      %s431 = sphi 0, %s430
      %s445 = sphi 0, %s431
      %s449 = sphi 0, %s449
      %s451 = sphi 0, %s449
      %s452 = sphi 0, %s451
      %s466 = sphi 0, %s452
      %s470 = sphi 0, %s470
      %s472 = sphi 0, %s470
      %s473 = sphi 0, %s472
      %s487 = sphi 0, %s473
      %s493 = sphi 0, %s495
      %s496 = sphi 0, %s493
      %s497 = sphi 0, %s496
      %s513 = sphi 0, %s497
    $region4: #{transformer_forward.7} parent=1 // loop_header_branch
      %29 = sbr.rel (%p27) target = $region8
    $region5: #{transformer_forward.7} parent=1 // loop_body
      %s31 = ssub.s32 %s26, 1
      %s32 = ssub.s32 %s26, 2
      %s39 = sadd.s32 1, %s34
      %p40 = scmp.ge.s32.totalorder %s39, 4
      %s41 = scalar_select %p40, 0, %s39
      %s42 = sadd.s32 1, %s33
      %s43 = scalar_select %p40, %s42, %s33
      %p44 = scmp.ge.s32.totalorder %s43, 2
      %s45 = scalar_select %p44, 0, %s43
      %s46 = ssub.s32 %s33, %s45
      %p47 = scmp.eq.s32.totalorder %s46, 0
      %s49 = sadd.s32 %s48, 1
      %s50 = scalar_select %p47, %s48, %s49
      %p53 = pneg %p47
      %p54 = scmp.eq.s32.totalorder %s26, 7
      %p55 = por %p53, %p54
      %p56 = scmp.ne.s32.totalorder %s48, %s51
      %p57 = scmp.eq.s32.totalorder %s26, 0
      %p58 = por %p56, %p57
      %p59 = scmp.ne.s32.totalorder %s48, %s51
      %p60 = scmp.eq.s32.totalorder %s31, 7
      %p61 = por %p59, %p60
      %p62 = scmp.ne.s32.totalorder %s51, %s52
      %p63 = scmp.eq.s32.totalorder %s31, 0
      %p64 = por %p62, %p63
      %p65 = scmp.ne.s32.totalorder %s51, %s52
      %p66 = scmp.eq.s32.totalorder %s32, 7
      %p67 = por %p65, %p66
      %p69 = scmp.ne.s32.totalorder %s52, %s68
      %p70 = scmp.eq.s32.totalorder %s32, 0
      %p71 = por %p69, %p70
      %s72 = ssub.s32 %s33, %s45
      %p73 = scmp.eq.s32.totalorder %s72, 0
      %s75 = sadd.s32 %s74, 1
      %s76 = scalar_select %p73, %s74, %s75
      %p79 = pneg %p73
      %p80 = scmp.eq.s32.totalorder %s26, 7
      %p81 = por %p79, %p80
      %p82 = scmp.ne.s32.totalorder %s74, %s77
      %p83 = scmp.eq.s32.totalorder %s26, 0
      %p84 = por %p82, %p83
      %p85 = scmp.ne.s32.totalorder %s74, %s77
      %p86 = scmp.eq.s32.totalorder %s31, 7
      %p87 = por %p85, %p86
      %p88 = scmp.ne.s32.totalorder %s77, %s78
      %p89 = scmp.eq.s32.totalorder %s31, 0
      %p90 = por %p88, %p89
      %p91 = scmp.ne.s32.totalorder %s77, %s78
      %p92 = scmp.eq.s32.totalorder %s32, 7
      %p93 = por %p91, %p92
      %p95 = scmp.ne.s32.totalorder %s78, %s94
      %p96 = scmp.eq.s32.totalorder %s32, 0
      %p97 = por %p95, %p96
      %s99 = sadd.s32 %s98, 1
      %p102 = scmp.eq.s32.totalorder %s26, 7
      %p103 = scmp.ne.s32.totalorder %s98, %s100
      %p104 = scmp.eq.s32.totalorder %s26, 0
      %p105 = por %p103, %p104
      %p106 = scmp.ne.s32.totalorder %s98, %s100
      %p107 = scmp.eq.s32.totalorder %s31, 7
      %p108 = por %p106, %p107
      %p109 = scmp.ne.s32.totalorder %s100, %s101
      %p110 = scmp.eq.s32.totalorder %s31, 0
      %p111 = por %p109, %p110
      %p112 = scmp.ne.s32.totalorder %s100, %s101
      %p113 = scmp.eq.s32.totalorder %s32, 7
      %p114 = por %p112, %p113
      %p116 = scmp.ne.s32.totalorder %s101, %s115
      %p117 = scmp.eq.s32.totalorder %s32, 0
      %p118 = por %p116, %p117
      %s120 = sadd.s32 %s119, 1
      %p123 = scmp.eq.s32.totalorder %s26, 7
      %p124 = scmp.ne.s32.totalorder %s119, %s121
      %p125 = scmp.eq.s32.totalorder %s26, 0
      %p126 = por %p124, %p125
      %p127 = scmp.ne.s32.totalorder %s119, %s121
      %p128 = scmp.eq.s32.totalorder %s31, 7
      %p129 = por %p127, %p128
      %p130 = scmp.ne.s32.totalorder %s121, %s122
      %p131 = scmp.eq.s32.totalorder %s31, 0
      %p132 = por %p130, %p131
      %p133 = scmp.ne.s32.totalorder %s121, %s122
      %p134 = scmp.eq.s32.totalorder %s32, 7
      %p135 = por %p133, %p134
      %p137 = scmp.ne.s32.totalorder %s122, %s136
      %p138 = scmp.eq.s32.totalorder %s32, 0
      %p139 = por %p137, %p138
      %s141 = sadd.s32 %s140, 1
      %p144 = scmp.eq.s32.totalorder %s26, 7
      %p145 = scmp.ne.s32.totalorder %s140, %s142
      %p146 = scmp.eq.s32.totalorder %s26, 0
      %p147 = por %p145, %p146
      %p148 = scmp.ne.s32.totalorder %s140, %s142
      %p149 = scmp.eq.s32.totalorder %s31, 7
      %p150 = por %p148, %p149
      %p151 = scmp.ne.s32.totalorder %s142, %s143
      %p152 = scmp.eq.s32.totalorder %s31, 0
      %p153 = por %p151, %p152
      %p154 = scmp.ne.s32.totalorder %s142, %s143
      %p155 = scmp.eq.s32.totalorder %s32, 7
      %p156 = por %p154, %p155
      %p158 = scmp.ne.s32.totalorder %s143, %s157
      %p159 = scmp.eq.s32.totalorder %s32, 0
      %p160 = por %p158, %p159
      %s162 = sadd.s32 %s161, 1
      %p165 = scmp.eq.s32.totalorder %s26, 7
      %p166 = scmp.ne.s32.totalorder %s161, %s163
      %p167 = scmp.eq.s32.totalorder %s26, 0
      %p168 = por %p166, %p167
      %p169 = scmp.ne.s32.totalorder %s161, %s163
      %p170 = scmp.eq.s32.totalorder %s31, 7
      %p171 = por %p169, %p170
      %p172 = scmp.ne.s32.totalorder %s163, %s164
      %p173 = scmp.eq.s32.totalorder %s31, 0
      %p174 = por %p172, %p173
      %p175 = scmp.ne.s32.totalorder %s163, %s164
      %p176 = scmp.eq.s32.totalorder %s32, 7
      %p177 = por %p175, %p176
      %p179 = scmp.ne.s32.totalorder %s164, %s178
      %p180 = scmp.eq.s32.totalorder %s32, 0
      %p181 = por %p179, %p180
      %s183 = sadd.s32 %s182, 1
      %p186 = scmp.eq.s32.totalorder %s26, 7
      %p187 = scmp.ne.s32.totalorder %s182, %s184
      %p188 = scmp.eq.s32.totalorder %s26, 0
      %p189 = por %p187, %p188
      %p190 = scmp.ne.s32.totalorder %s182, %s184
      %p191 = scmp.eq.s32.totalorder %s31, 7
      %p192 = por %p190, %p191
      %p193 = scmp.ne.s32.totalorder %s184, %s185
      %p194 = scmp.eq.s32.totalorder %s31, 0
      %p195 = por %p193, %p194
      %p196 = scmp.ne.s32.totalorder %s184, %s185
      %p197 = scmp.eq.s32.totalorder %s32, 7
      %p198 = por %p196, %p197
      %p200 = scmp.ne.s32.totalorder %s185, %s199
      %p201 = scmp.eq.s32.totalorder %s32, 0
      %p202 = por %p200, %p201
      %s204 = sadd.s32 %s203, 1
      %p207 = scmp.eq.s32.totalorder %s26, 7
      %p208 = scmp.ne.s32.totalorder %s203, %s205
      %p209 = scmp.eq.s32.totalorder %s26, 0
      %p210 = por %p208, %p209
      %p211 = scmp.ne.s32.totalorder %s203, %s205
      %p212 = scmp.eq.s32.totalorder %s31, 7
      %p213 = por %p211, %p212
      %p214 = scmp.ne.s32.totalorder %s205, %s206
      %p215 = scmp.eq.s32.totalorder %s31, 0
      %p216 = por %p214, %p215
      %p217 = scmp.ne.s32.totalorder %s205, %s206
      %p218 = scmp.eq.s32.totalorder %s32, 7
      %p219 = por %p217, %p218
      %p221 = scmp.ne.s32.totalorder %s206, %s220
      %p222 = scmp.eq.s32.totalorder %s32, 0
      %p223 = por %p221, %p222
      %s225 = sadd.s32 %s224, 1
      %p228 = scmp.eq.s32.totalorder %s26, 7
      %p229 = scmp.ne.s32.totalorder %s224, %s226
      %p230 = scmp.eq.s32.totalorder %s26, 0
      %p231 = por %p229, %p230
      %p232 = scmp.ne.s32.totalorder %s224, %s226
      %p233 = scmp.eq.s32.totalorder %s31, 7
      %p234 = por %p232, %p233
      %p235 = scmp.ne.s32.totalorder %s226, %s227
      %p236 = scmp.eq.s32.totalorder %s31, 0
      %p237 = por %p235, %p236
      %p238 = scmp.ne.s32.totalorder %s226, %s227
      %p239 = scmp.eq.s32.totalorder %s32, 7
      %p240 = por %p238, %p239
      %p242 = scmp.ne.s32.totalorder %s227, %s241
      %p243 = scmp.eq.s32.totalorder %s32, 0
      %p244 = por %p242, %p243
      %s246 = sadd.s32 %s245, 1
      %p249 = scmp.eq.s32.totalorder %s26, 7
      %p250 = scmp.ne.s32.totalorder %s245, %s247
      %p251 = scmp.eq.s32.totalorder %s26, 0
      %p252 = por %p250, %p251
      %p253 = scmp.ne.s32.totalorder %s245, %s247
      %p254 = scmp.eq.s32.totalorder %s31, 7
      %p255 = por %p253, %p254
      %p256 = scmp.ne.s32.totalorder %s247, %s248
      %p257 = scmp.eq.s32.totalorder %s31, 0
      %p258 = por %p256, %p257
      %p259 = scmp.ne.s32.totalorder %s247, %s248
      %p260 = scmp.eq.s32.totalorder %s32, 7
      %p261 = por %p259, %p260
      %p263 = scmp.ne.s32.totalorder %s248, %s262
      %p264 = scmp.eq.s32.totalorder %s32, 0
      %p265 = por %p263, %p264
      %s267 = sadd.s32 %s266, 1
      %p270 = scmp.eq.s32.totalorder %s26, 7
      %p271 = scmp.ne.s32.totalorder %s266, %s268
      %p272 = scmp.eq.s32.totalorder %s26, 0
      %p273 = por %p271, %p272
      %p274 = scmp.ne.s32.totalorder %s266, %s268
      %p275 = scmp.eq.s32.totalorder %s31, 7
      %p276 = por %p274, %p275
      %p277 = scmp.ne.s32.totalorder %s268, %s269
      %p278 = scmp.eq.s32.totalorder %s31, 0
      %p279 = por %p277, %p278
      %p280 = scmp.ne.s32.totalorder %s268, %s269
      %p281 = scmp.eq.s32.totalorder %s32, 7
      %p282 = por %p280, %p281
      %p284 = scmp.ne.s32.totalorder %s269, %s283
      %p285 = scmp.eq.s32.totalorder %s32, 0
      %p286 = por %p284, %p285
      %s288 = sadd.s32 %s287, 1
      %p291 = scmp.eq.s32.totalorder %s26, 7
      %p292 = scmp.ne.s32.totalorder %s287, %s289
      %p293 = scmp.eq.s32.totalorder %s26, 0
      %p294 = por %p292, %p293
      %p295 = scmp.ne.s32.totalorder %s287, %s289
      %p296 = scmp.eq.s32.totalorder %s31, 7
      %p297 = por %p295, %p296
      %p298 = scmp.ne.s32.totalorder %s289, %s290
      %p299 = scmp.eq.s32.totalorder %s31, 0
      %p300 = por %p298, %p299
      %p301 = scmp.ne.s32.totalorder %s289, %s290
      %p302 = scmp.eq.s32.totalorder %s32, 7
      %p303 = por %p301, %p302
      %p305 = scmp.ne.s32.totalorder %s290, %s304
      %p306 = scmp.eq.s32.totalorder %s32, 0
      %p307 = por %p305, %p306
      %s309 = sadd.s32 %s308, 1
      %p312 = scmp.eq.s32.totalorder %s26, 7
      %p313 = scmp.ne.s32.totalorder %s308, %s310
      %p314 = scmp.eq.s32.totalorder %s26, 0
      %p315 = por %p313, %p314
      %p316 = scmp.ne.s32.totalorder %s308, %s310
      %p317 = scmp.eq.s32.totalorder %s31, 7
      %p318 = por %p316, %p317
      %p319 = scmp.ne.s32.totalorder %s310, %s311
      %p320 = scmp.eq.s32.totalorder %s31, 0
      %p321 = por %p319, %p320
      %p322 = scmp.ne.s32.totalorder %s310, %s311
      %p323 = scmp.eq.s32.totalorder %s32, 7
      %p324 = por %p322, %p323
      %p326 = scmp.ne.s32.totalorder %s311, %s325
      %p327 = scmp.eq.s32.totalorder %s32, 0
      %p328 = por %p326, %p327
      %s330 = sadd.s32 %s329, 1
      %p333 = scmp.eq.s32.totalorder %s26, 7
      %p334 = scmp.ne.s32.totalorder %s329, %s331
      %p335 = scmp.eq.s32.totalorder %s26, 0
      %p336 = por %p334, %p335
      %p337 = scmp.ne.s32.totalorder %s329, %s331
      %p338 = scmp.eq.s32.totalorder %s31, 7
      %p339 = por %p337, %p338
      %p340 = scmp.ne.s32.totalorder %s331, %s332
      %p341 = scmp.eq.s32.totalorder %s31, 0
      %p342 = por %p340, %p341
      %p343 = scmp.ne.s32.totalorder %s331, %s332
      %p344 = scmp.eq.s32.totalorder %s32, 7
      %p345 = por %p343, %p344
      %p347 = scmp.ne.s32.totalorder %s332, %s346
      %p348 = scmp.eq.s32.totalorder %s32, 0
      %p349 = por %p347, %p348
      %s350 = ssub.s32 %s34, %s41
      %p351 = scmp.eq.s32.totalorder %s350, 0
      %s353 = sadd.s32 %s352, 1
      %s354 = scalar_select %p351, %s352, %s353
      %p357 = pneg %p351
      %p358 = scmp.eq.s32.totalorder %s26, 7
      %p359 = por %p357, %p358
      %p360 = scmp.ne.s32.totalorder %s352, %s355
      %p361 = scmp.eq.s32.totalorder %s26, 0
      %p362 = por %p360, %p361
      %p363 = scmp.ne.s32.totalorder %s352, %s355
      %p364 = scmp.eq.s32.totalorder %s31, 7
      %p365 = por %p363, %p364
      %p366 = scmp.ne.s32.totalorder %s355, %s356
      %p367 = scmp.eq.s32.totalorder %s31, 0
      %p368 = por %p366, %p367
      %p369 = scmp.ne.s32.totalorder %s355, %s356
      %p370 = scmp.eq.s32.totalorder %s32, 7
      %p371 = por %p369, %p370
      %p373 = scmp.ne.s32.totalorder %s356, %s372
      %p374 = scmp.eq.s32.totalorder %s32, 0
      %p375 = por %p373, %p374
      %s376 = ssub.s32 %s34, %s41
      %p377 = scmp.eq.s32.totalorder %s376, 0
      %s379 = sadd.s32 %s378, 1
      %s380 = scalar_select %p377, %s378, %s379
      %p383 = pneg %p377
      %p384 = scmp.eq.s32.totalorder %s26, 7
      %p385 = por %p383, %p384
      %p386 = scmp.ne.s32.totalorder %s378, %s381
      %p387 = scmp.eq.s32.totalorder %s26, 0
      %p388 = por %p386, %p387
      %p389 = scmp.ne.s32.totalorder %s378, %s381
      %p390 = scmp.eq.s32.totalorder %s31, 7
      %p391 = por %p389, %p390
      %p392 = scmp.ne.s32.totalorder %s381, %s382
      %p393 = scmp.eq.s32.totalorder %s31, 0
      %p394 = por %p392, %p393
      %p395 = scmp.ne.s32.totalorder %s381, %s382
      %p396 = scmp.eq.s32.totalorder %s32, 7
      %p397 = por %p395, %p396
      %p399 = scmp.ne.s32.totalorder %s382, %s398
      %p400 = scmp.eq.s32.totalorder %s32, 0
      %p401 = por %p399, %p400
      %s402 = ssub.s32 %s34, %s41
      %p403 = scmp.eq.s32.totalorder %s402, 0
      %s405 = sadd.s32 %s404, 1
      %s406 = scalar_select %p403, %s404, %s405
      %p409 = pneg %p403
      %p410 = scmp.eq.s32.totalorder %s26, 7
      %p411 = por %p409, %p410
      %p412 = scmp.ne.s32.totalorder %s404, %s407
      %p413 = scmp.eq.s32.totalorder %s26, 0
      %p414 = por %p412, %p413
      %p415 = scmp.ne.s32.totalorder %s404, %s407
      %p416 = scmp.eq.s32.totalorder %s31, 7
      %p417 = por %p415, %p416
      %p418 = scmp.ne.s32.totalorder %s407, %s408
      %p419 = scmp.eq.s32.totalorder %s31, 0
      %p420 = por %p418, %p419
      %p421 = scmp.ne.s32.totalorder %s407, %s408
      %p422 = scmp.eq.s32.totalorder %s32, 7
      %p423 = por %p421, %p422
      %p425 = scmp.ne.s32.totalorder %s408, %s424
      %p426 = scmp.eq.s32.totalorder %s32, 0
      %p427 = por %p425, %p426
      %s429 = sadd.s32 %s428, 1
      %p432 = scmp.eq.s32.totalorder %s26, 7
      %p433 = scmp.ne.s32.totalorder %s428, %s430
      %p434 = scmp.eq.s32.totalorder %s26, 0
      %p435 = por %p433, %p434
      %p436 = scmp.ne.s32.totalorder %s428, %s430
      %p437 = scmp.eq.s32.totalorder %s31, 7
      %p438 = por %p436, %p437
      %p439 = scmp.ne.s32.totalorder %s430, %s431
      %p440 = scmp.eq.s32.totalorder %s31, 0
      %p441 = por %p439, %p440
      %p442 = scmp.ne.s32.totalorder %s430, %s431
      %p443 = scmp.eq.s32.totalorder %s32, 7
      %p444 = por %p442, %p443
      %p446 = scmp.ne.s32.totalorder %s431, %s445
      %p447 = scmp.eq.s32.totalorder %s32, 0
      %p448 = por %p446, %p447
      %s450 = sadd.s32 %s449, 1
      %p453 = scmp.eq.s32.totalorder %s26, 7
      %p454 = scmp.ne.s32.totalorder %s449, %s451
      %p455 = scmp.eq.s32.totalorder %s26, 0
      %p456 = por %p454, %p455
      %p457 = scmp.ne.s32.totalorder %s449, %s451
      %p458 = scmp.eq.s32.totalorder %s31, 7
      %p459 = por %p457, %p458
      %p460 = scmp.ne.s32.totalorder %s451, %s452
      %p461 = scmp.eq.s32.totalorder %s31, 0
      %p462 = por %p460, %p461
      %p463 = scmp.ne.s32.totalorder %s451, %s452
      %p464 = scmp.eq.s32.totalorder %s32, 7
      %p465 = por %p463, %p464
      %p467 = scmp.ne.s32.totalorder %s452, %s466
      %p468 = scmp.eq.s32.totalorder %s32, 0
      %p469 = por %p467, %p468
      %s471 = sadd.s32 %s470, 1
      %p474 = scmp.eq.s32.totalorder %s26, 7
      %p475 = scmp.ne.s32.totalorder %s470, %s472
      %p476 = scmp.eq.s32.totalorder %s26, 0
      %p477 = por %p475, %p476
      %p478 = scmp.ne.s32.totalorder %s470, %s472
      %p479 = scmp.eq.s32.totalorder %s31, 7
      %p480 = por %p478, %p479
      %p481 = scmp.ne.s32.totalorder %s472, %s473
      %p482 = scmp.eq.s32.totalorder %s31, 0
      %p483 = por %p481, %p482
      %p484 = scmp.ne.s32.totalorder %s472, %s473
      %p485 = scmp.eq.s32.totalorder %s32, 7
      %p486 = por %p484, %p485
      %p488 = scmp.ne.s32.totalorder %s473, %s487
      %p489 = scmp.eq.s32.totalorder %s32, 0
      %p490 = por %p488, %p489
      %s491 = ssub.s32 %s33, %s45
      %p492 = scmp.eq.s32.totalorder %s491, 0
      %s494 = sadd.s32 %s493, 1
      %s495 = scalar_select %p492, %s493, %s494
      %p498 = pneg %p492
      %p499 = scmp.eq.s32.totalorder %s26, 7
      %p500 = por %p498, %p499
      %p501 = scmp.ne.s32.totalorder %s493, %s496
      %p502 = scmp.eq.s32.totalorder %s26, 0
      %p503 = por %p501, %p502
      %p504 = scmp.ne.s32.totalorder %s493, %s496
      %p505 = scmp.eq.s32.totalorder %s31, 7
      %p506 = por %p504, %p505
      %p507 = scmp.ne.s32.totalorder %s496, %s497
      %p508 = scmp.eq.s32.totalorder %s31, 0
      %p509 = por %p507, %p508
      %p510 = scmp.ne.s32.totalorder %s496, %s497
      %p511 = scmp.eq.s32.totalorder %s32, 7
      %p512 = por %p510, %p511
      %p514 = scmp.ne.s32.totalorder %s497, %s513
      %p515 = scmp.eq.s32.totalorder %s32, 0
      %p516 = por %p514, %p515
      %p517 = scmp.le.s32.totalorder 1, %s26
      %p518 = scmp.lt.s32.totalorder %s26, 9
      %p519 = pnand %p517, %p518
      %p520 = pneg %p519
      // Predicated region
      $region9: #{transformer_forward.7} parent=5 // pred_check
        _
      $region10: #{transformer_forward.7} parent=5 // pred_check_branch
        %522 = sbr.rel (%p519) target = $region12
      $region11: #{transformer_forward.7} parent=5 // pred_region
        %s523 = ssub.s32 %s26, 1
        // Predicated region
        $region13: #{transformer_forward.7} parent=11 // pred_check
          %p524 = pneg %p111
        $region14: #{transformer_forward.7} parent=11 // pred_check_branch
          %526 = sbr.rel (%p524) target = $region16
        $region15: #{transformer_forward.7} parent=11 // pred_region
          _
        $region16: #{transformer_forward.7} parent=11 // pred_fallthru
          _
        // Predicated region
        $region17: #{transformer_forward.7} parent=11 // pred_check
          %p527 = pneg %p132
        $region18: #{transformer_forward.7} parent=11 // pred_check_branch
          %529 = sbr.rel (%p527) target = $region20
        $region19: #{transformer_forward.7} parent=11 // pred_region
          _
        $region20: #{transformer_forward.7} parent=11 // pred_fallthru
          _
        // Predicated region
        $region21: #{transformer_forward.7} parent=11 // pred_check
          %p530 = pneg %p153
        $region22: #{transformer_forward.7} parent=11 // pred_check_branch
          %532 = sbr.rel (%p530) target = $region24
        $region23: #{transformer_forward.7} parent=11 // pred_region
          _
        $region24: #{transformer_forward.7} parent=11 // pred_fallthru
          _
        // Predicated region
        $region25: #{transformer_forward.7} parent=11 // pred_check
          %p533 = pneg %p174
        $region26: #{transformer_forward.7} parent=11 // pred_check_branch
          %535 = sbr.rel (%p533) target = $region28
        $region27: #{transformer_forward.7} parent=11 // pred_region
          _
        $region28: #{transformer_forward.7} parent=11 // pred_fallthru
          _
        // Predicated region
        $region29: #{transformer_forward.7} parent=11 // pred_check
          %p536 = pneg %p195
        $region30: #{transformer_forward.7} parent=11 // pred_check_branch
          %538 = sbr.rel (%p536) target = $region32
        $region31: #{transformer_forward.7} parent=11 // pred_region
          _
        $region32: #{transformer_forward.7} parent=11 // pred_fallthru
          _
        // Predicated region
        $region33: #{transformer_forward.7} parent=11 // pred_check
          %p539 = pneg %p216
        $region34: #{transformer_forward.7} parent=11 // pred_check_branch
          %541 = sbr.rel (%p539) target = $region36
        $region35: #{transformer_forward.7} parent=11 // pred_region
          _
        $region36: #{transformer_forward.7} parent=11 // pred_fallthru
          _
        // Predicated region
        $region37: #{transformer_forward.7} parent=11 // pred_check
          %p542 = pneg %p237
        $region38: #{transformer_forward.7} parent=11 // pred_check_branch
          %544 = sbr.rel (%p542) target = $region40
        $region39: #{transformer_forward.7} parent=11 // pred_region
          _
        $region40: #{transformer_forward.7} parent=11 // pred_fallthru
          _
        // Predicated region
        $region41: #{transformer_forward.7} parent=11 // pred_check
          %p545 = pneg %p258
        $region42: #{transformer_forward.7} parent=11 // pred_check_branch
          %547 = sbr.rel (%p545) target = $region44
        $region43: #{transformer_forward.7} parent=11 // pred_region
          _
        $region44: #{transformer_forward.7} parent=11 // pred_fallthru
          _
        // Predicated region
        $region45: #{transformer_forward.7} parent=11 // pred_check
          %p548 = pneg %p279
        $region46: #{transformer_forward.7} parent=11 // pred_check_branch
          %550 = sbr.rel (%p548) target = $region48
        $region47: #{transformer_forward.7} parent=11 // pred_region
          _
        $region48: #{transformer_forward.7} parent=11 // pred_fallthru
          _
        // Predicated region
        $region49: #{transformer_forward.7} parent=11 // pred_check
          %p551 = pneg %p300
        $region50: #{transformer_forward.7} parent=11 // pred_check_branch
          %553 = sbr.rel (%p551) target = $region52
        $region51: #{transformer_forward.7} parent=11 // pred_region
          _
        $region52: #{transformer_forward.7} parent=11 // pred_fallthru
          _
        // Predicated region
        $region53: #{transformer_forward.7} parent=11 // pred_check
          %p554 = pneg %p321
        $region54: #{transformer_forward.7} parent=11 // pred_check_branch
          %556 = sbr.rel (%p554) target = $region56
        $region55: #{transformer_forward.7} parent=11 // pred_region
          _
        $region56: #{transformer_forward.7} parent=11 // pred_fallthru
          _
        // Predicated region
        $region57: #{transformer_forward.7} parent=11 // pred_check
          %p557 = pneg %p342
        $region58: #{transformer_forward.7} parent=11 // pred_check_branch
          %559 = sbr.rel (%p557) target = $region60
        $region59: #{transformer_forward.7} parent=11 // pred_region
          _
        $region60: #{transformer_forward.7} parent=11 // pred_fallthru
          _
        // Predicated region
        $region61: #{transformer_forward.7} parent=11 // pred_check
          %p560 = pneg %p441
        $region62: #{transformer_forward.7} parent=11 // pred_check_branch
          %562 = sbr.rel (%p560) target = $region64
        $region63: #{transformer_forward.7} parent=11 // pred_region
          _
        $region64: #{transformer_forward.7} parent=11 // pred_fallthru
          _
        // Predicated region
        $region65: #{transformer_forward.7} parent=11 // pred_check
          %p563 = pneg %p462
        $region66: #{transformer_forward.7} parent=11 // pred_check_branch
          %565 = sbr.rel (%p563) target = $region68
        $region67: #{transformer_forward.7} parent=11 // pred_region
          _
        $region68: #{transformer_forward.7} parent=11 // pred_fallthru
          _
        // Predicated region
        $region69: #{transformer_forward.7} parent=11 // pred_check
          %p566 = pneg %p483
        $region70: #{transformer_forward.7} parent=11 // pred_check_branch
          %568 = sbr.rel (%p566) target = $region72
        $region71: #{transformer_forward.7} parent=11 // pred_region
          _
        $region72: #{transformer_forward.7} parent=11 // pred_fallthru
          _
      $region12: #{transformer_forward.7} parent=5 // pred_fallthru
        _
      %p569 = scmp.lt.s32.totalorder %s26, 8
      // Predicated region
      $region73: #{transformer_forward.7} parent=5 // pred_check
        %p570 = pneg %p569
      $region74: #{transformer_forward.7} parent=5 // pred_check_branch
        %572 = sbr.rel (%p570) target = $region76
      $region75: #{transformer_forward.7} parent=5 // pred_region
        // Predicated region
        $region77: #{transformer_forward.7} parent=75 // pred_check
          %p573 = pneg %p58
        $region78: #{transformer_forward.7} parent=75 // pred_check_branch
          %575 = sbr.rel (%p573) target = $region80
        $region79: #{transformer_forward.7} parent=75 // pred_region
          %p576 = scmp.lt.s32.totalorder %s33, 1
          %s577 = scalar_select %p576, %s33, 1
          %s578 = smul.addr %s577, 4
          %s579 = scalar_lea.vmem %s0, %s578
        $region80: #{transformer_forward.7} parent=75 // pred_fallthru
          _
        // Predicated region
        $region81: #{transformer_forward.7} parent=75 // pred_check
          %p580 = pneg %p84
        $region82: #{transformer_forward.7} parent=75 // pred_check_branch
          %582 = sbr.rel (%p580) target = $region84
        $region83: #{transformer_forward.7} parent=75 // pred_region
          %p583 = scmp.lt.s32.totalorder %s33, 1
          %s584 = scalar_select %p583, %s33, 1
          %s585 = smul.addr %s584, 4
          %s586 = scalar_lea.vmem %s1, %s585
        $region84: #{transformer_forward.7} parent=75 // pred_fallthru
          _
        // Predicated region
        $region85: #{transformer_forward.7} parent=75 // pred_check
          %p587 = pneg %p362
        $region86: #{transformer_forward.7} parent=75 // pred_check_branch
          %589 = sbr.rel (%p587) target = $region88
        $region87: #{transformer_forward.7} parent=75 // pred_region
          %s590 = sand.u32 %s352, 1
          %s591 = sand.u32 %s352, 1
          %s592 = smul.addr %s591, 64
          %s593 = scalar_lea.vmem [#allocation4], %s592
          %s594 = smul.u32 4, %s34
          %s595 = smul.addr %s594, 4
          %s596 = scalar_lea.vmem %s14, %s595
          // Predicated region
          $region89: #{transformer_forward.7} parent=87 // pred_check
            _
          $region90: #{transformer_forward.7} parent=87 // pred_check_branch
            %598 = sbr.rel (0) target = $region92
          $region91: #{transformer_forward.7} parent=87 // pred_region
            // Predicated region
            $region93: #{transformer_forward.7} parent=91 // pred_check
              _
            $region94: #{transformer_forward.7} parent=91 // pred_check_branch
              %600 = sbr.rel (0) target = $region96
            $region95: #{transformer_forward.7} parent=91 // pred_region
              loop: start=0, step=1, limit=1
              $region97: #{transformer_forward.7} parent=95 // loop_pre_header
                _
              $region98: #{transformer_forward.7} parent=95 // loop_header
                %s602 = sphi 0, %s606
                %p603 = scmp.ge.s32.totalorder %s602, 1
                %s607 = sphi %s596, %s596
                %s608 = sphi %s593, %s593
              $region99: #{transformer_forward.7} parent=95 // loop_header_branch
                %605 = sbr.rel (%p603) target = $region103
              $region100: #{transformer_forward.7} parent=95 // loop_body
                %v609 = vld [vmem:[%s607] sm:$0xff]
                %610 = vst [vmem:[%s608] sm:$0xff] %v609
                %v611 = vld [vmem:[%s607 + $0x8] sm:$0xff]
                %612 = vst [vmem:[%s608 + $0x8] sm:$0xff] %v611
                %v613 = vld [vmem:[%s607 + $0x40] sm:$0xff]
                %614 = vst [vmem:[%s608 + $0x10] sm:$0xff] %v613
                %v615 = vld [vmem:[%s607 + $0x48] sm:$0xff]
                %616 = vst [vmem:[%s608 + $0x18] sm:$0xff] %v615
                %v617 = vld [vmem:[%s607 + $0x80] sm:$0xff]
                %618 = vst [vmem:[%s608 + $0x20] sm:$0xff] %v617
                %v619 = vld [vmem:[%s607 + $0x88] sm:$0xff]
                %620 = vst [vmem:[%s608 + $0x28] sm:$0xff] %v619
                %v621 = vld [vmem:[%s607 + $0xc0] sm:$0xff]
                %622 = vst [vmem:[%s608 + $0x30] sm:$0xff] %v621
                %v623 = vld [vmem:[%s607 + $0xc8] sm:$0xff]
                %624 = vst [vmem:[%s608 + $0x38] sm:$0xff] %v623
              $region101: #{transformer_forward.7} parent=95 // loop_footer
                %s606 = sadd.s32 1, %s602
              $region102: #{transformer_forward.7} parent=95 // loop_footer_branch
                %601 = sbr.rel target = $region98
              $region103: #{transformer_forward.7} parent=95 // loop_exit
                _
            $region96: #{transformer_forward.7} parent=91 // pred_fallthru
              _
            // Predicated region
            $region104: #{transformer_forward.7} parent=91 // pred_check
              _
            $region105: #{transformer_forward.7} parent=91 // pred_check_branch
              %626 = sbr.rel target = $region107
            $region106: #{transformer_forward.7} parent=91 // pred_region
              _
            $region107: #{transformer_forward.7} parent=91 // pred_fallthru
              _
          $region92: #{transformer_forward.7} parent=87 // pred_fallthru
            _
          %627 = vnop
        $region88: #{transformer_forward.7} parent=75 // pred_fallthru
          _
        // Predicated region
        $region108: #{transformer_forward.7} parent=75 // pred_check
          %p628 = pneg %p388
        $region109: #{transformer_forward.7} parent=75 // pred_check_branch
          %630 = sbr.rel (%p628) target = $region111
        $region110: #{transformer_forward.7} parent=75 // pred_region
          %s631 = smul.u32 4, %s34
          %p632 = scmp.lt.s32.totalorder %s631, 15
          %s633 = scalar_select %p632, %s631, 15
          %s634 = scalar_lea.vmem %s15, %s633
          %s635 = smul.u32 4, %s34
        $region111: #{transformer_forward.7} parent=75 // pred_fallthru
          _
        // Predicated region
        $region112: #{transformer_forward.7} parent=75 // pred_check
          %p636 = pneg %p414
        $region113: #{transformer_forward.7} parent=75 // pred_check_branch
          %638 = sbr.rel (%p636) target = $region115
        $region114: #{transformer_forward.7} parent=75 // pred_region
          %s639 = smul.u32 64, %s34
          %p640 = scmp.lt.s32.totalorder %s639, 255
          %s641 = scalar_select %p640, %s639, 255
          %s642 = smul.addr %s641, 4
          %s643 = scalar_lea.vmem %s16, %s642
          %s644 = smul.u32 64, %s34
        $region115: #{transformer_forward.7} parent=75 // pred_fallthru
          _
      $region76: #{transformer_forward.7} parent=5 // pred_fallthru
        _
      %p645 = scmp.le.s32.totalorder 1, %s26
      %p646 = scmp.lt.s32.totalorder %s26, 9
      %p647 = pnand %p645, %p646
      %p648 = pneg %p647
      // Predicated region
      $region116: #{transformer_forward.7} parent=5 // pred_check
        _
      $region117: #{transformer_forward.7} parent=5 // pred_check_branch
        %650 = sbr.rel (%p647) target = $region119
      $region118: #{transformer_forward.7} parent=5 // pred_region
        %s651 = ssub.s32 %s26, 1
        %s652 = sand.u32 %s355, 1
        %s653 = sand.u32 %s355, 1
        %s654 = smul.addr %s653, 64
        %s655 = scalar_lea.vmem [#allocation4], %s654
        // Predicated region
        $region120: #{transformer_forward.7} parent=118 // pred_check
          %p656 = pneg %p368
        $region121: #{transformer_forward.7} parent=118 // pred_check_branch
          %658 = sbr.rel (%p656) target = $region123
        $region122: #{transformer_forward.7} parent=118 // pred_region
          _
        $region123: #{transformer_forward.7} parent=118 // pred_fallthru
          _
        %p659 = scmp.lt.s32.totalorder %s35, 1
        %s660 = scalar_select %p659, %s35, 1
        %s661 = smul.addr %s660, 4
        %s662 = scalar_lea.vmem %s0, %s661
        %p663 = pneg %p64
        %p664 = pneg %p61
        %p665 = scmp.lt.s32.totalorder %s35, 1
        %s666 = scalar_select %p665, %s35, 1
        %s667 = smul.addr %s666, 4
        %s668 = scalar_lea.vmem %s1, %s667
        %p669 = pneg %p90
        %p670 = pneg %p87
        %p671 = pneg %p111
        %p672 = pneg %p108
        %p673 = pneg %p132
        %p674 = pneg %p129
        %p675 = pneg %p153
        %p676 = pneg %p150
        %p677 = pneg %p174
        %p678 = pneg %p171
        %p679 = pneg %p195
        %p680 = pneg %p192
        %p681 = pneg %p216
        %p682 = pneg %p213
        %p683 = pneg %p237
        %p684 = pneg %p234
        %p685 = pneg %p258
        %p686 = pneg %p255
        %p687 = pneg %p279
        %p688 = pneg %p276
        %p689 = pneg %p300
        %p690 = pneg %p297
        %p691 = pneg %p321
        %p692 = pneg %p318
        %p693 = pneg %p342
        %p694 = pneg %p339
        %s695 = sand.u32 %s355, 1
        %s696 = sand.u32 %s355, 1
        %s697 = smul.addr %s696, 64
        %s698 = scalar_lea.vmem [#allocation4], %s697
        %p699 = pneg %p368
        %p700 = pneg %p365
        %s701 = smul.u32 4, %s36
        %p702 = scmp.lt.s32.totalorder %s701, 15
        %s703 = scalar_select %p702, %s701, 15
        %s704 = scalar_lea.vmem %s15, %s703
        %p705 = pneg %p394
        %p706 = pneg %p391
        %s707 = smul.u32 64, %s36
        %p708 = scmp.lt.s32.totalorder %s707, 255
        %s709 = scalar_select %p708, %s707, 255
        %s710 = smul.addr %s709, 4
        %s711 = scalar_lea.vmem %s16, %s710
        %p712 = pneg %p420
        %p713 = pneg %p417
        %p714 = pneg %p441
        %p715 = pneg %p438
        %p716 = pneg %p462
        %p717 = pneg %p459
        %p718 = pneg %p483
        %p719 = pneg %p480
        %p720 = pneg %p509
        %p721 = pneg %p506
        %p722 = scmp.lt.s32.totalorder %s35, 1
        %s723 = scalar_select %p722, %s35, 1
        %s724 = smul.addr %s723, 4
        %s725 = scalar_lea.vmem %s20, %s724
        %p726 = scmp.lt.s32.totalorder %s35, 1
        %s727 = scalar_select %p726, %s35, 1
        %s728 = smul.addr %s727, 4
        %s729 = scalar_lea.vmem %s0, %s728
        %p730 = scmp.lt.s32.totalorder %s35, 1
        %s731 = scalar_select %p730, %s35, 1
        %s732 = smul.addr %s731, 4
        %s733 = scalar_lea.vmem %s1, %s732
        %s734 = smul.u32 4, %s36
        %s735 = smul.u32 4, %s36
        %p736 = scmp.lt.s32.totalorder %s735, 15
        %s737 = scalar_select %p736, %s735, 15
        %s738 = scalar_lea.vmem %s15, %s737
        %s739 = smul.u32 4, %s36
        %s740 = smul.u32 64, %s36
        %p741 = scmp.lt.s32.totalorder %s740, 255
        %s742 = scalar_select %p741, %s740, 255
        %s743 = smul.addr %s742, 4
        %s744 = scalar_lea.vmem %s16, %s743
        %s745 = smul.u32 64, %s36
        %p746 = scmp.lt.s32.totalorder %s35, 1
        %s747 = scalar_select %p746, %s35, 1
        %s748 = smul.addr %s747, 4
        %s749 = scalar_lea.vmem %s20, %s748
        %p751 = scmp.eq.s32.totalorder %s36, 0
        // Predicated region
        $region124: #{transformer_forward.7} parent=118 // pred_check
          %p752 = pneg %p751
        $region125: #{transformer_forward.7} parent=118 // pred_check_branch
          %754 = sbr.rel (%p752) target = $region127
        $region126: #{transformer_forward.7} parent=118 // pred_region
          %v755 = vld [vmem:[%s729] sm:$0xf]
          %v756 = vunpack.c.l.bf16 %v755
          %v757 = vld [vmem:[%s733] sm:$0xf]
          %v758 = vld [vmem:[%s2] sm:$0xf]
          %v759 = vld [vmem:[%s2 + $0x4] sm:$0xf]
          %v760 = vld [vmem:[%s2 + $0x8] sm:$0xf]
          %v761 = vld [vmem:[%s2 + $0xc] sm:$0xf]
          %v762 = vld [vmem:[%s3] sm:$0x1]
          %v763 = vld [vmem:[%s4] sm:$0xf]
          %v764 = vld [vmem:[%s4 + $0x4] sm:$0xf]
          %v765 = vld [vmem:[%s4 + $0x8] sm:$0xf]
          %v766 = vld [vmem:[%s4 + $0xc] sm:$0xf]
          %v767 = vld [vmem:[%s5] sm:$0x1]
          %v769 = vlaneseq
          %v770 = vshrl.u32 %v769, 7
          %v771 = vsub.s32 0, %v770
          %v772 = vrot.slane %v762, %v771
          %v778 = vunpack.c.l.b16 %v758
          %v779 = vunpack.c.l.b16 %v759
          %v780 = vunpack.c.l.b16 %v760
          %v781 = vunpack.c.l.b16 %v761
          %v782 = vpack.c.b16 %v779, %v778
          %v783 = vpack.c.b16 %v781, %v780
          %vm786 = vcmask 261120
          %v788 = vsel %vm786, %v755, 0
          %790 = vmatprep.subr.bf16.mxu0 0
          %791 = vmatpush1.bf16.msra.mxu0 %v782
          %792 = vmatprep.subr.bf16.mxu0 0
          %793 = vmatpush1.bf16.msra.mxu0 %v783
          %794 = vmatprep.subr.bf16.mxu0 0
          %795 = vmatpush1.bf16.msra.mxu0 0
          %796 = vmatprep.subr.bf16.mxu0 0
          %797 = vmatpush1.bf16.msra.mxu0 0
          %798 = vmatprep.subr.bf16.mxu0 0
          %799 = vmatpush1.bf16.msra.mxu0 0
          %800 = vmatprep.subr.bf16.mxu0 0
          %801 = vmatpush1.bf16.msra.mxu0 0
          %802 = vmatprep.subr.bf16.mxu0 0
          %803 = vmatpush1.bf16.msra.mxu0 0
          %804 = vmatprep.subr.bf16.mxu0 0
          %805 = vmatpush1.bf16.msra.mxu0 0
          %806 = vmatprep.subr.bf16.mxu0 0
          %807 = vmatpush1.bf16.msra.mxu0 0
          %808 = vmatprep.subr.bf16.mxu0 0
          %809 = vmatpush1.bf16.msra.mxu0 0
          %810 = vmatprep.subr.bf16.mxu0 0
          %811 = vmatpush1.bf16.msra.mxu0 0
          %812 = vmatprep.subr.bf16.mxu0 0
          %813 = vmatpush1.bf16.msra.mxu0 0
          %814 = vmatprep.subr.bf16.mxu0 0
          %815 = vmatpush1.bf16.msra.mxu0 0
          %816 = vmatprep.subr.bf16.mxu0 0
          %817 = vmatpush1.bf16.msra.mxu0 0
          %818 = vmatprep.subr.bf16.mxu0 0
          %819 = vmatpush1.bf16.msra.mxu0 0
          %820 = vmatprep.subr.bf16.mxu0 0
          %821 = vmatpush1.bf16.msra.mxu0 0
          %822 = vmatprep.mubr.bf16.mxu0 0
          %823 = vmatmul.mubr.bf16.gmra.mrb[0].mxu0 %v788
          %v824 = vpop.f32.mrb[0].mxu0
          %v825 = vadd.f32 %v772, %v824
          %v826 = vpop.f32.mrb[0].mxu0
          %v827 = vpop.f32.mrb[0].mxu0
          %v828 = vpop.f32.mrb[0].mxu0
          %829 = vdwg.mxu0
          %v830 = vpack.c.bf16 %v825, %v825
          %832 = vrot.lane.b32.xlu0 %v830, 96
          %v833 = vpop.permute.xlu0 %832
          %vm834 = vcmask 130048
          %v836 = vsel %vm834, %v830, 0
          %v839 = vsel %vm834, %v833, 0
          %841 = vmatprep.subr.bf16.mxu0 0
          %842 = vmatpush1.bf16.xpose.msra.mxu0 %v839
          %843 = vmatprep.subr.bf16.mxu0 0
          %844 = vmatpush1.bf16.xpose.msra.mxu0 0
          %845 = vmatprep.subr.bf16.mxu0 0
          %846 = vmatpush1.bf16.xpose.msra.mxu0 0
          %847 = vmatprep.subr.bf16.mxu0 0
          %848 = vmatpush1.bf16.xpose.msra.mxu0 0
          %849 = vmatprep.subr.bf16.mxu0 0
          %850 = vmatpush1.bf16.xpose.msra.mxu0 0
          %851 = vmatprep.subr.bf16.mxu0 0
          %852 = vmatpush1.bf16.xpose.msra.mxu0 0
          %853 = vmatprep.subr.bf16.mxu0 0
          %854 = vmatpush1.bf16.xpose.msra.mxu0 0
          %855 = vmatprep.subr.bf16.mxu0 0
          %856 = vmatpush1.bf16.xpose.msra.mxu0 0
          %857 = vmatprep.subr.bf16.mxu0 0
          %858 = vmatpush1.bf16.xpose.msra.mxu0 0
          %859 = vmatprep.subr.bf16.mxu0 0
          %860 = vmatpush1.bf16.xpose.msra.mxu0 0
          %861 = vmatprep.subr.bf16.mxu0 0
          %862 = vmatpush1.bf16.xpose.msra.mxu0 0
          %863 = vmatprep.subr.bf16.mxu0 0
          %864 = vmatpush1.bf16.xpose.msra.mxu0 0
          %865 = vmatprep.subr.bf16.mxu0 0
          %866 = vmatpush1.bf16.xpose.msra.mxu0 0
          %867 = vmatprep.subr.bf16.mxu0 0
          %868 = vmatpush1.bf16.xpose.msra.mxu0 0
          %869 = vmatprep.subr.bf16.mxu0 0
          %870 = vmatpush1.bf16.xpose.msra.mxu0 0
          %871 = vmatprep.subr.bf16.mxu0 0
          %872 = vmatpush1.bf16.xpose.msra.mxu0 0
          %873 = vmatprep.mubr.bf16.mxu0 0
          %874 = vmatmul.mubr.bf16.gmra.mrb[0].mxu0 %v836
          %v875 = vpop.f32.mrb[0].mxu0
          %v876 = vadd.f32 0.0, %v875
          %v877 = vpop.f32.mrb[0].mxu0
          %v878 = vpop.f32.mrb[0].mxu0
          %v879 = vpop.f32.mrb[0].mxu0
          %880 = vdwg.mxu0
          %v881 = vmul.f32 %v876, 0.25
          %vm882 = vcmask 64512
          %v883 = vsel %vm882, %v881, -inf
          %884 = vmax.xlane.f32.xlu0 %v883
          %v885 = vpop.xlane.xlu0 %884
          %v886 = vsub.f32 %v881, %v885
          %v887 = vmul.f32 %v886, 1.442695
          %v888 = vpow.pop %v887
          %v889 = vsel %vm882, %v888, 0.0
          %890 = vadd.xlane.f32.xlu0 %v889
          %v891 = vpop.xlane.xlu0 %890
          %v892 = vrcp.pop %v891
          %v893 = vmul.f32 %v888, %v892
          %v894 = vpack.c.bf16 %v893, %v893
          %895 = vrot.lane.b32.xlu0 %v830, 64
          %v896 = vpop.permute.xlu0 %895
          %v898 = vsel %vm882, %v894, 0
          %vm900 = vcmask 1043456
          %v902 = vsel %vm900, %v896, 0
          %904 = vmatprep.subr.bf16.mxu0 0
          %905 = vmatpush1.bf16.msra.mxu0 %v902
          %906 = vmatprep.subr.bf16.mxu0 0
          %907 = vmatpush1.bf16.msra.mxu0 0
          %908 = vmatprep.subr.bf16.mxu0 0
          %909 = vmatpush1.bf16.msra.mxu0 0
          %910 = vmatprep.subr.bf16.mxu0 0
          %911 = vmatpush1.bf16.msra.mxu0 0
          %912 = vmatprep.subr.bf16.mxu0 0
          %913 = vmatpush1.bf16.msra.mxu0 0
          %914 = vmatprep.subr.bf16.mxu0 0
          %915 = vmatpush1.bf16.msra.mxu0 0
          %916 = vmatprep.subr.bf16.mxu0 0
          %917 = vmatpush1.bf16.msra.mxu0 0
          %918 = vmatprep.subr.bf16.mxu0 0
          %919 = vmatpush1.bf16.msra.mxu0 0
          %920 = vmatprep.subr.bf16.mxu0 0
          %921 = vmatpush1.bf16.msra.mxu0 0
          %922 = vmatprep.subr.bf16.mxu0 0
          %923 = vmatpush1.bf16.msra.mxu0 0
          %924 = vmatprep.subr.bf16.mxu0 0
          %925 = vmatpush1.bf16.msra.mxu0 0
          %926 = vmatprep.subr.bf16.mxu0 0
          %927 = vmatpush1.bf16.msra.mxu0 0
          %928 = vmatprep.subr.bf16.mxu0 0
          %929 = vmatpush1.bf16.msra.mxu0 0
          %930 = vmatprep.subr.bf16.mxu0 0
          %931 = vmatpush1.bf16.msra.mxu0 0
          %932 = vmatprep.subr.bf16.mxu0 0
          %933 = vmatpush1.bf16.msra.mxu0 0
          %934 = vmatprep.subr.bf16.mxu0 0
          %935 = vmatpush1.bf16.msra.mxu0 0
          %936 = vmatprep.mubr.bf16.mxu0 0
          %937 = vmatmul.mubr.bf16.gmra.mrb[0].mxu0 %v898
          %v938 = vpop.f32.mrb[0].mxu0
          %v939 = vadd.f32 0.0, %v938
          %v940 = vpop.f32.mrb[0].mxu0
          %v941 = vpop.f32.mrb[0].mxu0
          %v942 = vpop.f32.mrb[0].mxu0
          %943 = vdwg.mxu0
          %944 = vrot.lane.b32.xlu0 %v830, 112
          %v945 = vpop.permute.xlu0 %944
          %946 = vrot.lane.b32.xlu0 %v830, 80
          %v947 = vpop.permute.xlu0 %946
          %v949 = vsel %vm834, %v945, 0
          %v952 = vsel %vm834, %v947, 0
          %954 = vmatprep.subr.bf16.mxu0 0
          %955 = vmatpush1.bf16.xpose.msra.mxu0 %v952
          %956 = vmatprep.subr.bf16.mxu0 0
          %957 = vmatpush1.bf16.xpose.msra.mxu0 0
          %958 = vmatprep.subr.bf16.mxu0 0
          %959 = vmatpush1.bf16.xpose.msra.mxu0 0
          %960 = vmatprep.subr.bf16.mxu0 0
          %961 = vmatpush1.bf16.xpose.msra.mxu0 0
          %962 = vmatprep.subr.bf16.mxu0 0
          %963 = vmatpush1.bf16.xpose.msra.mxu0 0
          %964 = vmatprep.subr.bf16.mxu0 0
          %965 = vmatpush1.bf16.xpose.msra.mxu0 0
          %966 = vmatprep.subr.bf16.mxu0 0
          %967 = vmatpush1.bf16.xpose.msra.mxu0 0
          %968 = vmatprep.subr.bf16.mxu0 0
          %969 = vmatpush1.bf16.xpose.msra.mxu0 0
          %970 = vmatprep.subr.bf16.mxu0 0
          %971 = vmatpush1.bf16.xpose.msra.mxu0 0
          %972 = vmatprep.subr.bf16.mxu0 0
          %973 = vmatpush1.bf16.xpose.msra.mxu0 0
          %974 = vmatprep.subr.bf16.mxu0 0
          %975 = vmatpush1.bf16.xpose.msra.mxu0 0
          %976 = vmatprep.subr.bf16.mxu0 0
          %977 = vmatpush1.bf16.xpose.msra.mxu0 0
          %978 = vmatprep.subr.bf16.mxu0 0
          %979 = vmatpush1.bf16.xpose.msra.mxu0 0
          %980 = vmatprep.subr.bf16.mxu0 0
          %981 = vmatpush1.bf16.xpose.msra.mxu0 0
          %982 = vmatprep.subr.bf16.mxu0 0
          %983 = vmatpush1.bf16.xpose.msra.mxu0 0
          %984 = vmatprep.subr.bf16.mxu0 0
          %985 = vmatpush1.bf16.xpose.msra.mxu0 0
          %986 = vmatprep.mubr.bf16.mxu0 0
          %987 = vmatmul.mubr.bf16.gmra.mrb[0].mxu0 %v949
          %v988 = vpop.f32.mrb[0].mxu0
          %v989 = vadd.f32 0.0, %v988
          %v990 = vpop.f32.mrb[0].mxu0
          %v991 = vpop.f32.mrb[0].mxu0
          %v992 = vpop.f32.mrb[0].mxu0
          %993 = vdwg.mxu0
          %v994 = vmul.f32 %v989, 0.25
          %v995 = vsel %vm882, %v994, -inf
          %996 = vmax.xlane.f32.xlu0 %v995
          %v997 = vpop.xlane.xlu0 %996
          %v998 = vsub.f32 %v994, %v997
          %v999 = vmul.f32 %v998, 1.442695
          %v1000 = vpow.pop %v999
          %v1001 = vsel %vm882, %v1000, 0.0
          %1002 = vadd.xlane.f32.xlu0 %v1001
          %v1003 = vpop.xlane.xlu0 %1002
          %v1004 = vrcp.pop %v1003
          %v1005 = vmul.f32 %v1000, %v1004
          %v1006 = vpack.c.bf16 %v1005, %v1005
          %1007 = vrot.lane.b32.xlu0 %v830, 48
          %v1008 = vpop.permute.xlu0 %1007
          %v1010 = vsel %vm882, %v1006, 0
          %v1013 = vsel %vm900, %v1008, 0
          %1015 = vmatprep.subr.bf16.mxu0 0
          %1016 = vmatpush1.bf16.msra.mxu0 %v1013
          %1017 = vmatprep.subr.bf16.mxu0 0
          %1018 = vmatpush1.bf16.msra.mxu0 0
          %1019 = vmatprep.subr.bf16.mxu0 0
          %1020 = vmatpush1.bf16.msra.mxu0 0
          %1021 = vmatprep.subr.bf16.mxu0 0
          %1022 = vmatpush1.bf16.msra.mxu0 0
          %1023 = vmatprep.subr.bf16.mxu0 0
          %1024 = vmatpush1.bf16.msra.mxu0 0
          %1025 = vmatprep.subr.bf16.mxu0 0
          %1026 = vmatpush1.bf16.msra.mxu0 0
          %1027 = vmatprep.subr.bf16.mxu0 0
          %1028 = vmatpush1.bf16.msra.mxu0 0
          %1029 = vmatprep.subr.bf16.mxu0 0
          %1030 = vmatpush1.bf16.msra.mxu0 0
          %1031 = vmatprep.subr.bf16.mxu0 0
          %1032 = vmatpush1.bf16.msra.mxu0 0
          %1033 = vmatprep.subr.bf16.mxu0 0
          %1034 = vmatpush1.bf16.msra.mxu0 0
          %1035 = vmatprep.subr.bf16.mxu0 0
          %1036 = vmatpush1.bf16.msra.mxu0 0
          %1037 = vmatprep.subr.bf16.mxu0 0
          %1038 = vmatpush1.bf16.msra.mxu0 0
          %1039 = vmatprep.subr.bf16.mxu0 0
          %1040 = vmatpush1.bf16.msra.mxu0 0
          %1041 = vmatprep.subr.bf16.mxu0 0
          %1042 = vmatpush1.bf16.msra.mxu0 0
          %1043 = vmatprep.subr.bf16.mxu0 0
          %1044 = vmatpush1.bf16.msra.mxu0 0
          %1045 = vmatprep.subr.bf16.mxu0 0
          %1046 = vmatpush1.bf16.msra.mxu0 0
          %1047 = vmatprep.mubr.bf16.mxu0 0
          %1048 = vmatmul.mubr.bf16.gmra.mrb[0].mxu0 %v1010
          %v1049 = vpop.f32.mrb[0].mxu0
          %v1050 = vadd.f32 0.0, %v1049
          %v1051 = vpop.f32.mrb[0].mxu0
          %v1052 = vpop.f32.mrb[0].mxu0
          %v1053 = vpop.f32.mrb[0].mxu0
          %1054 = vdwg.mxu0
          %1056 = vrot.lane.b32.xlu0 %v1050, 16
          %v1057 = vpop.permute.xlu0 %1056
          %v1059 = vsel %vm834, %v939, %v1057
          %v1060 = vpack.c.bf16 %v1059, %v1059
          %v1062 = vlaneseq
          %v1063 = vshrl.u32 %v1062, 7
          %v1064 = vsub.s32 0, %v1063
          %v1065 = vrot.slane %v767, %v1064
          %v1071 = vunpack.c.l.b16 %v763
          %v1072 = vunpack.c.l.b16 %v764
          %v1073 = vunpack.c.l.b16 %v765
          %v1074 = vunpack.c.l.b16 %v766
          %v1075 = vpack.c.b16 %v1072, %v1071
          %v1076 = vpack.c.b16 %v1074, %v1073
          %v1080 = vsel %vm786, %v1060, 0
          %1082 = vmatprep.subr.bf16.mxu0 0
          %1083 = vmatpush1.bf16.msra.mxu0 %v1075
          %1084 = vmatprep.subr.bf16.mxu0 0
          %1085 = vmatpush1.bf16.msra.mxu0 %v1076
          %1086 = vmatprep.subr.bf16.mxu0 0
          %1087 = vmatpush1.bf16.msra.mxu0 0
          %1088 = vmatprep.subr.bf16.mxu0 0
          %1089 = vmatpush1.bf16.msra.mxu0 0
          %1090 = vmatprep.subr.bf16.mxu0 0
          %1091 = vmatpush1.bf16.msra.mxu0 0
          %1092 = vmatprep.subr.bf16.mxu0 0
          %1093 = vmatpush1.bf16.msra.mxu0 0
          %1094 = vmatprep.subr.bf16.mxu0 0
          %1095 = vmatpush1.bf16.msra.mxu0 0
          %1096 = vmatprep.subr.bf16.mxu0 0
          %1097 = vmatpush1.bf16.msra.mxu0 0
          %1098 = vmatprep.subr.bf16.mxu0 0
          %1099 = vmatpush1.bf16.msra.mxu0 0
          %1100 = vmatprep.subr.bf16.mxu0 0
          %1101 = vmatpush1.bf16.msra.mxu0 0
          %1102 = vmatprep.subr.bf16.mxu0 0
          %1103 = vmatpush1.bf16.msra.mxu0 0
          %1104 = vmatprep.subr.bf16.mxu0 0
          %1105 = vmatpush1.bf16.msra.mxu0 0
          %1106 = vmatprep.subr.bf16.mxu0 0
          %1107 = vmatpush1.bf16.msra.mxu0 0
          %1108 = vmatprep.subr.bf16.mxu0 0
          %1109 = vmatpush1.bf16.msra.mxu0 0
          %1110 = vmatprep.subr.bf16.mxu0 0
          %1111 = vmatpush1.bf16.msra.mxu0 0
          %1112 = vmatprep.subr.bf16.mxu0 0
          %1113 = vmatpush1.bf16.msra.mxu0 0
          %1114 = vmatprep.mubr.bf16.mxu0 0
          %1115 = vmatmul.mubr.bf16.gmra.mrb[0].mxu0 %v1080
          %v1116 = vpop.f32.mrb[0].mxu0
          %v1117 = vadd.f32 %v1065, %v1116
          %v1118 = vpop.f32.mrb[0].mxu0
          %v1119 = vpop.f32.mrb[0].mxu0
          %v1120 = vpop.f32.mrb[0].mxu0
          %1121 = vdwg.mxu0
          %v1122 = vadd.f32 %v756, %v1117
          %v1123 = vld [vmem:[%s6] sm:$0x1]
          %v1124 = vld [vmem:[%s7] sm:$0x1]
          %v1125 = vsel %vm786, %v1122, 0.0
          %1126 = vadd.xlane.f32.xlu0 %v1125
          %v1127 = vpop.xlane.xlu0 %1126
          %v1128 = vrcp.pop 32.0
          %v1129 = vmul.f32 %v1127, %v1128
          %v1130 = vsub.f32 %v1122, %v1129
          %v1131 = vmul.f32 %v1130, %v1130
          %v1132 = vsel %vm786, %v1131, 0.0
          %1133 = vadd.xlane.f32.xlu0 %v1132
          %v1134 = vpop.xlane.xlu0 %1133
          %v1135 = vmul.f32 %v1134, %v1128
          %v1136 = vadd.f32 %v1135, 1e-05
          %v1137 = vrsqrt.pop %v1136
          %v1138 = vmul.f32 %v1130, %v1137
          %v1140 = vlaneseq
          %v1141 = vshrl.u32 %v1140, 7
          %v1142 = vsub.s32 0, %v1141
          %v1143 = vrot.slane %v1123, %v1142
          %v1145 = vmul.f32 %v1138, %v1143
          %v1147 = vlaneseq
          %v1148 = vshrl.u32 %v1147, 7
          %v1149 = vsub.s32 0, %v1148
          %v1150 = vrot.slane %v1124, %v1149
          %v1152 = vadd.f32 %v1145, %v1150
          %v1153 = vld [vmem:[%s8] sm:$0xf]
          %v1154 = vld [vmem:[%s8 + $0x4] sm:$0xf]
          %v1155 = vld [vmem:[%s8 + $0x8] sm:$0xf]
          %v1156 = vld [vmem:[%s8 + $0xc] sm:$0xf]
          %v1157 = vld [vmem:[%s9] sm:$0x1]
          %v1158 = vld [vmem:[%s10] sm:$0xf]
          %v1159 = vld [vmem:[%s10 + $0x4] sm:$0xf]
          %v1160 = vld [vmem:[%s10 + $0x8] sm:$0xf]
          %v1161 = vld [vmem:[%s10 + $0xc] sm:$0xf]
          %v1162 = vld [vmem:[%s11] sm:$0x1]
          %v1163 = vpack.c.bf16 %v1152, %v1152
          %v1165 = vlaneseq
          %v1166 = vshrl.u32 %v1165, 7
          %v1167 = vsub.s32 0, %v1166
          %v1168 = vrot.slane %v1157, %v1167
          %v1174 = vunpack.c.l.b16 %v1153
          %v1175 = vunpack.c.l.b16 %v1154
          %v1176 = vunpack.c.l.b16 %v1155
          %v1177 = vunpack.c.l.b16 %v1156
          %v1178 = vpack.c.b16 %v1175, %v1174
          %v1179 = vpack.c.b16 %v1177, %v1176
          %v1183 = vsel %vm786, %v1163, 0
          %1185 = vmatprep.subr.bf16.mxu0 0
          %1186 = vmatpush1.bf16.msra.mxu0 %v1178
          %1187 = vmatprep.subr.bf16.mxu0 0
          %1188 = vmatpush1.bf16.msra.mxu0 %v1179
          %1189 = vmatprep.subr.bf16.mxu0 0
          %1190 = vmatpush1.bf16.msra.mxu0 0
          %1191 = vmatprep.subr.bf16.mxu0 0
          %1192 = vmatpush1.bf16.msra.mxu0 0
          %1193 = vmatprep.subr.bf16.mxu0 0
          %1194 = vmatpush1.bf16.msra.mxu0 0
          %1195 = vmatprep.subr.bf16.mxu0 0
          %1196 = vmatpush1.bf16.msra.mxu0 0
          %1197 = vmatprep.subr.bf16.mxu0 0
          %1198 = vmatpush1.bf16.msra.mxu0 0
          %1199 = vmatprep.subr.bf16.mxu0 0
          %1200 = vmatpush1.bf16.msra.mxu0 0
          %1201 = vmatprep.subr.bf16.mxu0 0
          %1202 = vmatpush1.bf16.msra.mxu0 0
          %1203 = vmatprep.subr.bf16.mxu0 0
          %1204 = vmatpush1.bf16.msra.mxu0 0
          %1205 = vmatprep.subr.bf16.mxu0 0
          %1206 = vmatpush1.bf16.msra.mxu0 0
          %1207 = vmatprep.subr.bf16.mxu0 0
          %1208 = vmatpush1.bf16.msra.mxu0 0
          %1209 = vmatprep.subr.bf16.mxu0 0
          %1210 = vmatpush1.bf16.msra.mxu0 0
          %1211 = vmatprep.subr.bf16.mxu0 0
          %1212 = vmatpush1.bf16.msra.mxu0 0
          %1213 = vmatprep.subr.bf16.mxu0 0
          %1214 = vmatpush1.bf16.msra.mxu0 0
          %1215 = vmatprep.subr.bf16.mxu0 0
          %1216 = vmatpush1.bf16.msra.mxu0 0
          %1217 = vmatprep.mubr.bf16.mxu0 0
          %1218 = vmatmul.mubr.bf16.gmra.mrb[0].mxu0 %v1183
          %v1219 = vpop.f32.mrb[0].mxu0
          %v1220 = vadd.f32 %v1168, %v1219
          %v1221 = vpop.f32.mrb[0].mxu0
          %v1222 = vpop.f32.mrb[0].mxu0
          %v1223 = vpop.f32.mrb[0].mxu0
          %1224 = vdwg.mxu0
          %1225 = vrot.lane.b32.xlu0 %v1178, 96
          %v1226 = vpop.permute.xlu0 %1225
          %1227 = vrot.lane.b32.xlu0 %v1179, 96
          %v1228 = vpop.permute.xlu0 %1227
          %1231 = vrot.lane.b32.xlu0 %v1168, 96
          %v1232 = vpop.permute.xlu0 %1231
          %v1235 = vsel %vm786, %v757, 0
          %1237 = vmatprep.subr.bf16.mxu0 0
          %1238 = vmatpush1.bf16.msra.mxu0 %v1226
          %1239 = vmatprep.subr.bf16.mxu0 0
          %1240 = vmatpush1.bf16.msra.mxu0 %v1228
          %1241 = vmatprep.subr.bf16.mxu0 0
          %1242 = vmatpush1.bf16.msra.mxu0 0
          %1243 = vmatprep.subr.bf16.mxu0 0
          %1244 = vmatpush1.bf16.msra.mxu0 0
          %1245 = vmatprep.subr.bf16.mxu0 0
          %1246 = vmatpush1.bf16.msra.mxu0 0
          %1247 = vmatprep.subr.bf16.mxu0 0
          %1248 = vmatpush1.bf16.msra.mxu0 0
          %1249 = vmatprep.subr.bf16.mxu0 0
          %1250 = vmatpush1.bf16.msra.mxu0 0
          %1251 = vmatprep.subr.bf16.mxu0 0
          %1252 = vmatpush1.bf16.msra.mxu0 0
          %1253 = vmatprep.subr.bf16.mxu0 0
          %1254 = vmatpush1.bf16.msra.mxu0 0
          %1255 = vmatprep.subr.bf16.mxu0 0
          %1256 = vmatpush1.bf16.msra.mxu0 0
          %1257 = vmatprep.subr.bf16.mxu0 0
          %1258 = vmatpush1.bf16.msra.mxu0 0
          %1259 = vmatprep.subr.bf16.mxu0 0
          %1260 = vmatpush1.bf16.msra.mxu0 0
          %1261 = vmatprep.subr.bf16.mxu0 0
          %1262 = vmatpush1.bf16.msra.mxu0 0
          %1263 = vmatprep.subr.bf16.mxu0 0
          %1264 = vmatpush1.bf16.msra.mxu0 0
          %1265 = vmatprep.subr.bf16.mxu0 0
          %1266 = vmatpush1.bf16.msra.mxu0 0
          %1267 = vmatprep.subr.bf16.mxu0 0
          %1268 = vmatpush1.bf16.msra.mxu0 0
          %1269 = vmatprep.mubr.bf16.mxu0 0
          %1270 = vmatmul.mubr.bf16.gmra.mrb[0].mxu0 %v1235
          %v1271 = vpop.f32.mrb[0].mxu0
          %v1272 = vadd.f32 %v1232, %v1271
          %v1273 = vpop.f32.mrb[0].mxu0
          %v1274 = vpop.f32.mrb[0].mxu0
          %v1275 = vpop.f32.mrb[0].mxu0
          %1276 = vdwg.mxu0
          %v1277 = vpack.c.bf16 %v1220, %v1220
          %v1278 = vpack.c.bf16 %v1272, %v1272
          %v1280 = vsel %vm834, %v1277, 0
          %v1283 = vsel %vm834, %v1278, 0
          %1285 = vmatprep.subr.bf16.mxu0 0
          %1286 = vmatpush1.bf16.xpose.msra.mxu0 %v1283
          %1287 = vmatprep.subr.bf16.mxu0 0
          %1288 = vmatpush1.bf16.xpose.msra.mxu0 0
          %1289 = vmatprep.subr.bf16.mxu0 0
          %1290 = vmatpush1.bf16.xpose.msra.mxu0 0
          %1291 = vmatprep.subr.bf16.mxu0 0
          %1292 = vmatpush1.bf16.xpose.msra.mxu0 0
          %1293 = vmatprep.subr.bf16.mxu0 0
          %1294 = vmatpush1.bf16.xpose.msra.mxu0 0
          %1295 = vmatprep.subr.bf16.mxu0 0
          %1296 = vmatpush1.bf16.xpose.msra.mxu0 0
          %1297 = vmatprep.subr.bf16.mxu0 0
          %1298 = vmatpush1.bf16.xpose.msra.mxu0 0
          %1299 = vmatprep.subr.bf16.mxu0 0
          %1300 = vmatpush1.bf16.xpose.msra.mxu0 0
          %1301 = vmatprep.subr.bf16.mxu0 0
          %1302 = vmatpush1.bf16.xpose.msra.mxu0 0
          %1303 = vmatprep.subr.bf16.mxu0 0
          %1304 = vmatpush1.bf16.xpose.msra.mxu0 0
          %1305 = vmatprep.subr.bf16.mxu0 0
          %1306 = vmatpush1.bf16.xpose.msra.mxu0 0
          %1307 = vmatprep.subr.bf16.mxu0 0
          %1308 = vmatpush1.bf16.xpose.msra.mxu0 0
          %1309 = vmatprep.subr.bf16.mxu0 0
          %1310 = vmatpush1.bf16.xpose.msra.mxu0 0
          %1311 = vmatprep.subr.bf16.mxu0 0
          %1312 = vmatpush1.bf16.xpose.msra.mxu0 0
          %1313 = vmatprep.subr.bf16.mxu0 0
          %1314 = vmatpush1.bf16.xpose.msra.mxu0 0
          %1315 = vmatprep.subr.bf16.mxu0 0
          %1316 = vmatpush1.bf16.xpose.msra.mxu0 0
          %1317 = vmatprep.mubr.bf16.mxu0 0
          %1318 = vmatmul.mubr.bf16.gmra.mrb[0].mxu0 %v1280
          %v1319 = vpop.f32.mrb[0].mxu0
          %v1320 = vadd.f32 0.0, %v1319
          %v1321 = vpop.f32.mrb[0].mxu0
          %v1322 = vpop.f32.mrb[0].mxu0
          %v1323 = vpop.f32.mrb[0].mxu0
          %1324 = vdwg.mxu0
          %v1325 = vmul.f32 %v1320, 0.25
          %v1326 = vsel %vm882, %v1325, -inf
          %1327 = vmax.xlane.f32.xlu0 %v1326
          %v1328 = vpop.xlane.xlu0 %1327
          %v1329 = vsub.f32 %v1325, %v1328
          %v1330 = vmul.f32 %v1329, 1.442695
          %v1331 = vpow.pop %v1330
          %v1332 = vsel %vm882, %v1331, 0.0
          %1333 = vadd.xlane.f32.xlu0 %v1332
          %v1334 = vpop.xlane.xlu0 %1333
          %v1335 = vrcp.pop %v1334
          %v1336 = vmul.f32 %v1331, %v1335
          %v1337 = vpack.c.bf16 %v1336, %v1336
          %1339 = vrot.lane.b32.xlu0 %v1278, 96
          %v1340 = vpop.permute.xlu0 %1339
          %v1342 = vsel %vm882, %v1337, 0
          %v1345 = vsel %vm900, %v1340, 0
          %1347 = vmatprep.subr.bf16.mxu0 0
          %1348 = vmatpush1.bf16.msra.mxu0 %v1345
          %1349 = vmatprep.subr.bf16.mxu0 0
          %1350 = vmatpush1.bf16.msra.mxu0 0
          %1351 = vmatprep.subr.bf16.mxu0 0
          %1352 = vmatpush1.bf16.msra.mxu0 0
          %1353 = vmatprep.subr.bf16.mxu0 0
          %1354 = vmatpush1.bf16.msra.mxu0 0
          %1355 = vmatprep.subr.bf16.mxu0 0
          %1356 = vmatpush1.bf16.msra.mxu0 0
          %1357 = vmatprep.subr.bf16.mxu0 0
          %1358 = vmatpush1.bf16.msra.mxu0 0
          %1359 = vmatprep.subr.bf16.mxu0 0
          %1360 = vmatpush1.bf16.msra.mxu0 0
          %1361 = vmatprep.subr.bf16.mxu0 0
          %1362 = vmatpush1.bf16.msra.mxu0 0
          %1363 = vmatprep.subr.bf16.mxu0 0
          %1364 = vmatpush1.bf16.msra.mxu0 0
          %1365 = vmatprep.subr.bf16.mxu0 0
          %1366 = vmatpush1.bf16.msra.mxu0 0
          %1367 = vmatprep.subr.bf16.mxu0 0
          %1368 = vmatpush1.bf16.msra.mxu0 0
          %1369 = vmatprep.subr.bf16.mxu0 0
          %1370 = vmatpush1.bf16.msra.mxu0 0
          %1371 = vmatprep.subr.bf16.mxu0 0
          %1372 = vmatpush1.bf16.msra.mxu0 0
          %1373 = vmatprep.subr.bf16.mxu0 0
          %1374 = vmatpush1.bf16.msra.mxu0 0
          %1375 = vmatprep.subr.bf16.mxu0 0
          %1376 = vmatpush1.bf16.msra.mxu0 0
          %1377 = vmatprep.subr.bf16.mxu0 0
          %1378 = vmatpush1.bf16.msra.mxu0 0
          %1379 = vmatprep.mubr.bf16.mxu0 0
          %1380 = vmatmul.mubr.bf16.gmra.mrb[0].mxu0 %v1342
          %v1381 = vpop.f32.mrb[0].mxu0
          %v1382 = vadd.f32 0.0, %v1381
          %v1383 = vpop.f32.mrb[0].mxu0
          %v1384 = vpop.f32.mrb[0].mxu0
          %v1385 = vpop.f32.mrb[0].mxu0
          %1386 = vdwg.mxu0
          %1388 = vrot.lane.b32.xlu0 %v1277, 112
          %v1389 = vpop.permute.xlu0 %1388
          %1390 = vrot.lane.b32.xlu0 %v1278, 112
          %v1391 = vpop.permute.xlu0 %1390
          %v1393 = vsel %vm834, %v1389, 0
          %v1396 = vsel %vm834, %v1391, 0
          %1398 = vmatprep.subr.bf16.mxu0 0
          %1399 = vmatpush1.bf16.xpose.msra.mxu0 %v1396
          %1400 = vmatprep.subr.bf16.mxu0 0
          %1401 = vmatpush1.bf16.xpose.msra.mxu0 0
          %1402 = vmatprep.subr.bf16.mxu0 0
          %1403 = vmatpush1.bf16.xpose.msra.mxu0 0
          %1404 = vmatprep.subr.bf16.mxu0 0
          %1405 = vmatpush1.bf16.xpose.msra.mxu0 0
          %1406 = vmatprep.subr.bf16.mxu0 0
          %1407 = vmatpush1.bf16.xpose.msra.mxu0 0
          %1408 = vmatprep.subr.bf16.mxu0 0
          %1409 = vmatpush1.bf16.xpose.msra.mxu0 0
          %1410 = vmatprep.subr.bf16.mxu0 0
          %1411 = vmatpush1.bf16.xpose.msra.mxu0 0
          %1412 = vmatprep.subr.bf16.mxu0 0
          %1413 = vmatpush1.bf16.xpose.msra.mxu0 0
          %1414 = vmatprep.subr.bf16.mxu0 0
          %1415 = vmatpush1.bf16.xpose.msra.mxu0 0
          %1416 = vmatprep.subr.bf16.mxu0 0
          %1417 = vmatpush1.bf16.xpose.msra.mxu0 0
          %1418 = vmatprep.subr.bf16.mxu0 0
          %1419 = vmatpush1.bf16.xpose.msra.mxu0 0
          %1420 = vmatprep.subr.bf16.mxu0 0
          %1421 = vmatpush1.bf16.xpose.msra.mxu0 0
          %1422 = vmatprep.subr.bf16.mxu0 0
          %1423 = vmatpush1.bf16.xpose.msra.mxu0 0
          %1424 = vmatprep.subr.bf16.mxu0 0
          %1425 = vmatpush1.bf16.xpose.msra.mxu0 0
          %1426 = vmatprep.subr.bf16.mxu0 0
          %1427 = vmatpush1.bf16.xpose.msra.mxu0 0
          %1428 = vmatprep.subr.bf16.mxu0 0
          %1429 = vmatpush1.bf16.xpose.msra.mxu0 0
          %1430 = vmatprep.mubr.bf16.mxu0 0
          %1431 = vmatmul.mubr.bf16.gmra.mrb[0].mxu0 %v1393
          %v1432 = vpop.f32.mrb[0].mxu0
          %v1433 = vadd.f32 0.0, %v1432
          %v1434 = vpop.f32.mrb[0].mxu0
          %v1435 = vpop.f32.mrb[0].mxu0
          %v1436 = vpop.f32.mrb[0].mxu0
          %1437 = vdwg.mxu0
          %v1438 = vmul.f32 %v1433, 0.25
          %v1439 = vsel %vm882, %v1438, -inf
          %1440 = vmax.xlane.f32.xlu0 %v1439
          %v1441 = vpop.xlane.xlu0 %1440
          %v1442 = vsub.f32 %v1438, %v1441
          %v1443 = vmul.f32 %v1442, 1.442695
          %v1444 = vpow.pop %v1443
          %v1445 = vsel %vm882, %v1444, 0.0
          %1446 = vadd.xlane.f32.xlu0 %v1445
          %v1447 = vpop.xlane.xlu0 %1446
          %v1448 = vrcp.pop %v1447
          %v1449 = vmul.f32 %v1444, %v1448
          %v1450 = vpack.c.bf16 %v1449, %v1449
          %1451 = vrot.lane.b32.xlu0 %v1278, 80
          %v1452 = vpop.permute.xlu0 %1451
          %v1454 = vsel %vm882, %v1450, 0
          %v1457 = vsel %vm900, %v1452, 0
          %1459 = vmatprep.subr.bf16.mxu0 0
          %1460 = vmatpush1.bf16.msra.mxu0 %v1457
          %1461 = vmatprep.subr.bf16.mxu0 0
          %1462 = vmatpush1.bf16.msra.mxu0 0
          %1463 = vmatprep.subr.bf16.mxu0 0
          %1464 = vmatpush1.bf16.msra.mxu0 0
          %1465 = vmatprep.subr.bf16.mxu0 0
          %1466 = vmatpush1.bf16.msra.mxu0 0
          %1467 = vmatprep.subr.bf16.mxu0 0
          %1468 = vmatpush1.bf16.msra.mxu0 0
          %1469 = vmatprep.subr.bf16.mxu0 0
          %1470 = vmatpush1.bf16.msra.mxu0 0
          %1471 = vmatprep.subr.bf16.mxu0 0
          %1472 = vmatpush1.bf16.msra.mxu0 0
          %1473 = vmatprep.subr.bf16.mxu0 0
          %1474 = vmatpush1.bf16.msra.mxu0 0
          %1475 = vmatprep.subr.bf16.mxu0 0
          %1476 = vmatpush1.bf16.msra.mxu0 0
          %1477 = vmatprep.subr.bf16.mxu0 0
          %1478 = vmatpush1.bf16.msra.mxu0 0
          %1479 = vmatprep.subr.bf16.mxu0 0
          %1480 = vmatpush1.bf16.msra.mxu0 0
          %1481 = vmatprep.subr.bf16.mxu0 0
          %1482 = vmatpush1.bf16.msra.mxu0 0
          %1483 = vmatprep.subr.bf16.mxu0 0
          %1484 = vmatpush1.bf16.msra.mxu0 0
          %1485 = vmatprep.subr.bf16.mxu0 0
          %1486 = vmatpush1.bf16.msra.mxu0 0
          %1487 = vmatprep.subr.bf16.mxu0 0
          %1488 = vmatpush1.bf16.msra.mxu0 0
          %1489 = vmatprep.subr.bf16.mxu0 0
          %1490 = vmatpush1.bf16.msra.mxu0 0
          %1491 = vmatprep.mubr.bf16.mxu0 0
          %1492 = vmatmul.mubr.bf16.gmra.mrb[0].mxu0 %v1454
          %v1493 = vpop.f32.mrb[0].mxu0
          %v1494 = vadd.f32 0.0, %v1493
          %v1495 = vpop.f32.mrb[0].mxu0
          %v1496 = vpop.f32.mrb[0].mxu0
          %v1497 = vpop.f32.mrb[0].mxu0
          %1498 = vdwg.mxu0
          %1500 = vrot.lane.b32.xlu0 %v1494, 16
          %v1501 = vpop.permute.xlu0 %1500
          %v1503 = vsel %vm834, %v1382, %v1501
          %v1504 = vpack.c.bf16 %v1503, %v1503
          %v1506 = vlaneseq
          %v1507 = vshrl.u32 %v1506, 7
          %v1508 = vsub.s32 0, %v1507
          %v1509 = vrot.slane %v1162, %v1508
          %v1515 = vunpack.c.l.b16 %v1158
          %v1516 = vunpack.c.l.b16 %v1159
          %v1517 = vunpack.c.l.b16 %v1160
          %v1518 = vunpack.c.l.b16 %v1161
          %v1519 = vpack.c.b16 %v1516, %v1515
          %v1520 = vpack.c.b16 %v1518, %v1517
          %v1524 = vsel %vm786, %v1504, 0
          %1526 = vmatprep.subr.bf16.mxu0 0
          %1527 = vmatpush1.bf16.msra.mxu0 %v1519
          %1528 = vmatprep.subr.bf16.mxu0 0
          %1529 = vmatpush1.bf16.msra.mxu0 %v1520
          %1530 = vmatprep.subr.bf16.mxu0 0
          %1531 = vmatpush1.bf16.msra.mxu0 0
          %1532 = vmatprep.subr.bf16.mxu0 0
          %1533 = vmatpush1.bf16.msra.mxu0 0
          %1534 = vmatprep.subr.bf16.mxu0 0
          %1535 = vmatpush1.bf16.msra.mxu0 0
          %1536 = vmatprep.subr.bf16.mxu0 0
          %1537 = vmatpush1.bf16.msra.mxu0 0
          %1538 = vmatprep.subr.bf16.mxu0 0
          %1539 = vmatpush1.bf16.msra.mxu0 0
          %1540 = vmatprep.subr.bf16.mxu0 0
          %1541 = vmatpush1.bf16.msra.mxu0 0
          %1542 = vmatprep.subr.bf16.mxu0 0
          %1543 = vmatpush1.bf16.msra.mxu0 0
          %1544 = vmatprep.subr.bf16.mxu0 0
          %1545 = vmatpush1.bf16.msra.mxu0 0
          %1546 = vmatprep.subr.bf16.mxu0 0
          %1547 = vmatpush1.bf16.msra.mxu0 0
          %1548 = vmatprep.subr.bf16.mxu0 0
          %1549 = vmatpush1.bf16.msra.mxu0 0
          %1550 = vmatprep.subr.bf16.mxu0 0
          %1551 = vmatpush1.bf16.msra.mxu0 0
          %1552 = vmatprep.subr.bf16.mxu0 0
          %1553 = vmatpush1.bf16.msra.mxu0 0
          %1554 = vmatprep.subr.bf16.mxu0 0
          %1555 = vmatpush1.bf16.msra.mxu0 0
          %1556 = vmatprep.subr.bf16.mxu0 0
          %1557 = vmatpush1.bf16.msra.mxu0 0
          %1558 = vmatprep.mubr.bf16.mxu0 0
          %1559 = vmatmul.mubr.bf16.gmra.mrb[0].mxu0 %v1524
          %v1560 = vpop.f32.mrb[0].mxu0
          %v1561 = vadd.f32 %v1509, %v1560
          %v1562 = vpop.f32.mrb[0].mxu0
          %v1563 = vpop.f32.mrb[0].mxu0
          %v1564 = vpop.f32.mrb[0].mxu0
          %1565 = vdwg.mxu0
          %v1566 = vadd.f32 %v1152, %v1561
          %v1567 = vld [vmem:[%s12] sm:$0x1]
          %v1568 = vld [vmem:[%s13] sm:$0x1]
          %v1569 = vsel %vm786, %v1566, 0.0
          %1570 = vadd.xlane.f32.xlu0 %v1569
          %v1571 = vpop.xlane.xlu0 %1570
          %v1572 = vmul.f32 %v1571, %v1128
          %v1573 = vsub.f32 %v1566, %v1572
          %v1574 = vmul.f32 %v1573, %v1573
          %v1575 = vsel %vm786, %v1574, 0.0
          %1576 = vadd.xlane.f32.xlu0 %v1575
          %v1577 = vpop.xlane.xlu0 %1576
          %v1578 = vmul.f32 %v1577, %v1128
          %v1579 = vadd.f32 %v1578, 1e-05
          %v1580 = vrsqrt.pop %v1579
          %v1581 = vmul.f32 %v1573, %v1580
          %v1583 = vlaneseq
          %v1584 = vshrl.u32 %v1583, 7
          %v1585 = vsub.s32 0, %v1584
          %v1586 = vrot.slane %v1567, %v1585
          %v1588 = vmul.f32 %v1581, %v1586
          %v1590 = vlaneseq
          %v1591 = vshrl.u32 %v1590, 7
          %v1592 = vsub.s32 0, %v1591
          %v1593 = vrot.slane %v1568, %v1592
          %v1595 = vadd.f32 %v1588, %v1593
          %1596 = vst.msk [vmem:[#allocation2] sm:$0xff] %vm786, %v1595
          %1597 = vst.msk [vmem:[#allocation3] sm:$0xff] %vm786, 0.0
        $region127: #{transformer_forward.7} parent=118 // pred_fallthru
          _
        %v1598 = vld [vmem:[#allocation2] sm:$0xff]
        %v1599 = vld [vmem:[%s655] sm:$0xff]
        %v1600 = vld [vmem:[%s655 + $0x8] sm:$0xff]
        %v1601 = vld [vmem:[%s655 + $0x10] sm:$0xff]
        %v1602 = vld [vmem:[%s655 + $0x18] sm:$0xff]
        %v1603 = vld [vmem:[%s655 + $0x20] sm:$0xff]
        %v1604 = vld [vmem:[%s655 + $0x28] sm:$0xff]
        %v1605 = vld [vmem:[%s655 + $0x30] sm:$0xff]
        %v1606 = vld [vmem:[%s655 + $0x38] sm:$0xff]
        %v1607 = vpack.c.bf16 %v1598, %v1598
        %v1608 = vld [vmem:[%s738] sm:$0xf]
        %v1610 = vlaneseq
        %v1611 = vshrl.u32 %v1610, 7
        %v1612 = vsub.s32 0, %v1611
        %v1613 = vrot.slane %v1608, %v1612
        %v1614 = vlaneseq
        %v1615 = vshrl.u32 %v1614, 7
        %v1616 = vsub.s32 1, %v1615
        %v1617 = vrot.slane %v1608, %v1616
        %v1618 = vlaneseq
        %v1619 = vshrl.u32 %v1618, 7
        %v1620 = vsub.s32 2, %v1619
        %v1621 = vrot.slane %v1608, %v1620
        %v1622 = vlaneseq
        %v1623 = vshrl.u32 %v1622, 7
        %v1624 = vsub.s32 3, %v1623
        %v1625 = vrot.slane %v1608, %v1624
        %v1638 = vunpack.c.l.b16 %v1599
        %v1639 = vunpack.c.h.b16 %v1599
        %v1640 = vunpack.c.l.b16 %v1600
        %v1641 = vunpack.c.h.b16 %v1600
        %v1642 = vunpack.c.l.b16 %v1601
        %v1643 = vunpack.c.h.b16 %v1601
        %v1644 = vunpack.c.l.b16 %v1602
        %v1645 = vunpack.c.h.b16 %v1602
        %v1646 = vunpack.c.l.b16 %v1603
        %v1647 = vunpack.c.h.b16 %v1603
        %v1648 = vunpack.c.l.b16 %v1604
        %v1649 = vunpack.c.h.b16 %v1604
        %v1650 = vunpack.c.l.b16 %v1605
        %v1651 = vunpack.c.h.b16 %v1605
        %v1652 = vunpack.c.l.b16 %v1606
        %v1653 = vunpack.c.h.b16 %v1606
        %v1654 = vpack.c.b16 %v1642, %v1638
        %v1655 = vpack.c.b16 %v1643, %v1639
        %v1656 = vpack.c.b16 %v1644, %v1640
        %v1657 = vpack.c.b16 %v1645, %v1641
        %v1658 = vpack.c.b16 %v1650, %v1646
        %v1659 = vpack.c.b16 %v1651, %v1647
        %v1660 = vpack.c.b16 %v1652, %v1648
        %v1661 = vpack.c.b16 %v1653, %v1649
        %vm1670 = vcmask 261120
        %v1672 = vsel %vm1670, %v1607, 0
        %1674 = vmatprep.subr.bf16.mxu0 %v1655
        %1675 = vmatpush1.bf16.msra.mxu0 %v1654
        %1676 = vmatprep.subr.bf16.mxu0 %v1659
        %1677 = vmatpush1.bf16.msra.mxu0 %v1658
        %1678 = vmatprep.subr.bf16.mxu0 0
        %1679 = vmatpush1.bf16.msra.mxu0 0
        %1680 = vmatprep.subr.bf16.mxu0 0
        %1681 = vmatpush1.bf16.msra.mxu0 0
        %1682 = vmatprep.subr.bf16.mxu0 0
        %1683 = vmatpush1.bf16.msra.mxu0 0
        %1684 = vmatprep.subr.bf16.mxu0 0
        %1685 = vmatpush1.bf16.msra.mxu0 0
        %1686 = vmatprep.subr.bf16.mxu0 0
        %1687 = vmatpush1.bf16.msra.mxu0 0
        %1688 = vmatprep.subr.bf16.mxu0 0
        %1689 = vmatpush1.bf16.msra.mxu0 0
        %1690 = vmatprep.subr.bf16.mxu0 0
        %1691 = vmatpush1.bf16.msra.mxu0 0
        %1692 = vmatprep.subr.bf16.mxu0 0
        %1693 = vmatpush1.bf16.msra.mxu0 0
        %1694 = vmatprep.subr.bf16.mxu0 0
        %1695 = vmatpush1.bf16.msra.mxu0 0
        %1696 = vmatprep.subr.bf16.mxu0 0
        %1697 = vmatpush1.bf16.msra.mxu0 0
        %1698 = vmatprep.subr.bf16.mxu0 0
        %1699 = vmatpush1.bf16.msra.mxu0 0
        %1700 = vmatprep.subr.bf16.mxu0 0
        %1701 = vmatpush1.bf16.msra.mxu0 0
        %1702 = vmatprep.subr.bf16.mxu0 0
        %1703 = vmatpush1.bf16.msra.mxu0 0
        %1704 = vmatprep.subr.bf16.mxu0 0
        %1705 = vmatpush1.bf16.msra.mxu0 0
        %1706 = vmatprep.mubr.bf16.mxu0 0
        %1707 = vmatmul.mubr.bf16.gmra.mrb[0].mxu0 %v1672
        %v1708 = vpop.f32.mrb[0].mxu0
        %v1709 = vadd.f32 %v1613, %v1708
        %v1710 = vpop.f32.mrb[0].mxu0
        %v1711 = vadd.f32 %v1617, %v1710
        %v1712 = vpop.f32.mrb[0].mxu0
        %v1713 = vpop.f32.mrb[0].mxu0
        %1714 = vdwg.mxu0
        %1715 = vmatprep.subr.bf16.mxu0 %v1657
        %1716 = vmatpush1.bf16.msra.mxu0 %v1656
        %1717 = vmatprep.subr.bf16.mxu0 %v1661
        %1718 = vmatpush1.bf16.msra.mxu0 %v1660
        %1719 = vmatprep.subr.bf16.mxu0 0
        %1720 = vmatpush1.bf16.msra.mxu0 0
        %1721 = vmatprep.subr.bf16.mxu0 0
        %1722 = vmatpush1.bf16.msra.mxu0 0
        %1723 = vmatprep.subr.bf16.mxu0 0
        %1724 = vmatpush1.bf16.msra.mxu0 0
        %1725 = vmatprep.subr.bf16.mxu0 0
        %1726 = vmatpush1.bf16.msra.mxu0 0
        %1727 = vmatprep.subr.bf16.mxu0 0
        %1728 = vmatpush1.bf16.msra.mxu0 0
        %1729 = vmatprep.subr.bf16.mxu0 0
        %1730 = vmatpush1.bf16.msra.mxu0 0
        %1731 = vmatprep.subr.bf16.mxu0 0
        %1732 = vmatpush1.bf16.msra.mxu0 0
        %1733 = vmatprep.subr.bf16.mxu0 0
        %1734 = vmatpush1.bf16.msra.mxu0 0
        %1735 = vmatprep.subr.bf16.mxu0 0
        %1736 = vmatpush1.bf16.msra.mxu0 0
        %1737 = vmatprep.subr.bf16.mxu0 0
        %1738 = vmatpush1.bf16.msra.mxu0 0
        %1739 = vmatprep.subr.bf16.mxu0 0
        %1740 = vmatpush1.bf16.msra.mxu0 0
        %1741 = vmatprep.subr.bf16.mxu0 0
        %1742 = vmatpush1.bf16.msra.mxu0 0
        %1743 = vmatprep.subr.bf16.mxu0 0
        %1744 = vmatpush1.bf16.msra.mxu0 0
        %1745 = vmatprep.subr.bf16.mxu0 0
        %1746 = vmatpush1.bf16.msra.mxu0 0
        %1747 = vmatprep.mubr.bf16.mxu0 0
        %1748 = vmatmul.mubr.bf16.gmra.mrb[0].mxu0 %v1672
        %v1749 = vpop.f32.mrb[0].mxu0
        %v1750 = vadd.f32 %v1621, %v1749
        %v1751 = vpop.f32.mrb[0].mxu0
        %v1752 = vadd.f32 %v1625, %v1751
        %v1753 = vpop.f32.mrb[0].mxu0
        %v1754 = vpop.f32.mrb[0].mxu0
        %1755 = vdwg.mxu0
        %v1756 = vmax.f32 %v1709, 0.0
        %v1757 = vmax.f32 %v1711, 0.0
        %v1758 = vmax.f32 %v1750, 0.0
        %v1759 = vmax.f32 %v1752, 0.0
        %v1760 = vld [vmem:[#allocation3] sm:$0xff]
        %v1761 = vld [vmem:[%s744] sm:$0xf]
        %v1762 = vld [vmem:[%s744 + $0x4] sm:$0xf]
        %v1763 = vld [vmem:[%s744 + $0x8] sm:$0xf]
        %v1764 = vld [vmem:[%s744 + $0xc] sm:$0xf]
        %v1765 = vld [vmem:[%s744 + $0x10] sm:$0xf]
        %v1766 = vld [vmem:[%s744 + $0x14] sm:$0xf]
        %v1767 = vld [vmem:[%s744 + $0x18] sm:$0xf]
        %v1768 = vld [vmem:[%s744 + $0x1c] sm:$0xf]
        %v1769 = vld [vmem:[%s744 + $0x20] sm:$0xf]
        %v1770 = vld [vmem:[%s744 + $0x24] sm:$0xf]
        %v1771 = vld [vmem:[%s744 + $0x28] sm:$0xf]
        %v1772 = vld [vmem:[%s744 + $0x2c] sm:$0xf]
        %v1773 = vld [vmem:[%s744 + $0x30] sm:$0xf]
        %v1774 = vld [vmem:[%s744 + $0x34] sm:$0xf]
        %v1775 = vld [vmem:[%s744 + $0x38] sm:$0xf]
        %v1776 = vld [vmem:[%s744 + $0x3c] sm:$0xf]
        %v1777 = vld [vmem:[%s744 + $0x40] sm:$0xf]
        %v1778 = vld [vmem:[%s744 + $0x44] sm:$0xf]
        %v1779 = vld [vmem:[%s744 + $0x48] sm:$0xf]
        %v1780 = vld [vmem:[%s744 + $0x4c] sm:$0xf]
        %v1781 = vld [vmem:[%s744 + $0x50] sm:$0xf]
        %v1782 = vld [vmem:[%s744 + $0x54] sm:$0xf]
        %v1783 = vld [vmem:[%s744 + $0x58] sm:$0xf]
        %v1784 = vld [vmem:[%s744 + $0x5c] sm:$0xf]
        %v1785 = vld [vmem:[%s744 + $0x60] sm:$0xf]
        %v1786 = vld [vmem:[%s744 + $0x64] sm:$0xf]
        %v1787 = vld [vmem:[%s744 + $0x68] sm:$0xf]
        %v1788 = vld [vmem:[%s744 + $0x6c] sm:$0xf]
        %v1789 = vld [vmem:[%s744 + $0x70] sm:$0xf]
        %v1790 = vld [vmem:[%s744 + $0x74] sm:$0xf]
        %v1791 = vld [vmem:[%s744 + $0x78] sm:$0xf]
        %v1792 = vld [vmem:[%s744 + $0x7c] sm:$0xf]
        %v1793 = vld [vmem:[%s744 + $0x80] sm:$0xf]
        %v1794 = vld [vmem:[%s744 + $0x84] sm:$0xf]
        %v1795 = vld [vmem:[%s744 + $0x88] sm:$0xf]
        %v1796 = vld [vmem:[%s744 + $0x8c] sm:$0xf]
        %v1797 = vld [vmem:[%s744 + $0x90] sm:$0xf]
        %v1798 = vld [vmem:[%s744 + $0x94] sm:$0xf]
        %v1799 = vld [vmem:[%s744 + $0x98] sm:$0xf]
        %v1800 = vld [vmem:[%s744 + $0x9c] sm:$0xf]
        %v1801 = vld [vmem:[%s744 + $0xa0] sm:$0xf]
        %v1802 = vld [vmem:[%s744 + $0xa4] sm:$0xf]
        %v1803 = vld [vmem:[%s744 + $0xa8] sm:$0xf]
        %v1804 = vld [vmem:[%s744 + $0xac] sm:$0xf]
        %v1805 = vld [vmem:[%s744 + $0xb0] sm:$0xf]
        %v1806 = vld [vmem:[%s744 + $0xb4] sm:$0xf]
        %v1807 = vld [vmem:[%s744 + $0xb8] sm:$0xf]
        %v1808 = vld [vmem:[%s744 + $0xbc] sm:$0xf]
        %v1809 = vld [vmem:[%s744 + $0xc0] sm:$0xf]
        %v1810 = vld [vmem:[%s744 + $0xc4] sm:$0xf]
        %v1811 = vld [vmem:[%s744 + $0xc8] sm:$0xf]
        %v1812 = vld [vmem:[%s744 + $0xcc] sm:$0xf]
        %v1813 = vld [vmem:[%s744 + $0xd0] sm:$0xf]
        %v1814 = vld [vmem:[%s744 + $0xd4] sm:$0xf]
        %v1815 = vld [vmem:[%s744 + $0xd8] sm:$0xf]
        %v1816 = vld [vmem:[%s744 + $0xdc] sm:$0xf]
        %v1817 = vld [vmem:[%s744 + $0xe0] sm:$0xf]
        %v1818 = vld [vmem:[%s744 + $0xe4] sm:$0xf]
        %v1819 = vld [vmem:[%s744 + $0xe8] sm:$0xf]
        %v1820 = vld [vmem:[%s744 + $0xec] sm:$0xf]
        %v1821 = vld [vmem:[%s744 + $0xf0] sm:$0xf]
        %v1822 = vld [vmem:[%s744 + $0xf4] sm:$0xf]
        %v1823 = vld [vmem:[%s744 + $0xf8] sm:$0xf]
        %v1824 = vld [vmem:[%s744 + $0xfc] sm:$0xf]
        %v1825 = vpack.c.bf16 %v1756, %v1756
        %v1826 = vpack.c.bf16 %v1757, %v1757
        %v1827 = vpack.c.bf16 %v1758, %v1758
        %v1828 = vpack.c.bf16 %v1759, %v1759
        %v1893 = vunpack.c.l.b16 %v1761
        %v1894 = vunpack.c.l.b16 %v1762
        %v1895 = vunpack.c.l.b16 %v1763
        %v1896 = vunpack.c.l.b16 %v1764
        %v1897 = vunpack.c.l.b16 %v1765
        %v1898 = vunpack.c.l.b16 %v1766
        %v1899 = vunpack.c.l.b16 %v1767
        %v1900 = vunpack.c.l.b16 %v1768
        %v1901 = vunpack.c.l.b16 %v1769
        %v1902 = vunpack.c.l.b16 %v1770
        %v1903 = vunpack.c.l.b16 %v1771
        %v1904 = vunpack.c.l.b16 %v1772
        %v1905 = vunpack.c.l.b16 %v1773
        %v1906 = vunpack.c.l.b16 %v1774
        %v1907 = vunpack.c.l.b16 %v1775
        %v1908 = vunpack.c.l.b16 %v1776
        %v1909 = vunpack.c.l.b16 %v1777
        %v1910 = vunpack.c.l.b16 %v1778
        %v1911 = vunpack.c.l.b16 %v1779
        %v1912 = vunpack.c.l.b16 %v1780
        %v1913 = vunpack.c.l.b16 %v1781
        %v1914 = vunpack.c.l.b16 %v1782
        %v1915 = vunpack.c.l.b16 %v1783
        %v1916 = vunpack.c.l.b16 %v1784
        %v1917 = vunpack.c.l.b16 %v1785
        %v1918 = vunpack.c.l.b16 %v1786
        %v1919 = vunpack.c.l.b16 %v1787
        %v1920 = vunpack.c.l.b16 %v1788
        %v1921 = vunpack.c.l.b16 %v1789
        %v1922 = vunpack.c.l.b16 %v1790
        %v1923 = vunpack.c.l.b16 %v1791
        %v1924 = vunpack.c.l.b16 %v1792
        %v1925 = vunpack.c.l.b16 %v1793
        %v1926 = vunpack.c.l.b16 %v1794
        %v1927 = vunpack.c.l.b16 %v1795
        %v1928 = vunpack.c.l.b16 %v1796
        %v1929 = vunpack.c.l.b16 %v1797
        %v1930 = vunpack.c.l.b16 %v1798
        %v1931 = vunpack.c.l.b16 %v1799
        %v1932 = vunpack.c.l.b16 %v1800
        %v1933 = vunpack.c.l.b16 %v1801
        %v1934 = vunpack.c.l.b16 %v1802
        %v1935 = vunpack.c.l.b16 %v1803
        %v1936 = vunpack.c.l.b16 %v1804
        %v1937 = vunpack.c.l.b16 %v1805
        %v1938 = vunpack.c.l.b16 %v1806
        %v1939 = vunpack.c.l.b16 %v1807
        %v1940 = vunpack.c.l.b16 %v1808
        %v1941 = vunpack.c.l.b16 %v1809
        %v1942 = vunpack.c.l.b16 %v1810
        %v1943 = vunpack.c.l.b16 %v1811
        %v1944 = vunpack.c.l.b16 %v1812
        %v1945 = vunpack.c.l.b16 %v1813
        %v1946 = vunpack.c.l.b16 %v1814
        %v1947 = vunpack.c.l.b16 %v1815
        %v1948 = vunpack.c.l.b16 %v1816
        %v1949 = vunpack.c.l.b16 %v1817
        %v1950 = vunpack.c.l.b16 %v1818
        %v1951 = vunpack.c.l.b16 %v1819
        %v1952 = vunpack.c.l.b16 %v1820
        %v1953 = vunpack.c.l.b16 %v1821
        %v1954 = vunpack.c.l.b16 %v1822
        %v1955 = vunpack.c.l.b16 %v1823
        %v1956 = vunpack.c.l.b16 %v1824
        %v1957 = vpack.c.b16 %v1894, %v1893
        %v1958 = vpack.c.b16 %v1896, %v1895
        %v1959 = vpack.c.b16 %v1898, %v1897
        %v1960 = vpack.c.b16 %v1900, %v1899
        %v1961 = vpack.c.b16 %v1902, %v1901
        %v1962 = vpack.c.b16 %v1904, %v1903
        %v1963 = vpack.c.b16 %v1906, %v1905
        %v1964 = vpack.c.b16 %v1908, %v1907
        %v1965 = vpack.c.b16 %v1910, %v1909
        %v1966 = vpack.c.b16 %v1912, %v1911
        %v1967 = vpack.c.b16 %v1914, %v1913
        %v1968 = vpack.c.b16 %v1916, %v1915
        %v1969 = vpack.c.b16 %v1918, %v1917
        %v1970 = vpack.c.b16 %v1920, %v1919
        %v1971 = vpack.c.b16 %v1922, %v1921
        %v1972 = vpack.c.b16 %v1924, %v1923
        %v1973 = vpack.c.b16 %v1926, %v1925
        %v1974 = vpack.c.b16 %v1928, %v1927
        %v1975 = vpack.c.b16 %v1930, %v1929
        %v1976 = vpack.c.b16 %v1932, %v1931
        %v1977 = vpack.c.b16 %v1934, %v1933
        %v1978 = vpack.c.b16 %v1936, %v1935
        %v1979 = vpack.c.b16 %v1938, %v1937
        %v1980 = vpack.c.b16 %v1940, %v1939
        %v1981 = vpack.c.b16 %v1942, %v1941
        %v1982 = vpack.c.b16 %v1944, %v1943
        %v1983 = vpack.c.b16 %v1946, %v1945
        %v1984 = vpack.c.b16 %v1948, %v1947
        %v1985 = vpack.c.b16 %v1950, %v1949
        %v1986 = vpack.c.b16 %v1952, %v1951
        %v1987 = vpack.c.b16 %v1954, %v1953
        %v1988 = vpack.c.b16 %v1956, %v1955
        %2021 = vmatprep.subr.bf16.mxu0 0
        %2022 = vmatpush1.bf16.msra.mxu0 %v1957
        %2023 = vmatprep.subr.bf16.mxu0 0
        %2024 = vmatpush1.bf16.msra.mxu0 %v1958
        %2025 = vmatprep.subr.bf16.mxu0 0
        %2026 = vmatpush1.bf16.msra.mxu0 %v1959
        %2027 = vmatprep.subr.bf16.mxu0 0
        %2028 = vmatpush1.bf16.msra.mxu0 %v1960
        %2029 = vmatprep.subr.bf16.mxu0 0
        %2030 = vmatpush1.bf16.msra.mxu0 %v1961
        %2031 = vmatprep.subr.bf16.mxu0 0
        %2032 = vmatpush1.bf16.msra.mxu0 %v1962
        %2033 = vmatprep.subr.bf16.mxu0 0
        %2034 = vmatpush1.bf16.msra.mxu0 %v1963
        %2035 = vmatprep.subr.bf16.mxu0 0
        %2036 = vmatpush1.bf16.msra.mxu0 %v1964
        %2037 = vmatprep.subr.bf16.mxu0 0
        %2038 = vmatpush1.bf16.msra.mxu0 %v1965
        %2039 = vmatprep.subr.bf16.mxu0 0
        %2040 = vmatpush1.bf16.msra.mxu0 %v1966
        %2041 = vmatprep.subr.bf16.mxu0 0
        %2042 = vmatpush1.bf16.msra.mxu0 %v1967
        %2043 = vmatprep.subr.bf16.mxu0 0
        %2044 = vmatpush1.bf16.msra.mxu0 %v1968
        %2045 = vmatprep.subr.bf16.mxu0 0
        %2046 = vmatpush1.bf16.msra.mxu0 %v1969
        %2047 = vmatprep.subr.bf16.mxu0 0
        %2048 = vmatpush1.bf16.msra.mxu0 %v1970
        %2049 = vmatprep.subr.bf16.mxu0 0
        %2050 = vmatpush1.bf16.msra.mxu0 %v1971
        %2051 = vmatprep.subr.bf16.mxu0 0
        %2052 = vmatpush1.bf16.msra.mxu0 %v1972
        %2053 = vmatprep.mubr.bf16.mxu0 %v1826
        %2054 = vmatmul.mubr.bf16.gmra.mrb[0].mxu0 %v1825
        %v2055 = vpop.f32.mrb[0].mxu0
        %v2056 = vadd.f32 0.0, %v2055
        %v2057 = vpop.f32.mrb[0].mxu0
        %v2058 = vpop.f32.mrb[0].mxu0
        %v2059 = vpop.f32.mrb[0].mxu0
        %2060 = vdwg.mxu0
        %2061 = vmatprep.subr.bf16.mxu0 0
        %2062 = vmatpush1.bf16.msra.mxu0 %v1973
        %2063 = vmatprep.subr.bf16.mxu0 0
        %2064 = vmatpush1.bf16.msra.mxu0 %v1974
        %2065 = vmatprep.subr.bf16.mxu0 0
        %2066 = vmatpush1.bf16.msra.mxu0 %v1975
        %2067 = vmatprep.subr.bf16.mxu0 0
        %2068 = vmatpush1.bf16.msra.mxu0 %v1976
        %2069 = vmatprep.subr.bf16.mxu0 0
        %2070 = vmatpush1.bf16.msra.mxu0 %v1977
        %2071 = vmatprep.subr.bf16.mxu0 0
        %2072 = vmatpush1.bf16.msra.mxu0 %v1978
        %2073 = vmatprep.subr.bf16.mxu0 0
        %2074 = vmatpush1.bf16.msra.mxu0 %v1979
        %2075 = vmatprep.subr.bf16.mxu0 0
        %2076 = vmatpush1.bf16.msra.mxu0 %v1980
        %2077 = vmatprep.subr.bf16.mxu0 0
        %2078 = vmatpush1.bf16.msra.mxu0 %v1981
        %2079 = vmatprep.subr.bf16.mxu0 0
        %2080 = vmatpush1.bf16.msra.mxu0 %v1982
        %2081 = vmatprep.subr.bf16.mxu0 0
        %2082 = vmatpush1.bf16.msra.mxu0 %v1983
        %2083 = vmatprep.subr.bf16.mxu0 0
        %2084 = vmatpush1.bf16.msra.mxu0 %v1984
        %2085 = vmatprep.subr.bf16.mxu0 0
        %2086 = vmatpush1.bf16.msra.mxu0 %v1985
        %2087 = vmatprep.subr.bf16.mxu0 0
        %2088 = vmatpush1.bf16.msra.mxu0 %v1986
        %2089 = vmatprep.subr.bf16.mxu0 0
        %2090 = vmatpush1.bf16.msra.mxu0 %v1987
        %2091 = vmatprep.subr.bf16.mxu0 0
        %2092 = vmatpush1.bf16.msra.mxu0 %v1988
        %2093 = vmatprep.mubr.bf16.mxu0 %v1828
        %2094 = vmatmul.mubr.bf16.gmra.mrb[0].mxu0 %v1827
        %v2095 = vpop.f32.mrb[0].mxu0
        %v2096 = vadd.f32 %v2056, %v2095
        %v2097 = vpop.f32.mrb[0].mxu0
        %v2098 = vpop.f32.mrb[0].mxu0
        %v2099 = vpop.f32.mrb[0].mxu0
        %2100 = vdwg.mxu0
        %v2101 = vadd.f32 %v1760, %v2096
        %2102 = vst.msk [vmem:[#allocation3] sm:$0xff] %vm1670, %v2101
        %p2103 = scmp.eq.s32.totalorder %s36, 3
        // Predicated region
        $region128: #{transformer_forward.7} parent=118 // pred_check
          %p2104 = pneg %p2103
        $region129: #{transformer_forward.7} parent=118 // pred_check_branch
          %2106 = sbr.rel (%p2104) target = $region131
        $region130: #{transformer_forward.7} parent=118 // pred_region
          %v2107 = vld [vmem:[#allocation2] sm:$0xff]
          %v2108 = vld [vmem:[#allocation3] sm:$0xff]
          %v2109 = vadd.f32 %v2107, %v2108
          %v2110 = vld [vmem:[%s17] sm:$0x1]
          %v2112 = vlaneseq
          %v2113 = vshrl.u32 %v2112, 7
          %v2114 = vsub.s32 0, %v2113
          %v2115 = vrot.slane %v2110, %v2114
          %v2117 = vadd.f32 %v2109, %v2115
          %v2118 = vld [vmem:[%s18] sm:$0x1]
          %v2119 = vld [vmem:[%s19] sm:$0x1]
          %v2120 = vsel %vm1670, %v2117, 0.0
          %2121 = vadd.xlane.f32.xlu0 %v2120
          %v2122 = vpop.xlane.xlu0 %2121
          %v2123 = vrcp.pop 32.0
          %v2124 = vmul.f32 %v2122, %v2123
          %v2125 = vsub.f32 %v2117, %v2124
          %v2126 = vmul.f32 %v2125, %v2125
          %v2127 = vsel %vm1670, %v2126, 0.0
          %2128 = vadd.xlane.f32.xlu0 %v2127
          %v2129 = vpop.xlane.xlu0 %2128
          %v2130 = vmul.f32 %v2129, %v2123
          %v2131 = vadd.f32 %v2130, 1e-05
          %v2132 = vrsqrt.pop %v2131
          %v2133 = vmul.f32 %v2125, %v2132
          %v2135 = vlaneseq
          %v2136 = vshrl.u32 %v2135, 7
          %v2137 = vsub.s32 0, %v2136
          %v2138 = vrot.slane %v2118, %v2137
          %v2140 = vmul.f32 %v2133, %v2138
          %v2142 = vlaneseq
          %v2143 = vshrl.u32 %v2142, 7
          %v2144 = vsub.s32 0, %v2143
          %v2145 = vrot.slane %v2119, %v2144
          %v2147 = vadd.f32 %v2140, %v2145
          %v2148 = vpack.c.bf16 %v2147, %v2147
          %vm2149 = vcmask 257024
          %2150 = vst.msk [vmem:[%s749] sm:$0xf] %vm2149, %v2148
        $region131: #{transformer_forward.7} parent=118 // pred_fallthru
          _
        %p2151 = scmp.lt.s32.totalorder %s35, 1
        %s2152 = scalar_select %p2151, %s35, 1
        %s2153 = smul.addr %s2152, 4
        %s2154 = scalar_lea.vmem %s20, %s2153
        // Predicated region
        $region132: #{transformer_forward.7} parent=118 // pred_check
          %p2155 = pneg %p506
        $region133: #{transformer_forward.7} parent=118 // pred_check_branch
          %2157 = sbr.rel (%p2155) target = $region135
        $region134: #{transformer_forward.7} parent=118 // pred_region
          _
        $region135: #{transformer_forward.7} parent=118 // pred_fallthru
          _
      $region119: #{transformer_forward.7} parent=5 // pred_fallthru
        _
      %p2158 = scmp.le.s32.totalorder 2, %s26
      // Predicated region
      $region136: #{transformer_forward.7} parent=5 // pred_check
        %p2159 = pneg %p2158
      $region137: #{transformer_forward.7} parent=5 // pred_check_branch
        %2161 = sbr.rel (%p2159) target = $region139
      $region138: #{transformer_forward.7} parent=5 // pred_region
        %s2162 = ssub.s32 %s26, 2
        // Predicated region
        $region140: #{transformer_forward.7} parent=138 // pred_check
          %p2163 = pneg %p512
        $region141: #{transformer_forward.7} parent=138 // pred_check_branch
          %2165 = sbr.rel (%p2163) target = $region143
        $region142: #{transformer_forward.7} parent=138 // pred_region
          %p2166 = scmp.lt.s32.totalorder %s37, 1
          %s2167 = scalar_select %p2166, %s37, 1
          %s2168 = smul.addr %s2167, 4
          %s2169 = scalar_lea.vmem %s20, %s2168
        $region143: #{transformer_forward.7} parent=138 // pred_fallthru
          _
      $region139: #{transformer_forward.7} parent=5 // pred_fallthru
        _
    $region6: #{transformer_forward.7} parent=1 // loop_footer
      %s30 = sadd.s32 1, %s26
    $region7: #{transformer_forward.7} parent=1 // loop_footer_branch
      %25 = sbr.rel target = $region3
    $region8: #{transformer_forward.7} parent=1 // loop_exit
      _

// kernel: transformer_forward.9
$region0: #{transformer_forward.9}
  #allocation0 [shape = 'u32[]', space=smem, size = 0x4, offset = 0x4, fixed_abs, tag = 'smem constant byte address 0x4 - core index']
  #allocation1 [shape = 'u32[144,128]{1,0:T(1,128)}', space=vmem, size = 0x12000, scoped, tag = 'internal scratch']
  %s0 = inlined_call_operand.vmem [shape: bf16[16,32], index: 0, kind: input, shape index: {}]
  %s1 = inlined_call_operand.vmem [shape: f32[1,32], index: 1, kind: input, shape index: {}]
  %s2 = inlined_call_operand.vmem [shape: f32[1,32], index: 2, kind: input, shape index: {}]
  %s3 = inlined_call_operand.vmem [shape: bf16[32,32], index: 3, kind: input, shape index: {}]
  %s4 = inlined_call_operand.vmem [shape: f32[1,32], index: 4, kind: input, shape index: {}]
  %s5 = inlined_call_operand.vmem [shape: f32[16,32], index: 5, kind: output, shape index: {}]
  %s6 = sld [smem:[#allocation0]]
  $region30: #{transformer_forward.9} parent=0
    _
  %s8 = ssub.s32 1, %s6
  %s9 = scalar_select 0, %s8, %s6
  // Predicated region
  $region2: #{transformer_forward.9} parent=0 // pred_check
    _
  $region3: #{transformer_forward.9} parent=0 // pred_check_branch
    %11 = sbr.rel (0) target = $region5
  $region4: #{transformer_forward.9} parent=0 // pred_region
    _
  $region5: #{transformer_forward.9} parent=0 // pred_fallthru
    _
  // Predicated region
  $region6: #{transformer_forward.9} parent=0 // pred_check
    _
  $region7: #{transformer_forward.9} parent=0 // pred_check_branch
    %13 = sbr.rel (0) target = $region9
  $region8: #{transformer_forward.9} parent=0 // pred_region
    _
  $region9: #{transformer_forward.9} parent=0 // pred_fallthru
    _
  // Predicated region
  $region10: #{transformer_forward.9} parent=0 // pred_check
    _
  $region11: #{transformer_forward.9} parent=0 // pred_check_branch
    %15 = sbr.rel (0) target = $region13
  $region12: #{transformer_forward.9} parent=0 // pred_region
    _
  $region13: #{transformer_forward.9} parent=0 // pred_fallthru
    _
  // Predicated region
  $region14: #{transformer_forward.9} parent=0 // pred_check
    _
  $region15: #{transformer_forward.9} parent=0 // pred_check_branch
    %17 = sbr.rel (0) target = $region17
  $region16: #{transformer_forward.9} parent=0 // pred_region
    _
  $region17: #{transformer_forward.9} parent=0 // pred_fallthru
    _
  // Predicated region
  $region18: #{transformer_forward.9} parent=0 // pred_check
    _
  $region19: #{transformer_forward.9} parent=0 // pred_check_branch
    %19 = sbr.rel (0) target = $region21
  $region20: #{transformer_forward.9} parent=0 // pred_region
    _
  $region21: #{transformer_forward.9} parent=0 // pred_fallthru
    _
  %v21 = vld [vmem:[%s0] sm:$0xf]
  %v22 = vld [vmem:[%s0 + $0x4] sm:$0xf]
  %v23 = vunpack.c.l.bf16 %v21
  %v24 = vunpack.c.l.bf16 %v22
  %v25 = vld [vmem:[%s1] sm:$0x1]
  %v26 = vld [vmem:[%s2] sm:$0x1]
  %vm27 = vcmask 261120
  %v28 = vsel %vm27, %v23, 0.0
  %29 = vadd.xlane.f32.xlu0 %v28
  %v30 = vpop.xlane.xlu0 %29
  %v31 = vsel %vm27, %v24, 0.0
  %32 = vadd.xlane.f32.xlu0 %v31
  %v33 = vpop.xlane.xlu0 %32
  %v34 = vrcp.pop 32.0
  %v35 = vmul.f32 %v30, %v34
  %v36 = vmul.f32 %v33, %v34
  %v37 = vsub.f32 %v23, %v35
  %v38 = vsub.f32 %v24, %v36
  %v39 = vmul.f32 %v37, %v37
  %v40 = vmul.f32 %v38, %v38
  %v41 = vsel %vm27, %v39, 0.0
  %42 = vadd.xlane.f32.xlu0 %v41
  %v43 = vpop.xlane.xlu0 %42
  %v44 = vsel %vm27, %v40, 0.0
  %45 = vadd.xlane.f32.xlu0 %v44
  %v46 = vpop.xlane.xlu0 %45
  %v47 = vmul.f32 %v43, %v34
  %v48 = vmul.f32 %v46, %v34
  %v49 = vadd.f32 %v47, 1e-05
  %v50 = vadd.f32 %v48, 1e-05
  %v51 = vrsqrt.pop %v49
  %v52 = vrsqrt.pop %v50
  %v53 = vmul.f32 %v37, %v51
  %v54 = vmul.f32 %v38, %v52
  %v56 = vlaneseq
  %v57 = vshrl.u32 %v56, 7
  %v58 = vsub.s32 0, %v57
  %v59 = vrot.slane %v25, %v58
  %v61 = vmul.f32 %v53, %v59
  %v62 = vmul.f32 %v54, %v59
  %v64 = vlaneseq
  %v65 = vshrl.u32 %v64, 7
  %v66 = vsub.s32 0, %v65
  %v67 = vrot.slane %v26, %v66
  %v69 = vadd.f32 %v61, %v67
  %v70 = vadd.f32 %v62, %v67
  %v71 = vld [vmem:[%s3] sm:$0xf]
  %v72 = vld [vmem:[%s3 + $0x4] sm:$0xf]
  %v73 = vld [vmem:[%s3 + $0x8] sm:$0xf]
  %v74 = vld [vmem:[%s3 + $0xc] sm:$0xf]
  %v75 = vpack.c.bf16 %v70, %v69
  %v76 = vld [vmem:[%s4] sm:$0x1]
  %v78 = vlaneseq
  %v79 = vshrl.u32 %v78, 7
  %v80 = vsub.s32 0, %v79
  %v81 = vrot.slane %v76, %v80
  %v87 = vunpack.c.l.b16 %v71
  %v88 = vunpack.c.l.b16 %v72
  %v89 = vunpack.c.l.b16 %v73
  %v90 = vunpack.c.l.b16 %v74
  %v91 = vpack.c.b16 %v88, %v87
  %v92 = vpack.c.b16 %v90, %v89
  %v96 = vsel %vm27, %v75, 0
  %98 = vmatprep.subr.bf16.mxu0 0
  %99 = vmatpush1.bf16.msra.mxu0 %v91
  %100 = vmatprep.subr.bf16.mxu0 0
  %101 = vmatpush1.bf16.msra.mxu0 %v92
  %102 = vmatprep.subr.bf16.mxu0 0
  %103 = vmatpush1.bf16.msra.mxu0 0
  %104 = vmatprep.subr.bf16.mxu0 0
  %105 = vmatpush1.bf16.msra.mxu0 0
  %106 = vmatprep.subr.bf16.mxu0 0
  %107 = vmatpush1.bf16.msra.mxu0 0
  %108 = vmatprep.subr.bf16.mxu0 0
  %109 = vmatpush1.bf16.msra.mxu0 0
  %110 = vmatprep.subr.bf16.mxu0 0
  %111 = vmatpush1.bf16.msra.mxu0 0
  %112 = vmatprep.subr.bf16.mxu0 0
  %113 = vmatpush1.bf16.msra.mxu0 0
  %114 = vmatprep.subr.bf16.mxu0 0
  %115 = vmatpush1.bf16.msra.mxu0 0
  %116 = vmatprep.subr.bf16.mxu0 0
  %117 = vmatpush1.bf16.msra.mxu0 0
  %118 = vmatprep.subr.bf16.mxu0 0
  %119 = vmatpush1.bf16.msra.mxu0 0
  %120 = vmatprep.subr.bf16.mxu0 0
  %121 = vmatpush1.bf16.msra.mxu0 0
  %122 = vmatprep.subr.bf16.mxu0 0
  %123 = vmatpush1.bf16.msra.mxu0 0
  %124 = vmatprep.subr.bf16.mxu0 0
  %125 = vmatpush1.bf16.msra.mxu0 0
  %126 = vmatprep.subr.bf16.mxu0 0
  %127 = vmatpush1.bf16.msra.mxu0 0
  %128 = vmatprep.subr.bf16.mxu0 0
  %129 = vmatpush1.bf16.msra.mxu0 0
  %130 = vmatprep.mubr.bf16.mxu0 0
  %131 = vmatmul.mubr.bf16.gmra.mrb[0].mxu0 %v96
  %v132 = vpop.f32.mrb[0].mxu0
  %v133 = vadd.f32 %v81, %v132
  %v134 = vpop.f32.mrb[0].mxu0
  %v135 = vpop.f32.mrb[0].mxu0
  %v136 = vadd.f32 %v81, %v135
  %v137 = vpop.f32.mrb[0].mxu0
  %138 = vdwg.mxu0
  %139 = vst.msk [vmem:[%s5] sm:$0xff] %vm27, %v133
  %140 = vst.msk [vmem:[%s5 + $0x8] sm:$0xff] %vm27, %v136
  // Predicated region
  $region22: #{transformer_forward.9} parent=0 // pred_check
    _
  $region23: #{transformer_forward.9} parent=0 // pred_check_branch
    %142 = sbr.rel (0) target = $region25
  $region24: #{transformer_forward.9} parent=0 // pred_region
    _
  $region25: #{transformer_forward.9} parent=0 // pred_fallthru
    _
  // Predicated region
  $region26: #{transformer_forward.9} parent=0 // pred_check
    _
  $region27: #{transformer_forward.9} parent=0 // pred_check_branch
    %144 = sbr.rel (0) target = $region29
  $region28: #{transformer_forward.9} parent=0 // pred_region
    _
  $region29: #{transformer_forward.9} parent=0 // pred_fallthru
    _

</llo_original>
